<compile_context>
chip_gen: v6e
topology: v6e:2x2x1
jax: 0.10.0
libtpu: 0.0.40
codegen_flags: <defaults>
</compile_context>

<pallas_src>
import functools

import jax
import jax.numpy as jnp
from jax import lax
from jax.experimental import pallas as pl
from jax.experimental.pallas import tpu as pltpu


# ----------------------------------------------------------------------------
# Fused kernel: all LSTM layers + attention + BN(eval) + FC, per batch tile
# ----------------------------------------------------------------------------
def _make_fused_kernel(num_layers, T, Bt, H):
    n_in = 1 + 3 * num_layers + 6

    def kernel(*refs):
        x_ref = refs[0]                                          # (T, Bt, F)
        layer_refs = [refs[1 + 3 * l: 4 + 3 * l] for l in range(num_layers)]
        (gamma_ref, beta_ref, rmean_ref, rvar_ref,
         wfc_ref, bfc_ref) = refs[1 + 3 * num_layers: n_in]
        out_ref = refs[n_in]                                     # (Bt, O)
        seq_scr, gxi, gxf, gxg, gxo, h_scr, c_scr = refs[n_in + 1:]

        def run_layer(x_flat, w_ih_ref, w_hh_ref, b_ref):
            # --- hoisted input projection + bias: one big (T*Bt, F_in) matmul
            #     per gate, written time-major so the recurrence reads dense
            #     (Bt, H) tiles with no per-step lane slicing.
            for g_idx, gx in enumerate((gxi, gxf, gxg, gxo)):
                gx[...] = (
                    jnp.dot(x_flat, w_ih_ref[g_idx],
                            preferred_element_type=jnp.float32)
                    + b_ref[g_idx]
                ).reshape(T, Bt, H)

            h_scr[...] = jnp.zeros_like(h_scr)
            c_scr[...] = jnp.zeros_like(c_scr)

            # --- serial recurrence: only h @ W_hh remains on the critical path;
            #     per-gate (H, H) weights keep gate selection off the lane axis.
            def step(t, carry):
                h = h_scr[...]
                c = c_scr[...]
                zi = gxi[t] + jnp.dot(h, w_hh_ref[0], preferred_element_type=jnp.float32)
                zf = gxf[t] + jnp.dot(h, w_hh_ref[1], preferred_element_type=jnp.float32)
                zg = gxg[t] + jnp.dot(h, w_hh_ref[2], preferred_element_type=jnp.float32)
                zo = gxo[t] + jnp.dot(h, w_hh_ref[3], preferred_element_type=jnp.float32)
                i_g = jax.nn.sigmoid(zi)
                f_g = jax.nn.sigmoid(zf)
                g_g = jnp.tanh(zg)
                o_g = jax.nn.sigmoid(zo)
                c_new = f_g * c + i_g * g_g
                h_new = o_g * jnp.tanh(c_new)
                h_scr[...] = h_new
                c_scr[...] = c_new
                seq_scr[t] = h_new            # layer output sequence, in place
                return carry

            # T is static & small: fully unroll for cross-step scheduling.
            lax.fori_loop(0, T, step, 0, unroll=True)

        # Layer 0 consumes the (T, Bt, F) input; deeper layers reuse seq_scr in
        # place (the pre-pass consumes it into gx* before the loop rewrites it),
        # so there is a single (T, Bt, H) sequence buffer for all layers.
        F_in = x_ref.shape[-1]
        run_layer(x_ref[...].reshape(T * Bt, F_in), *layer_refs[0])
        for l in range(1, num_layers):
            run_layer(seq_scr[...].reshape(T * Bt, H), *layer_refs[l])

        # F.dropout(..., training=False) -> identity (eval mode).

        y = seq_scr[...]                                  # (T, Bt, H)
        # attention scores: softmax over T of mean over H
        m = jnp.mean(y, axis=2, keepdims=True)            # (T, Bt, 1)
        m_max = jnp.max(m, axis=0, keepdims=True)
        e = jnp.exp(m - m_max)
        denom = jnp.sum(e, axis=0, keepdims=True)
        scores = e * pl.reciprocal(denom, approx=False)   # (T, Bt, 1)
        # Weighted sum over time: with time as the leading axis this is a
        # size-1 lane broadcast + T vector adds (no sublane/lane reduction and
        # no relayout), which is cheap at these shapes.
        attn = jnp.sum(scores * y, axis=0)                # (Bt, H)

        # BatchNorm1d (eval mode, running stats, eps=1e-5)
        xhat = (attn - rmean_ref[...]) * lax.rsqrt(rvar_ref[...] + 1e-5)
        bn = xhat * gamma_ref[...] + beta_ref[...]        # (Bt, H)

        # Linear
        out_ref[...] = (
            jnp.dot(bn, wfc_ref[...], preferred_element_type=jnp.float32)
            + bfc_ref[...]
        )

    return kernel


def _full_spec(arr):
    zeros = (0,) * arr.ndim
    return pl.BlockSpec(arr.shape, lambda b, _z=zeros: _z)


# ----------------------------------------------------------------------------
# Wrapper: batch padding, batch-parallel grid, explicit VMEM budget
# ----------------------------------------------------------------------------
def lstm_attention_reg_forward(x_btf, params, *, b_tile=8):
    """x_btf: (B, T, input_size) -> (B, output_size). Eval-mode forward."""
    B, T, F = x_btf.shape
    lstm_params = params["lstm"]
    num_layers = len(lstm_params)
    H = lstm_params[0]["w_hh"].shape[-1]
    O = params["fc_w"].shape[-1]

    # Pad the batch to a sublane-friendly multiple of the tile (>= 8 for f32)
    # and make the raw input time-major once; padded rows are sliced off at the
    # end (BN uses running stats, so padding does not affect real rows).
    b_tile = max(8, int(b_tile))
    B_pad = ((B + b_tile - 1) // b_tile) * b_tile
    x_p = jnp.pad(x_btf.astype(jnp.float32), ((0, B_pad - B), (0, 0), (0, 0)))
    x_tbf = jnp.transpose(x_p, (1, 0, 2))                 # (T, B_pad, F)

    args = [x_tbf]
    in_specs = [pl.BlockSpec((T, b_tile, F), lambda b: (0, b, 0))]
    for lp in lstm_params:
        for arr in (lp["w_ih"], lp["w_hh"], lp["bias"]):
            args.append(arr)
            in_specs.append(_full_spec(arr))
    for name in ("bn_gamma", "bn_beta", "bn_mean", "bn_var", "fc_w", "fc_b"):
        args.append(params[name])
        in_specs.append(_full_spec(params[name]))

    scratch_shapes = (
        [pltpu.VMEM((T, b_tile, H), jnp.float32) for _ in range(5)]  # seq + 4 gate pre-acts
        + [pltpu.VMEM((b_tile, H), jnp.float32) for _ in range(2)]   # h, c state
    )

    # Explicit VMEM budget: double-buffered blocks + scratch, capped below the
    # v7x 64 MiB physical VMEM so the same tile plan compiles on v5e/v6e/v7x.
    param_bytes = sum(int(a.size) * a.dtype.itemsize for a in args[1:])
    io_bytes = (T * b_tile * F + b_tile * O) * 4
    scratch_bytes = (5 * T * b_tile * H + 2 * b_tile * H) * 4
    vmem_limit = 2 * (param_bytes + io_bytes) + scratch_bytes + (2 << 20)
    vmem_limit = int(max(4 << 20, min(vmem_limit, 60 << 20)))

    kernel = _make_fused_kernel(num_layers, T, b_tile, H)
    out_pad = pl.pallas_call(
        kernel,
        out_shape=jax.ShapeDtypeStruct((B_pad, O), jnp.float32),
        grid=(B_pad // b_tile,),
        in_specs=in_specs,
        out_specs=pl.BlockSpec((b_tile, O), lambda b: (b, 0)),
        scratch_shapes=scratch_shapes,
        compiler_params=pltpu.CompilerParams(
            dimension_semantics=("parallel",),
            vmem_limit_bytes=vmem_limit,
        ),
    )(*args)
    return out_pad[:B]


# ----------------------------------------------------------------------------
# Parameter construction (kernel layout; gate order i, f, g, o)
#   w_ih[g] = W_ih[g*H:(g+1)*H, :].T   (F_in, H)
#   w_hh[g] = W_hh[g*H:(g+1)*H, :].T   (H, H)
#   bias[g] = (b_ih + b_hh)[g*H:(g+1)*H]  as (1, H)
# ----------------------------------------------------------------------------
def init_params(key, input_size, hidden_size, num_layers, output_size):
    k = 1.0 / jnp.sqrt(jnp.float32(hidden_size))
    keys = jax.random.split(key, num_layers * 4 + 2)
    ki = 0
    params = {"lstm": []}
    for layer in range(num_layers):
        fan_in = input_size if layer == 0 else hidden_size
        w_ih = jax.random.uniform(keys[ki], (4, fan_in, hidden_size),
                                  minval=-k, maxval=k, dtype=jnp.float32); ki += 1
        w_hh = jax.random.uniform(keys[ki], (4, hidden_size, hidden_size),
                                  minval=-k, maxval=k, dtype=jnp.float32); ki += 1
        b_ih = jax.random.uniform(keys[ki], (4, 1, hidden_size),
                                  minval=-k, maxval=k, dtype=jnp.float32); ki += 1
        b_hh = jax.random.uniform(keys[ki], (4, 1, hidden_size),
                                  minval=-k, maxval=k, dtype=jnp.float32); ki += 1
        params["lstm"].append({"w_ih": w_ih, "w_hh": w_hh, "bias": b_ih + b_hh})
    params["bn_gamma"] = jnp.ones((1, hidden_size), jnp.float32)
    params["bn_beta"] = jnp.zeros((1, hidden_size), jnp.float32)
    params["bn_mean"] = jnp.zeros((1, hidden_size), jnp.float32)
    params["bn_var"] = jnp.ones((1, hidden_size), jnp.float32)
    params["fc_w"] = jax.random.uniform(keys[ki], (hidden_size, output_size),
                                        minval=-k, maxval=k, dtype=jnp.float32); ki += 1
    params["fc_b"] = jax.random.uniform(keys[ki], (1, output_size),
                                        minval=-k, maxval=k, dtype=jnp.float32); ki += 1
    return params


if __name__ == "__main__":
    # Small shapes consistent with the module: batch=2, seq=8, input=4,
    # hidden=32, num_layers=2, output=3.
    B, T, INPUT, HIDDEN, LAYERS, OUT = 2, 8, 4, 32, 2, 3

    key = jax.random.PRNGKey(0)
    k_x, k_p = jax.random.split(key)
    x = jax.random.normal(k_x, (B, T, INPUT), dtype=jnp.float32)
    params = init_params(k_p, INPUT, HIDDEN, LAYERS, OUT)

    fwd = jax.jit(functools.partial(lstm_attention_reg_forward, params=params))
    out = fwd(x)
    jax.block_until_ready(out)
    assert out.shape == (B, OUT)
    assert bool(jnp.all(jnp.isfinite(out)))
    # TODO(synk): training-mode dropout (LSTM inter-layer + F.dropout) not implemented; eval semantics only.
    print("KERNEL_OK")
</pallas_src>

<mosaic_0001>
module attributes {stable_mosaic.version = 11 : i64} {
  func.func @kernel(%arg0: i32, %arg1: memref<8x8x4xf32, #tpu.memory_space<vmem>>, %arg2: memref<4x4x32xf32, #tpu.memory_space<vmem>>, %arg3: memref<4x32x32xf32, #tpu.memory_space<vmem>>, %arg4: memref<4x1x32xf32, #tpu.memory_space<vmem>>, %arg5: memref<4x32x32xf32, #tpu.memory_space<vmem>>, %arg6: memref<4x32x32xf32, #tpu.memory_space<vmem>>, %arg7: memref<4x1x32xf32, #tpu.memory_space<vmem>>, %arg8: memref<1x32xf32, #tpu.memory_space<vmem>>, %arg9: memref<1x32xf32, #tpu.memory_space<vmem>>, %arg10: memref<1x32xf32, #tpu.memory_space<vmem>>, %arg11: memref<1x32xf32, #tpu.memory_space<vmem>>, %arg12: memref<32x3xf32, #tpu.memory_space<vmem>>, %arg13: memref<1x3xf32, #tpu.memory_space<vmem>>, %arg14: memref<8x3xf32, #tpu.memory_space<vmem>>, %arg15: memref<8x8x32xf32, #tpu.memory_space<vmem>>, %arg16: memref<8x8x32xf32, #tpu.memory_space<vmem>>, %arg17: memref<8x8x32xf32, #tpu.memory_space<vmem>>, %arg18: memref<8x8x32xf32, #tpu.memory_space<vmem>>, %arg19: memref<8x8x32xf32, #tpu.memory_space<vmem>>, %arg20: memref<8x32xf32, #tpu.memory_space<vmem>>, %arg21: memref<8x32xf32, #tpu.memory_space<vmem>>) attributes {dimension_semantics = [#tpu.dimension_semantics<parallel>], iteration_bounds = array<i64: 1>, scalar_prefetch = 0 : i64, scratch_operands = 7 : i64, tpu.core_type = #tpu.core_type<tc>, window_params = [{transform_indices = @transform_0, window_bounds = array<i64: 8, 8, 4>}, {pipeline_mode = #tpu.pipeline_mode<synchronous>, transform_indices = @transform_1, window_bounds = array<i64: 4, 4, 32>}, {pipeline_mode = #tpu.pipeline_mode<synchronous>, transform_indices = @transform_2, window_bounds = array<i64: 4, 32, 32>}, {pipeline_mode = #tpu.pipeline_mode<synchronous>, transform_indices = @transform_3, window_bounds = array<i64: 4, 1, 32>}, {pipeline_mode = #tpu.pipeline_mode<synchronous>, transform_indices = @transform_4, window_bounds = array<i64: 4, 32, 32>}, {pipeline_mode = #tpu.pipeline_mode<synchronous>, transform_indices = @transform_5, window_bounds = array<i64: 4, 32, 32>}, {pipeline_mode = #tpu.pipeline_mode<synchronous>, transform_indices = @transform_6, window_bounds = array<i64: 4, 1, 32>}, {pipeline_mode = #tpu.pipeline_mode<synchronous>, transform_indices = @transform_7, window_bounds = array<i64: 1, 32>}, {pipeline_mode = #tpu.pipeline_mode<synchronous>, transform_indices = @transform_8, window_bounds = array<i64: 1, 32>}, {pipeline_mode = #tpu.pipeline_mode<synchronous>, transform_indices = @transform_9, window_bounds = array<i64: 1, 32>}, {pipeline_mode = #tpu.pipeline_mode<synchronous>, transform_indices = @transform_10, window_bounds = array<i64: 1, 32>}, {pipeline_mode = #tpu.pipeline_mode<synchronous>, transform_indices = @transform_11, window_bounds = array<i64: 32, 3>}, {pipeline_mode = #tpu.pipeline_mode<synchronous>, transform_indices = @transform_12, window_bounds = array<i64: 1, 3>}, {transform_indices = @transform_13, window_bounds = array<i64: 8, 3>}]} {
    %c0 = arith.constant 0 : index
    %c0_0 = arith.constant 0 : index
    %c0_1 = arith.constant 0 : index
    %0 = vector.load %arg1[%c0, %c0_0, %c0_1] : memref<8x8x4xf32, #tpu.memory_space<vmem>>, vector<8x8x4xf32>
    %1 = vector.shape_cast %0 : vector<8x8x4xf32> to vector<64x4xf32>
    %c0_2 = arith.constant 0 : index
    %c0_3 = arith.constant 0 : index
    %c0_4 = arith.constant 0 : index
    %2 = vector.load %arg2[%c0_2, %c0_3, %c0_4] : memref<4x4x32xf32, #tpu.memory_space<vmem>>, vector<1x4x32xf32>
    %3 = vector.shape_cast %2 : vector<1x4x32xf32> to vector<4x32xf32>
    %cst = arith.constant dense<0.000000e+00> : vector<64x32xf32>
    %4 = tpu.matmul %1, %3, %cst {dimension_numbers = #tpu.dot_dimension_numbers<[1], [0], [0], [1], [0, 0, 1, 1], [], []>} : vector<64x4xf32>, vector<4x32xf32>, vector<64x32xf32> -> vector<64x32xf32>
    %c0_5 = arith.constant 0 : index
    %c0_6 = arith.constant 0 : index
    %c0_7 = arith.constant 0 : index
    %5 = vector.load %arg4[%c0_5, %c0_6, %c0_7] : memref<4x1x32xf32, #tpu.memory_space<vmem>>, vector<1x1x32xf32>
    %6 = vector.shape_cast %5 : vector<1x1x32xf32> to vector<1x32xf32>
    %7 = vector.broadcast %6 : vector<1x32xf32> to vector<64x32xf32>
    %8 = arith.addf %4, %7 : vector<64x32xf32>
    %9 = vector.shape_cast %8 : vector<64x32xf32> to vector<8x8x32xf32>
    %c0_8 = arith.constant 0 : index
    %c0_9 = arith.constant 0 : index
    %c0_10 = arith.constant 0 : index
    %10 = vector.load %arg16[%c0_8, %c0_9, %c0_10] : memref<8x8x32xf32, #tpu.memory_space<vmem>>, vector<8x8x32xf32>
    tpu.vector_store %arg16[%c0_8, %c0_9, %c0_10], %9 {strides = array<i32>} : memref<8x8x32xf32, #tpu.memory_space<vmem>>, vector<8x8x32xf32>,
    %c1 = arith.constant 1 : index
    %c0_11 = arith.constant 0 : index
    %c0_12 = arith.constant 0 : index
    %11 = vector.load %arg2[%c1, %c0_11, %c0_12] : memref<4x4x32xf32, #tpu.memory_space<vmem>>, vector<1x4x32xf32>
    %12 = vector.shape_cast %11 : vector<1x4x32xf32> to vector<4x32xf32>
    %cst_13 = arith.constant dense<0.000000e+00> : vector<64x32xf32>
    %13 = tpu.matmul %1, %12, %cst_13 {dimension_numbers = #tpu.dot_dimension_numbers<[1], [0], [0], [1], [0, 0, 1, 1], [], []>} : vector<64x4xf32>, vector<4x32xf32>, vector<64x32xf32> -> vector<64x32xf32>
    %c1_14 = arith.constant 1 : index
    %c0_15 = arith.constant 0 : index
    %c0_16 = arith.constant 0 : index
    %14 = vector.load %arg4[%c1_14, %c0_15, %c0_16] : memref<4x1x32xf32, #tpu.memory_space<vmem>>, vector<1x1x32xf32>
    %15 = vector.shape_cast %14 : vector<1x1x32xf32> to vector<1x32xf32>
    %16 = vector.broadcast %15 : vector<1x32xf32> to vector<64x32xf32>
    %17 = arith.addf %13, %16 : vector<64x32xf32>
    %18 = vector.shape_cast %17 : vector<64x32xf32> to vector<8x8x32xf32>
    %c0_17 = arith.constant 0 : index
    %c0_18 = arith.constant 0 : index
    %c0_19 = arith.constant 0 : index
    %19 = vector.load %arg17[%c0_17, %c0_18, %c0_19] : memref<8x8x32xf32, #tpu.memory_space<vmem>>, vector<8x8x32xf32>
    tpu.vector_store %arg17[%c0_17, %c0_18, %c0_19], %18 {strides = array<i32>} : memref<8x8x32xf32, #tpu.memory_space<vmem>>, vector<8x8x32xf32>,
    %c2 = arith.constant 2 : index
    %c0_20 = arith.constant 0 : index
    %c0_21 = arith.constant 0 : index
    %20 = vector.load %arg2[%c2, %c0_20, %c0_21] : memref<4x4x32xf32, #tpu.memory_space<vmem>>, vector<1x4x32xf32>
    %21 = vector.shape_cast %20 : vector<1x4x32xf32> to vector<4x32xf32>
    %cst_22 = arith.constant dense<0.000000e+00> : vector<64x32xf32>
    %22 = tpu.matmul %1, %21, %cst_22 {dimension_numbers = #tpu.dot_dimension_numbers<[1], [0], [0], [1], [0, 0, 1, 1], [], []>} : vector<64x4xf32>, vector<4x32xf32>, vector<64x32xf32> -> vector<64x32xf32>
    %c2_23 = arith.constant 2 : index
    %c0_24 = arith.constant 0 : index
    %c0_25 = arith.constant 0 : index
    %23 = vector.load %arg4[%c2_23, %c0_24, %c0_25] : memref<4x1x32xf32, #tpu.memory_space<vmem>>, vector<1x1x32xf32>
    %24 = vector.shape_cast %23 : vector<1x1x32xf32> to vector<1x32xf32>
    %25 = vector.broadcast %24 : vector<1x32xf32> to vector<64x32xf32>
    %26 = arith.addf %22, %25 : vector<64x32xf32>
    %27 = vector.shape_cast %26 : vector<64x32xf32> to vector<8x8x32xf32>
    %c0_26 = arith.constant 0 : index
    %c0_27 = arith.constant 0 : index
    %c0_28 = arith.constant 0 : index
    %28 = vector.load %arg18[%c0_26, %c0_27, %c0_28] : memref<8x8x32xf32, #tpu.memory_space<vmem>>, vector<8x8x32xf32>
    tpu.vector_store %arg18[%c0_26, %c0_27, %c0_28], %27 {strides = array<i32>} : memref<8x8x32xf32, #tpu.memory_space<vmem>>, vector<8x8x32xf32>,
    %c3 = arith.constant 3 : index
    %c0_29 = arith.constant 0 : index
    %c0_30 = arith.constant 0 : index
    %29 = vector.load %arg2[%c3, %c0_29, %c0_30] : memref<4x4x32xf32, #tpu.memory_space<vmem>>, vector<1x4x32xf32>
    %30 = vector.shape_cast %29 : vector<1x4x32xf32> to vector<4x32xf32>
    %cst_31 = arith.constant dense<0.000000e+00> : vector<64x32xf32>
    %31 = tpu.matmul %1, %30, %cst_31 {dimension_numbers = #tpu.dot_dimension_numbers<[1], [0], [0], [1], [0, 0, 1, 1], [], []>} : vector<64x4xf32>, vector<4x32xf32>, vector<64x32xf32> -> vector<64x32xf32>
    %c3_32 = arith.constant 3 : index
    %c0_33 = arith.constant 0 : index
    %c0_34 = arith.constant 0 : index
    %32 = vector.load %arg4[%c3_32, %c0_33, %c0_34] : memref<4x1x32xf32, #tpu.memory_space<vmem>>, vector<1x1x32xf32>
    %33 = vector.shape_cast %32 : vector<1x1x32xf32> to vector<1x32xf32>
    %34 = vector.broadcast %33 : vector<1x32xf32> to vector<64x32xf32>
    %35 = arith.addf %31, %34 : vector<64x32xf32>
    %36 = vector.shape_cast %35 : vector<64x32xf32> to vector<8x8x32xf32>
    %c0_35 = arith.constant 0 : index
    %c0_36 = arith.constant 0 : index
    %c0_37 = arith.constant 0 : index
    %37 = vector.load %arg19[%c0_35, %c0_36, %c0_37] : memref<8x8x32xf32, #tpu.memory_space<vmem>>, vector<8x8x32xf32>
    tpu.vector_store %arg19[%c0_35, %c0_36, %c0_37], %36 {strides = array<i32>} : memref<8x8x32xf32, #tpu.memory_space<vmem>>, vector<8x8x32xf32>,
    %cst_38 = arith.constant 0.000000e+00 : f32
    %38 = vector.broadcast %cst_38 : f32 to vector<8x32xf32>
    %c0_39 = arith.constant 0 : index
    %c0_40 = arith.constant 0 : index
    %39 = vector.load %arg20[%c0_39, %c0_40] : memref<8x32xf32, #tpu.memory_space<vmem>>, vector<8x32xf32>
    tpu.vector_store %arg20[%c0_39, %c0_40], %38 {strides = array<i32>} : memref<8x32xf32, #tpu.memory_space<vmem>>, vector<8x32xf32>,
    %cst_41 = arith.constant 0.000000e+00 : f32
    %40 = vector.broadcast %cst_41 : f32 to vector<8x32xf32>
    %c0_42 = arith.constant 0 : index
    %c0_43 = arith.constant 0 : index
    %41 = vector.load %arg21[%c0_42, %c0_43] : memref<8x32xf32, #tpu.memory_space<vmem>>, vector<8x32xf32>
    tpu.vector_store %arg21[%c0_42, %c0_43], %40 {strides = array<i32>} : memref<8x32xf32, #tpu.memory_space<vmem>>, vector<8x32xf32>,
    %c0_i32 = arith.constant 0 : i32
    %c0_44 = arith.constant 0 : index
    %c0_45 = arith.constant 0 : index
    %42 = vector.load %arg20[%c0_44, %c0_45] : memref<8x32xf32, #tpu.memory_space<vmem>>, vector<8x32xf32>
    %c0_46 = arith.constant 0 : index
    %c0_47 = arith.constant 0 : index
    %43 = vector.load %arg21[%c0_46, %c0_47] : memref<8x32xf32, #tpu.memory_space<vmem>>, vector<8x32xf32>
    %44 = arith.index_cast %c0_i32 : i32 to index
    %c0_48 = arith.constant 0 : index
    %c0_49 = arith.constant 0 : index
    %45 = vector.load %arg16[%44, %c0_48, %c0_49] : memref<8x8x32xf32, #tpu.memory_space<vmem>>, vector<1x8x32xf32>
    %46 = vector.shape_cast %45 : vector<1x8x32xf32> to vector<8x32xf32>
    %c0_50 = arith.constant 0 : index
    %c0_51 = arith.constant 0 : index
    %c0_52 = arith.constant 0 : index
    %47 = vector.load %arg3[%c0_50, %c0_51, %c0_52] : memref<4x32x32xf32, #tpu.memory_space<vmem>>, vector<1x32x32xf32>
    %48 = vector.shape_cast %47 : vector<1x32x32xf32> to vector<32x32xf32>
    %cst_53 = arith.constant dense<0.000000e+00> : vector<8x32xf32>
    %49 = tpu.matmul %42, %48, %cst_53 {dimension_numbers = #tpu.dot_dimension_numbers<[1], [0], [0], [1], [0, 0, 1, 1], [], []>} : vector<8x32xf32>, vector<32x32xf32>, vector<8x32xf32> -> vector<8x32xf32>
    %50 = arith.addf %46, %49 : vector<8x32xf32>
    %51 = arith.index_cast %c0_i32 : i32 to index
    %c0_54 = arith.constant 0 : index
    %c0_55 = arith.constant 0 : index
    %52 = vector.load %arg17[%51, %c0_54, %c0_55] : memref<8x8x32xf32, #tpu.memory_space<vmem>>, vector<1x8x32xf32>
    %53 = vector.shape_cast %52 : vector<1x8x32xf32> to vector<8x32xf32>
    %c1_56 = arith.constant 1 : index
    %c0_57 = arith.constant 0 : index
    %c0_58 = arith.constant 0 : index
    %54 = vector.load %arg3[%c1_56, %c0_57, %c0_58] : memref<4x32x32xf32, #tpu.memory_space<vmem>>, vector<1x32x32xf32>
    %55 = vector.shape_cast %54 : vector<1x32x32xf32> to vector<32x32xf32>
    %cst_59 = arith.constant dense<0.000000e+00> : vector<8x32xf32>
    %56 = tpu.matmul %42, %55, %cst_59 {dimension_numbers = #tpu.dot_dimension_numbers<[1], [0], [0], [1], [0, 0, 1, 1], [], []>} : vector<8x32xf32>, vector<32x32xf32>, vector<8x32xf32> -> vector<8x32xf32>
    %57 = arith.addf %53, %56 : vector<8x32xf32>
    %58 = arith.index_cast %c0_i32 : i32 to index
    %c0_60 = arith.constant 0 : index
    %c0_61 = arith.constant 0 : index
    %59 = vector.load %arg18[%58, %c0_60, %c0_61] : memref<8x8x32xf32, #tpu.memory_space<vmem>>, vector<1x8x32xf32>
    %60 = vector.shape_cast %59 : vector<1x8x32xf32> to vector<8x32xf32>
    %c2_62 = arith.constant 2 : index
    %c0_63 = arith.constant 0 : index
    %c0_64 = arith.constant 0 : index
    %61 = vector.load %arg3[%c2_62, %c0_63, %c0_64] : memref<4x32x32xf32, #tpu.memory_space<vmem>>, vector<1x32x32xf32>
    %62 = vector.shape_cast %61 : vector<1x32x32xf32> to vector<32x32xf32>
    %cst_65 = arith.constant dense<0.000000e+00> : vector<8x32xf32>
    %63 = tpu.matmul %42, %62, %cst_65 {dimension_numbers = #tpu.dot_dimension_numbers<[1], [0], [0], [1], [0, 0, 1, 1], [], []>} : vector<8x32xf32>, vector<32x32xf32>, vector<8x32xf32> -> vector<8x32xf32>
    %64 = arith.addf %60, %63 : vector<8x32xf32>
    %65 = arith.index_cast %c0_i32 : i32 to index
    %c0_66 = arith.constant 0 : index
    %c0_67 = arith.constant 0 : index
    %66 = vector.load %arg19[%65, %c0_66, %c0_67] : memref<8x8x32xf32, #tpu.memory_space<vmem>>, vector<1x8x32xf32>
    %67 = vector.shape_cast %66 : vector<1x8x32xf32> to vector<8x32xf32>
    %c3_68 = arith.constant 3 : index
    %c0_69 = arith.constant 0 : index
    %c0_70 = arith.constant 0 : index
    %68 = vector.load %arg3[%c3_68, %c0_69, %c0_70] : memref<4x32x32xf32, #tpu.memory_space<vmem>>, vector<1x32x32xf32>
    %69 = vector.shape_cast %68 : vector<1x32x32xf32> to vector<32x32xf32>
    %cst_71 = arith.constant dense<0.000000e+00> : vector<8x32xf32>
    %70 = tpu.matmul %42, %69, %cst_71 {dimension_numbers = #tpu.dot_dimension_numbers<[1], [0], [0], [1], [0, 0, 1, 1], [], []>} : vector<8x32xf32>, vector<32x32xf32>, vector<8x32xf32> -> vector<8x32xf32>
    %71 = arith.addf %67, %70 : vector<8x32xf32>
    %72 = arith.negf %50 : vector<8x32xf32>
    %73 = math.exp %72 : vector<8x32xf32>
    %cst_72 = arith.constant 1.000000e+00 : f32
    %74 = vector.broadcast %cst_72 : f32 to vector<8x32xf32>
    %75 = arith.addf %74, %73 : vector<8x32xf32>
    %76 = arith.divf %74, %75 : vector<8x32xf32>
    %77 = arith.negf %57 : vector<8x32xf32>
    %78 = math.exp %77 : vector<8x32xf32>
    %cst_73 = arith.constant 1.000000e+00 : f32
    %79 = vector.broadcast %cst_73 : f32 to vector<8x32xf32>
    %80 = arith.addf %79, %78 : vector<8x32xf32>
    %81 = arith.divf %79, %80 : vector<8x32xf32>
    %82 = math.tanh %64 : vector<8x32xf32>
    %83 = arith.negf %71 : vector<8x32xf32>
    %84 = math.exp %83 : vector<8x32xf32>
    %cst_74 = arith.constant 1.000000e+00 : f32
    %85 = vector.broadcast %cst_74 : f32 to vector<8x32xf32>
    %86 = arith.addf %85, %84 : vector<8x32xf32>
    %87 = arith.divf %85, %86 : vector<8x32xf32>
    %88 = arith.mulf %81, %43 : vector<8x32xf32>
    %89 = arith.mulf %76, %82 : vector<8x32xf32>
    %90 = arith.addf %88, %89 : vector<8x32xf32>
    %91 = math.tanh %90 : vector<8x32xf32>
    %92 = arith.mulf %87, %91 : vector<8x32xf32>
    %c0_75 = arith.constant 0 : index
    %c0_76 = arith.constant 0 : index
    %93 = vector.load %arg20[%c0_75, %c0_76] : memref<8x32xf32, #tpu.memory_space<vmem>>, vector<8x32xf32>
    tpu.vector_store %arg20[%c0_75, %c0_76], %92 {strides = array<i32>} : memref<8x32xf32, #tpu.memory_space<vmem>>, vector<8x32xf32>,
    %c0_77 = arith.constant 0 : index
    %c0_78 = arith.constant 0 : index
    %94 = vector.load %arg21[%c0_77, %c0_78] : memref<8x32xf32, #tpu.memory_space<vmem>>, vector<8x32xf32>
    tpu.vector_store %arg21[%c0_77, %c0_78], %90 {strides = array<i32>} : memref<8x32xf32, #tpu.memory_space<vmem>>, vector<8x32xf32>,
    %95 = arith.index_cast %c0_i32 : i32 to index
    %c0_79 = arith.constant 0 : index
    %c0_80 = arith.constant 0 : index
    %96 = vector.load %arg15[%95, %c0_79, %c0_80] : memref<8x8x32xf32, #tpu.memory_space<vmem>>, vector<1x8x32xf32>
    %97 = vector.shape_cast %96 : vector<1x8x32xf32> to vector<8x32xf32>
    %98 = vector.shape_cast %92 : vector<8x32xf32> to vector<1x8x32xf32>
    tpu.vector_store %arg15[%95, %c0_79, %c0_80], %98 {strides = array<i32>} : memref<8x8x32xf32, #tpu.memory_space<vmem>>, vector<1x8x32xf32>,
    %c1_i32 = arith.constant 1 : i32
    %c0_81 = arith.constant 0 : index
    %c0_82 = arith.constant 0 : index
    %99 = vector.load %arg20[%c0_81, %c0_82] : memref<8x32xf32, #tpu.memory_space<vmem>>, vector<8x32xf32>
    %c0_83 = arith.constant 0 : index
    %c0_84 = arith.constant 0 : index
    %100 = vector.load %arg21[%c0_83, %c0_84] : memref<8x32xf32, #tpu.memory_space<vmem>>, vector<8x32xf32>
    %101 = arith.index_cast %c1_i32 : i32 to index
    %c0_85 = arith.constant 0 : index
    %c0_86 = arith.constant 0 : index
    %102 = vector.load %arg16[%101, %c0_85, %c0_86] : memref<8x8x32xf32, #tpu.memory_space<vmem>>, vector<1x8x32xf32>
    %103 = vector.shape_cast %102 : vector<1x8x32xf32> to vector<8x32xf32>
    %c0_87 = arith.constant 0 : index
    %c0_88 = arith.constant 0 : index
    %c0_89 = arith.constant 0 : index
    %104 = vector.load %arg3[%c0_87, %c0_88, %c0_89] : memref<4x32x32xf32, #tpu.memory_space<vmem>>, vector<1x32x32xf32>
    %105 = vector.shape_cast %104 : vector<1x32x32xf32> to vector<32x32xf32>
    %cst_90 = arith.constant dense<0.000000e+00> : vector<8x32xf32>
    %106 = tpu.matmul %99, %105, %cst_90 {dimension_numbers = #tpu.dot_dimension_numbers<[1], [0], [0], [1], [0, 0, 1, 1], [], []>} : vector<8x32xf32>, vector<32x32xf32>, vector<8x32xf32> -> vector<8x32xf32>
    %107 = arith.addf %103, %106 : vector<8x32xf32>
    %108 = arith.index_cast %c1_i32 : i32 to index
    %c0_91 = arith.constant 0 : index
    %c0_92 = arith.constant 0 : index
    %109 = vector.load %arg17[%108, %c0_91, %c0_92] : memref<8x8x32xf32, #tpu.memory_space<vmem>>, vector<1x8x32xf32>
    %110 = vector.shape_cast %109 : vector<1x8x32xf32> to vector<8x32xf32>
    %c1_93 = arith.constant 1 : index
    %c0_94 = arith.constant 0 : index
    %c0_95 = arith.constant 0 : index
    %111 = vector.load %arg3[%c1_93, %c0_94, %c0_95] : memref<4x32x32xf32, #tpu.memory_space<vmem>>, vector<1x32x32xf32>
    %112 = vector.shape_cast %111 : vector<1x32x32xf32> to vector<32x32xf32>
    %cst_96 = arith.constant dense<0.000000e+00> : vector<8x32xf32>
    %113 = tpu.matmul %99, %112, %cst_96 {dimension_numbers = #tpu.dot_dimension_numbers<[1], [0], [0], [1], [0, 0, 1, 1], [], []>} : vector<8x32xf32>, vector<32x32xf32>, vector<8x32xf32> -> vector<8x32xf32>
    %114 = arith.addf %110, %113 : vector<8x32xf32>
    %115 = arith.index_cast %c1_i32 : i32 to index
    %c0_97 = arith.constant 0 : index
    %c0_98 = arith.constant 0 : index
    %116 = vector.load %arg18[%115, %c0_97, %c0_98] : memref<8x8x32xf32, #tpu.memory_space<vmem>>, vector<1x8x32xf32>
    %117 = vector.shape_cast %116 : vector<1x8x32xf32> to vector<8x32xf32>
    %c2_99 = arith.constant 2 : index
    %c0_100 = arith.constant 0 : index
    %c0_101 = arith.constant 0 : index
    %118 = vector.load %arg3[%c2_99, %c0_100, %c0_101] : memref<4x32x32xf32, #tpu.memory_space<vmem>>, vector<1x32x32xf32>
    %119 = vector.shape_cast %118 : vector<1x32x32xf32> to vector<32x32xf32>
    %cst_102 = arith.constant dense<0.000000e+00> : vector<8x32xf32>
    %120 = tpu.matmul %99, %119, %cst_102 {dimension_numbers = #tpu.dot_dimension_numbers<[1], [0], [0], [1], [0, 0, 1, 1], [], []>} : vector<8x32xf32>, vector<32x32xf32>, vector<8x32xf32> -> vector<8x32xf32>
    %121 = arith.addf %117, %120 : vector<8x32xf32>
    %122 = arith.index_cast %c1_i32 : i32 to index
    %c0_103 = arith.constant 0 : index
    %c0_104 = arith.constant 0 : index
    %123 = vector.load %arg19[%122, %c0_103, %c0_104] : memref<8x8x32xf32, #tpu.memory_space<vmem>>, vector<1x8x32xf32>
    %124 = vector.shape_cast %123 : vector<1x8x32xf32> to vector<8x32xf32>
    %c3_105 = arith.constant 3 : index
    %c0_106 = arith.constant 0 : index
    %c0_107 = arith.constant 0 : index
    %125 = vector.load %arg3[%c3_105, %c0_106, %c0_107] : memref<4x32x32xf32, #tpu.memory_space<vmem>>, vector<1x32x32xf32>
    %126 = vector.shape_cast %125 : vector<1x32x32xf32> to vector<32x32xf32>
    %cst_108 = arith.constant dense<0.000000e+00> : vector<8x32xf32>
    %127 = tpu.matmul %99, %126, %cst_108 {dimension_numbers = #tpu.dot_dimension_numbers<[1], [0], [0], [1], [0, 0, 1, 1], [], []>} : vector<8x32xf32>, vector<32x32xf32>, vector<8x32xf32> -> vector<8x32xf32>
    %128 = arith.addf %124, %127 : vector<8x32xf32>
    %129 = arith.negf %107 : vector<8x32xf32>
    %130 = math.exp %129 : vector<8x32xf32>
    %cst_109 = arith.constant 1.000000e+00 : f32
    %131 = vector.broadcast %cst_109 : f32 to vector<8x32xf32>
    %132 = arith.addf %131, %130 : vector<8x32xf32>
    %133 = arith.divf %131, %132 : vector<8x32xf32>
    %134 = arith.negf %114 : vector<8x32xf32>
    %135 = math.exp %134 : vector<8x32xf32>
    %cst_110 = arith.constant 1.000000e+00 : f32
    %136 = vector.broadcast %cst_110 : f32 to vector<8x32xf32>
    %137 = arith.addf %136, %135 : vector<8x32xf32>
    %138 = arith.divf %136, %137 : vector<8x32xf32>
    %139 = math.tanh %121 : vector<8x32xf32>
    %140 = arith.negf %128 : vector<8x32xf32>
    %141 = math.exp %140 : vector<8x32xf32>
    %cst_111 = arith.constant 1.000000e+00 : f32
    %142 = vector.broadcast %cst_111 : f32 to vector<8x32xf32>
    %143 = arith.addf %142, %141 : vector<8x32xf32>
    %144 = arith.divf %142, %143 : vector<8x32xf32>
    %145 = arith.mulf %138, %100 : vector<8x32xf32>
    %146 = arith.mulf %133, %139 : vector<8x32xf32>
    %147 = arith.addf %145, %146 : vector<8x32xf32>
    %148 = math.tanh %147 : vector<8x32xf32>
    %149 = arith.mulf %144, %148 : vector<8x32xf32>
    %c0_112 = arith.constant 0 : index
    %c0_113 = arith.constant 0 : index
    %150 = vector.load %arg20[%c0_112, %c0_113] : memref<8x32xf32, #tpu.memory_space<vmem>>, vector<8x32xf32>
    tpu.vector_store %arg20[%c0_112, %c0_113], %149 {strides = array<i32>} : memref<8x32xf32, #tpu.memory_space<vmem>>, vector<8x32xf32>,
    %c0_114 = arith.constant 0 : index
    %c0_115 = arith.constant 0 : index
    %151 = vector.load %arg21[%c0_114, %c0_115] : memref<8x32xf32, #tpu.memory_space<vmem>>, vector<8x32xf32>
    tpu.vector_store %arg21[%c0_114, %c0_115], %147 {strides = array<i32>} : memref<8x32xf32, #tpu.memory_space<vmem>>, vector<8x32xf32>,
    %152 = arith.index_cast %c1_i32 : i32 to index
    %c0_116 = arith.constant 0 : index
    %c0_117 = arith.constant 0 : index
    %153 = vector.load %arg15[%152, %c0_116, %c0_117] : memref<8x8x32xf32, #tpu.memory_space<vmem>>, vector<1x8x32xf32>
    %154 = vector.shape_cast %153 : vector<1x8x32xf32> to vector<8x32xf32>
    %155 = vector.shape_cast %149 : vector<8x32xf32> to vector<1x8x32xf32>
    tpu.vector_store %arg15[%152, %c0_116, %c0_117], %155 {strides = array<i32>} : memref<8x8x32xf32, #tpu.memory_space<vmem>>, vector<1x8x32xf32>,
    %c2_i32 = arith.constant 2 : i32
    %c0_118 = arith.constant 0 : index
    %c0_119 = arith.constant 0 : index
    %156 = vector.load %arg20[%c0_118, %c0_119] : memref<8x32xf32, #tpu.memory_space<vmem>>, vector<8x32xf32>
    %c0_120 = arith.constant 0 : index
    %c0_121 = arith.constant 0 : index
    %157 = vector.load %arg21[%c0_120, %c0_121] : memref<8x32xf32, #tpu.memory_space<vmem>>, vector<8x32xf32>
    %158 = arith.index_cast %c2_i32 : i32 to index
    %c0_122 = arith.constant 0 : index
    %c0_123 = arith.constant 0 : index
    %159 = vector.load %arg16[%158, %c0_122, %c0_123] : memref<8x8x32xf32, #tpu.memory_space<vmem>>, vector<1x8x32xf32>
    %160 = vector.shape_cast %159 : vector<1x8x32xf32> to vector<8x32xf32>
    %c0_124 = arith.constant 0 : index
    %c0_125 = arith.constant 0 : index
    %c0_126 = arith.constant 0 : index
    %161 = vector.load %arg3[%c0_124, %c0_125, %c0_126] : memref<4x32x32xf32, #tpu.memory_space<vmem>>, vector<1x32x32xf32>
    %162 = vector.shape_cast %161 : vector<1x32x32xf32> to vector<32x32xf32>
    %cst_127 = arith.constant dense<0.000000e+00> : vector<8x32xf32>
    %163 = tpu.matmul %156, %162, %cst_127 {dimension_numbers = #tpu.dot_dimension_numbers<[1], [0], [0], [1], [0, 0, 1, 1], [], []>} : vector<8x32xf32>, vector<32x32xf32>, vector<8x32xf32> -> vector<8x32xf32>
    %164 = arith.addf %160, %163 : vector<8x32xf32>
    %165 = arith.index_cast %c2_i32 : i32 to index
    %c0_128 = arith.constant 0 : index
    %c0_129 = arith.constant 0 : index
    %166 = vector.load %arg17[%165, %c0_128, %c0_129] : memref<8x8x32xf32, #tpu.memory_space<vmem>>, vector<1x8x32xf32>
    %167 = vector.shape_cast %166 : vector<1x8x32xf32> to vector<8x32xf32>
    %c1_130 = arith.constant 1 : index
    %c0_131 = arith.constant 0 : index
    %c0_132 = arith.constant 0 : index
    %168 = vector.load %arg3[%c1_130, %c0_131, %c0_132] : memref<4x32x32xf32, #tpu.memory_space<vmem>>, vector<1x32x32xf32>
    %169 = vector.shape_cast %168 : vector<1x32x32xf32> to vector<32x32xf32>
    %cst_133 = arith.constant dense<0.000000e+00> : vector<8x32xf32>
    %170 = tpu.matmul %156, %169, %cst_133 {dimension_numbers = #tpu.dot_dimension_numbers<[1], [0], [0], [1], [0, 0, 1, 1], [], []>} : vector<8x32xf32>, vector<32x32xf32>, vector<8x32xf32> -> vector<8x32xf32>
    %171 = arith.addf %167, %170 : vector<8x32xf32>
    %172 = arith.index_cast %c2_i32 : i32 to index
    %c0_134 = arith.constant 0 : index
    %c0_135 = arith.constant 0 : index
    %173 = vector.load %arg18[%172, %c0_134, %c0_135] : memref<8x8x32xf32, #tpu.memory_space<vmem>>, vector<1x8x32xf32>
    %174 = vector.shape_cast %173 : vector<1x8x32xf32> to vector<8x32xf32>
    %c2_136 = arith.constant 2 : index
    %c0_137 = arith.constant 0 : index
    %c0_138 = arith.constant 0 : index
    %175 = vector.load %arg3[%c2_136, %c0_137, %c0_138] : memref<4x32x32xf32, #tpu.memory_space<vmem>>, vector<1x32x32xf32>
    %176 = vector.shape_cast %175 : vector<1x32x32xf32> to vector<32x32xf32>
    %cst_139 = arith.constant dense<0.000000e+00> : vector<8x32xf32>
    %177 = tpu.matmul %156, %176, %cst_139 {dimension_numbers = #tpu.dot_dimension_numbers<[1], [0], [0], [1], [0, 0, 1, 1], [], []>} : vector<8x32xf32>, vector<32x32xf32>, vector<8x32xf32> -> vector<8x32xf32>
    %178 = arith.addf %174, %177 : vector<8x32xf32>
    %179 = arith.index_cast %c2_i32 : i32 to index
    %c0_140 = arith.constant 0 : index
    %c0_141 = arith.constant 0 : index
    %180 = vector.load %arg19[%179, %c0_140, %c0_141] : memref<8x8x32xf32, #tpu.memory_space<vmem>>, vector<1x8x32xf32>
    %181 = vector.shape_cast %180 : vector<1x8x32xf32> to vector<8x32xf32>
    %c3_142 = arith.constant 3 : index
    %c0_143 = arith.constant 0 : index
    %c0_144 = arith.constant 0 : index
    %182 = vector.load %arg3[%c3_142, %c0_143, %c0_144] : memref<4x32x32xf32, #tpu.memory_space<vmem>>, vector<1x32x32xf32>
    %183 = vector.shape_cast %182 : vector<1x32x32xf32> to vector<32x32xf32>
    %cst_145 = arith.constant dense<0.000000e+00> : vector<8x32xf32>
    %184 = tpu.matmul %156, %183, %cst_145 {dimension_numbers = #tpu.dot_dimension_numbers<[1], [0], [0], [1], [0, 0, 1, 1], [], []>} : vector<8x32xf32>, vector<32x32xf32>, vector<8x32xf32> -> vector<8x32xf32>
    %185 = arith.addf %181, %184 : vector<8x32xf32>
    %186 = arith.negf %164 : vector<8x32xf32>
    %187 = math.exp %186 : vector<8x32xf32>
    %cst_146 = arith.constant 1.000000e+00 : f32
    %188 = vector.broadcast %cst_146 : f32 to vector<8x32xf32>
    %189 = arith.addf %188, %187 : vector<8x32xf32>
    %190 = arith.divf %188, %189 : vector<8x32xf32>
    %191 = arith.negf %171 : vector<8x32xf32>
    %192 = math.exp %191 : vector<8x32xf32>
    %cst_147 = arith.constant 1.000000e+00 : f32
    %193 = vector.broadcast %cst_147 : f32 to vector<8x32xf32>
    %194 = arith.addf %193, %192 : vector<8x32xf32>
    %195 = arith.divf %193, %194 : vector<8x32xf32>
    %196 = math.tanh %178 : vector<8x32xf32>
    %197 = arith.negf %185 : vector<8x32xf32>
    %198 = math.exp %197 : vector<8x32xf32>
    %cst_148 = arith.constant 1.000000e+00 : f32
    %199 = vector.broadcast %cst_148 : f32 to vector<8x32xf32>
    %200 = arith.addf %199, %198 : vector<8x32xf32>
    %201 = arith.divf %199, %200 : vector<8x32xf32>
    %202 = arith.mulf %195, %157 : vector<8x32xf32>
    %203 = arith.mulf %190, %196 : vector<8x32xf32>
    %204 = arith.addf %202, %203 : vector<8x32xf32>
    %205 = math.tanh %204 : vector<8x32xf32>
    %206 = arith.mulf %201, %205 : vector<8x32xf32>
    %c0_149 = arith.constant 0 : index
    %c0_150 = arith.constant 0 : index
    %207 = vector.load %arg20[%c0_149, %c0_150] : memref<8x32xf32, #tpu.memory_space<vmem>>, vector<8x32xf32>
    tpu.vector_store %arg20[%c0_149, %c0_150], %206 {strides = array<i32>} : memref<8x32xf32, #tpu.memory_space<vmem>>, vector<8x32xf32>,
    %c0_151 = arith.constant 0 : index
    %c0_152 = arith.constant 0 : index
    %208 = vector.load %arg21[%c0_151, %c0_152] : memref<8x32xf32, #tpu.memory_space<vmem>>, vector<8x32xf32>
    tpu.vector_store %arg21[%c0_151, %c0_152], %204 {strides = array<i32>} : memref<8x32xf32, #tpu.memory_space<vmem>>, vector<8x32xf32>,
    %209 = arith.index_cast %c2_i32 : i32 to index
    %c0_153 = arith.constant 0 : index
    %c0_154 = arith.constant 0 : index
    %210 = vector.load %arg15[%209, %c0_153, %c0_154] : memref<8x8x32xf32, #tpu.memory_space<vmem>>, vector<1x8x32xf32>
    %211 = vector.shape_cast %210 : vector<1x8x32xf32> to vector<8x32xf32>
    %212 = vector.shape_cast %206 : vector<8x32xf32> to vector<1x8x32xf32>
    tpu.vector_store %arg15[%209, %c0_153, %c0_154], %212 {strides = array<i32>} : memref<8x8x32xf32, #tpu.memory_space<vmem>>, vector<1x8x32xf32>,
    %c3_i32 = arith.constant 3 : i32
    %c0_155 = arith.constant 0 : index
    %c0_156 = arith.constant 0 : index
    %213 = vector.load %arg20[%c0_155, %c0_156] : memref<8x32xf32, #tpu.memory_space<vmem>>, vector<8x32xf32>
    %c0_157 = arith.constant 0 : index
    %c0_158 = arith.constant 0 : index
    %214 = vector.load %arg21[%c0_157, %c0_158] : memref<8x32xf32, #tpu.memory_space<vmem>>, vector<8x32xf32>
    %215 = arith.index_cast %c3_i32 : i32 to index
    %c0_159 = arith.constant 0 : index
    %c0_160 = arith.constant 0 : index
    %216 = vector.load %arg16[%215, %c0_159, %c0_160] : memref<8x8x32xf32, #tpu.memory_space<vmem>>, vector<1x8x32xf32>
    %217 = vector.shape_cast %216 : vector<1x8x32xf32> to vector<8x32xf32>
    %c0_161 = arith.constant 0 : index
    %c0_162 = arith.constant 0 : index
    %c0_163 = arith.constant 0 : index
    %218 = vector.load %arg3[%c0_161, %c0_162, %c0_163] : memref<4x32x32xf32, #tpu.memory_space<vmem>>, vector<1x32x32xf32>
    %219 = vector.shape_cast %218 : vector<1x32x32xf32> to vector<32x32xf32>
    %cst_164 = arith.constant dense<0.000000e+00> : vector<8x32xf32>
    %220 = tpu.matmul %213, %219, %cst_164 {dimension_numbers = #tpu.dot_dimension_numbers<[1], [0], [0], [1], [0, 0, 1, 1], [], []>} : vector<8x32xf32>, vector<32x32xf32>, vector<8x32xf32> -> vector<8x32xf32>
    %221 = arith.addf %217, %220 : vector<8x32xf32>
    %222 = arith.index_cast %c3_i32 : i32 to index
    %c0_165 = arith.constant 0 : index
    %c0_166 = arith.constant 0 : index
    %223 = vector.load %arg17[%222, %c0_165, %c0_166] : memref<8x8x32xf32, #tpu.memory_space<vmem>>, vector<1x8x32xf32>
    %224 = vector.shape_cast %223 : vector<1x8x32xf32> to vector<8x32xf32>
    %c1_167 = arith.constant 1 : index
    %c0_168 = arith.constant 0 : index
    %c0_169 = arith.constant 0 : index
    %225 = vector.load %arg3[%c1_167, %c0_168, %c0_169] : memref<4x32x32xf32, #tpu.memory_space<vmem>>, vector<1x32x32xf32>
    %226 = vector.shape_cast %225 : vector<1x32x32xf32> to vector<32x32xf32>
    %cst_170 = arith.constant dense<0.000000e+00> : vector<8x32xf32>
    %227 = tpu.matmul %213, %226, %cst_170 {dimension_numbers = #tpu.dot_dimension_numbers<[1], [0], [0], [1], [0, 0, 1, 1], [], []>} : vector<8x32xf32>, vector<32x32xf32>, vector<8x32xf32> -> vector<8x32xf32>
    %228 = arith.addf %224, %227 : vector<8x32xf32>
    %229 = arith.index_cast %c3_i32 : i32 to index
    %c0_171 = arith.constant 0 : index
    %c0_172 = arith.constant 0 : index
    %230 = vector.load %arg18[%229, %c0_171, %c0_172] : memref<8x8x32xf32, #tpu.memory_space<vmem>>, vector<1x8x32xf32>
    %231 = vector.shape_cast %230 : vector<1x8x32xf32> to vector<8x32xf32>
    %c2_173 = arith.constant 2 : index
    %c0_174 = arith.constant 0 : index
    %c0_175 = arith.constant 0 : index
    %232 = vector.load %arg3[%c2_173, %c0_174, %c0_175] : memref<4x32x32xf32, #tpu.memory_space<vmem>>, vector<1x32x32xf32>
    %233 = vector.shape_cast %232 : vector<1x32x32xf32> to vector<32x32xf32>
    %cst_176 = arith.constant dense<0.000000e+00> : vector<8x32xf32>
    %234 = tpu.matmul %213, %233, %cst_176 {dimension_numbers = #tpu.dot_dimension_numbers<[1], [0], [0], [1], [0, 0, 1, 1], [], []>} : vector<8x32xf32>, vector<32x32xf32>, vector<8x32xf32> -> vector<8x32xf32>
    %235 = arith.addf %231, %234 : vector<8x32xf32>
    %236 = arith.index_cast %c3_i32 : i32 to index
    %c0_177 = arith.constant 0 : index
    %c0_178 = arith.constant 0 : index
    %237 = vector.load %arg19[%236, %c0_177, %c0_178] : memref<8x8x32xf32, #tpu.memory_space<vmem>>, vector<1x8x32xf32>
    %238 = vector.shape_cast %237 : vector<1x8x32xf32> to vector<8x32xf32>
    %c3_179 = arith.constant 3 : index
    %c0_180 = arith.constant 0 : index
    %c0_181 = arith.constant 0 : index
    %239 = vector.load %arg3[%c3_179, %c0_180, %c0_181] : memref<4x32x32xf32, #tpu.memory_space<vmem>>, vector<1x32x32xf32>
    %240 = vector.shape_cast %239 : vector<1x32x32xf32> to vector<32x32xf32>
    %cst_182 = arith.constant dense<0.000000e+00> : vector<8x32xf32>
    %241 = tpu.matmul %213, %240, %cst_182 {dimension_numbers = #tpu.dot_dimension_numbers<[1], [0], [0], [1], [0, 0, 1, 1], [], []>} : vector<8x32xf32>, vector<32x32xf32>, vector<8x32xf32> -> vector<8x32xf32>
    %242 = arith.addf %238, %241 : vector<8x32xf32>
    %243 = arith.negf %221 : vector<8x32xf32>
    %244 = math.exp %243 : vector<8x32xf32>
    %cst_183 = arith.constant 1.000000e+00 : f32
    %245 = vector.broadcast %cst_183 : f32 to vector<8x32xf32>
    %246 = arith.addf %245, %244 : vector<8x32xf32>
    %247 = arith.divf %245, %246 : vector<8x32xf32>
    %248 = arith.negf %228 : vector<8x32xf32>
    %249 = math.exp %248 : vector<8x32xf32>
    %cst_184 = arith.constant 1.000000e+00 : f32
    %250 = vector.broadcast %cst_184 : f32 to vector<8x32xf32>
    %251 = arith.addf %250, %249 : vector<8x32xf32>
    %252 = arith.divf %250, %251 : vector<8x32xf32>
    %253 = math.tanh %235 : vector<8x32xf32>
    %254 = arith.negf %242 : vector<8x32xf32>
    %255 = math.exp %254 : vector<8x32xf32>
    %cst_185 = arith.constant 1.000000e+00 : f32
    %256 = vector.broadcast %cst_185 : f32 to vector<8x32xf32>
    %257 = arith.addf %256, %255 : vector<8x32xf32>
    %258 = arith.divf %256, %257 : vector<8x32xf32>
    %259 = arith.mulf %252, %214 : vector<8x32xf32>
    %260 = arith.mulf %247, %253 : vector<8x32xf32>
    %261 = arith.addf %259, %260 : vector<8x32xf32>
    %262 = math.tanh %261 : vector<8x32xf32>
    %263 = arith.mulf %258, %262 : vector<8x32xf32>
    %c0_186 = arith.constant 0 : index
    %c0_187 = arith.constant 0 : index
    %264 = vector.load %arg20[%c0_186, %c0_187] : memref<8x32xf32, #tpu.memory_space<vmem>>, vector<8x32xf32>
    tpu.vector_store %arg20[%c0_186, %c0_187], %263 {strides = array<i32>} : memref<8x32xf32, #tpu.memory_space<vmem>>, vector<8x32xf32>,
    %c0_188 = arith.constant 0 : index
    %c0_189 = arith.constant 0 : index
    %265 = vector.load %arg21[%c0_188, %c0_189] : memref<8x32xf32, #tpu.memory_space<vmem>>, vector<8x32xf32>
    tpu.vector_store %arg21[%c0_188, %c0_189], %261 {strides = array<i32>} : memref<8x32xf32, #tpu.memory_space<vmem>>, vector<8x32xf32>,
    %266 = arith.index_cast %c3_i32 : i32 to index
    %c0_190 = arith.constant 0 : index
    %c0_191 = arith.constant 0 : index
    %267 = vector.load %arg15[%266, %c0_190, %c0_191] : memref<8x8x32xf32, #tpu.memory_space<vmem>>, vector<1x8x32xf32>
    %268 = vector.shape_cast %267 : vector<1x8x32xf32> to vector<8x32xf32>
    %269 = vector.shape_cast %263 : vector<8x32xf32> to vector<1x8x32xf32>
    tpu.vector_store %arg15[%266, %c0_190, %c0_191], %269 {strides = array<i32>} : memref<8x8x32xf32, #tpu.memory_space<vmem>>, vector<1x8x32xf32>,
    %c4_i32 = arith.constant 4 : i32
    %c0_192 = arith.constant 0 : index
    %c0_193 = arith.constant 0 : index
    %270 = vector.load %arg20[%c0_192, %c0_193] : memref<8x32xf32, #tpu.memory_space<vmem>>, vector<8x32xf32>
    %c0_194 = arith.constant 0 : index
    %c0_195 = arith.constant 0 : index
    %271 = vector.load %arg21[%c0_194, %c0_195] : memref<8x32xf32, #tpu.memory_space<vmem>>, vector<8x32xf32>
    %272 = arith.index_cast %c4_i32 : i32 to index
    %c0_196 = arith.constant 0 : index
    %c0_197 = arith.constant 0 : index
    %273 = vector.load %arg16[%272, %c0_196, %c0_197] : memref<8x8x32xf32, #tpu.memory_space<vmem>>, vector<1x8x32xf32>
    %274 = vector.shape_cast %273 : vector<1x8x32xf32> to vector<8x32xf32>
    %c0_198 = arith.constant 0 : index
    %c0_199 = arith.constant 0 : index
    %c0_200 = arith.constant 0 : index
    %275 = vector.load %arg3[%c0_198, %c0_199, %c0_200] : memref<4x32x32xf32, #tpu.memory_space<vmem>>, vector<1x32x32xf32>
    %276 = vector.shape_cast %275 : vector<1x32x32xf32> to vector<32x32xf32>
    %cst_201 = arith.constant dense<0.000000e+00> : vector<8x32xf32>
    %277 = tpu.matmul %270, %276, %cst_201 {dimension_numbers = #tpu.dot_dimension_numbers<[1], [0], [0], [1], [0, 0, 1, 1], [], []>} : vector<8x32xf32>, vector<32x32xf32>, vector<8x32xf32> -> vector<8x32xf32>
    %278 = arith.addf %274, %277 : vector<8x32xf32>
    %279 = arith.index_cast %c4_i32 : i32 to index
    %c0_202 = arith.constant 0 : index
    %c0_203 = arith.constant 0 : index
    %280 = vector.load %arg17[%279, %c0_202, %c0_203] : memref<8x8x32xf32, #tpu.memory_space<vmem>>, vector<1x8x32xf32>
    %281 = vector.shape_cast %280 : vector<1x8x32xf32> to vector<8x32xf32>
    %c1_204 = arith.constant 1 : index
    %c0_205 = arith.constant 0 : index
    %c0_206 = arith.constant 0 : index
    %282 = vector.load %arg3[%c1_204, %c0_205, %c0_206] : memref<4x32x32xf32, #tpu.memory_space<vmem>>, vector<1x32x32xf32>
    %283 = vector.shape_cast %282 : vector<1x32x32xf32> to vector<32x32xf32>
    %cst_207 = arith.constant dense<0.000000e+00> : vector<8x32xf32>
    %284 = tpu.matmul %270, %283, %cst_207 {dimension_numbers = #tpu.dot_dimension_numbers<[1], [0], [0], [1], [0, 0, 1, 1], [], []>} : vector<8x32xf32>, vector<32x32xf32>, vector<8x32xf32> -> vector<8x32xf32>
    %285 = arith.addf %281, %284 : vector<8x32xf32>
    %286 = arith.index_cast %c4_i32 : i32 to index
    %c0_208 = arith.constant 0 : index
    %c0_209 = arith.constant 0 : index
    %287 = vector.load %arg18[%286, %c0_208, %c0_209] : memref<8x8x32xf32, #tpu.memory_space<vmem>>, vector<1x8x32xf32>
    %288 = vector.shape_cast %287 : vector<1x8x32xf32> to vector<8x32xf32>
    %c2_210 = arith.constant 2 : index
    %c0_211 = arith.constant 0 : index
    %c0_212 = arith.constant 0 : index
    %289 = vector.load %arg3[%c2_210, %c0_211, %c0_212] : memref<4x32x32xf32, #tpu.memory_space<vmem>>, vector<1x32x32xf32>
    %290 = vector.shape_cast %289 : vector<1x32x32xf32> to vector<32x32xf32>
    %cst_213 = arith.constant dense<0.000000e+00> : vector<8x32xf32>
    %291 = tpu.matmul %270, %290, %cst_213 {dimension_numbers = #tpu.dot_dimension_numbers<[1], [0], [0], [1], [0, 0, 1, 1], [], []>} : vector<8x32xf32>, vector<32x32xf32>, vector<8x32xf32> -> vector<8x32xf32>
    %292 = arith.addf %288, %291 : vector<8x32xf32>
    %293 = arith.index_cast %c4_i32 : i32 to index
    %c0_214 = arith.constant 0 : index
    %c0_215 = arith.constant 0 : index
    %294 = vector.load %arg19[%293, %c0_214, %c0_215] : memref<8x8x32xf32, #tpu.memory_space<vmem>>, vector<1x8x32xf32>
    %295 = vector.shape_cast %294 : vector<1x8x32xf32> to vector<8x32xf32>
    %c3_216 = arith.constant 3 : index
    %c0_217 = arith.constant 0 : index
    %c0_218 = arith.constant 0 : index
    %296 = vector.load %arg3[%c3_216, %c0_217, %c0_218] : memref<4x32x32xf32, #tpu.memory_space<vmem>>, vector<1x32x32xf32>
    %297 = vector.shape_cast %296 : vector<1x32x32xf32> to vector<32x32xf32>
    %cst_219 = arith.constant dense<0.000000e+00> : vector<8x32xf32>
    %298 = tpu.matmul %270, %297, %cst_219 {dimension_numbers = #tpu.dot_dimension_numbers<[1], [0], [0], [1], [0, 0, 1, 1], [], []>} : vector<8x32xf32>, vector<32x32xf32>, vector<8x32xf32> -> vector<8x32xf32>
    %299 = arith.addf %295, %298 : vector<8x32xf32>
    %300 = arith.negf %278 : vector<8x32xf32>
    %301 = math.exp %300 : vector<8x32xf32>
    %cst_220 = arith.constant 1.000000e+00 : f32
    %302 = vector.broadcast %cst_220 : f32 to vector<8x32xf32>
    %303 = arith.addf %302, %301 : vector<8x32xf32>
    %304 = arith.divf %302, %303 : vector<8x32xf32>
    %305 = arith.negf %285 : vector<8x32xf32>
    %306 = math.exp %305 : vector<8x32xf32>
    %cst_221 = arith.constant 1.000000e+00 : f32
    %307 = vector.broadcast %cst_221 : f32 to vector<8x32xf32>
    %308 = arith.addf %307, %306 : vector<8x32xf32>
    %309 = arith.divf %307, %308 : vector<8x32xf32>
    %310 = math.tanh %292 : vector<8x32xf32>
    %311 = arith.negf %299 : vector<8x32xf32>
    %312 = math.exp %311 : vector<8x32xf32>
    %cst_222 = arith.constant 1.000000e+00 : f32
    %313 = vector.broadcast %cst_222 : f32 to vector<8x32xf32>
    %314 = arith.addf %313, %312 : vector<8x32xf32>
    %315 = arith.divf %313, %314 : vector<8x32xf32>
    %316 = arith.mulf %309, %271 : vector<8x32xf32>
    %317 = arith.mulf %304, %310 : vector<8x32xf32>
    %318 = arith.addf %316, %317 : vector<8x32xf32>
    %319 = math.tanh %318 : vector<8x32xf32>
    %320 = arith.mulf %315, %319 : vector<8x32xf32>
    %c0_223 = arith.constant 0 : index
    %c0_224 = arith.constant 0 : index
    %321 = vector.load %arg20[%c0_223, %c0_224] : memref<8x32xf32, #tpu.memory_space<vmem>>, vector<8x32xf32>
    tpu.vector_store %arg20[%c0_223, %c0_224], %320 {strides = array<i32>} : memref<8x32xf32, #tpu.memory_space<vmem>>, vector<8x32xf32>,
    %c0_225 = arith.constant 0 : index
    %c0_226 = arith.constant 0 : index
    %322 = vector.load %arg21[%c0_225, %c0_226] : memref<8x32xf32, #tpu.memory_space<vmem>>, vector<8x32xf32>
    tpu.vector_store %arg21[%c0_225, %c0_226], %318 {strides = array<i32>} : memref<8x32xf32, #tpu.memory_space<vmem>>, vector<8x32xf32>,
    %323 = arith.index_cast %c4_i32 : i32 to index
    %c0_227 = arith.constant 0 : index
    %c0_228 = arith.constant 0 : index
    %324 = vector.load %arg15[%323, %c0_227, %c0_228] : memref<8x8x32xf32, #tpu.memory_space<vmem>>, vector<1x8x32xf32>
    %325 = vector.shape_cast %324 : vector<1x8x32xf32> to vector<8x32xf32>
    %326 = vector.shape_cast %320 : vector<8x32xf32> to vector<1x8x32xf32>
    tpu.vector_store %arg15[%323, %c0_227, %c0_228], %326 {strides = array<i32>} : memref<8x8x32xf32, #tpu.memory_space<vmem>>, vector<1x8x32xf32>,
    %c5_i32 = arith.constant 5 : i32
    %c0_229 = arith.constant 0 : index
    %c0_230 = arith.constant 0 : index
    %327 = vector.load %arg20[%c0_229, %c0_230] : memref<8x32xf32, #tpu.memory_space<vmem>>, vector<8x32xf32>
    %c0_231 = arith.constant 0 : index
    %c0_232 = arith.constant 0 : index
    %328 = vector.load %arg21[%c0_231, %c0_232] : memref<8x32xf32, #tpu.memory_space<vmem>>, vector<8x32xf32>
    %329 = arith.index_cast %c5_i32 : i32 to index
    %c0_233 = arith.constant 0 : index
    %c0_234 = arith.constant 0 : index
    %330 = vector.load %arg16[%329, %c0_233, %c0_234] : memref<8x8x32xf32, #tpu.memory_space<vmem>>, vector<1x8x32xf32>
    %331 = vector.shape_cast %330 : vector<1x8x32xf32> to vector<8x32xf32>
    %c0_235 = arith.constant 0 : index
    %c0_236 = arith.constant 0 : index
    %c0_237 = arith.constant 0 : index
    %332 = vector.load %arg3[%c0_235, %c0_236, %c0_237] : memref<4x32x32xf32, #tpu.memory_space<vmem>>, vector<1x32x32xf32>
    %333 = vector.shape_cast %332 : vector<1x32x32xf32> to vector<32x32xf32>
    %cst_238 = arith.constant dense<0.000000e+00> : vector<8x32xf32>
    %334 = tpu.matmul %327, %333, %cst_238 {dimension_numbers = #tpu.dot_dimension_numbers<[1], [0], [0], [1], [0, 0, 1, 1], [], []>} : vector<8x32xf32>, vector<32x32xf32>, vector<8x32xf32> -> vector<8x32xf32>
    %335 = arith.addf %331, %334 : vector<8x32xf32>
    %336 = arith.index_cast %c5_i32 : i32 to index
    %c0_239 = arith.constant 0 : index
    %c0_240 = arith.constant 0 : index
    %337 = vector.load %arg17[%336, %c0_239, %c0_240] : memref<8x8x32xf32, #tpu.memory_space<vmem>>, vector<1x8x32xf32>
    %338 = vector.shape_cast %337 : vector<1x8x32xf32> to vector<8x32xf32>
    %c1_241 = arith.constant 1 : index
    %c0_242 = arith.constant 0 : index
    %c0_243 = arith.constant 0 : index
    %339 = vector.load %arg3[%c1_241, %c0_242, %c0_243] : memref<4x32x32xf32, #tpu.memory_space<vmem>>, vector<1x32x32xf32>
    %340 = vector.shape_cast %339 : vector<1x32x32xf32> to vector<32x32xf32>
    %cst_244 = arith.constant dense<0.000000e+00> : vector<8x32xf32>
    %341 = tpu.matmul %327, %340, %cst_244 {dimension_numbers = #tpu.dot_dimension_numbers<[1], [0], [0], [1], [0, 0, 1, 1], [], []>} : vector<8x32xf32>, vector<32x32xf32>, vector<8x32xf32> -> vector<8x32xf32>
    %342 = arith.addf %338, %341 : vector<8x32xf32>
    %343 = arith.index_cast %c5_i32 : i32 to index
    %c0_245 = arith.constant 0 : index
    %c0_246 = arith.constant 0 : index
    %344 = vector.load %arg18[%343, %c0_245, %c0_246] : memref<8x8x32xf32, #tpu.memory_space<vmem>>, vector<1x8x32xf32>
    %345 = vector.shape_cast %344 : vector<1x8x32xf32> to vector<8x32xf32>
    %c2_247 = arith.constant 2 : index
    %c0_248 = arith.constant 0 : index
    %c0_249 = arith.constant 0 : index
    %346 = vector.load %arg3[%c2_247, %c0_248, %c0_249] : memref<4x32x32xf32, #tpu.memory_space<vmem>>, vector<1x32x32xf32>
    %347 = vector.shape_cast %346 : vector<1x32x32xf32> to vector<32x32xf32>
    %cst_250 = arith.constant dense<0.000000e+00> : vector<8x32xf32>
    %348 = tpu.matmul %327, %347, %cst_250 {dimension_numbers = #tpu.dot_dimension_numbers<[1], [0], [0], [1], [0, 0, 1, 1], [], []>} : vector<8x32xf32>, vector<32x32xf32>, vector<8x32xf32> -> vector<8x32xf32>
    %349 = arith.addf %345, %348 : vector<8x32xf32>
    %350 = arith.index_cast %c5_i32 : i32 to index
    %c0_251 = arith.constant 0 : index
    %c0_252 = arith.constant 0 : index
    %351 = vector.load %arg19[%350, %c0_251, %c0_252] : memref<8x8x32xf32, #tpu.memory_space<vmem>>, vector<1x8x32xf32>
    %352 = vector.shape_cast %351 : vector<1x8x32xf32> to vector<8x32xf32>
    %c3_253 = arith.constant 3 : index
    %c0_254 = arith.constant 0 : index
    %c0_255 = arith.constant 0 : index
    %353 = vector.load %arg3[%c3_253, %c0_254, %c0_255] : memref<4x32x32xf32, #tpu.memory_space<vmem>>, vector<1x32x32xf32>
    %354 = vector.shape_cast %353 : vector<1x32x32xf32> to vector<32x32xf32>
    %cst_256 = arith.constant dense<0.000000e+00> : vector<8x32xf32>
    %355 = tpu.matmul %327, %354, %cst_256 {dimension_numbers = #tpu.dot_dimension_numbers<[1], [0], [0], [1], [0, 0, 1, 1], [], []>} : vector<8x32xf32>, vector<32x32xf32>, vector<8x32xf32> -> vector<8x32xf32>
    %356 = arith.addf %352, %355 : vector<8x32xf32>
    %357 = arith.negf %335 : vector<8x32xf32>
    %358 = math.exp %357 : vector<8x32xf32>
    %cst_257 = arith.constant 1.000000e+00 : f32
    %359 = vector.broadcast %cst_257 : f32 to vector<8x32xf32>
    %360 = arith.addf %359, %358 : vector<8x32xf32>
    %361 = arith.divf %359, %360 : vector<8x32xf32>
    %362 = arith.negf %342 : vector<8x32xf32>
    %363 = math.exp %362 : vector<8x32xf32>
    %cst_258 = arith.constant 1.000000e+00 : f32
    %364 = vector.broadcast %cst_258 : f32 to vector<8x32xf32>
    %365 = arith.addf %364, %363 : vector<8x32xf32>
    %366 = arith.divf %364, %365 : vector<8x32xf32>
    %367 = math.tanh %349 : vector<8x32xf32>
    %368 = arith.negf %356 : vector<8x32xf32>
    %369 = math.exp %368 : vector<8x32xf32>
    %cst_259 = arith.constant 1.000000e+00 : f32
    %370 = vector.broadcast %cst_259 : f32 to vector<8x32xf32>
    %371 = arith.addf %370, %369 : vector<8x32xf32>
    %372 = arith.divf %370, %371 : vector<8x32xf32>
    %373 = arith.mulf %366, %328 : vector<8x32xf32>
    %374 = arith.mulf %361, %367 : vector<8x32xf32>
    %375 = arith.addf %373, %374 : vector<8x32xf32>
    %376 = math.tanh %375 : vector<8x32xf32>
    %377 = arith.mulf %372, %376 : vector<8x32xf32>
    %c0_260 = arith.constant 0 : index
    %c0_261 = arith.constant 0 : index
    %378 = vector.load %arg20[%c0_260, %c0_261] : memref<8x32xf32, #tpu.memory_space<vmem>>, vector<8x32xf32>
    tpu.vector_store %arg20[%c0_260, %c0_261], %377 {strides = array<i32>} : memref<8x32xf32, #tpu.memory_space<vmem>>, vector<8x32xf32>,
    %c0_262 = arith.constant 0 : index
    %c0_263 = arith.constant 0 : index
    %379 = vector.load %arg21[%c0_262, %c0_263] : memref<8x32xf32, #tpu.memory_space<vmem>>, vector<8x32xf32>
    tpu.vector_store %arg21[%c0_262, %c0_263], %375 {strides = array<i32>} : memref<8x32xf32, #tpu.memory_space<vmem>>, vector<8x32xf32>,
    %380 = arith.index_cast %c5_i32 : i32 to index
    %c0_264 = arith.constant 0 : index
    %c0_265 = arith.constant 0 : index
    %381 = vector.load %arg15[%380, %c0_264, %c0_265] : memref<8x8x32xf32, #tpu.memory_space<vmem>>, vector<1x8x32xf32>
    %382 = vector.shape_cast %381 : vector<1x8x32xf32> to vector<8x32xf32>
    %383 = vector.shape_cast %377 : vector<8x32xf32> to vector<1x8x32xf32>
    tpu.vector_store %arg15[%380, %c0_264, %c0_265], %383 {strides = array<i32>} : memref<8x8x32xf32, #tpu.memory_space<vmem>>, vector<1x8x32xf32>,
    %c6_i32 = arith.constant 6 : i32
    %c0_266 = arith.constant 0 : index
    %c0_267 = arith.constant 0 : index
    %384 = vector.load %arg20[%c0_266, %c0_267] : memref<8x32xf32, #tpu.memory_space<vmem>>, vector<8x32xf32>
    %c0_268 = arith.constant 0 : index
    %c0_269 = arith.constant 0 : index
    %385 = vector.load %arg21[%c0_268, %c0_269] : memref<8x32xf32, #tpu.memory_space<vmem>>, vector<8x32xf32>
    %386 = arith.index_cast %c6_i32 : i32 to index
    %c0_270 = arith.constant 0 : index
    %c0_271 = arith.constant 0 : index
    %387 = vector.load %arg16[%386, %c0_270, %c0_271] : memref<8x8x32xf32, #tpu.memory_space<vmem>>, vector<1x8x32xf32>
    %388 = vector.shape_cast %387 : vector<1x8x32xf32> to vector<8x32xf32>
    %c0_272 = arith.constant 0 : index
    %c0_273 = arith.constant 0 : index
    %c0_274 = arith.constant 0 : index
    %389 = vector.load %arg3[%c0_272, %c0_273, %c0_274] : memref<4x32x32xf32, #tpu.memory_space<vmem>>, vector<1x32x32xf32>
    %390 = vector.shape_cast %389 : vector<1x32x32xf32> to vector<32x32xf32>
    %cst_275 = arith.constant dense<0.000000e+00> : vector<8x32xf32>
    %391 = tpu.matmul %384, %390, %cst_275 {dimension_numbers = #tpu.dot_dimension_numbers<[1], [0], [0], [1], [0, 0, 1, 1], [], []>} : vector<8x32xf32>, vector<32x32xf32>, vector<8x32xf32> -> vector<8x32xf32>
    %392 = arith.addf %388, %391 : vector<8x32xf32>
    %393 = arith.index_cast %c6_i32 : i32 to index
    %c0_276 = arith.constant 0 : index
    %c0_277 = arith.constant 0 : index
    %394 = vector.load %arg17[%393, %c0_276, %c0_277] : memref<8x8x32xf32, #tpu.memory_space<vmem>>, vector<1x8x32xf32>
    %395 = vector.shape_cast %394 : vector<1x8x32xf32> to vector<8x32xf32>
    %c1_278 = arith.constant 1 : index
    %c0_279 = arith.constant 0 : index
    %c0_280 = arith.constant 0 : index
    %396 = vector.load %arg3[%c1_278, %c0_279, %c0_280] : memref<4x32x32xf32, #tpu.memory_space<vmem>>, vector<1x32x32xf32>
    %397 = vector.shape_cast %396 : vector<1x32x32xf32> to vector<32x32xf32>
    %cst_281 = arith.constant dense<0.000000e+00> : vector<8x32xf32>
    %398 = tpu.matmul %384, %397, %cst_281 {dimension_numbers = #tpu.dot_dimension_numbers<[1], [0], [0], [1], [0, 0, 1, 1], [], []>} : vector<8x32xf32>, vector<32x32xf32>, vector<8x32xf32> -> vector<8x32xf32>
    %399 = arith.addf %395, %398 : vector<8x32xf32>
    %400 = arith.index_cast %c6_i32 : i32 to index
    %c0_282 = arith.constant 0 : index
    %c0_283 = arith.constant 0 : index
    %401 = vector.load %arg18[%400, %c0_282, %c0_283] : memref<8x8x32xf32, #tpu.memory_space<vmem>>, vector<1x8x32xf32>
    %402 = vector.shape_cast %401 : vector<1x8x32xf32> to vector<8x32xf32>
    %c2_284 = arith.constant 2 : index
    %c0_285 = arith.constant 0 : index
    %c0_286 = arith.constant 0 : index
    %403 = vector.load %arg3[%c2_284, %c0_285, %c0_286] : memref<4x32x32xf32, #tpu.memory_space<vmem>>, vector<1x32x32xf32>
    %404 = vector.shape_cast %403 : vector<1x32x32xf32> to vector<32x32xf32>
    %cst_287 = arith.constant dense<0.000000e+00> : vector<8x32xf32>
    %405 = tpu.matmul %384, %404, %cst_287 {dimension_numbers = #tpu.dot_dimension_numbers<[1], [0], [0], [1], [0, 0, 1, 1], [], []>} : vector<8x32xf32>, vector<32x32xf32>, vector<8x32xf32> -> vector<8x32xf32>
    %406 = arith.addf %402, %405 : vector<8x32xf32>
    %407 = arith.index_cast %c6_i32 : i32 to index
    %c0_288 = arith.constant 0 : index
    %c0_289 = arith.constant 0 : index
    %408 = vector.load %arg19[%407, %c0_288, %c0_289] : memref<8x8x32xf32, #tpu.memory_space<vmem>>, vector<1x8x32xf32>
    %409 = vector.shape_cast %408 : vector<1x8x32xf32> to vector<8x32xf32>
    %c3_290 = arith.constant 3 : index
    %c0_291 = arith.constant 0 : index
    %c0_292 = arith.constant 0 : index
    %410 = vector.load %arg3[%c3_290, %c0_291, %c0_292] : memref<4x32x32xf32, #tpu.memory_space<vmem>>, vector<1x32x32xf32>
    %411 = vector.shape_cast %410 : vector<1x32x32xf32> to vector<32x32xf32>
    %cst_293 = arith.constant dense<0.000000e+00> : vector<8x32xf32>
    %412 = tpu.matmul %384, %411, %cst_293 {dimension_numbers = #tpu.dot_dimension_numbers<[1], [0], [0], [1], [0, 0, 1, 1], [], []>} : vector<8x32xf32>, vector<32x32xf32>, vector<8x32xf32> -> vector<8x32xf32>
    %413 = arith.addf %409, %412 : vector<8x32xf32>
    %414 = arith.negf %392 : vector<8x32xf32>
    %415 = math.exp %414 : vector<8x32xf32>
    %cst_294 = arith.constant 1.000000e+00 : f32
    %416 = vector.broadcast %cst_294 : f32 to vector<8x32xf32>
    %417 = arith.addf %416, %415 : vector<8x32xf32>
    %418 = arith.divf %416, %417 : vector<8x32xf32>
    %419 = arith.negf %399 : vector<8x32xf32>
    %420 = math.exp %419 : vector<8x32xf32>
    %cst_295 = arith.constant 1.000000e+00 : f32
    %421 = vector.broadcast %cst_295 : f32 to vector<8x32xf32>
    %422 = arith.addf %421, %420 : vector<8x32xf32>
    %423 = arith.divf %421, %422 : vector<8x32xf32>
    %424 = math.tanh %406 : vector<8x32xf32>
    %425 = arith.negf %413 : vector<8x32xf32>
    %426 = math.exp %425 : vector<8x32xf32>
    %cst_296 = arith.constant 1.000000e+00 : f32
    %427 = vector.broadcast %cst_296 : f32 to vector<8x32xf32>
    %428 = arith.addf %427, %426 : vector<8x32xf32>
    %429 = arith.divf %427, %428 : vector<8x32xf32>
    %430 = arith.mulf %423, %385 : vector<8x32xf32>
    %431 = arith.mulf %418, %424 : vector<8x32xf32>
    %432 = arith.addf %430, %431 : vector<8x32xf32>
    %433 = math.tanh %432 : vector<8x32xf32>
    %434 = arith.mulf %429, %433 : vector<8x32xf32>
    %c0_297 = arith.constant 0 : index
    %c0_298 = arith.constant 0 : index
    %435 = vector.load %arg20[%c0_297, %c0_298] : memref<8x32xf32, #tpu.memory_space<vmem>>, vector<8x32xf32>
    tpu.vector_store %arg20[%c0_297, %c0_298], %434 {strides = array<i32>} : memref<8x32xf32, #tpu.memory_space<vmem>>, vector<8x32xf32>,
    %c0_299 = arith.constant 0 : index
    %c0_300 = arith.constant 0 : index
    %436 = vector.load %arg21[%c0_299, %c0_300] : memref<8x32xf32, #tpu.memory_space<vmem>>, vector<8x32xf32>
    tpu.vector_store %arg21[%c0_299, %c0_300], %432 {strides = array<i32>} : memref<8x32xf32, #tpu.memory_space<vmem>>, vector<8x32xf32>,
    %437 = arith.index_cast %c6_i32 : i32 to index
    %c0_301 = arith.constant 0 : index
    %c0_302 = arith.constant 0 : index
    %438 = vector.load %arg15[%437, %c0_301, %c0_302] : memref<8x8x32xf32, #tpu.memory_space<vmem>>, vector<1x8x32xf32>
    %439 = vector.shape_cast %438 : vector<1x8x32xf32> to vector<8x32xf32>
    %440 = vector.shape_cast %434 : vector<8x32xf32> to vector<1x8x32xf32>
    tpu.vector_store %arg15[%437, %c0_301, %c0_302], %440 {strides = array<i32>} : memref<8x8x32xf32, #tpu.memory_space<vmem>>, vector<1x8x32xf32>,
    %c7_i32 = arith.constant 7 : i32
    %c0_303 = arith.constant 0 : index
    %c0_304 = arith.constant 0 : index
    %441 = vector.load %arg20[%c0_303, %c0_304] : memref<8x32xf32, #tpu.memory_space<vmem>>, vector<8x32xf32>
    %c0_305 = arith.constant 0 : index
    %c0_306 = arith.constant 0 : index
    %442 = vector.load %arg21[%c0_305, %c0_306] : memref<8x32xf32, #tpu.memory_space<vmem>>, vector<8x32xf32>
    %443 = arith.index_cast %c7_i32 : i32 to index
    %c0_307 = arith.constant 0 : index
    %c0_308 = arith.constant 0 : index
    %444 = vector.load %arg16[%443, %c0_307, %c0_308] : memref<8x8x32xf32, #tpu.memory_space<vmem>>, vector<1x8x32xf32>
    %445 = vector.shape_cast %444 : vector<1x8x32xf32> to vector<8x32xf32>
    %c0_309 = arith.constant 0 : index
    %c0_310 = arith.constant 0 : index
    %c0_311 = arith.constant 0 : index
    %446 = vector.load %arg3[%c0_309, %c0_310, %c0_311] : memref<4x32x32xf32, #tpu.memory_space<vmem>>, vector<1x32x32xf32>
    %447 = vector.shape_cast %446 : vector<1x32x32xf32> to vector<32x32xf32>
    %cst_312 = arith.constant dense<0.000000e+00> : vector<8x32xf32>
    %448 = tpu.matmul %441, %447, %cst_312 {dimension_numbers = #tpu.dot_dimension_numbers<[1], [0], [0], [1], [0, 0, 1, 1], [], []>} : vector<8x32xf32>, vector<32x32xf32>, vector<8x32xf32> -> vector<8x32xf32>
    %449 = arith.addf %445, %448 : vector<8x32xf32>
    %450 = arith.index_cast %c7_i32 : i32 to index
    %c0_313 = arith.constant 0 : index
    %c0_314 = arith.constant 0 : index
    %451 = vector.load %arg17[%450, %c0_313, %c0_314] : memref<8x8x32xf32, #tpu.memory_space<vmem>>, vector<1x8x32xf32>
    %452 = vector.shape_cast %451 : vector<1x8x32xf32> to vector<8x32xf32>
    %c1_315 = arith.constant 1 : index
    %c0_316 = arith.constant 0 : index
    %c0_317 = arith.constant 0 : index
    %453 = vector.load %arg3[%c1_315, %c0_316, %c0_317] : memref<4x32x32xf32, #tpu.memory_space<vmem>>, vector<1x32x32xf32>
    %454 = vector.shape_cast %453 : vector<1x32x32xf32> to vector<32x32xf32>
    %cst_318 = arith.constant dense<0.000000e+00> : vector<8x32xf32>
    %455 = tpu.matmul %441, %454, %cst_318 {dimension_numbers = #tpu.dot_dimension_numbers<[1], [0], [0], [1], [0, 0, 1, 1], [], []>} : vector<8x32xf32>, vector<32x32xf32>, vector<8x32xf32> -> vector<8x32xf32>
    %456 = arith.addf %452, %455 : vector<8x32xf32>
    %457 = arith.index_cast %c7_i32 : i32 to index
    %c0_319 = arith.constant 0 : index
    %c0_320 = arith.constant 0 : index
    %458 = vector.load %arg18[%457, %c0_319, %c0_320] : memref<8x8x32xf32, #tpu.memory_space<vmem>>, vector<1x8x32xf32>
    %459 = vector.shape_cast %458 : vector<1x8x32xf32> to vector<8x32xf32>
    %c2_321 = arith.constant 2 : index
    %c0_322 = arith.constant 0 : index
    %c0_323 = arith.constant 0 : index
    %460 = vector.load %arg3[%c2_321, %c0_322, %c0_323] : memref<4x32x32xf32, #tpu.memory_space<vmem>>, vector<1x32x32xf32>
    %461 = vector.shape_cast %460 : vector<1x32x32xf32> to vector<32x32xf32>
    %cst_324 = arith.constant dense<0.000000e+00> : vector<8x32xf32>
    %462 = tpu.matmul %441, %461, %cst_324 {dimension_numbers = #tpu.dot_dimension_numbers<[1], [0], [0], [1], [0, 0, 1, 1], [], []>} : vector<8x32xf32>, vector<32x32xf32>, vector<8x32xf32> -> vector<8x32xf32>
    %463 = arith.addf %459, %462 : vector<8x32xf32>
    %464 = arith.index_cast %c7_i32 : i32 to index
    %c0_325 = arith.constant 0 : index
    %c0_326 = arith.constant 0 : index
    %465 = vector.load %arg19[%464, %c0_325, %c0_326] : memref<8x8x32xf32, #tpu.memory_space<vmem>>, vector<1x8x32xf32>
    %466 = vector.shape_cast %465 : vector<1x8x32xf32> to vector<8x32xf32>
    %c3_327 = arith.constant 3 : index
    %c0_328 = arith.constant 0 : index
    %c0_329 = arith.constant 0 : index
    %467 = vector.load %arg3[%c3_327, %c0_328, %c0_329] : memref<4x32x32xf32, #tpu.memory_space<vmem>>, vector<1x32x32xf32>
    %468 = vector.shape_cast %467 : vector<1x32x32xf32> to vector<32x32xf32>
    %cst_330 = arith.constant dense<0.000000e+00> : vector<8x32xf32>
    %469 = tpu.matmul %441, %468, %cst_330 {dimension_numbers = #tpu.dot_dimension_numbers<[1], [0], [0], [1], [0, 0, 1, 1], [], []>} : vector<8x32xf32>, vector<32x32xf32>, vector<8x32xf32> -> vector<8x32xf32>
    %470 = arith.addf %466, %469 : vector<8x32xf32>
    %471 = arith.negf %449 : vector<8x32xf32>
    %472 = math.exp %471 : vector<8x32xf32>
    %cst_331 = arith.constant 1.000000e+00 : f32
    %473 = vector.broadcast %cst_331 : f32 to vector<8x32xf32>
    %474 = arith.addf %473, %472 : vector<8x32xf32>
    %475 = arith.divf %473, %474 : vector<8x32xf32>
    %476 = arith.negf %456 : vector<8x32xf32>
    %477 = math.exp %476 : vector<8x32xf32>
    %cst_332 = arith.constant 1.000000e+00 : f32
    %478 = vector.broadcast %cst_332 : f32 to vector<8x32xf32>
    %479 = arith.addf %478, %477 : vector<8x32xf32>
    %480 = arith.divf %478, %479 : vector<8x32xf32>
    %481 = math.tanh %463 : vector<8x32xf32>
    %482 = arith.negf %470 : vector<8x32xf32>
    %483 = math.exp %482 : vector<8x32xf32>
    %cst_333 = arith.constant 1.000000e+00 : f32
    %484 = vector.broadcast %cst_333 : f32 to vector<8x32xf32>
    %485 = arith.addf %484, %483 : vector<8x32xf32>
    %486 = arith.divf %484, %485 : vector<8x32xf32>
    %487 = arith.mulf %480, %442 : vector<8x32xf32>
    %488 = arith.mulf %475, %481 : vector<8x32xf32>
    %489 = arith.addf %487, %488 : vector<8x32xf32>
    %490 = math.tanh %489 : vector<8x32xf32>
    %491 = arith.mulf %486, %490 : vector<8x32xf32>
    %c0_334 = arith.constant 0 : index
    %c0_335 = arith.constant 0 : index
    %492 = vector.load %arg20[%c0_334, %c0_335] : memref<8x32xf32, #tpu.memory_space<vmem>>, vector<8x32xf32>
    tpu.vector_store %arg20[%c0_334, %c0_335], %491 {strides = array<i32>} : memref<8x32xf32, #tpu.memory_space<vmem>>, vector<8x32xf32>,
    %c0_336 = arith.constant 0 : index
    %c0_337 = arith.constant 0 : index
    %493 = vector.load %arg21[%c0_336, %c0_337] : memref<8x32xf32, #tpu.memory_space<vmem>>, vector<8x32xf32>
    tpu.vector_store %arg21[%c0_336, %c0_337], %489 {strides = array<i32>} : memref<8x32xf32, #tpu.memory_space<vmem>>, vector<8x32xf32>,
    %494 = arith.index_cast %c7_i32 : i32 to index
    %c0_338 = arith.constant 0 : index
    %c0_339 = arith.constant 0 : index
    %495 = vector.load %arg15[%494, %c0_338, %c0_339] : memref<8x8x32xf32, #tpu.memory_space<vmem>>, vector<1x8x32xf32>
    %496 = vector.shape_cast %495 : vector<1x8x32xf32> to vector<8x32xf32>
    %497 = vector.shape_cast %491 : vector<8x32xf32> to vector<1x8x32xf32>
    tpu.vector_store %arg15[%494, %c0_338, %c0_339], %497 {strides = array<i32>} : memref<8x8x32xf32, #tpu.memory_space<vmem>>, vector<1x8x32xf32>,
    %c8_i32 = arith.constant 8 : i32
    %c0_340 = arith.constant 0 : index
    %c0_341 = arith.constant 0 : index
    %c0_342 = arith.constant 0 : index
    %498 = vector.load %arg15[%c0_340, %c0_341, %c0_342] : memref<8x8x32xf32, #tpu.memory_space<vmem>>, vector<8x8x32xf32>
    %499 = vector.shape_cast %498 : vector<8x8x32xf32> to vector<64x32xf32>
    %c0_343 = arith.constant 0 : index
    %c0_344 = arith.constant 0 : index
    %c0_345 = arith.constant 0 : index
    %500 = vector.load %arg5[%c0_343, %c0_344, %c0_345] : memref<4x32x32xf32, #tpu.memory_space<vmem>>, vector<1x32x32xf32>
    %501 = vector.shape_cast %500 : vector<1x32x32xf32> to vector<32x32xf32>
    %cst_346 = arith.constant dense<0.000000e+00> : vector<64x32xf32>
    %502 = tpu.matmul %499, %501, %cst_346 {dimension_numbers = #tpu.dot_dimension_numbers<[1], [0], [0], [1], [0, 0, 1, 1], [], []>} : vector<64x32xf32>, vector<32x32xf32>, vector<64x32xf32> -> vector<64x32xf32>
    %c0_347 = arith.constant 0 : index
    %c0_348 = arith.constant 0 : index
    %c0_349 = arith.constant 0 : index
    %503 = vector.load %arg7[%c0_347, %c0_348, %c0_349] : memref<4x1x32xf32, #tpu.memory_space<vmem>>, vector<1x1x32xf32>
    %504 = vector.shape_cast %503 : vector<1x1x32xf32> to vector<1x32xf32>
    %505 = vector.broadcast %504 : vector<1x32xf32> to vector<64x32xf32>
    %506 = arith.addf %502, %505 : vector<64x32xf32>
    %507 = vector.shape_cast %506 : vector<64x32xf32> to vector<8x8x32xf32>
    %c0_350 = arith.constant 0 : index
    %c0_351 = arith.constant 0 : index
    %c0_352 = arith.constant 0 : index
    %508 = vector.load %arg16[%c0_350, %c0_351, %c0_352] : memref<8x8x32xf32, #tpu.memory_space<vmem>>, vector<8x8x32xf32>
    tpu.vector_store %arg16[%c0_350, %c0_351, %c0_352], %507 {strides = array<i32>} : memref<8x8x32xf32, #tpu.memory_space<vmem>>, vector<8x8x32xf32>,
    %c1_353 = arith.constant 1 : index
    %c0_354 = arith.constant 0 : index
    %c0_355 = arith.constant 0 : index
    %509 = vector.load %arg5[%c1_353, %c0_354, %c0_355] : memref<4x32x32xf32, #tpu.memory_space<vmem>>, vector<1x32x32xf32>
    %510 = vector.shape_cast %509 : vector<1x32x32xf32> to vector<32x32xf32>
    %cst_356 = arith.constant dense<0.000000e+00> : vector<64x32xf32>
    %511 = tpu.matmul %499, %510, %cst_356 {dimension_numbers = #tpu.dot_dimension_numbers<[1], [0], [0], [1], [0, 0, 1, 1], [], []>} : vector<64x32xf32>, vector<32x32xf32>, vector<64x32xf32> -> vector<64x32xf32>
    %c1_357 = arith.constant 1 : index
    %c0_358 = arith.constant 0 : index
    %c0_359 = arith.constant 0 : index
    %512 = vector.load %arg7[%c1_357, %c0_358, %c0_359] : memref<4x1x32xf32, #tpu.memory_space<vmem>>, vector<1x1x32xf32>
    %513 = vector.shape_cast %512 : vector<1x1x32xf32> to vector<1x32xf32>
    %514 = vector.broadcast %513 : vector<1x32xf32> to vector<64x32xf32>
    %515 = arith.addf %511, %514 : vector<64x32xf32>
    %516 = vector.shape_cast %515 : vector<64x32xf32> to vector<8x8x32xf32>
    %c0_360 = arith.constant 0 : index
    %c0_361 = arith.constant 0 : index
    %c0_362 = arith.constant 0 : index
    %517 = vector.load %arg17[%c0_360, %c0_361, %c0_362] : memref<8x8x32xf32, #tpu.memory_space<vmem>>, vector<8x8x32xf32>
    tpu.vector_store %arg17[%c0_360, %c0_361, %c0_362], %516 {strides = array<i32>} : memref<8x8x32xf32, #tpu.memory_space<vmem>>, vector<8x8x32xf32>,
    %c2_363 = arith.constant 2 : index
    %c0_364 = arith.constant 0 : index
    %c0_365 = arith.constant 0 : index
    %518 = vector.load %arg5[%c2_363, %c0_364, %c0_365] : memref<4x32x32xf32, #tpu.memory_space<vmem>>, vector<1x32x32xf32>
    %519 = vector.shape_cast %518 : vector<1x32x32xf32> to vector<32x32xf32>
    %cst_366 = arith.constant dense<0.000000e+00> : vector<64x32xf32>
    %520 = tpu.matmul %499, %519, %cst_366 {dimension_numbers = #tpu.dot_dimension_numbers<[1], [0], [0], [1], [0, 0, 1, 1], [], []>} : vector<64x32xf32>, vector<32x32xf32>, vector<64x32xf32> -> vector<64x32xf32>
    %c2_367 = arith.constant 2 : index
    %c0_368 = arith.constant 0 : index
    %c0_369 = arith.constant 0 : index
    %521 = vector.load %arg7[%c2_367, %c0_368, %c0_369] : memref<4x1x32xf32, #tpu.memory_space<vmem>>, vector<1x1x32xf32>
    %522 = vector.shape_cast %521 : vector<1x1x32xf32> to vector<1x32xf32>
    %523 = vector.broadcast %522 : vector<1x32xf32> to vector<64x32xf32>
    %524 = arith.addf %520, %523 : vector<64x32xf32>
    %525 = vector.shape_cast %524 : vector<64x32xf32> to vector<8x8x32xf32>
    %c0_370 = arith.constant 0 : index
    %c0_371 = arith.constant 0 : index
    %c0_372 = arith.constant 0 : index
    %526 = vector.load %arg18[%c0_370, %c0_371, %c0_372] : memref<8x8x32xf32, #tpu.memory_space<vmem>>, vector<8x8x32xf32>
    tpu.vector_store %arg18[%c0_370, %c0_371, %c0_372], %525 {strides = array<i32>} : memref<8x8x32xf32, #tpu.memory_space<vmem>>, vector<8x8x32xf32>,
    %c3_373 = arith.constant 3 : index
    %c0_374 = arith.constant 0 : index
    %c0_375 = arith.constant 0 : index
    %527 = vector.load %arg5[%c3_373, %c0_374, %c0_375] : memref<4x32x32xf32, #tpu.memory_space<vmem>>, vector<1x32x32xf32>
    %528 = vector.shape_cast %527 : vector<1x32x32xf32> to vector<32x32xf32>
    %cst_376 = arith.constant dense<0.000000e+00> : vector<64x32xf32>
    %529 = tpu.matmul %499, %528, %cst_376 {dimension_numbers = #tpu.dot_dimension_numbers<[1], [0], [0], [1], [0, 0, 1, 1], [], []>} : vector<64x32xf32>, vector<32x32xf32>, vector<64x32xf32> -> vector<64x32xf32>
    %c3_377 = arith.constant 3 : index
    %c0_378 = arith.constant 0 : index
    %c0_379 = arith.constant 0 : index
    %530 = vector.load %arg7[%c3_377, %c0_378, %c0_379] : memref<4x1x32xf32, #tpu.memory_space<vmem>>, vector<1x1x32xf32>
    %531 = vector.shape_cast %530 : vector<1x1x32xf32> to vector<1x32xf32>
    %532 = vector.broadcast %531 : vector<1x32xf32> to vector<64x32xf32>
    %533 = arith.addf %529, %532 : vector<64x32xf32>
    %534 = vector.shape_cast %533 : vector<64x32xf32> to vector<8x8x32xf32>
    %c0_380 = arith.constant 0 : index
    %c0_381 = arith.constant 0 : index
    %c0_382 = arith.constant 0 : index
    %535 = vector.load %arg19[%c0_380, %c0_381, %c0_382] : memref<8x8x32xf32, #tpu.memory_space<vmem>>, vector<8x8x32xf32>
    tpu.vector_store %arg19[%c0_380, %c0_381, %c0_382], %534 {strides = array<i32>} : memref<8x8x32xf32, #tpu.memory_space<vmem>>, vector<8x8x32xf32>,
    %cst_383 = arith.constant 0.000000e+00 : f32
    %536 = vector.broadcast %cst_383 : f32 to vector<8x32xf32>
    %c0_384 = arith.constant 0 : index
    %c0_385 = arith.constant 0 : index
    %537 = vector.load %arg20[%c0_384, %c0_385] : memref<8x32xf32, #tpu.memory_space<vmem>>, vector<8x32xf32>
    tpu.vector_store %arg20[%c0_384, %c0_385], %536 {strides = array<i32>} : memref<8x32xf32, #tpu.memory_space<vmem>>, vector<8x32xf32>,
    %cst_386 = arith.constant 0.000000e+00 : f32
    %538 = vector.broadcast %cst_386 : f32 to vector<8x32xf32>
    %c0_387 = arith.constant 0 : index
    %c0_388 = arith.constant 0 : index
    %539 = vector.load %arg21[%c0_387, %c0_388] : memref<8x32xf32, #tpu.memory_space<vmem>>, vector<8x32xf32>
    tpu.vector_store %arg21[%c0_387, %c0_388], %538 {strides = array<i32>} : memref<8x32xf32, #tpu.memory_space<vmem>>, vector<8x32xf32>,
    %c0_i32_389 = arith.constant 0 : i32
    %c0_390 = arith.constant 0 : index
    %c0_391 = arith.constant 0 : index
    %540 = vector.load %arg20[%c0_390, %c0_391] : memref<8x32xf32, #tpu.memory_space<vmem>>, vector<8x32xf32>
    %c0_392 = arith.constant 0 : index
    %c0_393 = arith.constant 0 : index
    %541 = vector.load %arg21[%c0_392, %c0_393] : memref<8x32xf32, #tpu.memory_space<vmem>>, vector<8x32xf32>
    %542 = arith.index_cast %c0_i32_389 : i32 to index
    %c0_394 = arith.constant 0 : index
    %c0_395 = arith.constant 0 : index
    %543 = vector.load %arg16[%542, %c0_394, %c0_395] : memref<8x8x32xf32, #tpu.memory_space<vmem>>, vector<1x8x32xf32>
    %544 = vector.shape_cast %543 : vector<1x8x32xf32> to vector<8x32xf32>
    %c0_396 = arith.constant 0 : index
    %c0_397 = arith.constant 0 : index
    %c0_398 = arith.constant 0 : index
    %545 = vector.load %arg6[%c0_396, %c0_397, %c0_398] : memref<4x32x32xf32, #tpu.memory_space<vmem>>, vector<1x32x32xf32>
    %546 = vector.shape_cast %545 : vector<1x32x32xf32> to vector<32x32xf32>
    %cst_399 = arith.constant dense<0.000000e+00> : vector<8x32xf32>
    %547 = tpu.matmul %540, %546, %cst_399 {dimension_numbers = #tpu.dot_dimension_numbers<[1], [0], [0], [1], [0, 0, 1, 1], [], []>} : vector<8x32xf32>, vector<32x32xf32>, vector<8x32xf32> -> vector<8x32xf32>
    %548 = arith.addf %544, %547 : vector<8x32xf32>
    %549 = arith.index_cast %c0_i32_389 : i32 to index
    %c0_400 = arith.constant 0 : index
    %c0_401 = arith.constant 0 : index
    %550 = vector.load %arg17[%549, %c0_400, %c0_401] : memref<8x8x32xf32, #tpu.memory_space<vmem>>, vector<1x8x32xf32>
    %551 = vector.shape_cast %550 : vector<1x8x32xf32> to vector<8x32xf32>
    %c1_402 = arith.constant 1 : index
    %c0_403 = arith.constant 0 : index
    %c0_404 = arith.constant 0 : index
    %552 = vector.load %arg6[%c1_402, %c0_403, %c0_404] : memref<4x32x32xf32, #tpu.memory_space<vmem>>, vector<1x32x32xf32>
    %553 = vector.shape_cast %552 : vector<1x32x32xf32> to vector<32x32xf32>
    %cst_405 = arith.constant dense<0.000000e+00> : vector<8x32xf32>
    %554 = tpu.matmul %540, %553, %cst_405 {dimension_numbers = #tpu.dot_dimension_numbers<[1], [0], [0], [1], [0, 0, 1, 1], [], []>} : vector<8x32xf32>, vector<32x32xf32>, vector<8x32xf32> -> vector<8x32xf32>
    %555 = arith.addf %551, %554 : vector<8x32xf32>
    %556 = arith.index_cast %c0_i32_389 : i32 to index
    %c0_406 = arith.constant 0 : index
    %c0_407 = arith.constant 0 : index
    %557 = vector.load %arg18[%556, %c0_406, %c0_407] : memref<8x8x32xf32, #tpu.memory_space<vmem>>, vector<1x8x32xf32>
    %558 = vector.shape_cast %557 : vector<1x8x32xf32> to vector<8x32xf32>
    %c2_408 = arith.constant 2 : index
    %c0_409 = arith.constant 0 : index
    %c0_410 = arith.constant 0 : index
    %559 = vector.load %arg6[%c2_408, %c0_409, %c0_410] : memref<4x32x32xf32, #tpu.memory_space<vmem>>, vector<1x32x32xf32>
    %560 = vector.shape_cast %559 : vector<1x32x32xf32> to vector<32x32xf32>
    %cst_411 = arith.constant dense<0.000000e+00> : vector<8x32xf32>
    %561 = tpu.matmul %540, %560, %cst_411 {dimension_numbers = #tpu.dot_dimension_numbers<[1], [0], [0], [1], [0, 0, 1, 1], [], []>} : vector<8x32xf32>, vector<32x32xf32>, vector<8x32xf32> -> vector<8x32xf32>
    %562 = arith.addf %558, %561 : vector<8x32xf32>
    %563 = arith.index_cast %c0_i32_389 : i32 to index
    %c0_412 = arith.constant 0 : index
    %c0_413 = arith.constant 0 : index
    %564 = vector.load %arg19[%563, %c0_412, %c0_413] : memref<8x8x32xf32, #tpu.memory_space<vmem>>, vector<1x8x32xf32>
    %565 = vector.shape_cast %564 : vector<1x8x32xf32> to vector<8x32xf32>
    %c3_414 = arith.constant 3 : index
    %c0_415 = arith.constant 0 : index
    %c0_416 = arith.constant 0 : index
    %566 = vector.load %arg6[%c3_414, %c0_415, %c0_416] : memref<4x32x32xf32, #tpu.memory_space<vmem>>, vector<1x32x32xf32>
    %567 = vector.shape_cast %566 : vector<1x32x32xf32> to vector<32x32xf32>
    %cst_417 = arith.constant dense<0.000000e+00> : vector<8x32xf32>
    %568 = tpu.matmul %540, %567, %cst_417 {dimension_numbers = #tpu.dot_dimension_numbers<[1], [0], [0], [1], [0, 0, 1, 1], [], []>} : vector<8x32xf32>, vector<32x32xf32>, vector<8x32xf32> -> vector<8x32xf32>
    %569 = arith.addf %565, %568 : vector<8x32xf32>
    %570 = arith.negf %548 : vector<8x32xf32>
    %571 = math.exp %570 : vector<8x32xf32>
    %cst_418 = arith.constant 1.000000e+00 : f32
    %572 = vector.broadcast %cst_418 : f32 to vector<8x32xf32>
    %573 = arith.addf %572, %571 : vector<8x32xf32>
    %574 = arith.divf %572, %573 : vector<8x32xf32>
    %575 = arith.negf %555 : vector<8x32xf32>
    %576 = math.exp %575 : vector<8x32xf32>
    %cst_419 = arith.constant 1.000000e+00 : f32
    %577 = vector.broadcast %cst_419 : f32 to vector<8x32xf32>
    %578 = arith.addf %577, %576 : vector<8x32xf32>
    %579 = arith.divf %577, %578 : vector<8x32xf32>
    %580 = math.tanh %562 : vector<8x32xf32>
    %581 = arith.negf %569 : vector<8x32xf32>
    %582 = math.exp %581 : vector<8x32xf32>
    %cst_420 = arith.constant 1.000000e+00 : f32
    %583 = vector.broadcast %cst_420 : f32 to vector<8x32xf32>
    %584 = arith.addf %583, %582 : vector<8x32xf32>
    %585 = arith.divf %583, %584 : vector<8x32xf32>
    %586 = arith.mulf %579, %541 : vector<8x32xf32>
    %587 = arith.mulf %574, %580 : vector<8x32xf32>
    %588 = arith.addf %586, %587 : vector<8x32xf32>
    %589 = math.tanh %588 : vector<8x32xf32>
    %590 = arith.mulf %585, %589 : vector<8x32xf32>
    %c0_421 = arith.constant 0 : index
    %c0_422 = arith.constant 0 : index
    %591 = vector.load %arg20[%c0_421, %c0_422] : memref<8x32xf32, #tpu.memory_space<vmem>>, vector<8x32xf32>
    tpu.vector_store %arg20[%c0_421, %c0_422], %590 {strides = array<i32>} : memref<8x32xf32, #tpu.memory_space<vmem>>, vector<8x32xf32>,
    %c0_423 = arith.constant 0 : index
    %c0_424 = arith.constant 0 : index
    %592 = vector.load %arg21[%c0_423, %c0_424] : memref<8x32xf32, #tpu.memory_space<vmem>>, vector<8x32xf32>
    tpu.vector_store %arg21[%c0_423, %c0_424], %588 {strides = array<i32>} : memref<8x32xf32, #tpu.memory_space<vmem>>, vector<8x32xf32>,
    %593 = arith.index_cast %c0_i32_389 : i32 to index
    %c0_425 = arith.constant 0 : index
    %c0_426 = arith.constant 0 : index
    %594 = vector.load %arg15[%593, %c0_425, %c0_426] : memref<8x8x32xf32, #tpu.memory_space<vmem>>, vector<1x8x32xf32>
    %595 = vector.shape_cast %594 : vector<1x8x32xf32> to vector<8x32xf32>
    %596 = vector.shape_cast %590 : vector<8x32xf32> to vector<1x8x32xf32>
    tpu.vector_store %arg15[%593, %c0_425, %c0_426], %596 {strides = array<i32>} : memref<8x8x32xf32, #tpu.memory_space<vmem>>, vector<1x8x32xf32>,
    %c1_i32_427 = arith.constant 1 : i32
    %c0_428 = arith.constant 0 : index
    %c0_429 = arith.constant 0 : index
    %597 = vector.load %arg20[%c0_428, %c0_429] : memref<8x32xf32, #tpu.memory_space<vmem>>, vector<8x32xf32>
    %c0_430 = arith.constant 0 : index
    %c0_431 = arith.constant 0 : index
    %598 = vector.load %arg21[%c0_430, %c0_431] : memref<8x32xf32, #tpu.memory_space<vmem>>, vector<8x32xf32>
    %599 = arith.index_cast %c1_i32_427 : i32 to index
    %c0_432 = arith.constant 0 : index
    %c0_433 = arith.constant 0 : index
    %600 = vector.load %arg16[%599, %c0_432, %c0_433] : memref<8x8x32xf32, #tpu.memory_space<vmem>>, vector<1x8x32xf32>
    %601 = vector.shape_cast %600 : vector<1x8x32xf32> to vector<8x32xf32>
    %c0_434 = arith.constant 0 : index
    %c0_435 = arith.constant 0 : index
    %c0_436 = arith.constant 0 : index
    %602 = vector.load %arg6[%c0_434, %c0_435, %c0_436] : memref<4x32x32xf32, #tpu.memory_space<vmem>>, vector<1x32x32xf32>
    %603 = vector.shape_cast %602 : vector<1x32x32xf32> to vector<32x32xf32>
    %cst_437 = arith.constant dense<0.000000e+00> : vector<8x32xf32>
    %604 = tpu.matmul %597, %603, %cst_437 {dimension_numbers = #tpu.dot_dimension_numbers<[1], [0], [0], [1], [0, 0, 1, 1], [], []>} : vector<8x32xf32>, vector<32x32xf32>, vector<8x32xf32> -> vector<8x32xf32>
    %605 = arith.addf %601, %604 : vector<8x32xf32>
    %606 = arith.index_cast %c1_i32_427 : i32 to index
    %c0_438 = arith.constant 0 : index
    %c0_439 = arith.constant 0 : index
    %607 = vector.load %arg17[%606, %c0_438, %c0_439] : memref<8x8x32xf32, #tpu.memory_space<vmem>>, vector<1x8x32xf32>
    %608 = vector.shape_cast %607 : vector<1x8x32xf32> to vector<8x32xf32>
    %c1_440 = arith.constant 1 : index
    %c0_441 = arith.constant 0 : index
    %c0_442 = arith.constant 0 : index
    %609 = vector.load %arg6[%c1_440, %c0_441, %c0_442] : memref<4x32x32xf32, #tpu.memory_space<vmem>>, vector<1x32x32xf32>
    %610 = vector.shape_cast %609 : vector<1x32x32xf32> to vector<32x32xf32>
    %cst_443 = arith.constant dense<0.000000e+00> : vector<8x32xf32>
    %611 = tpu.matmul %597, %610, %cst_443 {dimension_numbers = #tpu.dot_dimension_numbers<[1], [0], [0], [1], [0, 0, 1, 1], [], []>} : vector<8x32xf32>, vector<32x32xf32>, vector<8x32xf32> -> vector<8x32xf32>
    %612 = arith.addf %608, %611 : vector<8x32xf32>
    %613 = arith.index_cast %c1_i32_427 : i32 to index
    %c0_444 = arith.constant 0 : index
    %c0_445 = arith.constant 0 : index
    %614 = vector.load %arg18[%613, %c0_444, %c0_445] : memref<8x8x32xf32, #tpu.memory_space<vmem>>, vector<1x8x32xf32>
    %615 = vector.shape_cast %614 : vector<1x8x32xf32> to vector<8x32xf32>
    %c2_446 = arith.constant 2 : index
    %c0_447 = arith.constant 0 : index
    %c0_448 = arith.constant 0 : index
    %616 = vector.load %arg6[%c2_446, %c0_447, %c0_448] : memref<4x32x32xf32, #tpu.memory_space<vmem>>, vector<1x32x32xf32>
    %617 = vector.shape_cast %616 : vector<1x32x32xf32> to vector<32x32xf32>
    %cst_449 = arith.constant dense<0.000000e+00> : vector<8x32xf32>
    %618 = tpu.matmul %597, %617, %cst_449 {dimension_numbers = #tpu.dot_dimension_numbers<[1], [0], [0], [1], [0, 0, 1, 1], [], []>} : vector<8x32xf32>, vector<32x32xf32>, vector<8x32xf32> -> vector<8x32xf32>
    %619 = arith.addf %615, %618 : vector<8x32xf32>
    %620 = arith.index_cast %c1_i32_427 : i32 to index
    %c0_450 = arith.constant 0 : index
    %c0_451 = arith.constant 0 : index
    %621 = vector.load %arg19[%620, %c0_450, %c0_451] : memref<8x8x32xf32, #tpu.memory_space<vmem>>, vector<1x8x32xf32>
    %622 = vector.shape_cast %621 : vector<1x8x32xf32> to vector<8x32xf32>
    %c3_452 = arith.constant 3 : index
    %c0_453 = arith.constant 0 : index
    %c0_454 = arith.constant 0 : index
    %623 = vector.load %arg6[%c3_452, %c0_453, %c0_454] : memref<4x32x32xf32, #tpu.memory_space<vmem>>, vector<1x32x32xf32>
    %624 = vector.shape_cast %623 : vector<1x32x32xf32> to vector<32x32xf32>
    %cst_455 = arith.constant dense<0.000000e+00> : vector<8x32xf32>
    %625 = tpu.matmul %597, %624, %cst_455 {dimension_numbers = #tpu.dot_dimension_numbers<[1], [0], [0], [1], [0, 0, 1, 1], [], []>} : vector<8x32xf32>, vector<32x32xf32>, vector<8x32xf32> -> vector<8x32xf32>
    %626 = arith.addf %622, %625 : vector<8x32xf32>
    %627 = arith.negf %605 : vector<8x32xf32>
    %628 = math.exp %627 : vector<8x32xf32>
    %cst_456 = arith.constant 1.000000e+00 : f32
    %629 = vector.broadcast %cst_456 : f32 to vector<8x32xf32>
    %630 = arith.addf %629, %628 : vector<8x32xf32>
    %631 = arith.divf %629, %630 : vector<8x32xf32>
    %632 = arith.negf %612 : vector<8x32xf32>
    %633 = math.exp %632 : vector<8x32xf32>
    %cst_457 = arith.constant 1.000000e+00 : f32
    %634 = vector.broadcast %cst_457 : f32 to vector<8x32xf32>
    %635 = arith.addf %634, %633 : vector<8x32xf32>
    %636 = arith.divf %634, %635 : vector<8x32xf32>
    %637 = math.tanh %619 : vector<8x32xf32>
    %638 = arith.negf %626 : vector<8x32xf32>
    %639 = math.exp %638 : vector<8x32xf32>
    %cst_458 = arith.constant 1.000000e+00 : f32
    %640 = vector.broadcast %cst_458 : f32 to vector<8x32xf32>
    %641 = arith.addf %640, %639 : vector<8x32xf32>
    %642 = arith.divf %640, %641 : vector<8x32xf32>
    %643 = arith.mulf %636, %598 : vector<8x32xf32>
    %644 = arith.mulf %631, %637 : vector<8x32xf32>
    %645 = arith.addf %643, %644 : vector<8x32xf32>
    %646 = math.tanh %645 : vector<8x32xf32>
    %647 = arith.mulf %642, %646 : vector<8x32xf32>
    %c0_459 = arith.constant 0 : index
    %c0_460 = arith.constant 0 : index
    %648 = vector.load %arg20[%c0_459, %c0_460] : memref<8x32xf32, #tpu.memory_space<vmem>>, vector<8x32xf32>
    tpu.vector_store %arg20[%c0_459, %c0_460], %647 {strides = array<i32>} : memref<8x32xf32, #tpu.memory_space<vmem>>, vector<8x32xf32>,
    %c0_461 = arith.constant 0 : index
    %c0_462 = arith.constant 0 : index
    %649 = vector.load %arg21[%c0_461, %c0_462] : memref<8x32xf32, #tpu.memory_space<vmem>>, vector<8x32xf32>
    tpu.vector_store %arg21[%c0_461, %c0_462], %645 {strides = array<i32>} : memref<8x32xf32, #tpu.memory_space<vmem>>, vector<8x32xf32>,
    %650 = arith.index_cast %c1_i32_427 : i32 to index
    %c0_463 = arith.constant 0 : index
    %c0_464 = arith.constant 0 : index
    %651 = vector.load %arg15[%650, %c0_463, %c0_464] : memref<8x8x32xf32, #tpu.memory_space<vmem>>, vector<1x8x32xf32>
    %652 = vector.shape_cast %651 : vector<1x8x32xf32> to vector<8x32xf32>
    %653 = vector.shape_cast %647 : vector<8x32xf32> to vector<1x8x32xf32>
    tpu.vector_store %arg15[%650, %c0_463, %c0_464], %653 {strides = array<i32>} : memref<8x8x32xf32, #tpu.memory_space<vmem>>, vector<1x8x32xf32>,
    %c2_i32_465 = arith.constant 2 : i32
    %c0_466 = arith.constant 0 : index
    %c0_467 = arith.constant 0 : index
    %654 = vector.load %arg20[%c0_466, %c0_467] : memref<8x32xf32, #tpu.memory_space<vmem>>, vector<8x32xf32>
    %c0_468 = arith.constant 0 : index
    %c0_469 = arith.constant 0 : index
    %655 = vector.load %arg21[%c0_468, %c0_469] : memref<8x32xf32, #tpu.memory_space<vmem>>, vector<8x32xf32>
    %656 = arith.index_cast %c2_i32_465 : i32 to index
    %c0_470 = arith.constant 0 : index
    %c0_471 = arith.constant 0 : index
    %657 = vector.load %arg16[%656, %c0_470, %c0_471] : memref<8x8x32xf32, #tpu.memory_space<vmem>>, vector<1x8x32xf32>
    %658 = vector.shape_cast %657 : vector<1x8x32xf32> to vector<8x32xf32>
    %c0_472 = arith.constant 0 : index
    %c0_473 = arith.constant 0 : index
    %c0_474 = arith.constant 0 : index
    %659 = vector.load %arg6[%c0_472, %c0_473, %c0_474] : memref<4x32x32xf32, #tpu.memory_space<vmem>>, vector<1x32x32xf32>
    %660 = vector.shape_cast %659 : vector<1x32x32xf32> to vector<32x32xf32>
    %cst_475 = arith.constant dense<0.000000e+00> : vector<8x32xf32>
    %661 = tpu.matmul %654, %660, %cst_475 {dimension_numbers = #tpu.dot_dimension_numbers<[1], [0], [0], [1], [0, 0, 1, 1], [], []>} : vector<8x32xf32>, vector<32x32xf32>, vector<8x32xf32> -> vector<8x32xf32>
    %662 = arith.addf %658, %661 : vector<8x32xf32>
    %663 = arith.index_cast %c2_i32_465 : i32 to index
    %c0_476 = arith.constant 0 : index
    %c0_477 = arith.constant 0 : index
    %664 = vector.load %arg17[%663, %c0_476, %c0_477] : memref<8x8x32xf32, #tpu.memory_space<vmem>>, vector<1x8x32xf32>
    %665 = vector.shape_cast %664 : vector<1x8x32xf32> to vector<8x32xf32>
    %c1_478 = arith.constant 1 : index
    %c0_479 = arith.constant 0 : index
    %c0_480 = arith.constant 0 : index
    %666 = vector.load %arg6[%c1_478, %c0_479, %c0_480] : memref<4x32x32xf32, #tpu.memory_space<vmem>>, vector<1x32x32xf32>
    %667 = vector.shape_cast %666 : vector<1x32x32xf32> to vector<32x32xf32>
    %cst_481 = arith.constant dense<0.000000e+00> : vector<8x32xf32>
    %668 = tpu.matmul %654, %667, %cst_481 {dimension_numbers = #tpu.dot_dimension_numbers<[1], [0], [0], [1], [0, 0, 1, 1], [], []>} : vector<8x32xf32>, vector<32x32xf32>, vector<8x32xf32> -> vector<8x32xf32>
    %669 = arith.addf %665, %668 : vector<8x32xf32>
    %670 = arith.index_cast %c2_i32_465 : i32 to index
    %c0_482 = arith.constant 0 : index
    %c0_483 = arith.constant 0 : index
    %671 = vector.load %arg18[%670, %c0_482, %c0_483] : memref<8x8x32xf32, #tpu.memory_space<vmem>>, vector<1x8x32xf32>
    %672 = vector.shape_cast %671 : vector<1x8x32xf32> to vector<8x32xf32>
    %c2_484 = arith.constant 2 : index
    %c0_485 = arith.constant 0 : index
    %c0_486 = arith.constant 0 : index
    %673 = vector.load %arg6[%c2_484, %c0_485, %c0_486] : memref<4x32x32xf32, #tpu.memory_space<vmem>>, vector<1x32x32xf32>
    %674 = vector.shape_cast %673 : vector<1x32x32xf32> to vector<32x32xf32>
    %cst_487 = arith.constant dense<0.000000e+00> : vector<8x32xf32>
    %675 = tpu.matmul %654, %674, %cst_487 {dimension_numbers = #tpu.dot_dimension_numbers<[1], [0], [0], [1], [0, 0, 1, 1], [], []>} : vector<8x32xf32>, vector<32x32xf32>, vector<8x32xf32> -> vector<8x32xf32>
    %676 = arith.addf %672, %675 : vector<8x32xf32>
    %677 = arith.index_cast %c2_i32_465 : i32 to index
    %c0_488 = arith.constant 0 : index
    %c0_489 = arith.constant 0 : index
    %678 = vector.load %arg19[%677, %c0_488, %c0_489] : memref<8x8x32xf32, #tpu.memory_space<vmem>>, vector<1x8x32xf32>
    %679 = vector.shape_cast %678 : vector<1x8x32xf32> to vector<8x32xf32>
    %c3_490 = arith.constant 3 : index
    %c0_491 = arith.constant 0 : index
    %c0_492 = arith.constant 0 : index
    %680 = vector.load %arg6[%c3_490, %c0_491, %c0_492] : memref<4x32x32xf32, #tpu.memory_space<vmem>>, vector<1x32x32xf32>
    %681 = vector.shape_cast %680 : vector<1x32x32xf32> to vector<32x32xf32>
    %cst_493 = arith.constant dense<0.000000e+00> : vector<8x32xf32>
    %682 = tpu.matmul %654, %681, %cst_493 {dimension_numbers = #tpu.dot_dimension_numbers<[1], [0], [0], [1], [0, 0, 1, 1], [], []>} : vector<8x32xf32>, vector<32x32xf32>, vector<8x32xf32> -> vector<8x32xf32>
    %683 = arith.addf %679, %682 : vector<8x32xf32>
    %684 = arith.negf %662 : vector<8x32xf32>
    %685 = math.exp %684 : vector<8x32xf32>
    %cst_494 = arith.constant 1.000000e+00 : f32
    %686 = vector.broadcast %cst_494 : f32 to vector<8x32xf32>
    %687 = arith.addf %686, %685 : vector<8x32xf32>
    %688 = arith.divf %686, %687 : vector<8x32xf32>
    %689 = arith.negf %669 : vector<8x32xf32>
    %690 = math.exp %689 : vector<8x32xf32>
    %cst_495 = arith.constant 1.000000e+00 : f32
    %691 = vector.broadcast %cst_495 : f32 to vector<8x32xf32>
    %692 = arith.addf %691, %690 : vector<8x32xf32>
    %693 = arith.divf %691, %692 : vector<8x32xf32>
    %694 = math.tanh %676 : vector<8x32xf32>
    %695 = arith.negf %683 : vector<8x32xf32>
    %696 = math.exp %695 : vector<8x32xf32>
    %cst_496 = arith.constant 1.000000e+00 : f32
    %697 = vector.broadcast %cst_496 : f32 to vector<8x32xf32>
    %698 = arith.addf %697, %696 : vector<8x32xf32>
    %699 = arith.divf %697, %698 : vector<8x32xf32>
    %700 = arith.mulf %693, %655 : vector<8x32xf32>
    %701 = arith.mulf %688, %694 : vector<8x32xf32>
    %702 = arith.addf %700, %701 : vector<8x32xf32>
    %703 = math.tanh %702 : vector<8x32xf32>
    %704 = arith.mulf %699, %703 : vector<8x32xf32>
    %c0_497 = arith.constant 0 : index
    %c0_498 = arith.constant 0 : index
    %705 = vector.load %arg20[%c0_497, %c0_498] : memref<8x32xf32, #tpu.memory_space<vmem>>, vector<8x32xf32>
    tpu.vector_store %arg20[%c0_497, %c0_498], %704 {strides = array<i32>} : memref<8x32xf32, #tpu.memory_space<vmem>>, vector<8x32xf32>,
    %c0_499 = arith.constant 0 : index
    %c0_500 = arith.constant 0 : index
    %706 = vector.load %arg21[%c0_499, %c0_500] : memref<8x32xf32, #tpu.memory_space<vmem>>, vector<8x32xf32>
    tpu.vector_store %arg21[%c0_499, %c0_500], %702 {strides = array<i32>} : memref<8x32xf32, #tpu.memory_space<vmem>>, vector<8x32xf32>,
    %707 = arith.index_cast %c2_i32_465 : i32 to index
    %c0_501 = arith.constant 0 : index
    %c0_502 = arith.constant 0 : index
    %708 = vector.load %arg15[%707, %c0_501, %c0_502] : memref<8x8x32xf32, #tpu.memory_space<vmem>>, vector<1x8x32xf32>
    %709 = vector.shape_cast %708 : vector<1x8x32xf32> to vector<8x32xf32>
    %710 = vector.shape_cast %704 : vector<8x32xf32> to vector<1x8x32xf32>
    tpu.vector_store %arg15[%707, %c0_501, %c0_502], %710 {strides = array<i32>} : memref<8x8x32xf32, #tpu.memory_space<vmem>>, vector<1x8x32xf32>,
    %c3_i32_503 = arith.constant 3 : i32
    %c0_504 = arith.constant 0 : index
    %c0_505 = arith.constant 0 : index
    %711 = vector.load %arg20[%c0_504, %c0_505] : memref<8x32xf32, #tpu.memory_space<vmem>>, vector<8x32xf32>
    %c0_506 = arith.constant 0 : index
    %c0_507 = arith.constant 0 : index
    %712 = vector.load %arg21[%c0_506, %c0_507] : memref<8x32xf32, #tpu.memory_space<vmem>>, vector<8x32xf32>
    %713 = arith.index_cast %c3_i32_503 : i32 to index
    %c0_508 = arith.constant 0 : index
    %c0_509 = arith.constant 0 : index
    %714 = vector.load %arg16[%713, %c0_508, %c0_509] : memref<8x8x32xf32, #tpu.memory_space<vmem>>, vector<1x8x32xf32>
    %715 = vector.shape_cast %714 : vector<1x8x32xf32> to vector<8x32xf32>
    %c0_510 = arith.constant 0 : index
    %c0_511 = arith.constant 0 : index
    %c0_512 = arith.constant 0 : index
    %716 = vector.load %arg6[%c0_510, %c0_511, %c0_512] : memref<4x32x32xf32, #tpu.memory_space<vmem>>, vector<1x32x32xf32>
    %717 = vector.shape_cast %716 : vector<1x32x32xf32> to vector<32x32xf32>
    %cst_513 = arith.constant dense<0.000000e+00> : vector<8x32xf32>
    %718 = tpu.matmul %711, %717, %cst_513 {dimension_numbers = #tpu.dot_dimension_numbers<[1], [0], [0], [1], [0, 0, 1, 1], [], []>} : vector<8x32xf32>, vector<32x32xf32>, vector<8x32xf32> -> vector<8x32xf32>
    %719 = arith.addf %715, %718 : vector<8x32xf32>
    %720 = arith.index_cast %c3_i32_503 : i32 to index
    %c0_514 = arith.constant 0 : index
    %c0_515 = arith.constant 0 : index
    %721 = vector.load %arg17[%720, %c0_514, %c0_515] : memref<8x8x32xf32, #tpu.memory_space<vmem>>, vector<1x8x32xf32>
    %722 = vector.shape_cast %721 : vector<1x8x32xf32> to vector<8x32xf32>
    %c1_516 = arith.constant 1 : index
    %c0_517 = arith.constant 0 : index
    %c0_518 = arith.constant 0 : index
    %723 = vector.load %arg6[%c1_516, %c0_517, %c0_518] : memref<4x32x32xf32, #tpu.memory_space<vmem>>, vector<1x32x32xf32>
    %724 = vector.shape_cast %723 : vector<1x32x32xf32> to vector<32x32xf32>
    %cst_519 = arith.constant dense<0.000000e+00> : vector<8x32xf32>
    %725 = tpu.matmul %711, %724, %cst_519 {dimension_numbers = #tpu.dot_dimension_numbers<[1], [0], [0], [1], [0, 0, 1, 1], [], []>} : vector<8x32xf32>, vector<32x32xf32>, vector<8x32xf32> -> vector<8x32xf32>
    %726 = arith.addf %722, %725 : vector<8x32xf32>
    %727 = arith.index_cast %c3_i32_503 : i32 to index
    %c0_520 = arith.constant 0 : index
    %c0_521 = arith.constant 0 : index
    %728 = vector.load %arg18[%727, %c0_520, %c0_521] : memref<8x8x32xf32, #tpu.memory_space<vmem>>, vector<1x8x32xf32>
    %729 = vector.shape_cast %728 : vector<1x8x32xf32> to vector<8x32xf32>
    %c2_522 = arith.constant 2 : index
    %c0_523 = arith.constant 0 : index
    %c0_524 = arith.constant 0 : index
    %730 = vector.load %arg6[%c2_522, %c0_523, %c0_524] : memref<4x32x32xf32, #tpu.memory_space<vmem>>, vector<1x32x32xf32>
    %731 = vector.shape_cast %730 : vector<1x32x32xf32> to vector<32x32xf32>
    %cst_525 = arith.constant dense<0.000000e+00> : vector<8x32xf32>
    %732 = tpu.matmul %711, %731, %cst_525 {dimension_numbers = #tpu.dot_dimension_numbers<[1], [0], [0], [1], [0, 0, 1, 1], [], []>} : vector<8x32xf32>, vector<32x32xf32>, vector<8x32xf32> -> vector<8x32xf32>
    %733 = arith.addf %729, %732 : vector<8x32xf32>
    %734 = arith.index_cast %c3_i32_503 : i32 to index
    %c0_526 = arith.constant 0 : index
    %c0_527 = arith.constant 0 : index
    %735 = vector.load %arg19[%734, %c0_526, %c0_527] : memref<8x8x32xf32, #tpu.memory_space<vmem>>, vector<1x8x32xf32>
    %736 = vector.shape_cast %735 : vector<1x8x32xf32> to vector<8x32xf32>
    %c3_528 = arith.constant 3 : index
    %c0_529 = arith.constant 0 : index
    %c0_530 = arith.constant 0 : index
    %737 = vector.load %arg6[%c3_528, %c0_529, %c0_530] : memref<4x32x32xf32, #tpu.memory_space<vmem>>, vector<1x32x32xf32>
    %738 = vector.shape_cast %737 : vector<1x32x32xf32> to vector<32x32xf32>
    %cst_531 = arith.constant dense<0.000000e+00> : vector<8x32xf32>
    %739 = tpu.matmul %711, %738, %cst_531 {dimension_numbers = #tpu.dot_dimension_numbers<[1], [0], [0], [1], [0, 0, 1, 1], [], []>} : vector<8x32xf32>, vector<32x32xf32>, vector<8x32xf32> -> vector<8x32xf32>
    %740 = arith.addf %736, %739 : vector<8x32xf32>
    %741 = arith.negf %719 : vector<8x32xf32>
    %742 = math.exp %741 : vector<8x32xf32>
    %cst_532 = arith.constant 1.000000e+00 : f32
    %743 = vector.broadcast %cst_532 : f32 to vector<8x32xf32>
    %744 = arith.addf %743, %742 : vector<8x32xf32>
    %745 = arith.divf %743, %744 : vector<8x32xf32>
    %746 = arith.negf %726 : vector<8x32xf32>
    %747 = math.exp %746 : vector<8x32xf32>
    %cst_533 = arith.constant 1.000000e+00 : f32
    %748 = vector.broadcast %cst_533 : f32 to vector<8x32xf32>
    %749 = arith.addf %748, %747 : vector<8x32xf32>
    %750 = arith.divf %748, %749 : vector<8x32xf32>
    %751 = math.tanh %733 : vector<8x32xf32>
    %752 = arith.negf %740 : vector<8x32xf32>
    %753 = math.exp %752 : vector<8x32xf32>
    %cst_534 = arith.constant 1.000000e+00 : f32
    %754 = vector.broadcast %cst_534 : f32 to vector<8x32xf32>
    %755 = arith.addf %754, %753 : vector<8x32xf32>
    %756 = arith.divf %754, %755 : vector<8x32xf32>
    %757 = arith.mulf %750, %712 : vector<8x32xf32>
    %758 = arith.mulf %745, %751 : vector<8x32xf32>
    %759 = arith.addf %757, %758 : vector<8x32xf32>
    %760 = math.tanh %759 : vector<8x32xf32>
    %761 = arith.mulf %756, %760 : vector<8x32xf32>
    %c0_535 = arith.constant 0 : index
    %c0_536 = arith.constant 0 : index
    %762 = vector.load %arg20[%c0_535, %c0_536] : memref<8x32xf32, #tpu.memory_space<vmem>>, vector<8x32xf32>
    tpu.vector_store %arg20[%c0_535, %c0_536], %761 {strides = array<i32>} : memref<8x32xf32, #tpu.memory_space<vmem>>, vector<8x32xf32>,
    %c0_537 = arith.constant 0 : index
    %c0_538 = arith.constant 0 : index
    %763 = vector.load %arg21[%c0_537, %c0_538] : memref<8x32xf32, #tpu.memory_space<vmem>>, vector<8x32xf32>
    tpu.vector_store %arg21[%c0_537, %c0_538], %759 {strides = array<i32>} : memref<8x32xf32, #tpu.memory_space<vmem>>, vector<8x32xf32>,
    %764 = arith.index_cast %c3_i32_503 : i32 to index
    %c0_539 = arith.constant 0 : index
    %c0_540 = arith.constant 0 : index
    %765 = vector.load %arg15[%764, %c0_539, %c0_540] : memref<8x8x32xf32, #tpu.memory_space<vmem>>, vector<1x8x32xf32>
    %766 = vector.shape_cast %765 : vector<1x8x32xf32> to vector<8x32xf32>
    %767 = vector.shape_cast %761 : vector<8x32xf32> to vector<1x8x32xf32>
    tpu.vector_store %arg15[%764, %c0_539, %c0_540], %767 {strides = array<i32>} : memref<8x8x32xf32, #tpu.memory_space<vmem>>, vector<1x8x32xf32>,
    %c4_i32_541 = arith.constant 4 : i32
    %c0_542 = arith.constant 0 : index
    %c0_543 = arith.constant 0 : index
    %768 = vector.load %arg20[%c0_542, %c0_543] : memref<8x32xf32, #tpu.memory_space<vmem>>, vector<8x32xf32>
    %c0_544 = arith.constant 0 : index
    %c0_545 = arith.constant 0 : index
    %769 = vector.load %arg21[%c0_544, %c0_545] : memref<8x32xf32, #tpu.memory_space<vmem>>, vector<8x32xf32>
    %770 = arith.index_cast %c4_i32_541 : i32 to index
    %c0_546 = arith.constant 0 : index
    %c0_547 = arith.constant 0 : index
    %771 = vector.load %arg16[%770, %c0_546, %c0_547] : memref<8x8x32xf32, #tpu.memory_space<vmem>>, vector<1x8x32xf32>
    %772 = vector.shape_cast %771 : vector<1x8x32xf32> to vector<8x32xf32>
    %c0_548 = arith.constant 0 : index
    %c0_549 = arith.constant 0 : index
    %c0_550 = arith.constant 0 : index
    %773 = vector.load %arg6[%c0_548, %c0_549, %c0_550] : memref<4x32x32xf32, #tpu.memory_space<vmem>>, vector<1x32x32xf32>
    %774 = vector.shape_cast %773 : vector<1x32x32xf32> to vector<32x32xf32>
    %cst_551 = arith.constant dense<0.000000e+00> : vector<8x32xf32>
    %775 = tpu.matmul %768, %774, %cst_551 {dimension_numbers = #tpu.dot_dimension_numbers<[1], [0], [0], [1], [0, 0, 1, 1], [], []>} : vector<8x32xf32>, vector<32x32xf32>, vector<8x32xf32> -> vector<8x32xf32>
    %776 = arith.addf %772, %775 : vector<8x32xf32>
    %777 = arith.index_cast %c4_i32_541 : i32 to index
    %c0_552 = arith.constant 0 : index
    %c0_553 = arith.constant 0 : index
    %778 = vector.load %arg17[%777, %c0_552, %c0_553] : memref<8x8x32xf32, #tpu.memory_space<vmem>>, vector<1x8x32xf32>
    %779 = vector.shape_cast %778 : vector<1x8x32xf32> to vector<8x32xf32>
    %c1_554 = arith.constant 1 : index
    %c0_555 = arith.constant 0 : index
    %c0_556 = arith.constant 0 : index
    %780 = vector.load %arg6[%c1_554, %c0_555, %c0_556] : memref<4x32x32xf32, #tpu.memory_space<vmem>>, vector<1x32x32xf32>
    %781 = vector.shape_cast %780 : vector<1x32x32xf32> to vector<32x32xf32>
    %cst_557 = arith.constant dense<0.000000e+00> : vector<8x32xf32>
    %782 = tpu.matmul %768, %781, %cst_557 {dimension_numbers = #tpu.dot_dimension_numbers<[1], [0], [0], [1], [0, 0, 1, 1], [], []>} : vector<8x32xf32>, vector<32x32xf32>, vector<8x32xf32> -> vector<8x32xf32>
    %783 = arith.addf %779, %782 : vector<8x32xf32>
    %784 = arith.index_cast %c4_i32_541 : i32 to index
    %c0_558 = arith.constant 0 : index
    %c0_559 = arith.constant 0 : index
    %785 = vector.load %arg18[%784, %c0_558, %c0_559] : memref<8x8x32xf32, #tpu.memory_space<vmem>>, vector<1x8x32xf32>
    %786 = vector.shape_cast %785 : vector<1x8x32xf32> to vector<8x32xf32>
    %c2_560 = arith.constant 2 : index
    %c0_561 = arith.constant 0 : index
    %c0_562 = arith.constant 0 : index
    %787 = vector.load %arg6[%c2_560, %c0_561, %c0_562] : memref<4x32x32xf32, #tpu.memory_space<vmem>>, vector<1x32x32xf32>
    %788 = vector.shape_cast %787 : vector<1x32x32xf32> to vector<32x32xf32>
    %cst_563 = arith.constant dense<0.000000e+00> : vector<8x32xf32>
    %789 = tpu.matmul %768, %788, %cst_563 {dimension_numbers = #tpu.dot_dimension_numbers<[1], [0], [0], [1], [0, 0, 1, 1], [], []>} : vector<8x32xf32>, vector<32x32xf32>, vector<8x32xf32> -> vector<8x32xf32>
    %790 = arith.addf %786, %789 : vector<8x32xf32>
    %791 = arith.index_cast %c4_i32_541 : i32 to index
    %c0_564 = arith.constant 0 : index
    %c0_565 = arith.constant 0 : index
    %792 = vector.load %arg19[%791, %c0_564, %c0_565] : memref<8x8x32xf32, #tpu.memory_space<vmem>>, vector<1x8x32xf32>
    %793 = vector.shape_cast %792 : vector<1x8x32xf32> to vector<8x32xf32>
    %c3_566 = arith.constant 3 : index
    %c0_567 = arith.constant 0 : index
    %c0_568 = arith.constant 0 : index
    %794 = vector.load %arg6[%c3_566, %c0_567, %c0_568] : memref<4x32x32xf32, #tpu.memory_space<vmem>>, vector<1x32x32xf32>
    %795 = vector.shape_cast %794 : vector<1x32x32xf32> to vector<32x32xf32>
    %cst_569 = arith.constant dense<0.000000e+00> : vector<8x32xf32>
    %796 = tpu.matmul %768, %795, %cst_569 {dimension_numbers = #tpu.dot_dimension_numbers<[1], [0], [0], [1], [0, 0, 1, 1], [], []>} : vector<8x32xf32>, vector<32x32xf32>, vector<8x32xf32> -> vector<8x32xf32>
    %797 = arith.addf %793, %796 : vector<8x32xf32>
    %798 = arith.negf %776 : vector<8x32xf32>
    %799 = math.exp %798 : vector<8x32xf32>
    %cst_570 = arith.constant 1.000000e+00 : f32
    %800 = vector.broadcast %cst_570 : f32 to vector<8x32xf32>
    %801 = arith.addf %800, %799 : vector<8x32xf32>
    %802 = arith.divf %800, %801 : vector<8x32xf32>
    %803 = arith.negf %783 : vector<8x32xf32>
    %804 = math.exp %803 : vector<8x32xf32>
    %cst_571 = arith.constant 1.000000e+00 : f32
    %805 = vector.broadcast %cst_571 : f32 to vector<8x32xf32>
    %806 = arith.addf %805, %804 : vector<8x32xf32>
    %807 = arith.divf %805, %806 : vector<8x32xf32>
    %808 = math.tanh %790 : vector<8x32xf32>
    %809 = arith.negf %797 : vector<8x32xf32>
    %810 = math.exp %809 : vector<8x32xf32>
    %cst_572 = arith.constant 1.000000e+00 : f32
    %811 = vector.broadcast %cst_572 : f32 to vector<8x32xf32>
    %812 = arith.addf %811, %810 : vector<8x32xf32>
    %813 = arith.divf %811, %812 : vector<8x32xf32>
    %814 = arith.mulf %807, %769 : vector<8x32xf32>
    %815 = arith.mulf %802, %808 : vector<8x32xf32>
    %816 = arith.addf %814, %815 : vector<8x32xf32>
    %817 = math.tanh %816 : vector<8x32xf32>
    %818 = arith.mulf %813, %817 : vector<8x32xf32>
    %c0_573 = arith.constant 0 : index
    %c0_574 = arith.constant 0 : index
    %819 = vector.load %arg20[%c0_573, %c0_574] : memref<8x32xf32, #tpu.memory_space<vmem>>, vector<8x32xf32>
    tpu.vector_store %arg20[%c0_573, %c0_574], %818 {strides = array<i32>} : memref<8x32xf32, #tpu.memory_space<vmem>>, vector<8x32xf32>,
    %c0_575 = arith.constant 0 : index
    %c0_576 = arith.constant 0 : index
    %820 = vector.load %arg21[%c0_575, %c0_576] : memref<8x32xf32, #tpu.memory_space<vmem>>, vector<8x32xf32>
    tpu.vector_store %arg21[%c0_575, %c0_576], %816 {strides = array<i32>} : memref<8x32xf32, #tpu.memory_space<vmem>>, vector<8x32xf32>,
    %821 = arith.index_cast %c4_i32_541 : i32 to index
    %c0_577 = arith.constant 0 : index
    %c0_578 = arith.constant 0 : index
    %822 = vector.load %arg15[%821, %c0_577, %c0_578] : memref<8x8x32xf32, #tpu.memory_space<vmem>>, vector<1x8x32xf32>
    %823 = vector.shape_cast %822 : vector<1x8x32xf32> to vector<8x32xf32>
    %824 = vector.shape_cast %818 : vector<8x32xf32> to vector<1x8x32xf32>
    tpu.vector_store %arg15[%821, %c0_577, %c0_578], %824 {strides = array<i32>} : memref<8x8x32xf32, #tpu.memory_space<vmem>>, vector<1x8x32xf32>,
    %c5_i32_579 = arith.constant 5 : i32
    %c0_580 = arith.constant 0 : index
    %c0_581 = arith.constant 0 : index
    %825 = vector.load %arg20[%c0_580, %c0_581] : memref<8x32xf32, #tpu.memory_space<vmem>>, vector<8x32xf32>
    %c0_582 = arith.constant 0 : index
    %c0_583 = arith.constant 0 : index
    %826 = vector.load %arg21[%c0_582, %c0_583] : memref<8x32xf32, #tpu.memory_space<vmem>>, vector<8x32xf32>
    %827 = arith.index_cast %c5_i32_579 : i32 to index
    %c0_584 = arith.constant 0 : index
    %c0_585 = arith.constant 0 : index
    %828 = vector.load %arg16[%827, %c0_584, %c0_585] : memref<8x8x32xf32, #tpu.memory_space<vmem>>, vector<1x8x32xf32>
    %829 = vector.shape_cast %828 : vector<1x8x32xf32> to vector<8x32xf32>
    %c0_586 = arith.constant 0 : index
    %c0_587 = arith.constant 0 : index
    %c0_588 = arith.constant 0 : index
    %830 = vector.load %arg6[%c0_586, %c0_587, %c0_588] : memref<4x32x32xf32, #tpu.memory_space<vmem>>, vector<1x32x32xf32>
    %831 = vector.shape_cast %830 : vector<1x32x32xf32> to vector<32x32xf32>
    %cst_589 = arith.constant dense<0.000000e+00> : vector<8x32xf32>
    %832 = tpu.matmul %825, %831, %cst_589 {dimension_numbers = #tpu.dot_dimension_numbers<[1], [0], [0], [1], [0, 0, 1, 1], [], []>} : vector<8x32xf32>, vector<32x32xf32>, vector<8x32xf32> -> vector<8x32xf32>
    %833 = arith.addf %829, %832 : vector<8x32xf32>
    %834 = arith.index_cast %c5_i32_579 : i32 to index
    %c0_590 = arith.constant 0 : index
    %c0_591 = arith.constant 0 : index
    %835 = vector.load %arg17[%834, %c0_590, %c0_591] : memref<8x8x32xf32, #tpu.memory_space<vmem>>, vector<1x8x32xf32>
    %836 = vector.shape_cast %835 : vector<1x8x32xf32> to vector<8x32xf32>
    %c1_592 = arith.constant 1 : index
    %c0_593 = arith.constant 0 : index
    %c0_594 = arith.constant 0 : index
    %837 = vector.load %arg6[%c1_592, %c0_593, %c0_594] : memref<4x32x32xf32, #tpu.memory_space<vmem>>, vector<1x32x32xf32>
    %838 = vector.shape_cast %837 : vector<1x32x32xf32> to vector<32x32xf32>
    %cst_595 = arith.constant dense<0.000000e+00> : vector<8x32xf32>
    %839 = tpu.matmul %825, %838, %cst_595 {dimension_numbers = #tpu.dot_dimension_numbers<[1], [0], [0], [1], [0, 0, 1, 1], [], []>} : vector<8x32xf32>, vector<32x32xf32>, vector<8x32xf32> -> vector<8x32xf32>
    %840 = arith.addf %836, %839 : vector<8x32xf32>
    %841 = arith.index_cast %c5_i32_579 : i32 to index
    %c0_596 = arith.constant 0 : index
    %c0_597 = arith.constant 0 : index
    %842 = vector.load %arg18[%841, %c0_596, %c0_597] : memref<8x8x32xf32, #tpu.memory_space<vmem>>, vector<1x8x32xf32>
    %843 = vector.shape_cast %842 : vector<1x8x32xf32> to vector<8x32xf32>
    %c2_598 = arith.constant 2 : index
    %c0_599 = arith.constant 0 : index
    %c0_600 = arith.constant 0 : index
    %844 = vector.load %arg6[%c2_598, %c0_599, %c0_600] : memref<4x32x32xf32, #tpu.memory_space<vmem>>, vector<1x32x32xf32>
    %845 = vector.shape_cast %844 : vector<1x32x32xf32> to vector<32x32xf32>
    %cst_601 = arith.constant dense<0.000000e+00> : vector<8x32xf32>
    %846 = tpu.matmul %825, %845, %cst_601 {dimension_numbers = #tpu.dot_dimension_numbers<[1], [0], [0], [1], [0, 0, 1, 1], [], []>} : vector<8x32xf32>, vector<32x32xf32>, vector<8x32xf32> -> vector<8x32xf32>
    %847 = arith.addf %843, %846 : vector<8x32xf32>
    %848 = arith.index_cast %c5_i32_579 : i32 to index
    %c0_602 = arith.constant 0 : index
    %c0_603 = arith.constant 0 : index
    %849 = vector.load %arg19[%848, %c0_602, %c0_603] : memref<8x8x32xf32, #tpu.memory_space<vmem>>, vector<1x8x32xf32>
    %850 = vector.shape_cast %849 : vector<1x8x32xf32> to vector<8x32xf32>
    %c3_604 = arith.constant 3 : index
    %c0_605 = arith.constant 0 : index
    %c0_606 = arith.constant 0 : index
    %851 = vector.load %arg6[%c3_604, %c0_605, %c0_606] : memref<4x32x32xf32, #tpu.memory_space<vmem>>, vector<1x32x32xf32>
    %852 = vector.shape_cast %851 : vector<1x32x32xf32> to vector<32x32xf32>
    %cst_607 = arith.constant dense<0.000000e+00> : vector<8x32xf32>
    %853 = tpu.matmul %825, %852, %cst_607 {dimension_numbers = #tpu.dot_dimension_numbers<[1], [0], [0], [1], [0, 0, 1, 1], [], []>} : vector<8x32xf32>, vector<32x32xf32>, vector<8x32xf32> -> vector<8x32xf32>
    %854 = arith.addf %850, %853 : vector<8x32xf32>
    %855 = arith.negf %833 : vector<8x32xf32>
    %856 = math.exp %855 : vector<8x32xf32>
    %cst_608 = arith.constant 1.000000e+00 : f32
    %857 = vector.broadcast %cst_608 : f32 to vector<8x32xf32>
    %858 = arith.addf %857, %856 : vector<8x32xf32>
    %859 = arith.divf %857, %858 : vector<8x32xf32>
    %860 = arith.negf %840 : vector<8x32xf32>
    %861 = math.exp %860 : vector<8x32xf32>
    %cst_609 = arith.constant 1.000000e+00 : f32
    %862 = vector.broadcast %cst_609 : f32 to vector<8x32xf32>
    %863 = arith.addf %862, %861 : vector<8x32xf32>
    %864 = arith.divf %862, %863 : vector<8x32xf32>
    %865 = math.tanh %847 : vector<8x32xf32>
    %866 = arith.negf %854 : vector<8x32xf32>
    %867 = math.exp %866 : vector<8x32xf32>
    %cst_610 = arith.constant 1.000000e+00 : f32
    %868 = vector.broadcast %cst_610 : f32 to vector<8x32xf32>
    %869 = arith.addf %868, %867 : vector<8x32xf32>
    %870 = arith.divf %868, %869 : vector<8x32xf32>
    %871 = arith.mulf %864, %826 : vector<8x32xf32>
    %872 = arith.mulf %859, %865 : vector<8x32xf32>
    %873 = arith.addf %871, %872 : vector<8x32xf32>
    %874 = math.tanh %873 : vector<8x32xf32>
    %875 = arith.mulf %870, %874 : vector<8x32xf32>
    %c0_611 = arith.constant 0 : index
    %c0_612 = arith.constant 0 : index
    %876 = vector.load %arg20[%c0_611, %c0_612] : memref<8x32xf32, #tpu.memory_space<vmem>>, vector<8x32xf32>
    tpu.vector_store %arg20[%c0_611, %c0_612], %875 {strides = array<i32>} : memref<8x32xf32, #tpu.memory_space<vmem>>, vector<8x32xf32>,
    %c0_613 = arith.constant 0 : index
    %c0_614 = arith.constant 0 : index
    %877 = vector.load %arg21[%c0_613, %c0_614] : memref<8x32xf32, #tpu.memory_space<vmem>>, vector<8x32xf32>
    tpu.vector_store %arg21[%c0_613, %c0_614], %873 {strides = array<i32>} : memref<8x32xf32, #tpu.memory_space<vmem>>, vector<8x32xf32>,
    %878 = arith.index_cast %c5_i32_579 : i32 to index
    %c0_615 = arith.constant 0 : index
    %c0_616 = arith.constant 0 : index
    %879 = vector.load %arg15[%878, %c0_615, %c0_616] : memref<8x8x32xf32, #tpu.memory_space<vmem>>, vector<1x8x32xf32>
    %880 = vector.shape_cast %879 : vector<1x8x32xf32> to vector<8x32xf32>
    %881 = vector.shape_cast %875 : vector<8x32xf32> to vector<1x8x32xf32>
    tpu.vector_store %arg15[%878, %c0_615, %c0_616], %881 {strides = array<i32>} : memref<8x8x32xf32, #tpu.memory_space<vmem>>, vector<1x8x32xf32>,
    %c6_i32_617 = arith.constant 6 : i32
    %c0_618 = arith.constant 0 : index
    %c0_619 = arith.constant 0 : index
    %882 = vector.load %arg20[%c0_618, %c0_619] : memref<8x32xf32, #tpu.memory_space<vmem>>, vector<8x32xf32>
    %c0_620 = arith.constant 0 : index
    %c0_621 = arith.constant 0 : index
    %883 = vector.load %arg21[%c0_620, %c0_621] : memref<8x32xf32, #tpu.memory_space<vmem>>, vector<8x32xf32>
    %884 = arith.index_cast %c6_i32_617 : i32 to index
    %c0_622 = arith.constant 0 : index
    %c0_623 = arith.constant 0 : index
    %885 = vector.load %arg16[%884, %c0_622, %c0_623] : memref<8x8x32xf32, #tpu.memory_space<vmem>>, vector<1x8x32xf32>
    %886 = vector.shape_cast %885 : vector<1x8x32xf32> to vector<8x32xf32>
    %c0_624 = arith.constant 0 : index
    %c0_625 = arith.constant 0 : index
    %c0_626 = arith.constant 0 : index
    %887 = vector.load %arg6[%c0_624, %c0_625, %c0_626] : memref<4x32x32xf32, #tpu.memory_space<vmem>>, vector<1x32x32xf32>
    %888 = vector.shape_cast %887 : vector<1x32x32xf32> to vector<32x32xf32>
    %cst_627 = arith.constant dense<0.000000e+00> : vector<8x32xf32>
    %889 = tpu.matmul %882, %888, %cst_627 {dimension_numbers = #tpu.dot_dimension_numbers<[1], [0], [0], [1], [0, 0, 1, 1], [], []>} : vector<8x32xf32>, vector<32x32xf32>, vector<8x32xf32> -> vector<8x32xf32>
    %890 = arith.addf %886, %889 : vector<8x32xf32>
    %891 = arith.index_cast %c6_i32_617 : i32 to index
    %c0_628 = arith.constant 0 : index
    %c0_629 = arith.constant 0 : index
    %892 = vector.load %arg17[%891, %c0_628, %c0_629] : memref<8x8x32xf32, #tpu.memory_space<vmem>>, vector<1x8x32xf32>
    %893 = vector.shape_cast %892 : vector<1x8x32xf32> to vector<8x32xf32>
    %c1_630 = arith.constant 1 : index
    %c0_631 = arith.constant 0 : index
    %c0_632 = arith.constant 0 : index
    %894 = vector.load %arg6[%c1_630, %c0_631, %c0_632] : memref<4x32x32xf32, #tpu.memory_space<vmem>>, vector<1x32x32xf32>
    %895 = vector.shape_cast %894 : vector<1x32x32xf32> to vector<32x32xf32>
    %cst_633 = arith.constant dense<0.000000e+00> : vector<8x32xf32>
    %896 = tpu.matmul %882, %895, %cst_633 {dimension_numbers = #tpu.dot_dimension_numbers<[1], [0], [0], [1], [0, 0, 1, 1], [], []>} : vector<8x32xf32>, vector<32x32xf32>, vector<8x32xf32> -> vector<8x32xf32>
    %897 = arith.addf %893, %896 : vector<8x32xf32>
    %898 = arith.index_cast %c6_i32_617 : i32 to index
    %c0_634 = arith.constant 0 : index
    %c0_635 = arith.constant 0 : index
    %899 = vector.load %arg18[%898, %c0_634, %c0_635] : memref<8x8x32xf32, #tpu.memory_space<vmem>>, vector<1x8x32xf32>
    %900 = vector.shape_cast %899 : vector<1x8x32xf32> to vector<8x32xf32>
    %c2_636 = arith.constant 2 : index
    %c0_637 = arith.constant 0 : index
    %c0_638 = arith.constant 0 : index
    %901 = vector.load %arg6[%c2_636, %c0_637, %c0_638] : memref<4x32x32xf32, #tpu.memory_space<vmem>>, vector<1x32x32xf32>
    %902 = vector.shape_cast %901 : vector<1x32x32xf32> to vector<32x32xf32>
    %cst_639 = arith.constant dense<0.000000e+00> : vector<8x32xf32>
    %903 = tpu.matmul %882, %902, %cst_639 {dimension_numbers = #tpu.dot_dimension_numbers<[1], [0], [0], [1], [0, 0, 1, 1], [], []>} : vector<8x32xf32>, vector<32x32xf32>, vector<8x32xf32> -> vector<8x32xf32>
    %904 = arith.addf %900, %903 : vector<8x32xf32>
    %905 = arith.index_cast %c6_i32_617 : i32 to index
    %c0_640 = arith.constant 0 : index
    %c0_641 = arith.constant 0 : index
    %906 = vector.load %arg19[%905, %c0_640, %c0_641] : memref<8x8x32xf32, #tpu.memory_space<vmem>>, vector<1x8x32xf32>
    %907 = vector.shape_cast %906 : vector<1x8x32xf32> to vector<8x32xf32>
    %c3_642 = arith.constant 3 : index
    %c0_643 = arith.constant 0 : index
    %c0_644 = arith.constant 0 : index
    %908 = vector.load %arg6[%c3_642, %c0_643, %c0_644] : memref<4x32x32xf32, #tpu.memory_space<vmem>>, vector<1x32x32xf32>
    %909 = vector.shape_cast %908 : vector<1x32x32xf32> to vector<32x32xf32>
    %cst_645 = arith.constant dense<0.000000e+00> : vector<8x32xf32>
    %910 = tpu.matmul %882, %909, %cst_645 {dimension_numbers = #tpu.dot_dimension_numbers<[1], [0], [0], [1], [0, 0, 1, 1], [], []>} : vector<8x32xf32>, vector<32x32xf32>, vector<8x32xf32> -> vector<8x32xf32>
    %911 = arith.addf %907, %910 : vector<8x32xf32>
    %912 = arith.negf %890 : vector<8x32xf32>
    %913 = math.exp %912 : vector<8x32xf32>
    %cst_646 = arith.constant 1.000000e+00 : f32
    %914 = vector.broadcast %cst_646 : f32 to vector<8x32xf32>
    %915 = arith.addf %914, %913 : vector<8x32xf32>
    %916 = arith.divf %914, %915 : vector<8x32xf32>
    %917 = arith.negf %897 : vector<8x32xf32>
    %918 = math.exp %917 : vector<8x32xf32>
    %cst_647 = arith.constant 1.000000e+00 : f32
    %919 = vector.broadcast %cst_647 : f32 to vector<8x32xf32>
    %920 = arith.addf %919, %918 : vector<8x32xf32>
    %921 = arith.divf %919, %920 : vector<8x32xf32>
    %922 = math.tanh %904 : vector<8x32xf32>
    %923 = arith.negf %911 : vector<8x32xf32>
    %924 = math.exp %923 : vector<8x32xf32>
    %cst_648 = arith.constant 1.000000e+00 : f32
    %925 = vector.broadcast %cst_648 : f32 to vector<8x32xf32>
    %926 = arith.addf %925, %924 : vector<8x32xf32>
    %927 = arith.divf %925, %926 : vector<8x32xf32>
    %928 = arith.mulf %921, %883 : vector<8x32xf32>
    %929 = arith.mulf %916, %922 : vector<8x32xf32>
    %930 = arith.addf %928, %929 : vector<8x32xf32>
    %931 = math.tanh %930 : vector<8x32xf32>
    %932 = arith.mulf %927, %931 : vector<8x32xf32>
    %c0_649 = arith.constant 0 : index
    %c0_650 = arith.constant 0 : index
    %933 = vector.load %arg20[%c0_649, %c0_650] : memref<8x32xf32, #tpu.memory_space<vmem>>, vector<8x32xf32>
    tpu.vector_store %arg20[%c0_649, %c0_650], %932 {strides = array<i32>} : memref<8x32xf32, #tpu.memory_space<vmem>>, vector<8x32xf32>,
    %c0_651 = arith.constant 0 : index
    %c0_652 = arith.constant 0 : index
    %934 = vector.load %arg21[%c0_651, %c0_652] : memref<8x32xf32, #tpu.memory_space<vmem>>, vector<8x32xf32>
    tpu.vector_store %arg21[%c0_651, %c0_652], %930 {strides = array<i32>} : memref<8x32xf32, #tpu.memory_space<vmem>>, vector<8x32xf32>,
    %935 = arith.index_cast %c6_i32_617 : i32 to index
    %c0_653 = arith.constant 0 : index
    %c0_654 = arith.constant 0 : index
    %936 = vector.load %arg15[%935, %c0_653, %c0_654] : memref<8x8x32xf32, #tpu.memory_space<vmem>>, vector<1x8x32xf32>
    %937 = vector.shape_cast %936 : vector<1x8x32xf32> to vector<8x32xf32>
    %938 = vector.shape_cast %932 : vector<8x32xf32> to vector<1x8x32xf32>
    tpu.vector_store %arg15[%935, %c0_653, %c0_654], %938 {strides = array<i32>} : memref<8x8x32xf32, #tpu.memory_space<vmem>>, vector<1x8x32xf32>,
    %c7_i32_655 = arith.constant 7 : i32
    %c0_656 = arith.constant 0 : index
    %c0_657 = arith.constant 0 : index
    %939 = vector.load %arg20[%c0_656, %c0_657] : memref<8x32xf32, #tpu.memory_space<vmem>>, vector<8x32xf32>
    %c0_658 = arith.constant 0 : index
    %c0_659 = arith.constant 0 : index
    %940 = vector.load %arg21[%c0_658, %c0_659] : memref<8x32xf32, #tpu.memory_space<vmem>>, vector<8x32xf32>
    %941 = arith.index_cast %c7_i32_655 : i32 to index
    %c0_660 = arith.constant 0 : index
    %c0_661 = arith.constant 0 : index
    %942 = vector.load %arg16[%941, %c0_660, %c0_661] : memref<8x8x32xf32, #tpu.memory_space<vmem>>, vector<1x8x32xf32>
    %943 = vector.shape_cast %942 : vector<1x8x32xf32> to vector<8x32xf32>
    %c0_662 = arith.constant 0 : index
    %c0_663 = arith.constant 0 : index
    %c0_664 = arith.constant 0 : index
    %944 = vector.load %arg6[%c0_662, %c0_663, %c0_664] : memref<4x32x32xf32, #tpu.memory_space<vmem>>, vector<1x32x32xf32>
    %945 = vector.shape_cast %944 : vector<1x32x32xf32> to vector<32x32xf32>
    %cst_665 = arith.constant dense<0.000000e+00> : vector<8x32xf32>
    %946 = tpu.matmul %939, %945, %cst_665 {dimension_numbers = #tpu.dot_dimension_numbers<[1], [0], [0], [1], [0, 0, 1, 1], [], []>} : vector<8x32xf32>, vector<32x32xf32>, vector<8x32xf32> -> vector<8x32xf32>
    %947 = arith.addf %943, %946 : vector<8x32xf32>
    %948 = arith.index_cast %c7_i32_655 : i32 to index
    %c0_666 = arith.constant 0 : index
    %c0_667 = arith.constant 0 : index
    %949 = vector.load %arg17[%948, %c0_666, %c0_667] : memref<8x8x32xf32, #tpu.memory_space<vmem>>, vector<1x8x32xf32>
    %950 = vector.shape_cast %949 : vector<1x8x32xf32> to vector<8x32xf32>
    %c1_668 = arith.constant 1 : index
    %c0_669 = arith.constant 0 : index
    %c0_670 = arith.constant 0 : index
    %951 = vector.load %arg6[%c1_668, %c0_669, %c0_670] : memref<4x32x32xf32, #tpu.memory_space<vmem>>, vector<1x32x32xf32>
    %952 = vector.shape_cast %951 : vector<1x32x32xf32> to vector<32x32xf32>
    %cst_671 = arith.constant dense<0.000000e+00> : vector<8x32xf32>
    %953 = tpu.matmul %939, %952, %cst_671 {dimension_numbers = #tpu.dot_dimension_numbers<[1], [0], [0], [1], [0, 0, 1, 1], [], []>} : vector<8x32xf32>, vector<32x32xf32>, vector<8x32xf32> -> vector<8x32xf32>
    %954 = arith.addf %950, %953 : vector<8x32xf32>
    %955 = arith.index_cast %c7_i32_655 : i32 to index
    %c0_672 = arith.constant 0 : index
    %c0_673 = arith.constant 0 : index
    %956 = vector.load %arg18[%955, %c0_672, %c0_673] : memref<8x8x32xf32, #tpu.memory_space<vmem>>, vector<1x8x32xf32>
    %957 = vector.shape_cast %956 : vector<1x8x32xf32> to vector<8x32xf32>
    %c2_674 = arith.constant 2 : index
    %c0_675 = arith.constant 0 : index
    %c0_676 = arith.constant 0 : index
    %958 = vector.load %arg6[%c2_674, %c0_675, %c0_676] : memref<4x32x32xf32, #tpu.memory_space<vmem>>, vector<1x32x32xf32>
    %959 = vector.shape_cast %958 : vector<1x32x32xf32> to vector<32x32xf32>
    %cst_677 = arith.constant dense<0.000000e+00> : vector<8x32xf32>
    %960 = tpu.matmul %939, %959, %cst_677 {dimension_numbers = #tpu.dot_dimension_numbers<[1], [0], [0], [1], [0, 0, 1, 1], [], []>} : vector<8x32xf32>, vector<32x32xf32>, vector<8x32xf32> -> vector<8x32xf32>
    %961 = arith.addf %957, %960 : vector<8x32xf32>
    %962 = arith.index_cast %c7_i32_655 : i32 to index
    %c0_678 = arith.constant 0 : index
    %c0_679 = arith.constant 0 : index
    %963 = vector.load %arg19[%962, %c0_678, %c0_679] : memref<8x8x32xf32, #tpu.memory_space<vmem>>, vector<1x8x32xf32>
    %964 = vector.shape_cast %963 : vector<1x8x32xf32> to vector<8x32xf32>
    %c3_680 = arith.constant 3 : index
    %c0_681 = arith.constant 0 : index
    %c0_682 = arith.constant 0 : index
    %965 = vector.load %arg6[%c3_680, %c0_681, %c0_682] : memref<4x32x32xf32, #tpu.memory_space<vmem>>, vector<1x32x32xf32>
    %966 = vector.shape_cast %965 : vector<1x32x32xf32> to vector<32x32xf32>
    %cst_683 = arith.constant dense<0.000000e+00> : vector<8x32xf32>
    %967 = tpu.matmul %939, %966, %cst_683 {dimension_numbers = #tpu.dot_dimension_numbers<[1], [0], [0], [1], [0, 0, 1, 1], [], []>} : vector<8x32xf32>, vector<32x32xf32>, vector<8x32xf32> -> vector<8x32xf32>
    %968 = arith.addf %964, %967 : vector<8x32xf32>
    %969 = arith.negf %947 : vector<8x32xf32>
    %970 = math.exp %969 : vector<8x32xf32>
    %cst_684 = arith.constant 1.000000e+00 : f32
    %971 = vector.broadcast %cst_684 : f32 to vector<8x32xf32>
    %972 = arith.addf %971, %970 : vector<8x32xf32>
    %973 = arith.divf %971, %972 : vector<8x32xf32>
    %974 = arith.negf %954 : vector<8x32xf32>
    %975 = math.exp %974 : vector<8x32xf32>
    %cst_685 = arith.constant 1.000000e+00 : f32
    %976 = vector.broadcast %cst_685 : f32 to vector<8x32xf32>
    %977 = arith.addf %976, %975 : vector<8x32xf32>
    %978 = arith.divf %976, %977 : vector<8x32xf32>
    %979 = math.tanh %961 : vector<8x32xf32>
    %980 = arith.negf %968 : vector<8x32xf32>
    %981 = math.exp %980 : vector<8x32xf32>
    %cst_686 = arith.constant 1.000000e+00 : f32
    %982 = vector.broadcast %cst_686 : f32 to vector<8x32xf32>
    %983 = arith.addf %982, %981 : vector<8x32xf32>
    %984 = arith.divf %982, %983 : vector<8x32xf32>
    %985 = arith.mulf %978, %940 : vector<8x32xf32>
    %986 = arith.mulf %973, %979 : vector<8x32xf32>
    %987 = arith.addf %985, %986 : vector<8x32xf32>
    %988 = math.tanh %987 : vector<8x32xf32>
    %989 = arith.mulf %984, %988 : vector<8x32xf32>
    %c0_687 = arith.constant 0 : index
    %c0_688 = arith.constant 0 : index
    %990 = vector.load %arg20[%c0_687, %c0_688] : memref<8x32xf32, #tpu.memory_space<vmem>>, vector<8x32xf32>
    tpu.vector_store %arg20[%c0_687, %c0_688], %989 {strides = array<i32>} : memref<8x32xf32, #tpu.memory_space<vmem>>, vector<8x32xf32>,
    %c0_689 = arith.constant 0 : index
    %c0_690 = arith.constant 0 : index
    %991 = vector.load %arg21[%c0_689, %c0_690] : memref<8x32xf32, #tpu.memory_space<vmem>>, vector<8x32xf32>
    tpu.vector_store %arg21[%c0_689, %c0_690], %987 {strides = array<i32>} : memref<8x32xf32, #tpu.memory_space<vmem>>, vector<8x32xf32>,
    %992 = arith.index_cast %c7_i32_655 : i32 to index
    %c0_691 = arith.constant 0 : index
    %c0_692 = arith.constant 0 : index
    %993 = vector.load %arg15[%992, %c0_691, %c0_692] : memref<8x8x32xf32, #tpu.memory_space<vmem>>, vector<1x8x32xf32>
    %994 = vector.shape_cast %993 : vector<1x8x32xf32> to vector<8x32xf32>
    %995 = vector.shape_cast %989 : vector<8x32xf32> to vector<1x8x32xf32>
    tpu.vector_store %arg15[%992, %c0_691, %c0_692], %995 {strides = array<i32>} : memref<8x8x32xf32, #tpu.memory_space<vmem>>, vector<1x8x32xf32>,
    %c8_i32_693 = arith.constant 8 : i32
    %c0_694 = arith.constant 0 : index
    %c0_695 = arith.constant 0 : index
    %c0_696 = arith.constant 0 : index
    %996 = vector.load %arg15[%c0_694, %c0_695, %c0_696] : memref<8x8x32xf32, #tpu.memory_space<vmem>>, vector<8x8x32xf32>
    %cst_697 = arith.constant dense<0.000000e+00> : vector<8x8xf32>
    %997 = vector.multi_reduction <add>, %996, %cst_697 [2] : vector<8x8x32xf32> to vector<8x8xf32>
    %998 = vector.shape_cast %997 : vector<8x8xf32> to vector<8x8x1xf32>
    %cst_698 = arith.constant 3.200000e+01 : f32
    %999 = vector.broadcast %cst_698 : f32 to vector<8x8x1xf32>
    %1000 = arith.divf %998, %999 : vector<8x8x1xf32>
    %cst_699 = arith.constant dense<0xFF800000> : vector<8x1xf32>
    %1001 = vector.multi_reduction <maximumf>, %1000, %cst_699 [0] : vector<8x8x1xf32> to vector<8x1xf32>
    %1002 = vector.shape_cast %1001 : vector<8x1xf32> to vector<1x8x1xf32>
    %1003 = vector.broadcast %1002 : vector<1x8x1xf32> to vector<8x8x1xf32>
    %1004 = arith.subf %1000, %1003 : vector<8x8x1xf32>
    %1005 = math.exp %1004 : vector<8x8x1xf32>
    %cst_700 = arith.constant dense<0.000000e+00> : vector<8x1xf32>
    %1006 = vector.multi_reduction <add>, %1005, %cst_700 [0] : vector<8x8x1xf32> to vector<8x1xf32>
    %1007 = vector.shape_cast %1006 : vector<8x1xf32> to vector<1x8x1xf32>
    %1008 = tpu.reciprocal %1007 : vector<1x8x1xf32> -> vector<1x8x1xf32>
    %1009 = vector.broadcast %1008 : vector<1x8x1xf32> to vector<8x8x1xf32>
    %1010 = arith.mulf %1005, %1009 : vector<8x8x1xf32>
    %1011 = vector.broadcast %1010 : vector<8x8x1xf32> to vector<8x8x32xf32>
    %1012 = arith.mulf %1011, %996 : vector<8x8x32xf32>
    %cst_701 = arith.constant dense<0.000000e+00> : vector<8x32xf32>
    %1013 = vector.multi_reduction <add>, %1012, %cst_701 [0] : vector<8x8x32xf32> to vector<8x32xf32>
    %c0_702 = arith.constant 0 : index
    %c0_703 = arith.constant 0 : index
    %1014 = vector.load %arg10[%c0_702, %c0_703] : memref<1x32xf32, #tpu.memory_space<vmem>>, vector<1x32xf32>
    %1015 = vector.broadcast %1014 : vector<1x32xf32> to vector<8x32xf32>
    %1016 = arith.subf %1013, %1015 : vector<8x32xf32>
    %c0_704 = arith.constant 0 : index
    %c0_705 = arith.constant 0 : index
    %1017 = vector.load %arg11[%c0_704, %c0_705] : memref<1x32xf32, #tpu.memory_space<vmem>>, vector<1x32xf32>
    %cst_706 = arith.constant 9.99999974E-6 : f32
    %1018 = vector.broadcast %cst_706 : f32 to vector<1x32xf32>
    %1019 = arith.addf %1017, %1018 : vector<1x32xf32>
    %1020 = math.rsqrt %1019 : vector<1x32xf32>
    %1021 = vector.broadcast %1020 : vector<1x32xf32> to vector<8x32xf32>
    %1022 = arith.mulf %1016, %1021 : vector<8x32xf32>
    %c0_707 = arith.constant 0 : index
    %c0_708 = arith.constant 0 : index
    %1023 = vector.load %arg8[%c0_707, %c0_708] : memref<1x32xf32, #tpu.memory_space<vmem>>, vector<1x32xf32>
    %1024 = vector.broadcast %1023 : vector<1x32xf32> to vector<8x32xf32>
    %1025 = arith.mulf %1022, %1024 : vector<8x32xf32>
    %c0_709 = arith.constant 0 : index
    %c0_710 = arith.constant 0 : index
    %1026 = vector.load %arg9[%c0_709, %c0_710] : memref<1x32xf32, #tpu.memory_space<vmem>>, vector<1x32xf32>
    %1027 = vector.broadcast %1026 : vector<1x32xf32> to vector<8x32xf32>
    %1028 = arith.addf %1025, %1027 : vector<8x32xf32>
    %c0_711 = arith.constant 0 : index
    %c0_712 = arith.constant 0 : index
    %1029 = vector.load %arg12[%c0_711, %c0_712] : memref<32x3xf32, #tpu.memory_space<vmem>>, vector<32x3xf32>
    %cst_713 = arith.constant dense<0.000000e+00> : vector<8x3xf32>
    %1030 = tpu.matmul %1028, %1029, %cst_713 {dimension_numbers = #tpu.dot_dimension_numbers<[1], [0], [0], [1], [0, 0, 1, 1], [], []>} : vector<8x32xf32>, vector<32x3xf32>, vector<8x3xf32> -> vector<8x3xf32>
    %c0_714 = arith.constant 0 : index
    %c0_715 = arith.constant 0 : index
    %1031 = vector.load %arg13[%c0_714, %c0_715] : memref<1x3xf32, #tpu.memory_space<vmem>>, vector<1x3xf32>
    %1032 = vector.broadcast %1031 : vector<1x3xf32> to vector<8x3xf32>
    %1033 = arith.addf %1030, %1032 : vector<8x3xf32>
    %c0_716 = arith.constant 0 : index
    %c0_717 = arith.constant 0 : index
    %1034 = vector.load %arg14[%c0_716, %c0_717] : memref<8x3xf32, #tpu.memory_space<vmem>>, vector<8x3xf32>
    tpu.vector_store %arg14[%c0_716, %c0_717], %1033 {strides = array<i32>} : memref<8x3xf32, #tpu.memory_space<vmem>>, vector<8x3xf32>,
    return
  }
  func.func @transform_0(%arg0: i32) -> (i32, i32, i32) {
    %c0_i32 = arith.constant 0 : i32
    %c0_i32_0 = arith.constant 0 : i32
    %c0_i32_1 = arith.constant 0 : i32
    return %c0_i32, %arg0, %c0_i32_0 : i32, i32, i32
  }
  func.func @transform_1(%arg0: i32) -> (i32, i32, i32) {
    %c0_i32 = arith.constant 0 : i32
    %c0_i32_0 = arith.constant 0 : i32
    %c0_i32_1 = arith.constant 0 : i32
    %c0_i32_2 = arith.constant 0 : i32
    return %c0_i32, %c0_i32_0, %c0_i32_1 : i32, i32, i32
  }
  func.func @transform_2(%arg0: i32) -> (i32, i32, i32) {
    %c0_i32 = arith.constant 0 : i32
    %c0_i32_0 = arith.constant 0 : i32
    %c0_i32_1 = arith.constant 0 : i32
    %c0_i32_2 = arith.constant 0 : i32
    return %c0_i32, %c0_i32_0, %c0_i32_1 : i32, i32, i32
  }
  func.func @transform_3(%arg0: i32) -> (i32, i32, i32) {
    %c0_i32 = arith.constant 0 : i32
    %c0_i32_0 = arith.constant 0 : i32
    %c0_i32_1 = arith.constant 0 : i32
    %c0_i32_2 = arith.constant 0 : i32
    return %c0_i32, %c0_i32_0, %c0_i32_1 : i32, i32, i32
  }
  func.func @transform_4(%arg0: i32) -> (i32, i32, i32) {
    %c0_i32 = arith.constant 0 : i32
    %c0_i32_0 = arith.constant 0 : i32
    %c0_i32_1 = arith.constant 0 : i32
    %c0_i32_2 = arith.constant 0 : i32
    return %c0_i32, %c0_i32_0, %c0_i32_1 : i32, i32, i32
  }
  func.func @transform_5(%arg0: i32) -> (i32, i32, i32) {
    %c0_i32 = arith.constant 0 : i32
    %c0_i32_0 = arith.constant 0 : i32
    %c0_i32_1 = arith.constant 0 : i32
    %c0_i32_2 = arith.constant 0 : i32
    return %c0_i32, %c0_i32_0, %c0_i32_1 : i32, i32, i32
  }
  func.func @transform_6(%arg0: i32) -> (i32, i32, i32) {
    %c0_i32 = arith.constant 0 : i32
    %c0_i32_0 = arith.constant 0 : i32
    %c0_i32_1 = arith.constant 0 : i32
    %c0_i32_2 = arith.constant 0 : i32
    return %c0_i32, %c0_i32_0, %c0_i32_1 : i32, i32, i32
  }
  func.func @transform_7(%arg0: i32) -> (i32, i32) {
    %c0_i32 = arith.constant 0 : i32
    %c0_i32_0 = arith.constant 0 : i32
    %c0_i32_1 = arith.constant 0 : i32
    return %c0_i32, %c0_i32_0 : i32, i32
  }
  func.func @transform_8(%arg0: i32) -> (i32, i32) {
    %c0_i32 = arith.constant 0 : i32
    %c0_i32_0 = arith.constant 0 : i32
    %c0_i32_1 = arith.constant 0 : i32
    return %c0_i32, %c0_i32_0 : i32, i32
  }
  func.func @transform_9(%arg0: i32) -> (i32, i32) {
    %c0_i32 = arith.constant 0 : i32
    %c0_i32_0 = arith.constant 0 : i32
    %c0_i32_1 = arith.constant 0 : i32
    return %c0_i32, %c0_i32_0 : i32, i32
  }
  func.func @transform_10(%arg0: i32) -> (i32, i32) {
    %c0_i32 = arith.constant 0 : i32
    %c0_i32_0 = arith.constant 0 : i32
    %c0_i32_1 = arith.constant 0 : i32
    return %c0_i32, %c0_i32_0 : i32, i32
  }
  func.func @transform_11(%arg0: i32) -> (i32, i32) {
    %c0_i32 = arith.constant 0 : i32
    %c0_i32_0 = arith.constant 0 : i32
    %c0_i32_1 = arith.constant 0 : i32
    return %c0_i32, %c0_i32_0 : i32, i32
  }
  func.func @transform_12(%arg0: i32) -> (i32, i32) {
    %c0_i32 = arith.constant 0 : i32
    %c0_i32_0 = arith.constant 0 : i32
    %c0_i32_1 = arith.constant 0 : i32
    return %c0_i32, %c0_i32_0 : i32, i32
  }
  func.func @transform_13(%arg0: i32) -> (i32, i32) {
    %c0_i32 = arith.constant 0 : i32
    %c0_i32_0 = arith.constant 0 : i32
    return %arg0, %c0_i32 : i32, i32
  }
}

</mosaic_0001>

<llo_original>
// kernel: lstm_attention_reg_forward.1
$region0: #{lstm_attention_reg_forward.1}
  #allocation0 [shape = 'u32[]', space=smem, size = 0x4, offset = 0x4, fixed_abs, tag = 'smem constant byte address 0x4 - core index']
  #allocation1 [shape = 'u32[144,128]{1,0:T(1,128)}', space=vmem, size = 0x12000, scoped, tag = 'internal scratch']
  #allocation2 [shape = 'f32[8,8,32]{2,1,0:T(8,128)}', space=vmem, size = 0x8000, scoped, tag = 'scratch operand']
  #allocation3 [shape = 'f32[8,8,32]{2,1,0:T(8,128)}', space=vmem, size = 0x8000, scoped, tag = 'scratch operand']
  #allocation4 [shape = 'f32[8,8,32]{2,1,0:T(8,128)}', space=vmem, size = 0x8000, scoped, tag = 'scratch operand']
  #allocation5 [shape = 'f32[8,8,32]{2,1,0:T(8,128)}', space=vmem, size = 0x8000, scoped, tag = 'scratch operand']
  #allocation6 [shape = 'f32[8,8,32]{2,1,0:T(8,128)}', space=vmem, size = 0x8000, scoped, tag = 'scratch operand']
  #allocation7 [shape = 'f32[8,32]{1,0:T(8,128)}', space=vmem, size = 0x1000, scoped, tag = 'scratch operand']
  #allocation8 [shape = 'f32[8,32]{1,0:T(8,128)}', space=vmem, size = 0x1000, scoped, tag = 'scratch operand']
  %s0 = inlined_call_operand.vmem [shape: f32[8,8,4], index: 0, kind: input, shape index: {}]
  %s1 = inlined_call_operand.vmem [shape: f32[4,4,32], index: 1, kind: input, shape index: {}]
  %s2 = inlined_call_operand.hbm [shape: f32[4,32,32], index: 2, kind: input, shape index: {}]
  %s3 = inlined_call_operand.vmem [shape: f32[4,1,32], index: 3, kind: input, shape index: {}]
  %s4 = inlined_call_operand.hbm [shape: f32[4,32,32], index: 4, kind: input, shape index: {}]
  %s5 = inlined_call_operand.hbm [shape: f32[4,32,32], index: 5, kind: input, shape index: {}]
  %s6 = inlined_call_operand.vmem [shape: f32[4,1,32], index: 6, kind: input, shape index: {}]
  %s7 = inlined_call_operand.vmem [shape: f32[1,32], index: 7, kind: input, shape index: {}, may-alias: {7,10}]
  %s8 = inlined_call_operand.vmem [shape: f32[1,32], index: 8, kind: input, shape index: {}, may-alias: {8,9}]
  %s9 = inlined_call_operand.vmem [shape: f32[1,32], index: 9, kind: input, shape index: {}, may-alias: {8,9}]
  %s10 = inlined_call_operand.vmem [shape: f32[1,32], index: 10, kind: input, shape index: {}, may-alias: {7,10}]
  %s11 = inlined_call_operand.vmem [shape: f32[32,3], index: 11, kind: input, shape index: {}]
  %s12 = inlined_call_operand.vmem [shape: f32[1,3], index: 12, kind: input, shape index: {}]
  %s13 = inlined_call_operand.vmem [shape: f32[8,3], index: 13, kind: output, shape index: {}]
  %s14 = sld [smem:[#allocation0]]
  $region74: #{lstm_attention_reg_forward.1} parent=0
    _
  %s16 = ssub.s32 1, %s14
  %s17 = scalar_select 0, %s16, %s14
  $region1: #{lstm_attention_reg_forward.1} parent=0
    #allocation9 [shape = 'u8[65536]{0}', space=vmem, size = 0x10000, scoped, tag = 'input window, operand 2, single buffered']
    #allocation10 [shape = 's32[1]{0}', space=sflag, size = 0x4, scoped, tag = 'scoped memory for lstm_attention_reg_forward.1']
    #allocation11 [shape = 'u8[65536]{0}', space=vmem, size = 0x10000, scoped, tag = 'input window, operand 4, single buffered']
    #allocation12 [shape = 's32[1]{0}', space=sflag, size = 0x4, scoped, tag = 'scoped memory for lstm_attention_reg_forward.1']
    #allocation13 [shape = 'u8[65536]{0}', space=vmem, size = 0x10000, scoped, tag = 'input window, operand 5, single buffered']
    %18 = vsyncpa [#allocation10], 0
    %19 = vsyncpa [#allocation12], 0
    // Predicated region
    $region2: #{lstm_attention_reg_forward.1} parent=1 // pred_check
      _
    $region3: #{lstm_attention_reg_forward.1} parent=1 // pred_check_branch
      %21 = sbr.rel (0) target = $region5
    $region4: #{lstm_attention_reg_forward.1} parent=1 // pred_region
      _
    $region5: #{lstm_attention_reg_forward.1} parent=1 // pred_fallthru
      _
    // Predicated region
    $region6: #{lstm_attention_reg_forward.1} parent=1 // pred_check
      _
    $region7: #{lstm_attention_reg_forward.1} parent=1 // pred_check_branch
      %23 = sbr.rel (0) target = $region9
    $region8: #{lstm_attention_reg_forward.1} parent=1 // pred_region
      _
    $region9: #{lstm_attention_reg_forward.1} parent=1 // pred_fallthru
      _
    // Predicated region
    $region10: #{lstm_attention_reg_forward.1} parent=1 // pred_check
      _
    $region11: #{lstm_attention_reg_forward.1} parent=1 // pred_check_branch
      %25 = sbr.rel (0) target = $region13
    $region12: #{lstm_attention_reg_forward.1} parent=1 // pred_region
      %s27 = ssub.s32 2048, 2048
      %28 = vsyncadd [#allocation10], %s27
      %s29 = sshll.u32 [#allocation9], 4
      %s30 = int_to_ptr.vmem [resolvable:$true] %s29
      %35 = dma.hbm_to_vmem [thread:$0]  %s2, 2048, %s30, [#allocation10], 128, 128, 8
    $region13: #{lstm_attention_reg_forward.1} parent=1 // pred_fallthru
      _
    // Predicated region
    $region14: #{lstm_attention_reg_forward.1} parent=1 // pred_check
      _
    $region15: #{lstm_attention_reg_forward.1} parent=1 // pred_check_branch
      %37 = sbr.rel (0) target = $region17
    $region16: #{lstm_attention_reg_forward.1} parent=1 // pred_region
      _
    $region17: #{lstm_attention_reg_forward.1} parent=1 // pred_fallthru
      _
    // Predicated region
    $region18: #{lstm_attention_reg_forward.1} parent=1 // pred_check
      _
    $region19: #{lstm_attention_reg_forward.1} parent=1 // pred_check_branch
      %39 = sbr.rel (0) target = $region21
    $region20: #{lstm_attention_reg_forward.1} parent=1 // pred_region
      %s41 = ssub.s32 2048, 2048
      %42 = vsyncadd [#allocation12], %s41
      %s43 = sshll.u32 [#allocation11], 4
      %s44 = int_to_ptr.vmem [resolvable:$true] %s43
      %49 = dma.hbm_to_vmem [thread:$0]  %s4, 2048, %s44, [#allocation12], 128, 128, 8
    $region21: #{lstm_attention_reg_forward.1} parent=1 // pred_fallthru
      _
    // Predicated region
    $region22: #{lstm_attention_reg_forward.1} parent=1 // pred_check
      _
    $region23: #{lstm_attention_reg_forward.1} parent=1 // pred_check_branch
      %51 = sbr.rel (0) target = $region25
    $region24: #{lstm_attention_reg_forward.1} parent=1 // pred_region
      %s53 = ssub.s32 2048, 2048
      %54 = vsyncadd [#allocation12], %s53
      %s55 = sshll.u32 [#allocation13], 4
      %s56 = int_to_ptr.vmem [resolvable:$true] %s55
      %61 = dma.hbm_to_vmem [thread:$0]  %s5, 2048, %s56, [#allocation12], 128, 128, 8
    $region25: #{lstm_attention_reg_forward.1} parent=1 // pred_fallthru
      _
    // Predicated region
    $region26: #{lstm_attention_reg_forward.1} parent=1 // pred_check
      _
    $region27: #{lstm_attention_reg_forward.1} parent=1 // pred_check_branch
      %63 = sbr.rel (0) target = $region29
    $region28: #{lstm_attention_reg_forward.1} parent=1 // pred_region
      _
    $region29: #{lstm_attention_reg_forward.1} parent=1 // pred_fallthru
      _
    // Predicated region
    $region30: #{lstm_attention_reg_forward.1} parent=1 // pred_check
      _
    $region31: #{lstm_attention_reg_forward.1} parent=1 // pred_check_branch
      %65 = sbr.rel (0) target = $region33
    $region32: #{lstm_attention_reg_forward.1} parent=1 // pred_region
      _
    $region33: #{lstm_attention_reg_forward.1} parent=1 // pred_fallthru
      _
    // Predicated region
    $region34: #{lstm_attention_reg_forward.1} parent=1 // pred_check
      _
    $region35: #{lstm_attention_reg_forward.1} parent=1 // pred_check_branch
      %67 = sbr.rel (0) target = $region37
    $region36: #{lstm_attention_reg_forward.1} parent=1 // pred_region
      _
    $region37: #{lstm_attention_reg_forward.1} parent=1 // pred_fallthru
      _
    // Predicated region
    $region38: #{lstm_attention_reg_forward.1} parent=1 // pred_check
      _
    $region39: #{lstm_attention_reg_forward.1} parent=1 // pred_check_branch
      %69 = sbr.rel (0) target = $region41
    $region40: #{lstm_attention_reg_forward.1} parent=1 // pred_region
      _
    $region41: #{lstm_attention_reg_forward.1} parent=1 // pred_fallthru
      _
    // Predicated region
    $region42: #{lstm_attention_reg_forward.1} parent=1 // pred_check
      _
    $region43: #{lstm_attention_reg_forward.1} parent=1 // pred_check_branch
      %71 = sbr.rel (0) target = $region45
    $region44: #{lstm_attention_reg_forward.1} parent=1 // pred_region
      _
    $region45: #{lstm_attention_reg_forward.1} parent=1 // pred_fallthru
      _
    // Predicated region
    $region46: #{lstm_attention_reg_forward.1} parent=1 // pred_check
      _
    $region47: #{lstm_attention_reg_forward.1} parent=1 // pred_check_branch
      %73 = sbr.rel (0) target = $region49
    $region48: #{lstm_attention_reg_forward.1} parent=1 // pred_region
      _
    $region49: #{lstm_attention_reg_forward.1} parent=1 // pred_fallthru
      _
    // Predicated region
    $region50: #{lstm_attention_reg_forward.1} parent=1 // pred_check
      _
    $region51: #{lstm_attention_reg_forward.1} parent=1 // pred_check_branch
      %75 = sbr.rel (0) target = $region53
    $region52: #{lstm_attention_reg_forward.1} parent=1 // pred_region
      _
    $region53: #{lstm_attention_reg_forward.1} parent=1 // pred_fallthru
      _
    // Predicated region
    $region54: #{lstm_attention_reg_forward.1} parent=1 // pred_check
      _
    $region55: #{lstm_attention_reg_forward.1} parent=1 // pred_check_branch
      %77 = sbr.rel (0) target = $region57
    $region56: #{lstm_attention_reg_forward.1} parent=1 // pred_region
      %78 = dma.done [#allocation10], 2048
    $region57: #{lstm_attention_reg_forward.1} parent=1 // pred_fallthru
      _
    // Predicated region
    $region58: #{lstm_attention_reg_forward.1} parent=1 // pred_check
      _
    $region59: #{lstm_attention_reg_forward.1} parent=1 // pred_check_branch
      %80 = sbr.rel (0) target = $region61
    $region60: #{lstm_attention_reg_forward.1} parent=1 // pred_region
      %81 = dma.done [#allocation12], 2048
    $region61: #{lstm_attention_reg_forward.1} parent=1 // pred_fallthru
      _
    // Predicated region
    $region62: #{lstm_attention_reg_forward.1} parent=1 // pred_check
      _
    $region63: #{lstm_attention_reg_forward.1} parent=1 // pred_check_branch
      %83 = sbr.rel (0) target = $region65
    $region64: #{lstm_attention_reg_forward.1} parent=1 // pred_region
      %84 = dma.done [#allocation12], 2048
    $region65: #{lstm_attention_reg_forward.1} parent=1 // pred_fallthru
      _
    %v85 = vld [vmem:[%s0] sm:$0xff]
    %v86 = vld [vmem:[%s0 + $0x8] sm:$0xff]
    %v87 = vld [vmem:[%s0 + $0x10] sm:$0xff]
    %v88 = vld [vmem:[%s0 + $0x18] sm:$0xff]
    %v89 = vld [vmem:[%s0 + $0x20] sm:$0xff]
    %v90 = vld [vmem:[%s0 + $0x28] sm:$0xff]
    %v91 = vld [vmem:[%s0 + $0x30] sm:$0xff]
    %v92 = vld [vmem:[%s0 + $0x38] sm:$0xff]
    %v93 = vld [vmem:[%s1] sm:$0xf]
    %v94 = vld [vmem:[%s3] sm:$0x1]
    %v96 = vlaneseq
    %v97 = vshrl.u32 %v96, 7
    %v98 = vsub.s32 0, %v97
    %v99 = vrot.slane %v94, %v98
    %vm101 = vcmask 31744
    %v103 = vsel %vm101, %v85, 0
    %v106 = vsel %vm101, %v86, 0
    %v109 = vsel %vm101, %v87, 0
    %v112 = vsel %vm101, %v88, 0
    %v115 = vsel %vm101, %v89, 0
    %v118 = vsel %vm101, %v90, 0
    %v121 = vsel %vm101, %v91, 0
    %v124 = vsel %vm101, %v92, 0
    %vm126 = vcmask 1043456
    %v128 = vsel %vm126, %v93, 0
    %130 = vmatprep.subr.mxu0 0.0
    %131 = vmatpush1.msra.mxu0 0.0
    %132 = vmatprep.subr.mxu0 0.0
    %133 = vmatpush1.msra.mxu0 0.0
    %134 = vmatprep.subr.mxu0 0.0
    %135 = vmatpush1.msra.mxu0 0.0
    %136 = vmatprep.subr.mxu0 0.0
    %137 = vmatpush1.msra.mxu0 0.0
    %138 = vmatprep.subr.mxu0 0.0
    %139 = vmatpush1.msra.mxu0 0.0
    %140 = vmatprep.subr.mxu0 0.0
    %141 = vmatpush1.msra.mxu0 0.0
    %142 = vmatprep.subr.mxu0 0.0
    %143 = vmatpush1.msra.mxu0 0.0
    %144 = vmatprep.subr.mxu0 0.0
    %145 = vmatpush1.msra.mxu0 0.0
    %146 = vmatprep.subr.mxu0 0.0
    %147 = vmatpush1.msra.mxu0 0.0
    %148 = vmatprep.subr.mxu0 0.0
    %149 = vmatpush1.msra.mxu0 0.0
    %150 = vmatprep.subr.mxu0 0.0
    %151 = vmatpush1.msra.mxu0 0.0
    %152 = vmatprep.subr.mxu0 0.0
    %153 = vmatpush1.msra.mxu0 0.0
    %154 = vmatprep.subr.mxu0 0.0
    %155 = vmatpush1.msra.mxu0 0.0
    %156 = vmatprep.subr.mxu0 0.0
    %157 = vmatpush1.msra.mxu0 0.0
    %158 = vmatprep.subr.mxu0 0.0
    %159 = vmatpush1.msra.mxu0 0.0
    %160 = vmatprep.subr.mxu0 0.0
    %161 = vmatpush1.msra.mxu0 %v128
    %162 = vmatprep.subr.mxu0 0.0
    %163 = vmatpush2.msra.mxu0 0.0
    %164 = vmatprep.subr.mxu0 0.0
    %165 = vmatpush2.msra.mxu0 0.0
    %166 = vmatprep.subr.mxu0 0.0
    %167 = vmatpush2.msra.mxu0 0.0
    %168 = vmatprep.subr.mxu0 0.0
    %169 = vmatpush2.msra.mxu0 0.0
    %170 = vmatprep.subr.mxu0 0.0
    %171 = vmatpush2.msra.mxu0 0.0
    %172 = vmatprep.subr.mxu0 0.0
    %173 = vmatpush2.msra.mxu0 0.0
    %174 = vmatprep.subr.mxu0 0.0
    %175 = vmatpush2.msra.mxu0 0.0
    %176 = vmatprep.subr.mxu0 0.0
    %177 = vmatpush2.msra.mxu0 0.0
    %178 = vmatprep.subr.mxu0 0.0
    %179 = vmatpush2.msra.mxu0 0.0
    %180 = vmatprep.subr.mxu0 0.0
    %181 = vmatpush2.msra.mxu0 0.0
    %182 = vmatprep.subr.mxu0 0.0
    %183 = vmatpush2.msra.mxu0 0.0
    %184 = vmatprep.subr.mxu0 0.0
    %185 = vmatpush2.msra.mxu0 0.0
    %186 = vmatprep.subr.mxu0 0.0
    %187 = vmatpush2.msra.mxu0 0.0
    %188 = vmatprep.subr.mxu0 0.0
    %189 = vmatpush2.msra.mxu0 0.0
    %190 = vmatprep.subr.mxu0 0.0
    %191 = vmatpush2.msra.mxu0 0.0
    %192 = vmatprep.subr.mxu0 0.0
    %193 = vmatpush2.msra.mxu0 0.0
    %194 = vmatprep.mubr.f32.mxu0 0.0
    %195 = vmatmul.mubr.f32.gmra.mxu0 %v103
    %v196 = vpop.f32.mrf.mxu0
    %v197 = vadd.f32 %v99, %v196
    %v198 = vpop.f32.mrf.mxu0
    %199 = vmatprep.mubr.f32.mxu0 0.0
    %200 = vmatmul.mubr.f32.gmra.mxu0 %v106
    %v201 = vpop.f32.mrf.mxu0
    %v202 = vadd.f32 %v99, %v201
    %v203 = vpop.f32.mrf.mxu0
    %204 = vmatprep.mubr.f32.mxu0 0.0
    %205 = vmatmul.mubr.f32.gmra.mxu0 %v109
    %v206 = vpop.f32.mrf.mxu0
    %v207 = vadd.f32 %v99, %v206
    %v208 = vpop.f32.mrf.mxu0
    %209 = vmatprep.mubr.f32.mxu0 0.0
    %210 = vmatmul.mubr.f32.gmra.mxu0 %v112
    %v211 = vpop.f32.mrf.mxu0
    %v212 = vadd.f32 %v99, %v211
    %v213 = vpop.f32.mrf.mxu0
    %214 = vmatprep.mubr.f32.mxu0 0.0
    %215 = vmatmul.mubr.f32.gmra.mxu0 %v115
    %v216 = vpop.f32.mrf.mxu0
    %v217 = vadd.f32 %v99, %v216
    %v218 = vpop.f32.mrf.mxu0
    %219 = vmatprep.mubr.f32.mxu0 0.0
    %220 = vmatmul.mubr.f32.gmra.mxu0 %v118
    %v221 = vpop.f32.mrf.mxu0
    %v222 = vadd.f32 %v99, %v221
    %v223 = vpop.f32.mrf.mxu0
    %224 = vmatprep.mubr.f32.mxu0 0.0
    %225 = vmatmul.mubr.f32.gmra.mxu0 %v121
    %v226 = vpop.f32.mrf.mxu0
    %v227 = vadd.f32 %v99, %v226
    %v228 = vpop.f32.mrf.mxu0
    %229 = vmatprep.mubr.f32.mxu0 0.0
    %230 = vmatmul.mubr.f32.gmra.mxu0 %v124
    %v231 = vpop.f32.mrf.mxu0
    %v232 = vadd.f32 %v99, %v231
    %v233 = vpop.f32.mrf.mxu0
    %234 = vdwg.mxu0
    %vm235 = vcmask 261120
    %236 = vst.msk [vmem:[#allocation3] sm:$0xff] %vm235, %v197
    %237 = vst.msk [vmem:[#allocation3 + $0x8] sm:$0xff] %vm235, %v202
    %238 = vst.msk [vmem:[#allocation3 + $0x10] sm:$0xff] %vm235, %v207
    %239 = vst.msk [vmem:[#allocation3 + $0x18] sm:$0xff] %vm235, %v212
    %240 = vst.msk [vmem:[#allocation3 + $0x20] sm:$0xff] %vm235, %v217
    %241 = vst.msk [vmem:[#allocation3 + $0x28] sm:$0xff] %vm235, %v222
    %242 = vst.msk [vmem:[#allocation3 + $0x30] sm:$0xff] %vm235, %v227
    %243 = vst.msk [vmem:[#allocation3 + $0x38] sm:$0xff] %vm235, %v232
    %s244 = scalar_lea.vmem %s1, 4
    %v245 = vld [vmem:[%s244] sm:$0xf]
    %s246 = scalar_lea.vmem %s3, 1
    %v247 = vld [vmem:[%s246] sm:$0x1]
    %v249 = vlaneseq
    %v250 = vshrl.u32 %v249, 7
    %v251 = vsub.s32 0, %v250
    %v252 = vrot.slane %v247, %v251
    %v255 = vsel %vm126, %v245, 0
    %257 = vmatprep.subr.mxu0 0.0
    %258 = vmatpush1.msra.mxu0 0.0
    %259 = vmatprep.subr.mxu0 0.0
    %260 = vmatpush1.msra.mxu0 0.0
    %261 = vmatprep.subr.mxu0 0.0
    %262 = vmatpush1.msra.mxu0 0.0
    %263 = vmatprep.subr.mxu0 0.0
    %264 = vmatpush1.msra.mxu0 0.0
    %265 = vmatprep.subr.mxu0 0.0
    %266 = vmatpush1.msra.mxu0 0.0
    %267 = vmatprep.subr.mxu0 0.0
    %268 = vmatpush1.msra.mxu0 0.0
    %269 = vmatprep.subr.mxu0 0.0
    %270 = vmatpush1.msra.mxu0 0.0
    %271 = vmatprep.subr.mxu0 0.0
    %272 = vmatpush1.msra.mxu0 0.0
    %273 = vmatprep.subr.mxu0 0.0
    %274 = vmatpush1.msra.mxu0 0.0
    %275 = vmatprep.subr.mxu0 0.0
    %276 = vmatpush1.msra.mxu0 0.0
    %277 = vmatprep.subr.mxu0 0.0
    %278 = vmatpush1.msra.mxu0 0.0
    %279 = vmatprep.subr.mxu0 0.0
    %280 = vmatpush1.msra.mxu0 0.0
    %281 = vmatprep.subr.mxu0 0.0
    %282 = vmatpush1.msra.mxu0 0.0
    %283 = vmatprep.subr.mxu0 0.0
    %284 = vmatpush1.msra.mxu0 0.0
    %285 = vmatprep.subr.mxu0 0.0
    %286 = vmatpush1.msra.mxu0 0.0
    %287 = vmatprep.subr.mxu0 0.0
    %288 = vmatpush1.msra.mxu0 %v255
    %289 = vmatprep.subr.mxu0 0.0
    %290 = vmatpush2.msra.mxu0 0.0
    %291 = vmatprep.subr.mxu0 0.0
    %292 = vmatpush2.msra.mxu0 0.0
    %293 = vmatprep.subr.mxu0 0.0
    %294 = vmatpush2.msra.mxu0 0.0
    %295 = vmatprep.subr.mxu0 0.0
    %296 = vmatpush2.msra.mxu0 0.0
    %297 = vmatprep.subr.mxu0 0.0
    %298 = vmatpush2.msra.mxu0 0.0
    %299 = vmatprep.subr.mxu0 0.0
    %300 = vmatpush2.msra.mxu0 0.0
    %301 = vmatprep.subr.mxu0 0.0
    %302 = vmatpush2.msra.mxu0 0.0
    %303 = vmatprep.subr.mxu0 0.0
    %304 = vmatpush2.msra.mxu0 0.0
    %305 = vmatprep.subr.mxu0 0.0
    %306 = vmatpush2.msra.mxu0 0.0
    %307 = vmatprep.subr.mxu0 0.0
    %308 = vmatpush2.msra.mxu0 0.0
    %309 = vmatprep.subr.mxu0 0.0
    %310 = vmatpush2.msra.mxu0 0.0
    %311 = vmatprep.subr.mxu0 0.0
    %312 = vmatpush2.msra.mxu0 0.0
    %313 = vmatprep.subr.mxu0 0.0
    %314 = vmatpush2.msra.mxu0 0.0
    %315 = vmatprep.subr.mxu0 0.0
    %316 = vmatpush2.msra.mxu0 0.0
    %317 = vmatprep.subr.mxu0 0.0
    %318 = vmatpush2.msra.mxu0 0.0
    %319 = vmatprep.subr.mxu0 0.0
    %320 = vmatpush2.msra.mxu0 0.0
    %321 = vmatprep.mubr.f32.mxu0 0.0
    %322 = vmatmul.mubr.f32.gmra.mxu0 %v103
    %v323 = vpop.f32.mrf.mxu0
    %v324 = vadd.f32 %v252, %v323
    %v325 = vpop.f32.mrf.mxu0
    %326 = vmatprep.mubr.f32.mxu0 0.0
    %327 = vmatmul.mubr.f32.gmra.mxu0 %v106
    %v328 = vpop.f32.mrf.mxu0
    %v329 = vadd.f32 %v252, %v328
    %v330 = vpop.f32.mrf.mxu0
    %331 = vmatprep.mubr.f32.mxu0 0.0
    %332 = vmatmul.mubr.f32.gmra.mxu0 %v109
    %v333 = vpop.f32.mrf.mxu0
    %v334 = vadd.f32 %v252, %v333
    %v335 = vpop.f32.mrf.mxu0
    %336 = vmatprep.mubr.f32.mxu0 0.0
    %337 = vmatmul.mubr.f32.gmra.mxu0 %v112
    %v338 = vpop.f32.mrf.mxu0
    %v339 = vadd.f32 %v252, %v338
    %v340 = vpop.f32.mrf.mxu0
    %341 = vmatprep.mubr.f32.mxu0 0.0
    %342 = vmatmul.mubr.f32.gmra.mxu0 %v115
    %v343 = vpop.f32.mrf.mxu0
    %v344 = vadd.f32 %v252, %v343
    %v345 = vpop.f32.mrf.mxu0
    %346 = vmatprep.mubr.f32.mxu0 0.0
    %347 = vmatmul.mubr.f32.gmra.mxu0 %v118
    %v348 = vpop.f32.mrf.mxu0
    %v349 = vadd.f32 %v252, %v348
    %v350 = vpop.f32.mrf.mxu0
    %351 = vmatprep.mubr.f32.mxu0 0.0
    %352 = vmatmul.mubr.f32.gmra.mxu0 %v121
    %v353 = vpop.f32.mrf.mxu0
    %v354 = vadd.f32 %v252, %v353
    %v355 = vpop.f32.mrf.mxu0
    %356 = vmatprep.mubr.f32.mxu0 0.0
    %357 = vmatmul.mubr.f32.gmra.mxu0 %v124
    %v358 = vpop.f32.mrf.mxu0
    %v359 = vadd.f32 %v252, %v358
    %v360 = vpop.f32.mrf.mxu0
    %361 = vdwg.mxu0
    %362 = vst.msk [vmem:[#allocation4] sm:$0xff] %vm235, %v324
    %363 = vst.msk [vmem:[#allocation4 + $0x8] sm:$0xff] %vm235, %v329
    %364 = vst.msk [vmem:[#allocation4 + $0x10] sm:$0xff] %vm235, %v334
    %365 = vst.msk [vmem:[#allocation4 + $0x18] sm:$0xff] %vm235, %v339
    %366 = vst.msk [vmem:[#allocation4 + $0x20] sm:$0xff] %vm235, %v344
    %367 = vst.msk [vmem:[#allocation4 + $0x28] sm:$0xff] %vm235, %v349
    %368 = vst.msk [vmem:[#allocation4 + $0x30] sm:$0xff] %vm235, %v354
    %369 = vst.msk [vmem:[#allocation4 + $0x38] sm:$0xff] %vm235, %v359
    %s370 = scalar_lea.vmem %s1, 8
    %v371 = vld [vmem:[%s370] sm:$0xf]
    %s372 = scalar_lea.vmem %s3, 2
    %v373 = vld [vmem:[%s372] sm:$0x1]
    %v375 = vlaneseq
    %v376 = vshrl.u32 %v375, 7
    %v377 = vsub.s32 0, %v376
    %v378 = vrot.slane %v373, %v377
    %v381 = vsel %vm126, %v371, 0
    %383 = vmatprep.subr.mxu0 0.0
    %384 = vmatpush1.msra.mxu0 0.0
    %385 = vmatprep.subr.mxu0 0.0
    %386 = vmatpush1.msra.mxu0 0.0
    %387 = vmatprep.subr.mxu0 0.0
    %388 = vmatpush1.msra.mxu0 0.0
    %389 = vmatprep.subr.mxu0 0.0
    %390 = vmatpush1.msra.mxu0 0.0
    %391 = vmatprep.subr.mxu0 0.0
    %392 = vmatpush1.msra.mxu0 0.0
    %393 = vmatprep.subr.mxu0 0.0
    %394 = vmatpush1.msra.mxu0 0.0
    %395 = vmatprep.subr.mxu0 0.0
    %396 = vmatpush1.msra.mxu0 0.0
    %397 = vmatprep.subr.mxu0 0.0
    %398 = vmatpush1.msra.mxu0 0.0
    %399 = vmatprep.subr.mxu0 0.0
    %400 = vmatpush1.msra.mxu0 0.0
    %401 = vmatprep.subr.mxu0 0.0
    %402 = vmatpush1.msra.mxu0 0.0
    %403 = vmatprep.subr.mxu0 0.0
    %404 = vmatpush1.msra.mxu0 0.0
    %405 = vmatprep.subr.mxu0 0.0
    %406 = vmatpush1.msra.mxu0 0.0
    %407 = vmatprep.subr.mxu0 0.0
    %408 = vmatpush1.msra.mxu0 0.0
    %409 = vmatprep.subr.mxu0 0.0
    %410 = vmatpush1.msra.mxu0 0.0
    %411 = vmatprep.subr.mxu0 0.0
    %412 = vmatpush1.msra.mxu0 0.0
    %413 = vmatprep.subr.mxu0 0.0
    %414 = vmatpush1.msra.mxu0 %v381
    %415 = vmatprep.subr.mxu0 0.0
    %416 = vmatpush2.msra.mxu0 0.0
    %417 = vmatprep.subr.mxu0 0.0
    %418 = vmatpush2.msra.mxu0 0.0
    %419 = vmatprep.subr.mxu0 0.0
    %420 = vmatpush2.msra.mxu0 0.0
    %421 = vmatprep.subr.mxu0 0.0
    %422 = vmatpush2.msra.mxu0 0.0
    %423 = vmatprep.subr.mxu0 0.0
    %424 = vmatpush2.msra.mxu0 0.0
    %425 = vmatprep.subr.mxu0 0.0
    %426 = vmatpush2.msra.mxu0 0.0
    %427 = vmatprep.subr.mxu0 0.0
    %428 = vmatpush2.msra.mxu0 0.0
    %429 = vmatprep.subr.mxu0 0.0
    %430 = vmatpush2.msra.mxu0 0.0
    %431 = vmatprep.subr.mxu0 0.0
    %432 = vmatpush2.msra.mxu0 0.0
    %433 = vmatprep.subr.mxu0 0.0
    %434 = vmatpush2.msra.mxu0 0.0
    %435 = vmatprep.subr.mxu0 0.0
    %436 = vmatpush2.msra.mxu0 0.0
    %437 = vmatprep.subr.mxu0 0.0
    %438 = vmatpush2.msra.mxu0 0.0
    %439 = vmatprep.subr.mxu0 0.0
    %440 = vmatpush2.msra.mxu0 0.0
    %441 = vmatprep.subr.mxu0 0.0
    %442 = vmatpush2.msra.mxu0 0.0
    %443 = vmatprep.subr.mxu0 0.0
    %444 = vmatpush2.msra.mxu0 0.0
    %445 = vmatprep.subr.mxu0 0.0
    %446 = vmatpush2.msra.mxu0 0.0
    %447 = vmatprep.mubr.f32.mxu0 0.0
    %448 = vmatmul.mubr.f32.gmra.mxu0 %v103
    %v449 = vpop.f32.mrf.mxu0
    %v450 = vadd.f32 %v378, %v449
    %v451 = vpop.f32.mrf.mxu0
    %452 = vmatprep.mubr.f32.mxu0 0.0
    %453 = vmatmul.mubr.f32.gmra.mxu0 %v106
    %v454 = vpop.f32.mrf.mxu0
    %v455 = vadd.f32 %v378, %v454
    %v456 = vpop.f32.mrf.mxu0
    %457 = vmatprep.mubr.f32.mxu0 0.0
    %458 = vmatmul.mubr.f32.gmra.mxu0 %v109
    %v459 = vpop.f32.mrf.mxu0
    %v460 = vadd.f32 %v378, %v459
    %v461 = vpop.f32.mrf.mxu0
    %462 = vmatprep.mubr.f32.mxu0 0.0
    %463 = vmatmul.mubr.f32.gmra.mxu0 %v112
    %v464 = vpop.f32.mrf.mxu0
    %v465 = vadd.f32 %v378, %v464
    %v466 = vpop.f32.mrf.mxu0
    %467 = vmatprep.mubr.f32.mxu0 0.0
    %468 = vmatmul.mubr.f32.gmra.mxu0 %v115
    %v469 = vpop.f32.mrf.mxu0
    %v470 = vadd.f32 %v378, %v469
    %v471 = vpop.f32.mrf.mxu0
    %472 = vmatprep.mubr.f32.mxu0 0.0
    %473 = vmatmul.mubr.f32.gmra.mxu0 %v118
    %v474 = vpop.f32.mrf.mxu0
    %v475 = vadd.f32 %v378, %v474
    %v476 = vpop.f32.mrf.mxu0
    %477 = vmatprep.mubr.f32.mxu0 0.0
    %478 = vmatmul.mubr.f32.gmra.mxu0 %v121
    %v479 = vpop.f32.mrf.mxu0
    %v480 = vadd.f32 %v378, %v479
    %v481 = vpop.f32.mrf.mxu0
    %482 = vmatprep.mubr.f32.mxu0 0.0
    %483 = vmatmul.mubr.f32.gmra.mxu0 %v124
    %v484 = vpop.f32.mrf.mxu0
    %v485 = vadd.f32 %v378, %v484
    %v486 = vpop.f32.mrf.mxu0
    %487 = vdwg.mxu0
    %488 = vst.msk [vmem:[#allocation5] sm:$0xff] %vm235, %v450
    %489 = vst.msk [vmem:[#allocation5 + $0x8] sm:$0xff] %vm235, %v455
    %490 = vst.msk [vmem:[#allocation5 + $0x10] sm:$0xff] %vm235, %v460
    %491 = vst.msk [vmem:[#allocation5 + $0x18] sm:$0xff] %vm235, %v465
    %492 = vst.msk [vmem:[#allocation5 + $0x20] sm:$0xff] %vm235, %v470
    %493 = vst.msk [vmem:[#allocation5 + $0x28] sm:$0xff] %vm235, %v475
    %494 = vst.msk [vmem:[#allocation5 + $0x30] sm:$0xff] %vm235, %v480
    %495 = vst.msk [vmem:[#allocation5 + $0x38] sm:$0xff] %vm235, %v485
    %s496 = scalar_lea.vmem %s1, 12
    %v497 = vld [vmem:[%s496] sm:$0xf]
    %s498 = scalar_lea.vmem %s3, 3
    %v499 = vld [vmem:[%s498] sm:$0x1]
    %v501 = vlaneseq
    %v502 = vshrl.u32 %v501, 7
    %v503 = vsub.s32 0, %v502
    %v504 = vrot.slane %v499, %v503
    %v507 = vsel %vm126, %v497, 0
    %509 = vmatprep.subr.mxu0 0.0
    %510 = vmatpush1.msra.mxu0 0.0
    %511 = vmatprep.subr.mxu0 0.0
    %512 = vmatpush1.msra.mxu0 0.0
    %513 = vmatprep.subr.mxu0 0.0
    %514 = vmatpush1.msra.mxu0 0.0
    %515 = vmatprep.subr.mxu0 0.0
    %516 = vmatpush1.msra.mxu0 0.0
    %517 = vmatprep.subr.mxu0 0.0
    %518 = vmatpush1.msra.mxu0 0.0
    %519 = vmatprep.subr.mxu0 0.0
    %520 = vmatpush1.msra.mxu0 0.0
    %521 = vmatprep.subr.mxu0 0.0
    %522 = vmatpush1.msra.mxu0 0.0
    %523 = vmatprep.subr.mxu0 0.0
    %524 = vmatpush1.msra.mxu0 0.0
    %525 = vmatprep.subr.mxu0 0.0
    %526 = vmatpush1.msra.mxu0 0.0
    %527 = vmatprep.subr.mxu0 0.0
    %528 = vmatpush1.msra.mxu0 0.0
    %529 = vmatprep.subr.mxu0 0.0
    %530 = vmatpush1.msra.mxu0 0.0
    %531 = vmatprep.subr.mxu0 0.0
    %532 = vmatpush1.msra.mxu0 0.0
    %533 = vmatprep.subr.mxu0 0.0
    %534 = vmatpush1.msra.mxu0 0.0
    %535 = vmatprep.subr.mxu0 0.0
    %536 = vmatpush1.msra.mxu0 0.0
    %537 = vmatprep.subr.mxu0 0.0
    %538 = vmatpush1.msra.mxu0 0.0
    %539 = vmatprep.subr.mxu0 0.0
    %540 = vmatpush1.msra.mxu0 %v507
    %541 = vmatprep.subr.mxu0 0.0
    %542 = vmatpush2.msra.mxu0 0.0
    %543 = vmatprep.subr.mxu0 0.0
    %544 = vmatpush2.msra.mxu0 0.0
    %545 = vmatprep.subr.mxu0 0.0
    %546 = vmatpush2.msra.mxu0 0.0
    %547 = vmatprep.subr.mxu0 0.0
    %548 = vmatpush2.msra.mxu0 0.0
    %549 = vmatprep.subr.mxu0 0.0
    %550 = vmatpush2.msra.mxu0 0.0
    %551 = vmatprep.subr.mxu0 0.0
    %552 = vmatpush2.msra.mxu0 0.0
    %553 = vmatprep.subr.mxu0 0.0
    %554 = vmatpush2.msra.mxu0 0.0
    %555 = vmatprep.subr.mxu0 0.0
    %556 = vmatpush2.msra.mxu0 0.0
    %557 = vmatprep.subr.mxu0 0.0
    %558 = vmatpush2.msra.mxu0 0.0
    %559 = vmatprep.subr.mxu0 0.0
    %560 = vmatpush2.msra.mxu0 0.0
    %561 = vmatprep.subr.mxu0 0.0
    %562 = vmatpush2.msra.mxu0 0.0
    %563 = vmatprep.subr.mxu0 0.0
    %564 = vmatpush2.msra.mxu0 0.0
    %565 = vmatprep.subr.mxu0 0.0
    %566 = vmatpush2.msra.mxu0 0.0
    %567 = vmatprep.subr.mxu0 0.0
    %568 = vmatpush2.msra.mxu0 0.0
    %569 = vmatprep.subr.mxu0 0.0
    %570 = vmatpush2.msra.mxu0 0.0
    %571 = vmatprep.subr.mxu0 0.0
    %572 = vmatpush2.msra.mxu0 0.0
    %573 = vmatprep.mubr.f32.mxu0 0.0
    %574 = vmatmul.mubr.f32.gmra.mxu0 %v103
    %v575 = vpop.f32.mrf.mxu0
    %v576 = vadd.f32 %v504, %v575
    %v577 = vpop.f32.mrf.mxu0
    %578 = vmatprep.mubr.f32.mxu0 0.0
    %579 = vmatmul.mubr.f32.gmra.mxu0 %v106
    %v580 = vpop.f32.mrf.mxu0
    %v581 = vadd.f32 %v504, %v580
    %v582 = vpop.f32.mrf.mxu0
    %583 = vmatprep.mubr.f32.mxu0 0.0
    %584 = vmatmul.mubr.f32.gmra.mxu0 %v109
    %v585 = vpop.f32.mrf.mxu0
    %v586 = vadd.f32 %v504, %v585
    %v587 = vpop.f32.mrf.mxu0
    %588 = vmatprep.mubr.f32.mxu0 0.0
    %589 = vmatmul.mubr.f32.gmra.mxu0 %v112
    %v590 = vpop.f32.mrf.mxu0
    %v591 = vadd.f32 %v504, %v590
    %v592 = vpop.f32.mrf.mxu0
    %593 = vmatprep.mubr.f32.mxu0 0.0
    %594 = vmatmul.mubr.f32.gmra.mxu0 %v115
    %v595 = vpop.f32.mrf.mxu0
    %v596 = vadd.f32 %v504, %v595
    %v597 = vpop.f32.mrf.mxu0
    %598 = vmatprep.mubr.f32.mxu0 0.0
    %599 = vmatmul.mubr.f32.gmra.mxu0 %v118
    %v600 = vpop.f32.mrf.mxu0
    %v601 = vadd.f32 %v504, %v600
    %v602 = vpop.f32.mrf.mxu0
    %603 = vmatprep.mubr.f32.mxu0 0.0
    %604 = vmatmul.mubr.f32.gmra.mxu0 %v121
    %v605 = vpop.f32.mrf.mxu0
    %v606 = vadd.f32 %v504, %v605
    %v607 = vpop.f32.mrf.mxu0
    %608 = vmatprep.mubr.f32.mxu0 0.0
    %609 = vmatmul.mubr.f32.gmra.mxu0 %v124
    %v610 = vpop.f32.mrf.mxu0
    %v611 = vadd.f32 %v504, %v610
    %v612 = vpop.f32.mrf.mxu0
    %613 = vdwg.mxu0
    %614 = vst.msk [vmem:[#allocation6] sm:$0xff] %vm235, %v576
    %615 = vst.msk [vmem:[#allocation6 + $0x8] sm:$0xff] %vm235, %v581
    %616 = vst.msk [vmem:[#allocation6 + $0x10] sm:$0xff] %vm235, %v586
    %617 = vst.msk [vmem:[#allocation6 + $0x18] sm:$0xff] %vm235, %v591
    %618 = vst.msk [vmem:[#allocation6 + $0x20] sm:$0xff] %vm235, %v596
    %619 = vst.msk [vmem:[#allocation6 + $0x28] sm:$0xff] %vm235, %v601
    %620 = vst.msk [vmem:[#allocation6 + $0x30] sm:$0xff] %vm235, %v606
    %621 = vst.msk [vmem:[#allocation6 + $0x38] sm:$0xff] %vm235, %v611
    %622 = vst.msk [vmem:[#allocation7] sm:$0xff] %vm235, 0.0
    %623 = vst.msk [vmem:[#allocation8] sm:$0xff] %vm235, 0.0
    %v624 = vld [vmem:[#allocation7] sm:$0xff]
    %v625 = vld [vmem:[#allocation8] sm:$0xff]
    %v626 = vld [vmem:[#allocation3] sm:$0xff]
    %v627 = vld [vmem:[#allocation9] sm:$0xff]
    %v628 = vld [vmem:[#allocation9 + $0x8] sm:$0xff]
    %v629 = vld [vmem:[#allocation9 + $0x10] sm:$0xff]
    %v630 = vld [vmem:[#allocation9 + $0x18] sm:$0xff]
    %v632 = vsel %vm235, %v624, 0
    %634 = vmatprep.subr.mxu0 0.0
    %635 = vmatpush1.msra.mxu0 0.0
    %636 = vmatprep.subr.mxu0 0.0
    %637 = vmatpush1.msra.mxu0 0.0
    %638 = vmatprep.subr.mxu0 0.0
    %639 = vmatpush1.msra.mxu0 0.0
    %640 = vmatprep.subr.mxu0 0.0
    %641 = vmatpush1.msra.mxu0 0.0
    %642 = vmatprep.subr.mxu0 0.0
    %643 = vmatpush1.msra.mxu0 0.0
    %644 = vmatprep.subr.mxu0 0.0
    %645 = vmatpush1.msra.mxu0 0.0
    %646 = vmatprep.subr.mxu0 0.0
    %647 = vmatpush1.msra.mxu0 0.0
    %648 = vmatprep.subr.mxu0 0.0
    %649 = vmatpush1.msra.mxu0 0.0
    %650 = vmatprep.subr.mxu0 0.0
    %651 = vmatpush1.msra.mxu0 0.0
    %652 = vmatprep.subr.mxu0 0.0
    %653 = vmatpush1.msra.mxu0 0.0
    %654 = vmatprep.subr.mxu0 0.0
    %655 = vmatpush1.msra.mxu0 0.0
    %656 = vmatprep.subr.mxu0 0.0
    %657 = vmatpush1.msra.mxu0 0.0
    %658 = vmatprep.subr.mxu0 0.0
    %659 = vmatpush1.msra.mxu0 %v630
    %660 = vmatprep.subr.mxu0 0.0
    %661 = vmatpush1.msra.mxu0 %v629
    %662 = vmatprep.subr.mxu0 0.0
    %663 = vmatpush1.msra.mxu0 %v628
    %664 = vmatprep.subr.mxu0 0.0
    %665 = vmatpush1.msra.mxu0 %v627
    %666 = vmatprep.subr.mxu0 0.0
    %667 = vmatpush2.msra.mxu0 0.0
    %668 = vmatprep.subr.mxu0 0.0
    %669 = vmatpush2.msra.mxu0 0.0
    %670 = vmatprep.subr.mxu0 0.0
    %671 = vmatpush2.msra.mxu0 0.0
    %672 = vmatprep.subr.mxu0 0.0
    %673 = vmatpush2.msra.mxu0 0.0
    %674 = vmatprep.subr.mxu0 0.0
    %675 = vmatpush2.msra.mxu0 0.0
    %676 = vmatprep.subr.mxu0 0.0
    %677 = vmatpush2.msra.mxu0 0.0
    %678 = vmatprep.subr.mxu0 0.0
    %679 = vmatpush2.msra.mxu0 0.0
    %680 = vmatprep.subr.mxu0 0.0
    %681 = vmatpush2.msra.mxu0 0.0
    %682 = vmatprep.subr.mxu0 0.0
    %683 = vmatpush2.msra.mxu0 0.0
    %684 = vmatprep.subr.mxu0 0.0
    %685 = vmatpush2.msra.mxu0 0.0
    %686 = vmatprep.subr.mxu0 0.0
    %687 = vmatpush2.msra.mxu0 0.0
    %688 = vmatprep.subr.mxu0 0.0
    %689 = vmatpush2.msra.mxu0 0.0
    %690 = vmatprep.subr.mxu0 0.0
    %691 = vmatpush2.msra.mxu0 0.0
    %692 = vmatprep.subr.mxu0 0.0
    %693 = vmatpush2.msra.mxu0 0.0
    %694 = vmatprep.subr.mxu0 0.0
    %695 = vmatpush2.msra.mxu0 0.0
    %696 = vmatprep.subr.mxu0 0.0
    %697 = vmatpush2.msra.mxu0 0.0
    %698 = vmatprep.mubr.f32.mxu0 0.0
    %699 = vmatmul.mubr.f32.gmra.mxu0 %v632
    %v700 = vpop.f32.mrf.mxu0
    %v701 = vadd.f32 0.0, %v700
    %v702 = vpop.f32.mrf.mxu0
    %703 = vdwg.mxu0
    %v704 = vadd.f32 %v626, %v701
    %v705 = vld [vmem:[#allocation4] sm:$0xff]
    %s706 = scalar_lea.vmem [#allocation9], 32
    %v707 = vld [vmem:[%s706] sm:$0xff]
    %v708 = vld [vmem:[%s706 + $0x8] sm:$0xff]
    %v709 = vld [vmem:[%s706 + $0x10] sm:$0xff]
    %v710 = vld [vmem:[%s706 + $0x18] sm:$0xff]
    %711 = vmatprep.subr.mxu0 0.0
    %712 = vmatpush1.msra.mxu0 0.0
    %713 = vmatprep.subr.mxu0 0.0
    %714 = vmatpush1.msra.mxu0 0.0
    %715 = vmatprep.subr.mxu0 0.0
    %716 = vmatpush1.msra.mxu0 0.0
    %717 = vmatprep.subr.mxu0 0.0
    %718 = vmatpush1.msra.mxu0 0.0
    %719 = vmatprep.subr.mxu0 0.0
    %720 = vmatpush1.msra.mxu0 0.0
    %721 = vmatprep.subr.mxu0 0.0
    %722 = vmatpush1.msra.mxu0 0.0
    %723 = vmatprep.subr.mxu0 0.0
    %724 = vmatpush1.msra.mxu0 0.0
    %725 = vmatprep.subr.mxu0 0.0
    %726 = vmatpush1.msra.mxu0 0.0
    %727 = vmatprep.subr.mxu0 0.0
    %728 = vmatpush1.msra.mxu0 0.0
    %729 = vmatprep.subr.mxu0 0.0
    %730 = vmatpush1.msra.mxu0 0.0
    %731 = vmatprep.subr.mxu0 0.0
    %732 = vmatpush1.msra.mxu0 0.0
    %733 = vmatprep.subr.mxu0 0.0
    %734 = vmatpush1.msra.mxu0 0.0
    %735 = vmatprep.subr.mxu0 0.0
    %736 = vmatpush1.msra.mxu0 %v710
    %737 = vmatprep.subr.mxu0 0.0
    %738 = vmatpush1.msra.mxu0 %v709
    %739 = vmatprep.subr.mxu0 0.0
    %740 = vmatpush1.msra.mxu0 %v708
    %741 = vmatprep.subr.mxu0 0.0
    %742 = vmatpush1.msra.mxu0 %v707
    %743 = vmatprep.subr.mxu0 0.0
    %744 = vmatpush2.msra.mxu0 0.0
    %745 = vmatprep.subr.mxu0 0.0
    %746 = vmatpush2.msra.mxu0 0.0
    %747 = vmatprep.subr.mxu0 0.0
    %748 = vmatpush2.msra.mxu0 0.0
    %749 = vmatprep.subr.mxu0 0.0
    %750 = vmatpush2.msra.mxu0 0.0
    %751 = vmatprep.subr.mxu0 0.0
    %752 = vmatpush2.msra.mxu0 0.0
    %753 = vmatprep.subr.mxu0 0.0
    %754 = vmatpush2.msra.mxu0 0.0
    %755 = vmatprep.subr.mxu0 0.0
    %756 = vmatpush2.msra.mxu0 0.0
    %757 = vmatprep.subr.mxu0 0.0
    %758 = vmatpush2.msra.mxu0 0.0
    %759 = vmatprep.subr.mxu0 0.0
    %760 = vmatpush2.msra.mxu0 0.0
    %761 = vmatprep.subr.mxu0 0.0
    %762 = vmatpush2.msra.mxu0 0.0
    %763 = vmatprep.subr.mxu0 0.0
    %764 = vmatpush2.msra.mxu0 0.0
    %765 = vmatprep.subr.mxu0 0.0
    %766 = vmatpush2.msra.mxu0 0.0
    %767 = vmatprep.subr.mxu0 0.0
    %768 = vmatpush2.msra.mxu0 0.0
    %769 = vmatprep.subr.mxu0 0.0
    %770 = vmatpush2.msra.mxu0 0.0
    %771 = vmatprep.subr.mxu0 0.0
    %772 = vmatpush2.msra.mxu0 0.0
    %773 = vmatprep.subr.mxu0 0.0
    %774 = vmatpush2.msra.mxu0 0.0
    %775 = vmatprep.mubr.f32.mxu0 0.0
    %776 = vmatmul.mubr.f32.gmra.mxu0 %v632
    %v777 = vpop.f32.mrf.mxu0
    %v778 = vadd.f32 0.0, %v777
    %v779 = vpop.f32.mrf.mxu0
    %780 = vdwg.mxu0
    %v781 = vadd.f32 %v705, %v778
    %v782 = vld [vmem:[#allocation5] sm:$0xff]
    %s783 = scalar_lea.vmem [#allocation9], 64
    %v784 = vld [vmem:[%s783] sm:$0xff]
    %v785 = vld [vmem:[%s783 + $0x8] sm:$0xff]
    %v786 = vld [vmem:[%s783 + $0x10] sm:$0xff]
    %v787 = vld [vmem:[%s783 + $0x18] sm:$0xff]
    %788 = vmatprep.subr.mxu0 0.0
    %789 = vmatpush1.msra.mxu0 0.0
    %790 = vmatprep.subr.mxu0 0.0
    %791 = vmatpush1.msra.mxu0 0.0
    %792 = vmatprep.subr.mxu0 0.0
    %793 = vmatpush1.msra.mxu0 0.0
    %794 = vmatprep.subr.mxu0 0.0
    %795 = vmatpush1.msra.mxu0 0.0
    %796 = vmatprep.subr.mxu0 0.0
    %797 = vmatpush1.msra.mxu0 0.0
    %798 = vmatprep.subr.mxu0 0.0
    %799 = vmatpush1.msra.mxu0 0.0
    %800 = vmatprep.subr.mxu0 0.0
    %801 = vmatpush1.msra.mxu0 0.0
    %802 = vmatprep.subr.mxu0 0.0
    %803 = vmatpush1.msra.mxu0 0.0
    %804 = vmatprep.subr.mxu0 0.0
    %805 = vmatpush1.msra.mxu0 0.0
    %806 = vmatprep.subr.mxu0 0.0
    %807 = vmatpush1.msra.mxu0 0.0
    %808 = vmatprep.subr.mxu0 0.0
    %809 = vmatpush1.msra.mxu0 0.0
    %810 = vmatprep.subr.mxu0 0.0
    %811 = vmatpush1.msra.mxu0 0.0
    %812 = vmatprep.subr.mxu0 0.0
    %813 = vmatpush1.msra.mxu0 %v787
    %814 = vmatprep.subr.mxu0 0.0
    %815 = vmatpush1.msra.mxu0 %v786
    %816 = vmatprep.subr.mxu0 0.0
    %817 = vmatpush1.msra.mxu0 %v785
    %818 = vmatprep.subr.mxu0 0.0
    %819 = vmatpush1.msra.mxu0 %v784
    %820 = vmatprep.subr.mxu0 0.0
    %821 = vmatpush2.msra.mxu0 0.0
    %822 = vmatprep.subr.mxu0 0.0
    %823 = vmatpush2.msra.mxu0 0.0
    %824 = vmatprep.subr.mxu0 0.0
    %825 = vmatpush2.msra.mxu0 0.0
    %826 = vmatprep.subr.mxu0 0.0
    %827 = vmatpush2.msra.mxu0 0.0
    %828 = vmatprep.subr.mxu0 0.0
    %829 = vmatpush2.msra.mxu0 0.0
    %830 = vmatprep.subr.mxu0 0.0
    %831 = vmatpush2.msra.mxu0 0.0
    %832 = vmatprep.subr.mxu0 0.0
    %833 = vmatpush2.msra.mxu0 0.0
    %834 = vmatprep.subr.mxu0 0.0
    %835 = vmatpush2.msra.mxu0 0.0
    %836 = vmatprep.subr.mxu0 0.0
    %837 = vmatpush2.msra.mxu0 0.0
    %838 = vmatprep.subr.mxu0 0.0
    %839 = vmatpush2.msra.mxu0 0.0
    %840 = vmatprep.subr.mxu0 0.0
    %841 = vmatpush2.msra.mxu0 0.0
    %842 = vmatprep.subr.mxu0 0.0
    %843 = vmatpush2.msra.mxu0 0.0
    %844 = vmatprep.subr.mxu0 0.0
    %845 = vmatpush2.msra.mxu0 0.0
    %846 = vmatprep.subr.mxu0 0.0
    %847 = vmatpush2.msra.mxu0 0.0
    %848 = vmatprep.subr.mxu0 0.0
    %849 = vmatpush2.msra.mxu0 0.0
    %850 = vmatprep.subr.mxu0 0.0
    %851 = vmatpush2.msra.mxu0 0.0
    %852 = vmatprep.mubr.f32.mxu0 0.0
    %853 = vmatmul.mubr.f32.gmra.mxu0 %v632
    %v854 = vpop.f32.mrf.mxu0
    %v855 = vadd.f32 0.0, %v854
    %v856 = vpop.f32.mrf.mxu0
    %857 = vdwg.mxu0
    %v858 = vadd.f32 %v782, %v855
    %v859 = vld [vmem:[#allocation6] sm:$0xff]
    %s860 = scalar_lea.vmem [#allocation9], 96
    %v861 = vld [vmem:[%s860] sm:$0xff]
    %v862 = vld [vmem:[%s860 + $0x8] sm:$0xff]
    %v863 = vld [vmem:[%s860 + $0x10] sm:$0xff]
    %v864 = vld [vmem:[%s860 + $0x18] sm:$0xff]
    %865 = vmatprep.subr.mxu0 0.0
    %866 = vmatpush1.msra.mxu0 0.0
    %867 = vmatprep.subr.mxu0 0.0
    %868 = vmatpush1.msra.mxu0 0.0
    %869 = vmatprep.subr.mxu0 0.0
    %870 = vmatpush1.msra.mxu0 0.0
    %871 = vmatprep.subr.mxu0 0.0
    %872 = vmatpush1.msra.mxu0 0.0
    %873 = vmatprep.subr.mxu0 0.0
    %874 = vmatpush1.msra.mxu0 0.0
    %875 = vmatprep.subr.mxu0 0.0
    %876 = vmatpush1.msra.mxu0 0.0
    %877 = vmatprep.subr.mxu0 0.0
    %878 = vmatpush1.msra.mxu0 0.0
    %879 = vmatprep.subr.mxu0 0.0
    %880 = vmatpush1.msra.mxu0 0.0
    %881 = vmatprep.subr.mxu0 0.0
    %882 = vmatpush1.msra.mxu0 0.0
    %883 = vmatprep.subr.mxu0 0.0
    %884 = vmatpush1.msra.mxu0 0.0
    %885 = vmatprep.subr.mxu0 0.0
    %886 = vmatpush1.msra.mxu0 0.0
    %887 = vmatprep.subr.mxu0 0.0
    %888 = vmatpush1.msra.mxu0 0.0
    %889 = vmatprep.subr.mxu0 0.0
    %890 = vmatpush1.msra.mxu0 %v864
    %891 = vmatprep.subr.mxu0 0.0
    %892 = vmatpush1.msra.mxu0 %v863
    %893 = vmatprep.subr.mxu0 0.0
    %894 = vmatpush1.msra.mxu0 %v862
    %895 = vmatprep.subr.mxu0 0.0
    %896 = vmatpush1.msra.mxu0 %v861
    %897 = vmatprep.subr.mxu0 0.0
    %898 = vmatpush2.msra.mxu0 0.0
    %899 = vmatprep.subr.mxu0 0.0
    %900 = vmatpush2.msra.mxu0 0.0
    %901 = vmatprep.subr.mxu0 0.0
    %902 = vmatpush2.msra.mxu0 0.0
    %903 = vmatprep.subr.mxu0 0.0
    %904 = vmatpush2.msra.mxu0 0.0
    %905 = vmatprep.subr.mxu0 0.0
    %906 = vmatpush2.msra.mxu0 0.0
    %907 = vmatprep.subr.mxu0 0.0
    %908 = vmatpush2.msra.mxu0 0.0
    %909 = vmatprep.subr.mxu0 0.0
    %910 = vmatpush2.msra.mxu0 0.0
    %911 = vmatprep.subr.mxu0 0.0
    %912 = vmatpush2.msra.mxu0 0.0
    %913 = vmatprep.subr.mxu0 0.0
    %914 = vmatpush2.msra.mxu0 0.0
    %915 = vmatprep.subr.mxu0 0.0
    %916 = vmatpush2.msra.mxu0 0.0
    %917 = vmatprep.subr.mxu0 0.0
    %918 = vmatpush2.msra.mxu0 0.0
    %919 = vmatprep.subr.mxu0 0.0
    %920 = vmatpush2.msra.mxu0 0.0
    %921 = vmatprep.subr.mxu0 0.0
    %922 = vmatpush2.msra.mxu0 0.0
    %923 = vmatprep.subr.mxu0 0.0
    %924 = vmatpush2.msra.mxu0 0.0
    %925 = vmatprep.subr.mxu0 0.0
    %926 = vmatpush2.msra.mxu0 0.0
    %927 = vmatprep.subr.mxu0 0.0
    %928 = vmatpush2.msra.mxu0 0.0
    %929 = vmatprep.mubr.f32.mxu0 0.0
    %930 = vmatmul.mubr.f32.gmra.mxu0 %v632
    %v931 = vpop.f32.mrf.mxu0
    %v932 = vadd.f32 0.0, %v931
    %v933 = vpop.f32.mrf.mxu0
    %934 = vdwg.mxu0
    %v935 = vadd.f32 %v859, %v932
    %v936 = vxor.u32 %v704, 2147483648
    %v937 = vmul.f32 %v936, 1.442695
    %v938 = vpow.pop %v937
    %v939 = vadd.f32 %v938, 1.0
    %v940 = vrcp.pop %v939
    %v941 = vmul.f32 1.0, %v940
    %v942 = vxor.u32 %v781, 2147483648
    %v943 = vmul.f32 %v942, 1.442695
    %v944 = vpow.pop %v943
    %v945 = vadd.f32 %v944, 1.0
    %v946 = vrcp.pop %v945
    %v947 = vmul.f32 1.0, %v946
    %v948 = vtanh.pop %v858
    %v949 = vxor.u32 %v935, 2147483648
    %v950 = vmul.f32 %v949, 1.442695
    %v951 = vpow.pop %v950
    %v952 = vadd.f32 %v951, 1.0
    %v953 = vrcp.pop %v952
    %v954 = vmul.f32 1.0, %v953
    %v955 = vmul.f32 %v947, %v625
    %v956 = vmul.f32 %v941, %v948
    %v957 = vadd.f32 %v955, %v956
    %v958 = vtanh.pop %v957
    %v959 = vmul.f32 %v954, %v958
    %960 = vst.msk [vmem:[#allocation7] sm:$0xff] %vm235, %v959
    %961 = vst.msk [vmem:[#allocation8] sm:$0xff] %vm235, %v957
    %962 = vst.msk [vmem:[#allocation2] sm:$0xff] %vm235, %v959
    %v963 = vld [vmem:[#allocation7] sm:$0xff]
    %v964 = vld [vmem:[#allocation8] sm:$0xff]
    %s965 = scalar_lea.vmem [#allocation3], 8
    %v966 = vld [vmem:[%s965] sm:$0xff]
    %v967 = vld [vmem:[#allocation9] sm:$0xff]
    %v968 = vld [vmem:[#allocation9 + $0x8] sm:$0xff]
    %v969 = vld [vmem:[#allocation9 + $0x10] sm:$0xff]
    %v970 = vld [vmem:[#allocation9 + $0x18] sm:$0xff]
    %v972 = vsel %vm235, %v963, 0
    %974 = vmatprep.subr.mxu0 0.0
    %975 = vmatpush1.msra.mxu0 0.0
    %976 = vmatprep.subr.mxu0 0.0
    %977 = vmatpush1.msra.mxu0 0.0
    %978 = vmatprep.subr.mxu0 0.0
    %979 = vmatpush1.msra.mxu0 0.0
    %980 = vmatprep.subr.mxu0 0.0
    %981 = vmatpush1.msra.mxu0 0.0
    %982 = vmatprep.subr.mxu0 0.0
    %983 = vmatpush1.msra.mxu0 0.0
    %984 = vmatprep.subr.mxu0 0.0
    %985 = vmatpush1.msra.mxu0 0.0
    %986 = vmatprep.subr.mxu0 0.0
    %987 = vmatpush1.msra.mxu0 0.0
    %988 = vmatprep.subr.mxu0 0.0
    %989 = vmatpush1.msra.mxu0 0.0
    %990 = vmatprep.subr.mxu0 0.0
    %991 = vmatpush1.msra.mxu0 0.0
    %992 = vmatprep.subr.mxu0 0.0
    %993 = vmatpush1.msra.mxu0 0.0
    %994 = vmatprep.subr.mxu0 0.0
    %995 = vmatpush1.msra.mxu0 0.0
    %996 = vmatprep.subr.mxu0 0.0
    %997 = vmatpush1.msra.mxu0 0.0
    %998 = vmatprep.subr.mxu0 0.0
    %999 = vmatpush1.msra.mxu0 %v970
    %1000 = vmatprep.subr.mxu0 0.0
    %1001 = vmatpush1.msra.mxu0 %v969
    %1002 = vmatprep.subr.mxu0 0.0
    %1003 = vmatpush1.msra.mxu0 %v968
    %1004 = vmatprep.subr.mxu0 0.0
    %1005 = vmatpush1.msra.mxu0 %v967
    %1006 = vmatprep.subr.mxu0 0.0
    %1007 = vmatpush2.msra.mxu0 0.0
    %1008 = vmatprep.subr.mxu0 0.0
    %1009 = vmatpush2.msra.mxu0 0.0
    %1010 = vmatprep.subr.mxu0 0.0
    %1011 = vmatpush2.msra.mxu0 0.0
    %1012 = vmatprep.subr.mxu0 0.0
    %1013 = vmatpush2.msra.mxu0 0.0
    %1014 = vmatprep.subr.mxu0 0.0
    %1015 = vmatpush2.msra.mxu0 0.0
    %1016 = vmatprep.subr.mxu0 0.0
    %1017 = vmatpush2.msra.mxu0 0.0
    %1018 = vmatprep.subr.mxu0 0.0
    %1019 = vmatpush2.msra.mxu0 0.0
    %1020 = vmatprep.subr.mxu0 0.0
    %1021 = vmatpush2.msra.mxu0 0.0
    %1022 = vmatprep.subr.mxu0 0.0
    %1023 = vmatpush2.msra.mxu0 0.0
    %1024 = vmatprep.subr.mxu0 0.0
    %1025 = vmatpush2.msra.mxu0 0.0
    %1026 = vmatprep.subr.mxu0 0.0
    %1027 = vmatpush2.msra.mxu0 0.0
    %1028 = vmatprep.subr.mxu0 0.0
    %1029 = vmatpush2.msra.mxu0 0.0
    %1030 = vmatprep.subr.mxu0 0.0
    %1031 = vmatpush2.msra.mxu0 0.0
    %1032 = vmatprep.subr.mxu0 0.0
    %1033 = vmatpush2.msra.mxu0 0.0
    %1034 = vmatprep.subr.mxu0 0.0
    %1035 = vmatpush2.msra.mxu0 0.0
    %1036 = vmatprep.subr.mxu0 0.0
    %1037 = vmatpush2.msra.mxu0 0.0
    %1038 = vmatprep.mubr.f32.mxu0 0.0
    %1039 = vmatmul.mubr.f32.gmra.mxu0 %v972
    %v1040 = vpop.f32.mrf.mxu0
    %v1041 = vadd.f32 0.0, %v1040
    %v1042 = vpop.f32.mrf.mxu0
    %1043 = vdwg.mxu0
    %v1044 = vadd.f32 %v966, %v1041
    %s1045 = scalar_lea.vmem [#allocation4], 8
    %v1046 = vld [vmem:[%s1045] sm:$0xff]
    %v1047 = vld [vmem:[%s706] sm:$0xff]
    %v1048 = vld [vmem:[%s706 + $0x8] sm:$0xff]
    %v1049 = vld [vmem:[%s706 + $0x10] sm:$0xff]
    %v1050 = vld [vmem:[%s706 + $0x18] sm:$0xff]
    %1051 = vmatprep.subr.mxu0 0.0
    %1052 = vmatpush1.msra.mxu0 0.0
    %1053 = vmatprep.subr.mxu0 0.0
    %1054 = vmatpush1.msra.mxu0 0.0
    %1055 = vmatprep.subr.mxu0 0.0
    %1056 = vmatpush1.msra.mxu0 0.0
    %1057 = vmatprep.subr.mxu0 0.0
    %1058 = vmatpush1.msra.mxu0 0.0
    %1059 = vmatprep.subr.mxu0 0.0
    %1060 = vmatpush1.msra.mxu0 0.0
    %1061 = vmatprep.subr.mxu0 0.0
    %1062 = vmatpush1.msra.mxu0 0.0
    %1063 = vmatprep.subr.mxu0 0.0
    %1064 = vmatpush1.msra.mxu0 0.0
    %1065 = vmatprep.subr.mxu0 0.0
    %1066 = vmatpush1.msra.mxu0 0.0
    %1067 = vmatprep.subr.mxu0 0.0
    %1068 = vmatpush1.msra.mxu0 0.0
    %1069 = vmatprep.subr.mxu0 0.0
    %1070 = vmatpush1.msra.mxu0 0.0
    %1071 = vmatprep.subr.mxu0 0.0
    %1072 = vmatpush1.msra.mxu0 0.0
    %1073 = vmatprep.subr.mxu0 0.0
    %1074 = vmatpush1.msra.mxu0 0.0
    %1075 = vmatprep.subr.mxu0 0.0
    %1076 = vmatpush1.msra.mxu0 %v1050
    %1077 = vmatprep.subr.mxu0 0.0
    %1078 = vmatpush1.msra.mxu0 %v1049
    %1079 = vmatprep.subr.mxu0 0.0
    %1080 = vmatpush1.msra.mxu0 %v1048
    %1081 = vmatprep.subr.mxu0 0.0
    %1082 = vmatpush1.msra.mxu0 %v1047
    %1083 = vmatprep.subr.mxu0 0.0
    %1084 = vmatpush2.msra.mxu0 0.0
    %1085 = vmatprep.subr.mxu0 0.0
    %1086 = vmatpush2.msra.mxu0 0.0
    %1087 = vmatprep.subr.mxu0 0.0
    %1088 = vmatpush2.msra.mxu0 0.0
    %1089 = vmatprep.subr.mxu0 0.0
    %1090 = vmatpush2.msra.mxu0 0.0
    %1091 = vmatprep.subr.mxu0 0.0
    %1092 = vmatpush2.msra.mxu0 0.0
    %1093 = vmatprep.subr.mxu0 0.0
    %1094 = vmatpush2.msra.mxu0 0.0
    %1095 = vmatprep.subr.mxu0 0.0
    %1096 = vmatpush2.msra.mxu0 0.0
    %1097 = vmatprep.subr.mxu0 0.0
    %1098 = vmatpush2.msra.mxu0 0.0
    %1099 = vmatprep.subr.mxu0 0.0
    %1100 = vmatpush2.msra.mxu0 0.0
    %1101 = vmatprep.subr.mxu0 0.0
    %1102 = vmatpush2.msra.mxu0 0.0
    %1103 = vmatprep.subr.mxu0 0.0
    %1104 = vmatpush2.msra.mxu0 0.0
    %1105 = vmatprep.subr.mxu0 0.0
    %1106 = vmatpush2.msra.mxu0 0.0
    %1107 = vmatprep.subr.mxu0 0.0
    %1108 = vmatpush2.msra.mxu0 0.0
    %1109 = vmatprep.subr.mxu0 0.0
    %1110 = vmatpush2.msra.mxu0 0.0
    %1111 = vmatprep.subr.mxu0 0.0
    %1112 = vmatpush2.msra.mxu0 0.0
    %1113 = vmatprep.subr.mxu0 0.0
    %1114 = vmatpush2.msra.mxu0 0.0
    %1115 = vmatprep.mubr.f32.mxu0 0.0
    %1116 = vmatmul.mubr.f32.gmra.mxu0 %v972
    %v1117 = vpop.f32.mrf.mxu0
    %v1118 = vadd.f32 0.0, %v1117
    %v1119 = vpop.f32.mrf.mxu0
    %1120 = vdwg.mxu0
    %v1121 = vadd.f32 %v1046, %v1118
    %s1122 = scalar_lea.vmem [#allocation5], 8
    %v1123 = vld [vmem:[%s1122] sm:$0xff]
    %v1124 = vld [vmem:[%s783] sm:$0xff]
    %v1125 = vld [vmem:[%s783 + $0x8] sm:$0xff]
    %v1126 = vld [vmem:[%s783 + $0x10] sm:$0xff]
    %v1127 = vld [vmem:[%s783 + $0x18] sm:$0xff]
    %1128 = vmatprep.subr.mxu0 0.0
    %1129 = vmatpush1.msra.mxu0 0.0
    %1130 = vmatprep.subr.mxu0 0.0
    %1131 = vmatpush1.msra.mxu0 0.0
    %1132 = vmatprep.subr.mxu0 0.0
    %1133 = vmatpush1.msra.mxu0 0.0
    %1134 = vmatprep.subr.mxu0 0.0
    %1135 = vmatpush1.msra.mxu0 0.0
    %1136 = vmatprep.subr.mxu0 0.0
    %1137 = vmatpush1.msra.mxu0 0.0
    %1138 = vmatprep.subr.mxu0 0.0
    %1139 = vmatpush1.msra.mxu0 0.0
    %1140 = vmatprep.subr.mxu0 0.0
    %1141 = vmatpush1.msra.mxu0 0.0
    %1142 = vmatprep.subr.mxu0 0.0
    %1143 = vmatpush1.msra.mxu0 0.0
    %1144 = vmatprep.subr.mxu0 0.0
    %1145 = vmatpush1.msra.mxu0 0.0
    %1146 = vmatprep.subr.mxu0 0.0
    %1147 = vmatpush1.msra.mxu0 0.0
    %1148 = vmatprep.subr.mxu0 0.0
    %1149 = vmatpush1.msra.mxu0 0.0
    %1150 = vmatprep.subr.mxu0 0.0
    %1151 = vmatpush1.msra.mxu0 0.0
    %1152 = vmatprep.subr.mxu0 0.0
    %1153 = vmatpush1.msra.mxu0 %v1127
    %1154 = vmatprep.subr.mxu0 0.0
    %1155 = vmatpush1.msra.mxu0 %v1126
    %1156 = vmatprep.subr.mxu0 0.0
    %1157 = vmatpush1.msra.mxu0 %v1125
    %1158 = vmatprep.subr.mxu0 0.0
    %1159 = vmatpush1.msra.mxu0 %v1124
    %1160 = vmatprep.subr.mxu0 0.0
    %1161 = vmatpush2.msra.mxu0 0.0
    %1162 = vmatprep.subr.mxu0 0.0
    %1163 = vmatpush2.msra.mxu0 0.0
    %1164 = vmatprep.subr.mxu0 0.0
    %1165 = vmatpush2.msra.mxu0 0.0
    %1166 = vmatprep.subr.mxu0 0.0
    %1167 = vmatpush2.msra.mxu0 0.0
    %1168 = vmatprep.subr.mxu0 0.0
    %1169 = vmatpush2.msra.mxu0 0.0
    %1170 = vmatprep.subr.mxu0 0.0
    %1171 = vmatpush2.msra.mxu0 0.0
    %1172 = vmatprep.subr.mxu0 0.0
    %1173 = vmatpush2.msra.mxu0 0.0
    %1174 = vmatprep.subr.mxu0 0.0
    %1175 = vmatpush2.msra.mxu0 0.0
    %1176 = vmatprep.subr.mxu0 0.0
    %1177 = vmatpush2.msra.mxu0 0.0
    %1178 = vmatprep.subr.mxu0 0.0
    %1179 = vmatpush2.msra.mxu0 0.0
    %1180 = vmatprep.subr.mxu0 0.0
    %1181 = vmatpush2.msra.mxu0 0.0
    %1182 = vmatprep.subr.mxu0 0.0
    %1183 = vmatpush2.msra.mxu0 0.0
    %1184 = vmatprep.subr.mxu0 0.0
    %1185 = vmatpush2.msra.mxu0 0.0
    %1186 = vmatprep.subr.mxu0 0.0
    %1187 = vmatpush2.msra.mxu0 0.0
    %1188 = vmatprep.subr.mxu0 0.0
    %1189 = vmatpush2.msra.mxu0 0.0
    %1190 = vmatprep.subr.mxu0 0.0
    %1191 = vmatpush2.msra.mxu0 0.0
    %1192 = vmatprep.mubr.f32.mxu0 0.0
    %1193 = vmatmul.mubr.f32.gmra.mxu0 %v972
    %v1194 = vpop.f32.mrf.mxu0
    %v1195 = vadd.f32 0.0, %v1194
    %v1196 = vpop.f32.mrf.mxu0
    %1197 = vdwg.mxu0
    %v1198 = vadd.f32 %v1123, %v1195
    %s1199 = scalar_lea.vmem [#allocation6], 8
    %v1200 = vld [vmem:[%s1199] sm:$0xff]
    %v1201 = vld [vmem:[%s860] sm:$0xff]
    %v1202 = vld [vmem:[%s860 + $0x8] sm:$0xff]
    %v1203 = vld [vmem:[%s860 + $0x10] sm:$0xff]
    %v1204 = vld [vmem:[%s860 + $0x18] sm:$0xff]
    %1205 = vmatprep.subr.mxu0 0.0
    %1206 = vmatpush1.msra.mxu0 0.0
    %1207 = vmatprep.subr.mxu0 0.0
    %1208 = vmatpush1.msra.mxu0 0.0
    %1209 = vmatprep.subr.mxu0 0.0
    %1210 = vmatpush1.msra.mxu0 0.0
    %1211 = vmatprep.subr.mxu0 0.0
    %1212 = vmatpush1.msra.mxu0 0.0
    %1213 = vmatprep.subr.mxu0 0.0
    %1214 = vmatpush1.msra.mxu0 0.0
    %1215 = vmatprep.subr.mxu0 0.0
    %1216 = vmatpush1.msra.mxu0 0.0
    %1217 = vmatprep.subr.mxu0 0.0
    %1218 = vmatpush1.msra.mxu0 0.0
    %1219 = vmatprep.subr.mxu0 0.0
    %1220 = vmatpush1.msra.mxu0 0.0
    %1221 = vmatprep.subr.mxu0 0.0
    %1222 = vmatpush1.msra.mxu0 0.0
    %1223 = vmatprep.subr.mxu0 0.0
    %1224 = vmatpush1.msra.mxu0 0.0
    %1225 = vmatprep.subr.mxu0 0.0
    %1226 = vmatpush1.msra.mxu0 0.0
    %1227 = vmatprep.subr.mxu0 0.0
    %1228 = vmatpush1.msra.mxu0 0.0
    %1229 = vmatprep.subr.mxu0 0.0
    %1230 = vmatpush1.msra.mxu0 %v1204
    %1231 = vmatprep.subr.mxu0 0.0
    %1232 = vmatpush1.msra.mxu0 %v1203
    %1233 = vmatprep.subr.mxu0 0.0
    %1234 = vmatpush1.msra.mxu0 %v1202
    %1235 = vmatprep.subr.mxu0 0.0
    %1236 = vmatpush1.msra.mxu0 %v1201
    %1237 = vmatprep.subr.mxu0 0.0
    %1238 = vmatpush2.msra.mxu0 0.0
    %1239 = vmatprep.subr.mxu0 0.0
    %1240 = vmatpush2.msra.mxu0 0.0
    %1241 = vmatprep.subr.mxu0 0.0
    %1242 = vmatpush2.msra.mxu0 0.0
    %1243 = vmatprep.subr.mxu0 0.0
    %1244 = vmatpush2.msra.mxu0 0.0
    %1245 = vmatprep.subr.mxu0 0.0
    %1246 = vmatpush2.msra.mxu0 0.0
    %1247 = vmatprep.subr.mxu0 0.0
    %1248 = vmatpush2.msra.mxu0 0.0
    %1249 = vmatprep.subr.mxu0 0.0
    %1250 = vmatpush2.msra.mxu0 0.0
    %1251 = vmatprep.subr.mxu0 0.0
    %1252 = vmatpush2.msra.mxu0 0.0
    %1253 = vmatprep.subr.mxu0 0.0
    %1254 = vmatpush2.msra.mxu0 0.0
    %1255 = vmatprep.subr.mxu0 0.0
    %1256 = vmatpush2.msra.mxu0 0.0
    %1257 = vmatprep.subr.mxu0 0.0
    %1258 = vmatpush2.msra.mxu0 0.0
    %1259 = vmatprep.subr.mxu0 0.0
    %1260 = vmatpush2.msra.mxu0 0.0
    %1261 = vmatprep.subr.mxu0 0.0
    %1262 = vmatpush2.msra.mxu0 0.0
    %1263 = vmatprep.subr.mxu0 0.0
    %1264 = vmatpush2.msra.mxu0 0.0
    %1265 = vmatprep.subr.mxu0 0.0
    %1266 = vmatpush2.msra.mxu0 0.0
    %1267 = vmatprep.subr.mxu0 0.0
    %1268 = vmatpush2.msra.mxu0 0.0
    %1269 = vmatprep.mubr.f32.mxu0 0.0
    %1270 = vmatmul.mubr.f32.gmra.mxu0 %v972
    %v1271 = vpop.f32.mrf.mxu0
    %v1272 = vadd.f32 0.0, %v1271
    %v1273 = vpop.f32.mrf.mxu0
    %1274 = vdwg.mxu0
    %v1275 = vadd.f32 %v1200, %v1272
    %v1276 = vxor.u32 %v1044, 2147483648
    %v1277 = vmul.f32 %v1276, 1.442695
    %v1278 = vpow.pop %v1277
    %v1279 = vadd.f32 %v1278, 1.0
    %v1280 = vrcp.pop %v1279
    %v1281 = vmul.f32 1.0, %v1280
    %v1282 = vxor.u32 %v1121, 2147483648
    %v1283 = vmul.f32 %v1282, 1.442695
    %v1284 = vpow.pop %v1283
    %v1285 = vadd.f32 %v1284, 1.0
    %v1286 = vrcp.pop %v1285
    %v1287 = vmul.f32 1.0, %v1286
    %v1288 = vtanh.pop %v1198
    %v1289 = vxor.u32 %v1275, 2147483648
    %v1290 = vmul.f32 %v1289, 1.442695
    %v1291 = vpow.pop %v1290
    %v1292 = vadd.f32 %v1291, 1.0
    %v1293 = vrcp.pop %v1292
    %v1294 = vmul.f32 1.0, %v1293
    %v1295 = vmul.f32 %v1287, %v964
    %v1296 = vmul.f32 %v1281, %v1288
    %v1297 = vadd.f32 %v1295, %v1296
    %v1298 = vtanh.pop %v1297
    %v1299 = vmul.f32 %v1294, %v1298
    %1300 = vst.msk [vmem:[#allocation7] sm:$0xff] %vm235, %v1299
    %1301 = vst.msk [vmem:[#allocation8] sm:$0xff] %vm235, %v1297
    %s1302 = scalar_lea.vmem [#allocation2], 8
    %1303 = vst.msk [vmem:[%s1302] sm:$0xff] %vm235, %v1299
    %v1304 = vld [vmem:[#allocation7] sm:$0xff]
    %v1305 = vld [vmem:[#allocation8] sm:$0xff]
    %s1306 = scalar_lea.vmem [#allocation3], 16
    %v1307 = vld [vmem:[%s1306] sm:$0xff]
    %v1308 = vld [vmem:[#allocation9] sm:$0xff]
    %v1309 = vld [vmem:[#allocation9 + $0x8] sm:$0xff]
    %v1310 = vld [vmem:[#allocation9 + $0x10] sm:$0xff]
    %v1311 = vld [vmem:[#allocation9 + $0x18] sm:$0xff]
    %v1313 = vsel %vm235, %v1304, 0
    %1315 = vmatprep.subr.mxu0 0.0
    %1316 = vmatpush1.msra.mxu0 0.0
    %1317 = vmatprep.subr.mxu0 0.0
    %1318 = vmatpush1.msra.mxu0 0.0
    %1319 = vmatprep.subr.mxu0 0.0
    %1320 = vmatpush1.msra.mxu0 0.0
    %1321 = vmatprep.subr.mxu0 0.0
    %1322 = vmatpush1.msra.mxu0 0.0
    %1323 = vmatprep.subr.mxu0 0.0
    %1324 = vmatpush1.msra.mxu0 0.0
    %1325 = vmatprep.subr.mxu0 0.0
    %1326 = vmatpush1.msra.mxu0 0.0
    %1327 = vmatprep.subr.mxu0 0.0
    %1328 = vmatpush1.msra.mxu0 0.0
    %1329 = vmatprep.subr.mxu0 0.0
    %1330 = vmatpush1.msra.mxu0 0.0
    %1331 = vmatprep.subr.mxu0 0.0
    %1332 = vmatpush1.msra.mxu0 0.0
    %1333 = vmatprep.subr.mxu0 0.0
    %1334 = vmatpush1.msra.mxu0 0.0
    %1335 = vmatprep.subr.mxu0 0.0
    %1336 = vmatpush1.msra.mxu0 0.0
    %1337 = vmatprep.subr.mxu0 0.0
    %1338 = vmatpush1.msra.mxu0 0.0
    %1339 = vmatprep.subr.mxu0 0.0
    %1340 = vmatpush1.msra.mxu0 %v1311
    %1341 = vmatprep.subr.mxu0 0.0
    %1342 = vmatpush1.msra.mxu0 %v1310
    %1343 = vmatprep.subr.mxu0 0.0
    %1344 = vmatpush1.msra.mxu0 %v1309
    %1345 = vmatprep.subr.mxu0 0.0
    %1346 = vmatpush1.msra.mxu0 %v1308
    %1347 = vmatprep.subr.mxu0 0.0
    %1348 = vmatpush2.msra.mxu0 0.0
    %1349 = vmatprep.subr.mxu0 0.0
    %1350 = vmatpush2.msra.mxu0 0.0
    %1351 = vmatprep.subr.mxu0 0.0
    %1352 = vmatpush2.msra.mxu0 0.0
    %1353 = vmatprep.subr.mxu0 0.0
    %1354 = vmatpush2.msra.mxu0 0.0
    %1355 = vmatprep.subr.mxu0 0.0
    %1356 = vmatpush2.msra.mxu0 0.0
    %1357 = vmatprep.subr.mxu0 0.0
    %1358 = vmatpush2.msra.mxu0 0.0
    %1359 = vmatprep.subr.mxu0 0.0
    %1360 = vmatpush2.msra.mxu0 0.0
    %1361 = vmatprep.subr.mxu0 0.0
    %1362 = vmatpush2.msra.mxu0 0.0
    %1363 = vmatprep.subr.mxu0 0.0
    %1364 = vmatpush2.msra.mxu0 0.0
    %1365 = vmatprep.subr.mxu0 0.0
    %1366 = vmatpush2.msra.mxu0 0.0
    %1367 = vmatprep.subr.mxu0 0.0
    %1368 = vmatpush2.msra.mxu0 0.0
    %1369 = vmatprep.subr.mxu0 0.0
    %1370 = vmatpush2.msra.mxu0 0.0
    %1371 = vmatprep.subr.mxu0 0.0
    %1372 = vmatpush2.msra.mxu0 0.0
    %1373 = vmatprep.subr.mxu0 0.0
    %1374 = vmatpush2.msra.mxu0 0.0
    %1375 = vmatprep.subr.mxu0 0.0
    %1376 = vmatpush2.msra.mxu0 0.0
    %1377 = vmatprep.subr.mxu0 0.0
    %1378 = vmatpush2.msra.mxu0 0.0
    %1379 = vmatprep.mubr.f32.mxu0 0.0
    %1380 = vmatmul.mubr.f32.gmra.mxu0 %v1313
    %v1381 = vpop.f32.mrf.mxu0
    %v1382 = vadd.f32 0.0, %v1381
    %v1383 = vpop.f32.mrf.mxu0
    %1384 = vdwg.mxu0
    %v1385 = vadd.f32 %v1307, %v1382
    %s1386 = scalar_lea.vmem [#allocation4], 16
    %v1387 = vld [vmem:[%s1386] sm:$0xff]
    %v1388 = vld [vmem:[%s706] sm:$0xff]
    %v1389 = vld [vmem:[%s706 + $0x8] sm:$0xff]
    %v1390 = vld [vmem:[%s706 + $0x10] sm:$0xff]
    %v1391 = vld [vmem:[%s706 + $0x18] sm:$0xff]
    %1392 = vmatprep.subr.mxu0 0.0
    %1393 = vmatpush1.msra.mxu0 0.0
    %1394 = vmatprep.subr.mxu0 0.0
    %1395 = vmatpush1.msra.mxu0 0.0
    %1396 = vmatprep.subr.mxu0 0.0
    %1397 = vmatpush1.msra.mxu0 0.0
    %1398 = vmatprep.subr.mxu0 0.0
    %1399 = vmatpush1.msra.mxu0 0.0
    %1400 = vmatprep.subr.mxu0 0.0
    %1401 = vmatpush1.msra.mxu0 0.0
    %1402 = vmatprep.subr.mxu0 0.0
    %1403 = vmatpush1.msra.mxu0 0.0
    %1404 = vmatprep.subr.mxu0 0.0
    %1405 = vmatpush1.msra.mxu0 0.0
    %1406 = vmatprep.subr.mxu0 0.0
    %1407 = vmatpush1.msra.mxu0 0.0
    %1408 = vmatprep.subr.mxu0 0.0
    %1409 = vmatpush1.msra.mxu0 0.0
    %1410 = vmatprep.subr.mxu0 0.0
    %1411 = vmatpush1.msra.mxu0 0.0
    %1412 = vmatprep.subr.mxu0 0.0
    %1413 = vmatpush1.msra.mxu0 0.0
    %1414 = vmatprep.subr.mxu0 0.0
    %1415 = vmatpush1.msra.mxu0 0.0
    %1416 = vmatprep.subr.mxu0 0.0
    %1417 = vmatpush1.msra.mxu0 %v1391
    %1418 = vmatprep.subr.mxu0 0.0
    %1419 = vmatpush1.msra.mxu0 %v1390
    %1420 = vmatprep.subr.mxu0 0.0
    %1421 = vmatpush1.msra.mxu0 %v1389
    %1422 = vmatprep.subr.mxu0 0.0
    %1423 = vmatpush1.msra.mxu0 %v1388
    %1424 = vmatprep.subr.mxu0 0.0
    %1425 = vmatpush2.msra.mxu0 0.0
    %1426 = vmatprep.subr.mxu0 0.0
    %1427 = vmatpush2.msra.mxu0 0.0
    %1428 = vmatprep.subr.mxu0 0.0
    %1429 = vmatpush2.msra.mxu0 0.0
    %1430 = vmatprep.subr.mxu0 0.0
    %1431 = vmatpush2.msra.mxu0 0.0
    %1432 = vmatprep.subr.mxu0 0.0
    %1433 = vmatpush2.msra.mxu0 0.0
    %1434 = vmatprep.subr.mxu0 0.0
    %1435 = vmatpush2.msra.mxu0 0.0
    %1436 = vmatprep.subr.mxu0 0.0
    %1437 = vmatpush2.msra.mxu0 0.0
    %1438 = vmatprep.subr.mxu0 0.0
    %1439 = vmatpush2.msra.mxu0 0.0
    %1440 = vmatprep.subr.mxu0 0.0
    %1441 = vmatpush2.msra.mxu0 0.0
    %1442 = vmatprep.subr.mxu0 0.0
    %1443 = vmatpush2.msra.mxu0 0.0
    %1444 = vmatprep.subr.mxu0 0.0
    %1445 = vmatpush2.msra.mxu0 0.0
    %1446 = vmatprep.subr.mxu0 0.0
    %1447 = vmatpush2.msra.mxu0 0.0
    %1448 = vmatprep.subr.mxu0 0.0
    %1449 = vmatpush2.msra.mxu0 0.0
    %1450 = vmatprep.subr.mxu0 0.0
    %1451 = vmatpush2.msra.mxu0 0.0
    %1452 = vmatprep.subr.mxu0 0.0
    %1453 = vmatpush2.msra.mxu0 0.0
    %1454 = vmatprep.subr.mxu0 0.0
    %1455 = vmatpush2.msra.mxu0 0.0
    %1456 = vmatprep.mubr.f32.mxu0 0.0
    %1457 = vmatmul.mubr.f32.gmra.mxu0 %v1313
    %v1458 = vpop.f32.mrf.mxu0
    %v1459 = vadd.f32 0.0, %v1458
    %v1460 = vpop.f32.mrf.mxu0
    %1461 = vdwg.mxu0
    %v1462 = vadd.f32 %v1387, %v1459
    %s1463 = scalar_lea.vmem [#allocation5], 16
    %v1464 = vld [vmem:[%s1463] sm:$0xff]
    %v1465 = vld [vmem:[%s783] sm:$0xff]
    %v1466 = vld [vmem:[%s783 + $0x8] sm:$0xff]
    %v1467 = vld [vmem:[%s783 + $0x10] sm:$0xff]
    %v1468 = vld [vmem:[%s783 + $0x18] sm:$0xff]
    %1469 = vmatprep.subr.mxu0 0.0
    %1470 = vmatpush1.msra.mxu0 0.0
    %1471 = vmatprep.subr.mxu0 0.0
    %1472 = vmatpush1.msra.mxu0 0.0
    %1473 = vmatprep.subr.mxu0 0.0
    %1474 = vmatpush1.msra.mxu0 0.0
    %1475 = vmatprep.subr.mxu0 0.0
    %1476 = vmatpush1.msra.mxu0 0.0
    %1477 = vmatprep.subr.mxu0 0.0
    %1478 = vmatpush1.msra.mxu0 0.0
    %1479 = vmatprep.subr.mxu0 0.0
    %1480 = vmatpush1.msra.mxu0 0.0
    %1481 = vmatprep.subr.mxu0 0.0
    %1482 = vmatpush1.msra.mxu0 0.0
    %1483 = vmatprep.subr.mxu0 0.0
    %1484 = vmatpush1.msra.mxu0 0.0
    %1485 = vmatprep.subr.mxu0 0.0
    %1486 = vmatpush1.msra.mxu0 0.0
    %1487 = vmatprep.subr.mxu0 0.0
    %1488 = vmatpush1.msra.mxu0 0.0
    %1489 = vmatprep.subr.mxu0 0.0
    %1490 = vmatpush1.msra.mxu0 0.0
    %1491 = vmatprep.subr.mxu0 0.0
    %1492 = vmatpush1.msra.mxu0 0.0
    %1493 = vmatprep.subr.mxu0 0.0
    %1494 = vmatpush1.msra.mxu0 %v1468
    %1495 = vmatprep.subr.mxu0 0.0
    %1496 = vmatpush1.msra.mxu0 %v1467
    %1497 = vmatprep.subr.mxu0 0.0
    %1498 = vmatpush1.msra.mxu0 %v1466
    %1499 = vmatprep.subr.mxu0 0.0
    %1500 = vmatpush1.msra.mxu0 %v1465
    %1501 = vmatprep.subr.mxu0 0.0
    %1502 = vmatpush2.msra.mxu0 0.0
    %1503 = vmatprep.subr.mxu0 0.0
    %1504 = vmatpush2.msra.mxu0 0.0
    %1505 = vmatprep.subr.mxu0 0.0
    %1506 = vmatpush2.msra.mxu0 0.0
    %1507 = vmatprep.subr.mxu0 0.0
    %1508 = vmatpush2.msra.mxu0 0.0
    %1509 = vmatprep.subr.mxu0 0.0
    %1510 = vmatpush2.msra.mxu0 0.0
    %1511 = vmatprep.subr.mxu0 0.0
    %1512 = vmatpush2.msra.mxu0 0.0
    %1513 = vmatprep.subr.mxu0 0.0
    %1514 = vmatpush2.msra.mxu0 0.0
    %1515 = vmatprep.subr.mxu0 0.0
    %1516 = vmatpush2.msra.mxu0 0.0
    %1517 = vmatprep.subr.mxu0 0.0
    %1518 = vmatpush2.msra.mxu0 0.0
    %1519 = vmatprep.subr.mxu0 0.0
    %1520 = vmatpush2.msra.mxu0 0.0
    %1521 = vmatprep.subr.mxu0 0.0
    %1522 = vmatpush2.msra.mxu0 0.0
    %1523 = vmatprep.subr.mxu0 0.0
    %1524 = vmatpush2.msra.mxu0 0.0
    %1525 = vmatprep.subr.mxu0 0.0
    %1526 = vmatpush2.msra.mxu0 0.0
    %1527 = vmatprep.subr.mxu0 0.0
    %1528 = vmatpush2.msra.mxu0 0.0
    %1529 = vmatprep.subr.mxu0 0.0
    %1530 = vmatpush2.msra.mxu0 0.0
    %1531 = vmatprep.subr.mxu0 0.0
    %1532 = vmatpush2.msra.mxu0 0.0
    %1533 = vmatprep.mubr.f32.mxu0 0.0
    %1534 = vmatmul.mubr.f32.gmra.mxu0 %v1313
    %v1535 = vpop.f32.mrf.mxu0
    %v1536 = vadd.f32 0.0, %v1535
    %v1537 = vpop.f32.mrf.mxu0
    %1538 = vdwg.mxu0
    %v1539 = vadd.f32 %v1464, %v1536
    %s1540 = scalar_lea.vmem [#allocation6], 16
    %v1541 = vld [vmem:[%s1540] sm:$0xff]
    %v1542 = vld [vmem:[%s860] sm:$0xff]
    %v1543 = vld [vmem:[%s860 + $0x8] sm:$0xff]
    %v1544 = vld [vmem:[%s860 + $0x10] sm:$0xff]
    %v1545 = vld [vmem:[%s860 + $0x18] sm:$0xff]
    %1546 = vmatprep.subr.mxu0 0.0
    %1547 = vmatpush1.msra.mxu0 0.0
    %1548 = vmatprep.subr.mxu0 0.0
    %1549 = vmatpush1.msra.mxu0 0.0
    %1550 = vmatprep.subr.mxu0 0.0
    %1551 = vmatpush1.msra.mxu0 0.0
    %1552 = vmatprep.subr.mxu0 0.0
    %1553 = vmatpush1.msra.mxu0 0.0
    %1554 = vmatprep.subr.mxu0 0.0
    %1555 = vmatpush1.msra.mxu0 0.0
    %1556 = vmatprep.subr.mxu0 0.0
    %1557 = vmatpush1.msra.mxu0 0.0
    %1558 = vmatprep.subr.mxu0 0.0
    %1559 = vmatpush1.msra.mxu0 0.0
    %1560 = vmatprep.subr.mxu0 0.0
    %1561 = vmatpush1.msra.mxu0 0.0
    %1562 = vmatprep.subr.mxu0 0.0
    %1563 = vmatpush1.msra.mxu0 0.0
    %1564 = vmatprep.subr.mxu0 0.0
    %1565 = vmatpush1.msra.mxu0 0.0
    %1566 = vmatprep.subr.mxu0 0.0
    %1567 = vmatpush1.msra.mxu0 0.0
    %1568 = vmatprep.subr.mxu0 0.0
    %1569 = vmatpush1.msra.mxu0 0.0
    %1570 = vmatprep.subr.mxu0 0.0
    %1571 = vmatpush1.msra.mxu0 %v1545
    %1572 = vmatprep.subr.mxu0 0.0
    %1573 = vmatpush1.msra.mxu0 %v1544
    %1574 = vmatprep.subr.mxu0 0.0
    %1575 = vmatpush1.msra.mxu0 %v1543
    %1576 = vmatprep.subr.mxu0 0.0
    %1577 = vmatpush1.msra.mxu0 %v1542
    %1578 = vmatprep.subr.mxu0 0.0
    %1579 = vmatpush2.msra.mxu0 0.0
    %1580 = vmatprep.subr.mxu0 0.0
    %1581 = vmatpush2.msra.mxu0 0.0
    %1582 = vmatprep.subr.mxu0 0.0
    %1583 = vmatpush2.msra.mxu0 0.0
    %1584 = vmatprep.subr.mxu0 0.0
    %1585 = vmatpush2.msra.mxu0 0.0
    %1586 = vmatprep.subr.mxu0 0.0
    %1587 = vmatpush2.msra.mxu0 0.0
    %1588 = vmatprep.subr.mxu0 0.0
    %1589 = vmatpush2.msra.mxu0 0.0
    %1590 = vmatprep.subr.mxu0 0.0
    %1591 = vmatpush2.msra.mxu0 0.0
    %1592 = vmatprep.subr.mxu0 0.0
    %1593 = vmatpush2.msra.mxu0 0.0
    %1594 = vmatprep.subr.mxu0 0.0
    %1595 = vmatpush2.msra.mxu0 0.0
    %1596 = vmatprep.subr.mxu0 0.0
    %1597 = vmatpush2.msra.mxu0 0.0
    %1598 = vmatprep.subr.mxu0 0.0
    %1599 = vmatpush2.msra.mxu0 0.0
    %1600 = vmatprep.subr.mxu0 0.0
    %1601 = vmatpush2.msra.mxu0 0.0
    %1602 = vmatprep.subr.mxu0 0.0
    %1603 = vmatpush2.msra.mxu0 0.0
    %1604 = vmatprep.subr.mxu0 0.0
    %1605 = vmatpush2.msra.mxu0 0.0
    %1606 = vmatprep.subr.mxu0 0.0
    %1607 = vmatpush2.msra.mxu0 0.0
    %1608 = vmatprep.subr.mxu0 0.0
    %1609 = vmatpush2.msra.mxu0 0.0
    %1610 = vmatprep.mubr.f32.mxu0 0.0
    %1611 = vmatmul.mubr.f32.gmra.mxu0 %v1313
    %v1612 = vpop.f32.mrf.mxu0
    %v1613 = vadd.f32 0.0, %v1612
    %v1614 = vpop.f32.mrf.mxu0
    %1615 = vdwg.mxu0
    %v1616 = vadd.f32 %v1541, %v1613
    %v1617 = vxor.u32 %v1385, 2147483648
    %v1618 = vmul.f32 %v1617, 1.442695
    %v1619 = vpow.pop %v1618
    %v1620 = vadd.f32 %v1619, 1.0
    %v1621 = vrcp.pop %v1620
    %v1622 = vmul.f32 1.0, %v1621
    %v1623 = vxor.u32 %v1462, 2147483648
    %v1624 = vmul.f32 %v1623, 1.442695
    %v1625 = vpow.pop %v1624
    %v1626 = vadd.f32 %v1625, 1.0
    %v1627 = vrcp.pop %v1626
    %v1628 = vmul.f32 1.0, %v1627
    %v1629 = vtanh.pop %v1539
    %v1630 = vxor.u32 %v1616, 2147483648
    %v1631 = vmul.f32 %v1630, 1.442695
    %v1632 = vpow.pop %v1631
    %v1633 = vadd.f32 %v1632, 1.0
    %v1634 = vrcp.pop %v1633
    %v1635 = vmul.f32 1.0, %v1634
    %v1636 = vmul.f32 %v1628, %v1305
    %v1637 = vmul.f32 %v1622, %v1629
    %v1638 = vadd.f32 %v1636, %v1637
    %v1639 = vtanh.pop %v1638
    %v1640 = vmul.f32 %v1635, %v1639
    %1641 = vst.msk [vmem:[#allocation7] sm:$0xff] %vm235, %v1640
    %1642 = vst.msk [vmem:[#allocation8] sm:$0xff] %vm235, %v1638
    %s1643 = scalar_lea.vmem [#allocation2], 16
    %1644 = vst.msk [vmem:[%s1643] sm:$0xff] %vm235, %v1640
    %v1645 = vld [vmem:[#allocation7] sm:$0xff]
    %v1646 = vld [vmem:[#allocation8] sm:$0xff]
    %s1647 = scalar_lea.vmem [#allocation3], 24
    %v1648 = vld [vmem:[%s1647] sm:$0xff]
    %v1649 = vld [vmem:[#allocation9] sm:$0xff]
    %v1650 = vld [vmem:[#allocation9 + $0x8] sm:$0xff]
    %v1651 = vld [vmem:[#allocation9 + $0x10] sm:$0xff]
    %v1652 = vld [vmem:[#allocation9 + $0x18] sm:$0xff]
    %v1654 = vsel %vm235, %v1645, 0
    %1656 = vmatprep.subr.mxu0 0.0
    %1657 = vmatpush1.msra.mxu0 0.0
    %1658 = vmatprep.subr.mxu0 0.0
    %1659 = vmatpush1.msra.mxu0 0.0
    %1660 = vmatprep.subr.mxu0 0.0
    %1661 = vmatpush1.msra.mxu0 0.0
    %1662 = vmatprep.subr.mxu0 0.0
    %1663 = vmatpush1.msra.mxu0 0.0
    %1664 = vmatprep.subr.mxu0 0.0
    %1665 = vmatpush1.msra.mxu0 0.0
    %1666 = vmatprep.subr.mxu0 0.0
    %1667 = vmatpush1.msra.mxu0 0.0
    %1668 = vmatprep.subr.mxu0 0.0
    %1669 = vmatpush1.msra.mxu0 0.0
    %1670 = vmatprep.subr.mxu0 0.0
    %1671 = vmatpush1.msra.mxu0 0.0
    %1672 = vmatprep.subr.mxu0 0.0
    %1673 = vmatpush1.msra.mxu0 0.0
    %1674 = vmatprep.subr.mxu0 0.0
    %1675 = vmatpush1.msra.mxu0 0.0
    %1676 = vmatprep.subr.mxu0 0.0
    %1677 = vmatpush1.msra.mxu0 0.0
    %1678 = vmatprep.subr.mxu0 0.0
    %1679 = vmatpush1.msra.mxu0 0.0
    %1680 = vmatprep.subr.mxu0 0.0
    %1681 = vmatpush1.msra.mxu0 %v1652
    %1682 = vmatprep.subr.mxu0 0.0
    %1683 = vmatpush1.msra.mxu0 %v1651
    %1684 = vmatprep.subr.mxu0 0.0
    %1685 = vmatpush1.msra.mxu0 %v1650
    %1686 = vmatprep.subr.mxu0 0.0
    %1687 = vmatpush1.msra.mxu0 %v1649
    %1688 = vmatprep.subr.mxu0 0.0
    %1689 = vmatpush2.msra.mxu0 0.0
    %1690 = vmatprep.subr.mxu0 0.0
    %1691 = vmatpush2.msra.mxu0 0.0
    %1692 = vmatprep.subr.mxu0 0.0
    %1693 = vmatpush2.msra.mxu0 0.0
    %1694 = vmatprep.subr.mxu0 0.0
    %1695 = vmatpush2.msra.mxu0 0.0
    %1696 = vmatprep.subr.mxu0 0.0
    %1697 = vmatpush2.msra.mxu0 0.0
    %1698 = vmatprep.subr.mxu0 0.0
    %1699 = vmatpush2.msra.mxu0 0.0
    %1700 = vmatprep.subr.mxu0 0.0
    %1701 = vmatpush2.msra.mxu0 0.0
    %1702 = vmatprep.subr.mxu0 0.0
    %1703 = vmatpush2.msra.mxu0 0.0
    %1704 = vmatprep.subr.mxu0 0.0
    %1705 = vmatpush2.msra.mxu0 0.0
    %1706 = vmatprep.subr.mxu0 0.0
    %1707 = vmatpush2.msra.mxu0 0.0
    %1708 = vmatprep.subr.mxu0 0.0
    %1709 = vmatpush2.msra.mxu0 0.0
    %1710 = vmatprep.subr.mxu0 0.0
    %1711 = vmatpush2.msra.mxu0 0.0
    %1712 = vmatprep.subr.mxu0 0.0
    %1713 = vmatpush2.msra.mxu0 0.0
    %1714 = vmatprep.subr.mxu0 0.0
    %1715 = vmatpush2.msra.mxu0 0.0
    %1716 = vmatprep.subr.mxu0 0.0
    %1717 = vmatpush2.msra.mxu0 0.0
    %1718 = vmatprep.subr.mxu0 0.0
    %1719 = vmatpush2.msra.mxu0 0.0
    %1720 = vmatprep.mubr.f32.mxu0 0.0
    %1721 = vmatmul.mubr.f32.gmra.mxu0 %v1654
    %v1722 = vpop.f32.mrf.mxu0
    %v1723 = vadd.f32 0.0, %v1722
    %v1724 = vpop.f32.mrf.mxu0
    %1725 = vdwg.mxu0
    %v1726 = vadd.f32 %v1648, %v1723
    %s1727 = scalar_lea.vmem [#allocation4], 24
    %v1728 = vld [vmem:[%s1727] sm:$0xff]
    %v1729 = vld [vmem:[%s706] sm:$0xff]
    %v1730 = vld [vmem:[%s706 + $0x8] sm:$0xff]
    %v1731 = vld [vmem:[%s706 + $0x10] sm:$0xff]
    %v1732 = vld [vmem:[%s706 + $0x18] sm:$0xff]
    %1733 = vmatprep.subr.mxu0 0.0
    %1734 = vmatpush1.msra.mxu0 0.0
    %1735 = vmatprep.subr.mxu0 0.0
    %1736 = vmatpush1.msra.mxu0 0.0
    %1737 = vmatprep.subr.mxu0 0.0
    %1738 = vmatpush1.msra.mxu0 0.0
    %1739 = vmatprep.subr.mxu0 0.0
    %1740 = vmatpush1.msra.mxu0 0.0
    %1741 = vmatprep.subr.mxu0 0.0
    %1742 = vmatpush1.msra.mxu0 0.0
    %1743 = vmatprep.subr.mxu0 0.0
    %1744 = vmatpush1.msra.mxu0 0.0
    %1745 = vmatprep.subr.mxu0 0.0
    %1746 = vmatpush1.msra.mxu0 0.0
    %1747 = vmatprep.subr.mxu0 0.0
    %1748 = vmatpush1.msra.mxu0 0.0
    %1749 = vmatprep.subr.mxu0 0.0
    %1750 = vmatpush1.msra.mxu0 0.0
    %1751 = vmatprep.subr.mxu0 0.0
    %1752 = vmatpush1.msra.mxu0 0.0
    %1753 = vmatprep.subr.mxu0 0.0
    %1754 = vmatpush1.msra.mxu0 0.0
    %1755 = vmatprep.subr.mxu0 0.0
    %1756 = vmatpush1.msra.mxu0 0.0
    %1757 = vmatprep.subr.mxu0 0.0
    %1758 = vmatpush1.msra.mxu0 %v1732
    %1759 = vmatprep.subr.mxu0 0.0
    %1760 = vmatpush1.msra.mxu0 %v1731
    %1761 = vmatprep.subr.mxu0 0.0
    %1762 = vmatpush1.msra.mxu0 %v1730
    %1763 = vmatprep.subr.mxu0 0.0
    %1764 = vmatpush1.msra.mxu0 %v1729
    %1765 = vmatprep.subr.mxu0 0.0
    %1766 = vmatpush2.msra.mxu0 0.0
    %1767 = vmatprep.subr.mxu0 0.0
    %1768 = vmatpush2.msra.mxu0 0.0
    %1769 = vmatprep.subr.mxu0 0.0
    %1770 = vmatpush2.msra.mxu0 0.0
    %1771 = vmatprep.subr.mxu0 0.0
    %1772 = vmatpush2.msra.mxu0 0.0
    %1773 = vmatprep.subr.mxu0 0.0
    %1774 = vmatpush2.msra.mxu0 0.0
    %1775 = vmatprep.subr.mxu0 0.0
    %1776 = vmatpush2.msra.mxu0 0.0
    %1777 = vmatprep.subr.mxu0 0.0
    %1778 = vmatpush2.msra.mxu0 0.0
    %1779 = vmatprep.subr.mxu0 0.0
    %1780 = vmatpush2.msra.mxu0 0.0
    %1781 = vmatprep.subr.mxu0 0.0
    %1782 = vmatpush2.msra.mxu0 0.0
    %1783 = vmatprep.subr.mxu0 0.0
    %1784 = vmatpush2.msra.mxu0 0.0
    %1785 = vmatprep.subr.mxu0 0.0
    %1786 = vmatpush2.msra.mxu0 0.0
    %1787 = vmatprep.subr.mxu0 0.0
    %1788 = vmatpush2.msra.mxu0 0.0
    %1789 = vmatprep.subr.mxu0 0.0
    %1790 = vmatpush2.msra.mxu0 0.0
    %1791 = vmatprep.subr.mxu0 0.0
    %1792 = vmatpush2.msra.mxu0 0.0
    %1793 = vmatprep.subr.mxu0 0.0
    %1794 = vmatpush2.msra.mxu0 0.0
    %1795 = vmatprep.subr.mxu0 0.0
    %1796 = vmatpush2.msra.mxu0 0.0
    %1797 = vmatprep.mubr.f32.mxu0 0.0
    %1798 = vmatmul.mubr.f32.gmra.mxu0 %v1654
    %v1799 = vpop.f32.mrf.mxu0
    %v1800 = vadd.f32 0.0, %v1799
    %v1801 = vpop.f32.mrf.mxu0
    %1802 = vdwg.mxu0
    %v1803 = vadd.f32 %v1728, %v1800
    %s1804 = scalar_lea.vmem [#allocation5], 24
    %v1805 = vld [vmem:[%s1804] sm:$0xff]
    %v1806 = vld [vmem:[%s783] sm:$0xff]
    %v1807 = vld [vmem:[%s783 + $0x8] sm:$0xff]
    %v1808 = vld [vmem:[%s783 + $0x10] sm:$0xff]
    %v1809 = vld [vmem:[%s783 + $0x18] sm:$0xff]
    %1810 = vmatprep.subr.mxu0 0.0
    %1811 = vmatpush1.msra.mxu0 0.0
    %1812 = vmatprep.subr.mxu0 0.0
    %1813 = vmatpush1.msra.mxu0 0.0
    %1814 = vmatprep.subr.mxu0 0.0
    %1815 = vmatpush1.msra.mxu0 0.0
    %1816 = vmatprep.subr.mxu0 0.0
    %1817 = vmatpush1.msra.mxu0 0.0
    %1818 = vmatprep.subr.mxu0 0.0
    %1819 = vmatpush1.msra.mxu0 0.0
    %1820 = vmatprep.subr.mxu0 0.0
    %1821 = vmatpush1.msra.mxu0 0.0
    %1822 = vmatprep.subr.mxu0 0.0
    %1823 = vmatpush1.msra.mxu0 0.0
    %1824 = vmatprep.subr.mxu0 0.0
    %1825 = vmatpush1.msra.mxu0 0.0
    %1826 = vmatprep.subr.mxu0 0.0
    %1827 = vmatpush1.msra.mxu0 0.0
    %1828 = vmatprep.subr.mxu0 0.0
    %1829 = vmatpush1.msra.mxu0 0.0
    %1830 = vmatprep.subr.mxu0 0.0
    %1831 = vmatpush1.msra.mxu0 0.0
    %1832 = vmatprep.subr.mxu0 0.0
    %1833 = vmatpush1.msra.mxu0 0.0
    %1834 = vmatprep.subr.mxu0 0.0
    %1835 = vmatpush1.msra.mxu0 %v1809
    %1836 = vmatprep.subr.mxu0 0.0
    %1837 = vmatpush1.msra.mxu0 %v1808
    %1838 = vmatprep.subr.mxu0 0.0
    %1839 = vmatpush1.msra.mxu0 %v1807
    %1840 = vmatprep.subr.mxu0 0.0
    %1841 = vmatpush1.msra.mxu0 %v1806
    %1842 = vmatprep.subr.mxu0 0.0
    %1843 = vmatpush2.msra.mxu0 0.0
    %1844 = vmatprep.subr.mxu0 0.0
    %1845 = vmatpush2.msra.mxu0 0.0
    %1846 = vmatprep.subr.mxu0 0.0
    %1847 = vmatpush2.msra.mxu0 0.0
    %1848 = vmatprep.subr.mxu0 0.0
    %1849 = vmatpush2.msra.mxu0 0.0
    %1850 = vmatprep.subr.mxu0 0.0
    %1851 = vmatpush2.msra.mxu0 0.0
    %1852 = vmatprep.subr.mxu0 0.0
    %1853 = vmatpush2.msra.mxu0 0.0
    %1854 = vmatprep.subr.mxu0 0.0
    %1855 = vmatpush2.msra.mxu0 0.0
    %1856 = vmatprep.subr.mxu0 0.0
    %1857 = vmatpush2.msra.mxu0 0.0
    %1858 = vmatprep.subr.mxu0 0.0
    %1859 = vmatpush2.msra.mxu0 0.0
    %1860 = vmatprep.subr.mxu0 0.0
    %1861 = vmatpush2.msra.mxu0 0.0
    %1862 = vmatprep.subr.mxu0 0.0
    %1863 = vmatpush2.msra.mxu0 0.0
    %1864 = vmatprep.subr.mxu0 0.0
    %1865 = vmatpush2.msra.mxu0 0.0
    %1866 = vmatprep.subr.mxu0 0.0
    %1867 = vmatpush2.msra.mxu0 0.0
    %1868 = vmatprep.subr.mxu0 0.0
    %1869 = vmatpush2.msra.mxu0 0.0
    %1870 = vmatprep.subr.mxu0 0.0
    %1871 = vmatpush2.msra.mxu0 0.0
    %1872 = vmatprep.subr.mxu0 0.0
    %1873 = vmatpush2.msra.mxu0 0.0
    %1874 = vmatprep.mubr.f32.mxu0 0.0
    %1875 = vmatmul.mubr.f32.gmra.mxu0 %v1654
    %v1876 = vpop.f32.mrf.mxu0
    %v1877 = vadd.f32 0.0, %v1876
    %v1878 = vpop.f32.mrf.mxu0
    %1879 = vdwg.mxu0
    %v1880 = vadd.f32 %v1805, %v1877
    %s1881 = scalar_lea.vmem [#allocation6], 24
    %v1882 = vld [vmem:[%s1881] sm:$0xff]
    %v1883 = vld [vmem:[%s860] sm:$0xff]
    %v1884 = vld [vmem:[%s860 + $0x8] sm:$0xff]
    %v1885 = vld [vmem:[%s860 + $0x10] sm:$0xff]
    %v1886 = vld [vmem:[%s860 + $0x18] sm:$0xff]
    %1887 = vmatprep.subr.mxu0 0.0
    %1888 = vmatpush1.msra.mxu0 0.0
    %1889 = vmatprep.subr.mxu0 0.0
    %1890 = vmatpush1.msra.mxu0 0.0
    %1891 = vmatprep.subr.mxu0 0.0
    %1892 = vmatpush1.msra.mxu0 0.0
    %1893 = vmatprep.subr.mxu0 0.0
    %1894 = vmatpush1.msra.mxu0 0.0
    %1895 = vmatprep.subr.mxu0 0.0
    %1896 = vmatpush1.msra.mxu0 0.0
    %1897 = vmatprep.subr.mxu0 0.0
    %1898 = vmatpush1.msra.mxu0 0.0
    %1899 = vmatprep.subr.mxu0 0.0
    %1900 = vmatpush1.msra.mxu0 0.0
    %1901 = vmatprep.subr.mxu0 0.0
    %1902 = vmatpush1.msra.mxu0 0.0
    %1903 = vmatprep.subr.mxu0 0.0
    %1904 = vmatpush1.msra.mxu0 0.0
    %1905 = vmatprep.subr.mxu0 0.0
    %1906 = vmatpush1.msra.mxu0 0.0
    %1907 = vmatprep.subr.mxu0 0.0
    %1908 = vmatpush1.msra.mxu0 0.0
    %1909 = vmatprep.subr.mxu0 0.0
    %1910 = vmatpush1.msra.mxu0 0.0
    %1911 = vmatprep.subr.mxu0 0.0
    %1912 = vmatpush1.msra.mxu0 %v1886
    %1913 = vmatprep.subr.mxu0 0.0
    %1914 = vmatpush1.msra.mxu0 %v1885
    %1915 = vmatprep.subr.mxu0 0.0
    %1916 = vmatpush1.msra.mxu0 %v1884
    %1917 = vmatprep.subr.mxu0 0.0
    %1918 = vmatpush1.msra.mxu0 %v1883
    %1919 = vmatprep.subr.mxu0 0.0
    %1920 = vmatpush2.msra.mxu0 0.0
    %1921 = vmatprep.subr.mxu0 0.0
    %1922 = vmatpush2.msra.mxu0 0.0
    %1923 = vmatprep.subr.mxu0 0.0
    %1924 = vmatpush2.msra.mxu0 0.0
    %1925 = vmatprep.subr.mxu0 0.0
    %1926 = vmatpush2.msra.mxu0 0.0
    %1927 = vmatprep.subr.mxu0 0.0
    %1928 = vmatpush2.msra.mxu0 0.0
    %1929 = vmatprep.subr.mxu0 0.0
    %1930 = vmatpush2.msra.mxu0 0.0
    %1931 = vmatprep.subr.mxu0 0.0
    %1932 = vmatpush2.msra.mxu0 0.0
    %1933 = vmatprep.subr.mxu0 0.0
    %1934 = vmatpush2.msra.mxu0 0.0
    %1935 = vmatprep.subr.mxu0 0.0
    %1936 = vmatpush2.msra.mxu0 0.0
    %1937 = vmatprep.subr.mxu0 0.0
    %1938 = vmatpush2.msra.mxu0 0.0
    %1939 = vmatprep.subr.mxu0 0.0
    %1940 = vmatpush2.msra.mxu0 0.0
    %1941 = vmatprep.subr.mxu0 0.0
    %1942 = vmatpush2.msra.mxu0 0.0
    %1943 = vmatprep.subr.mxu0 0.0
    %1944 = vmatpush2.msra.mxu0 0.0
    %1945 = vmatprep.subr.mxu0 0.0
    %1946 = vmatpush2.msra.mxu0 0.0
    %1947 = vmatprep.subr.mxu0 0.0
    %1948 = vmatpush2.msra.mxu0 0.0
    %1949 = vmatprep.subr.mxu0 0.0
    %1950 = vmatpush2.msra.mxu0 0.0
    %1951 = vmatprep.mubr.f32.mxu0 0.0
    %1952 = vmatmul.mubr.f32.gmra.mxu0 %v1654
    %v1953 = vpop.f32.mrf.mxu0
    %v1954 = vadd.f32 0.0, %v1953
    %v1955 = vpop.f32.mrf.mxu0
    %1956 = vdwg.mxu0
    %v1957 = vadd.f32 %v1882, %v1954
    %v1958 = vxor.u32 %v1726, 2147483648
    %v1959 = vmul.f32 %v1958, 1.442695
    %v1960 = vpow.pop %v1959
    %v1961 = vadd.f32 %v1960, 1.0
    %v1962 = vrcp.pop %v1961
    %v1963 = vmul.f32 1.0, %v1962
    %v1964 = vxor.u32 %v1803, 2147483648
    %v1965 = vmul.f32 %v1964, 1.442695
    %v1966 = vpow.pop %v1965
    %v1967 = vadd.f32 %v1966, 1.0
    %v1968 = vrcp.pop %v1967
    %v1969 = vmul.f32 1.0, %v1968
    %v1970 = vtanh.pop %v1880
    %v1971 = vxor.u32 %v1957, 2147483648
    %v1972 = vmul.f32 %v1971, 1.442695
    %v1973 = vpow.pop %v1972
    %v1974 = vadd.f32 %v1973, 1.0
    %v1975 = vrcp.pop %v1974
    %v1976 = vmul.f32 1.0, %v1975
    %v1977 = vmul.f32 %v1969, %v1646
    %v1978 = vmul.f32 %v1963, %v1970
    %v1979 = vadd.f32 %v1977, %v1978
    %v1980 = vtanh.pop %v1979
    %v1981 = vmul.f32 %v1976, %v1980
    %1982 = vst.msk [vmem:[#allocation7] sm:$0xff] %vm235, %v1981
    %1983 = vst.msk [vmem:[#allocation8] sm:$0xff] %vm235, %v1979
    %s1984 = scalar_lea.vmem [#allocation2], 24
    %1985 = vst.msk [vmem:[%s1984] sm:$0xff] %vm235, %v1981
    %v1986 = vld [vmem:[#allocation7] sm:$0xff]
    %v1987 = vld [vmem:[#allocation8] sm:$0xff]
    %s1988 = scalar_lea.vmem [#allocation3], 32
    %v1989 = vld [vmem:[%s1988] sm:$0xff]
    %v1990 = vld [vmem:[#allocation9] sm:$0xff]
    %v1991 = vld [vmem:[#allocation9 + $0x8] sm:$0xff]
    %v1992 = vld [vmem:[#allocation9 + $0x10] sm:$0xff]
    %v1993 = vld [vmem:[#allocation9 + $0x18] sm:$0xff]
    %v1995 = vsel %vm235, %v1986, 0
    %1997 = vmatprep.subr.mxu0 0.0
    %1998 = vmatpush1.msra.mxu0 0.0
    %1999 = vmatprep.subr.mxu0 0.0
    %2000 = vmatpush1.msra.mxu0 0.0
    %2001 = vmatprep.subr.mxu0 0.0
    %2002 = vmatpush1.msra.mxu0 0.0
    %2003 = vmatprep.subr.mxu0 0.0
    %2004 = vmatpush1.msra.mxu0 0.0
    %2005 = vmatprep.subr.mxu0 0.0
    %2006 = vmatpush1.msra.mxu0 0.0
    %2007 = vmatprep.subr.mxu0 0.0
    %2008 = vmatpush1.msra.mxu0 0.0
    %2009 = vmatprep.subr.mxu0 0.0
    %2010 = vmatpush1.msra.mxu0 0.0
    %2011 = vmatprep.subr.mxu0 0.0
    %2012 = vmatpush1.msra.mxu0 0.0
    %2013 = vmatprep.subr.mxu0 0.0
    %2014 = vmatpush1.msra.mxu0 0.0
    %2015 = vmatprep.subr.mxu0 0.0
    %2016 = vmatpush1.msra.mxu0 0.0
    %2017 = vmatprep.subr.mxu0 0.0
    %2018 = vmatpush1.msra.mxu0 0.0
    %2019 = vmatprep.subr.mxu0 0.0
    %2020 = vmatpush1.msra.mxu0 0.0
    %2021 = vmatprep.subr.mxu0 0.0
    %2022 = vmatpush1.msra.mxu0 %v1993
    %2023 = vmatprep.subr.mxu0 0.0
    %2024 = vmatpush1.msra.mxu0 %v1992
    %2025 = vmatprep.subr.mxu0 0.0
    %2026 = vmatpush1.msra.mxu0 %v1991
    %2027 = vmatprep.subr.mxu0 0.0
    %2028 = vmatpush1.msra.mxu0 %v1990
    %2029 = vmatprep.subr.mxu0 0.0
    %2030 = vmatpush2.msra.mxu0 0.0
    %2031 = vmatprep.subr.mxu0 0.0
    %2032 = vmatpush2.msra.mxu0 0.0
    %2033 = vmatprep.subr.mxu0 0.0
    %2034 = vmatpush2.msra.mxu0 0.0
    %2035 = vmatprep.subr.mxu0 0.0
    %2036 = vmatpush2.msra.mxu0 0.0
    %2037 = vmatprep.subr.mxu0 0.0
    %2038 = vmatpush2.msra.mxu0 0.0
    %2039 = vmatprep.subr.mxu0 0.0
    %2040 = vmatpush2.msra.mxu0 0.0
    %2041 = vmatprep.subr.mxu0 0.0
    %2042 = vmatpush2.msra.mxu0 0.0
    %2043 = vmatprep.subr.mxu0 0.0
    %2044 = vmatpush2.msra.mxu0 0.0
    %2045 = vmatprep.subr.mxu0 0.0
    %2046 = vmatpush2.msra.mxu0 0.0
    %2047 = vmatprep.subr.mxu0 0.0
    %2048 = vmatpush2.msra.mxu0 0.0
    %2049 = vmatprep.subr.mxu0 0.0
    %2050 = vmatpush2.msra.mxu0 0.0
    %2051 = vmatprep.subr.mxu0 0.0
    %2052 = vmatpush2.msra.mxu0 0.0
    %2053 = vmatprep.subr.mxu0 0.0
    %2054 = vmatpush2.msra.mxu0 0.0
    %2055 = vmatprep.subr.mxu0 0.0
    %2056 = vmatpush2.msra.mxu0 0.0
    %2057 = vmatprep.subr.mxu0 0.0
    %2058 = vmatpush2.msra.mxu0 0.0
    %2059 = vmatprep.subr.mxu0 0.0
    %2060 = vmatpush2.msra.mxu0 0.0
    %2061 = vmatprep.mubr.f32.mxu0 0.0
    %2062 = vmatmul.mubr.f32.gmra.mxu0 %v1995
    %v2063 = vpop.f32.mrf.mxu0
    %v2064 = vadd.f32 0.0, %v2063
    %v2065 = vpop.f32.mrf.mxu0
    %2066 = vdwg.mxu0
    %v2067 = vadd.f32 %v1989, %v2064
    %s2068 = scalar_lea.vmem [#allocation4], 32
    %v2069 = vld [vmem:[%s2068] sm:$0xff]
    %v2070 = vld [vmem:[%s706] sm:$0xff]
    %v2071 = vld [vmem:[%s706 + $0x8] sm:$0xff]
    %v2072 = vld [vmem:[%s706 + $0x10] sm:$0xff]
    %v2073 = vld [vmem:[%s706 + $0x18] sm:$0xff]
    %2074 = vmatprep.subr.mxu0 0.0
    %2075 = vmatpush1.msra.mxu0 0.0
    %2076 = vmatprep.subr.mxu0 0.0
    %2077 = vmatpush1.msra.mxu0 0.0
    %2078 = vmatprep.subr.mxu0 0.0
    %2079 = vmatpush1.msra.mxu0 0.0
    %2080 = vmatprep.subr.mxu0 0.0
    %2081 = vmatpush1.msra.mxu0 0.0
    %2082 = vmatprep.subr.mxu0 0.0
    %2083 = vmatpush1.msra.mxu0 0.0
    %2084 = vmatprep.subr.mxu0 0.0
    %2085 = vmatpush1.msra.mxu0 0.0
    %2086 = vmatprep.subr.mxu0 0.0
    %2087 = vmatpush1.msra.mxu0 0.0
    %2088 = vmatprep.subr.mxu0 0.0
    %2089 = vmatpush1.msra.mxu0 0.0
    %2090 = vmatprep.subr.mxu0 0.0
    %2091 = vmatpush1.msra.mxu0 0.0
    %2092 = vmatprep.subr.mxu0 0.0
    %2093 = vmatpush1.msra.mxu0 0.0
    %2094 = vmatprep.subr.mxu0 0.0
    %2095 = vmatpush1.msra.mxu0 0.0
    %2096 = vmatprep.subr.mxu0 0.0
    %2097 = vmatpush1.msra.mxu0 0.0
    %2098 = vmatprep.subr.mxu0 0.0
    %2099 = vmatpush1.msra.mxu0 %v2073
    %2100 = vmatprep.subr.mxu0 0.0
    %2101 = vmatpush1.msra.mxu0 %v2072
    %2102 = vmatprep.subr.mxu0 0.0
    %2103 = vmatpush1.msra.mxu0 %v2071
    %2104 = vmatprep.subr.mxu0 0.0
    %2105 = vmatpush1.msra.mxu0 %v2070
    %2106 = vmatprep.subr.mxu0 0.0
    %2107 = vmatpush2.msra.mxu0 0.0
    %2108 = vmatprep.subr.mxu0 0.0
    %2109 = vmatpush2.msra.mxu0 0.0
    %2110 = vmatprep.subr.mxu0 0.0
    %2111 = vmatpush2.msra.mxu0 0.0
    %2112 = vmatprep.subr.mxu0 0.0
    %2113 = vmatpush2.msra.mxu0 0.0
    %2114 = vmatprep.subr.mxu0 0.0
    %2115 = vmatpush2.msra.mxu0 0.0
    %2116 = vmatprep.subr.mxu0 0.0
    %2117 = vmatpush2.msra.mxu0 0.0
    %2118 = vmatprep.subr.mxu0 0.0
    %2119 = vmatpush2.msra.mxu0 0.0
    %2120 = vmatprep.subr.mxu0 0.0
    %2121 = vmatpush2.msra.mxu0 0.0
    %2122 = vmatprep.subr.mxu0 0.0
    %2123 = vmatpush2.msra.mxu0 0.0
    %2124 = vmatprep.subr.mxu0 0.0
    %2125 = vmatpush2.msra.mxu0 0.0
    %2126 = vmatprep.subr.mxu0 0.0
    %2127 = vmatpush2.msra.mxu0 0.0
    %2128 = vmatprep.subr.mxu0 0.0
    %2129 = vmatpush2.msra.mxu0 0.0
    %2130 = vmatprep.subr.mxu0 0.0
    %2131 = vmatpush2.msra.mxu0 0.0
    %2132 = vmatprep.subr.mxu0 0.0
    %2133 = vmatpush2.msra.mxu0 0.0
    %2134 = vmatprep.subr.mxu0 0.0
    %2135 = vmatpush2.msra.mxu0 0.0
    %2136 = vmatprep.subr.mxu0 0.0
    %2137 = vmatpush2.msra.mxu0 0.0
    %2138 = vmatprep.mubr.f32.mxu0 0.0
    %2139 = vmatmul.mubr.f32.gmra.mxu0 %v1995
    %v2140 = vpop.f32.mrf.mxu0
    %v2141 = vadd.f32 0.0, %v2140
    %v2142 = vpop.f32.mrf.mxu0
    %2143 = vdwg.mxu0
    %v2144 = vadd.f32 %v2069, %v2141
    %s2145 = scalar_lea.vmem [#allocation5], 32
    %v2146 = vld [vmem:[%s2145] sm:$0xff]
    %v2147 = vld [vmem:[%s783] sm:$0xff]
    %v2148 = vld [vmem:[%s783 + $0x8] sm:$0xff]
    %v2149 = vld [vmem:[%s783 + $0x10] sm:$0xff]
    %v2150 = vld [vmem:[%s783 + $0x18] sm:$0xff]
    %2151 = vmatprep.subr.mxu0 0.0
    %2152 = vmatpush1.msra.mxu0 0.0
    %2153 = vmatprep.subr.mxu0 0.0
    %2154 = vmatpush1.msra.mxu0 0.0
    %2155 = vmatprep.subr.mxu0 0.0
    %2156 = vmatpush1.msra.mxu0 0.0
    %2157 = vmatprep.subr.mxu0 0.0
    %2158 = vmatpush1.msra.mxu0 0.0
    %2159 = vmatprep.subr.mxu0 0.0
    %2160 = vmatpush1.msra.mxu0 0.0
    %2161 = vmatprep.subr.mxu0 0.0
    %2162 = vmatpush1.msra.mxu0 0.0
    %2163 = vmatprep.subr.mxu0 0.0
    %2164 = vmatpush1.msra.mxu0 0.0
    %2165 = vmatprep.subr.mxu0 0.0
    %2166 = vmatpush1.msra.mxu0 0.0
    %2167 = vmatprep.subr.mxu0 0.0
    %2168 = vmatpush1.msra.mxu0 0.0
    %2169 = vmatprep.subr.mxu0 0.0
    %2170 = vmatpush1.msra.mxu0 0.0
    %2171 = vmatprep.subr.mxu0 0.0
    %2172 = vmatpush1.msra.mxu0 0.0
    %2173 = vmatprep.subr.mxu0 0.0
    %2174 = vmatpush1.msra.mxu0 0.0
    %2175 = vmatprep.subr.mxu0 0.0
    %2176 = vmatpush1.msra.mxu0 %v2150
    %2177 = vmatprep.subr.mxu0 0.0
    %2178 = vmatpush1.msra.mxu0 %v2149
    %2179 = vmatprep.subr.mxu0 0.0
    %2180 = vmatpush1.msra.mxu0 %v2148
    %2181 = vmatprep.subr.mxu0 0.0
    %2182 = vmatpush1.msra.mxu0 %v2147
    %2183 = vmatprep.subr.mxu0 0.0
    %2184 = vmatpush2.msra.mxu0 0.0
    %2185 = vmatprep.subr.mxu0 0.0
    %2186 = vmatpush2.msra.mxu0 0.0
    %2187 = vmatprep.subr.mxu0 0.0
    %2188 = vmatpush2.msra.mxu0 0.0
    %2189 = vmatprep.subr.mxu0 0.0
    %2190 = vmatpush2.msra.mxu0 0.0
    %2191 = vmatprep.subr.mxu0 0.0
    %2192 = vmatpush2.msra.mxu0 0.0
    %2193 = vmatprep.subr.mxu0 0.0
    %2194 = vmatpush2.msra.mxu0 0.0
    %2195 = vmatprep.subr.mxu0 0.0
    %2196 = vmatpush2.msra.mxu0 0.0
    %2197 = vmatprep.subr.mxu0 0.0
    %2198 = vmatpush2.msra.mxu0 0.0
    %2199 = vmatprep.subr.mxu0 0.0
    %2200 = vmatpush2.msra.mxu0 0.0
    %2201 = vmatprep.subr.mxu0 0.0
    %2202 = vmatpush2.msra.mxu0 0.0
    %2203 = vmatprep.subr.mxu0 0.0
    %2204 = vmatpush2.msra.mxu0 0.0
    %2205 = vmatprep.subr.mxu0 0.0
    %2206 = vmatpush2.msra.mxu0 0.0
    %2207 = vmatprep.subr.mxu0 0.0
    %2208 = vmatpush2.msra.mxu0 0.0
    %2209 = vmatprep.subr.mxu0 0.0
    %2210 = vmatpush2.msra.mxu0 0.0
    %2211 = vmatprep.subr.mxu0 0.0
    %2212 = vmatpush2.msra.mxu0 0.0
    %2213 = vmatprep.subr.mxu0 0.0
    %2214 = vmatpush2.msra.mxu0 0.0
    %2215 = vmatprep.mubr.f32.mxu0 0.0
    %2216 = vmatmul.mubr.f32.gmra.mxu0 %v1995
    %v2217 = vpop.f32.mrf.mxu0
    %v2218 = vadd.f32 0.0, %v2217
    %v2219 = vpop.f32.mrf.mxu0
    %2220 = vdwg.mxu0
    %v2221 = vadd.f32 %v2146, %v2218
    %s2222 = scalar_lea.vmem [#allocation6], 32
    %v2223 = vld [vmem:[%s2222] sm:$0xff]
    %v2224 = vld [vmem:[%s860] sm:$0xff]
    %v2225 = vld [vmem:[%s860 + $0x8] sm:$0xff]
    %v2226 = vld [vmem:[%s860 + $0x10] sm:$0xff]
    %v2227 = vld [vmem:[%s860 + $0x18] sm:$0xff]
    %2228 = vmatprep.subr.mxu0 0.0
    %2229 = vmatpush1.msra.mxu0 0.0
    %2230 = vmatprep.subr.mxu0 0.0
    %2231 = vmatpush1.msra.mxu0 0.0
    %2232 = vmatprep.subr.mxu0 0.0
    %2233 = vmatpush1.msra.mxu0 0.0
    %2234 = vmatprep.subr.mxu0 0.0
    %2235 = vmatpush1.msra.mxu0 0.0
    %2236 = vmatprep.subr.mxu0 0.0
    %2237 = vmatpush1.msra.mxu0 0.0
    %2238 = vmatprep.subr.mxu0 0.0
    %2239 = vmatpush1.msra.mxu0 0.0
    %2240 = vmatprep.subr.mxu0 0.0
    %2241 = vmatpush1.msra.mxu0 0.0
    %2242 = vmatprep.subr.mxu0 0.0
    %2243 = vmatpush1.msra.mxu0 0.0
    %2244 = vmatprep.subr.mxu0 0.0
    %2245 = vmatpush1.msra.mxu0 0.0
    %2246 = vmatprep.subr.mxu0 0.0
    %2247 = vmatpush1.msra.mxu0 0.0
    %2248 = vmatprep.subr.mxu0 0.0
    %2249 = vmatpush1.msra.mxu0 0.0
    %2250 = vmatprep.subr.mxu0 0.0
    %2251 = vmatpush1.msra.mxu0 0.0
    %2252 = vmatprep.subr.mxu0 0.0
    %2253 = vmatpush1.msra.mxu0 %v2227
    %2254 = vmatprep.subr.mxu0 0.0
    %2255 = vmatpush1.msra.mxu0 %v2226
    %2256 = vmatprep.subr.mxu0 0.0
    %2257 = vmatpush1.msra.mxu0 %v2225
    %2258 = vmatprep.subr.mxu0 0.0
    %2259 = vmatpush1.msra.mxu0 %v2224
    %2260 = vmatprep.subr.mxu0 0.0
    %2261 = vmatpush2.msra.mxu0 0.0
    %2262 = vmatprep.subr.mxu0 0.0
    %2263 = vmatpush2.msra.mxu0 0.0
    %2264 = vmatprep.subr.mxu0 0.0
    %2265 = vmatpush2.msra.mxu0 0.0
    %2266 = vmatprep.subr.mxu0 0.0
    %2267 = vmatpush2.msra.mxu0 0.0
    %2268 = vmatprep.subr.mxu0 0.0
    %2269 = vmatpush2.msra.mxu0 0.0
    %2270 = vmatprep.subr.mxu0 0.0
    %2271 = vmatpush2.msra.mxu0 0.0
    %2272 = vmatprep.subr.mxu0 0.0
    %2273 = vmatpush2.msra.mxu0 0.0
    %2274 = vmatprep.subr.mxu0 0.0
    %2275 = vmatpush2.msra.mxu0 0.0
    %2276 = vmatprep.subr.mxu0 0.0
    %2277 = vmatpush2.msra.mxu0 0.0
    %2278 = vmatprep.subr.mxu0 0.0
    %2279 = vmatpush2.msra.mxu0 0.0
    %2280 = vmatprep.subr.mxu0 0.0
    %2281 = vmatpush2.msra.mxu0 0.0
    %2282 = vmatprep.subr.mxu0 0.0
    %2283 = vmatpush2.msra.mxu0 0.0
    %2284 = vmatprep.subr.mxu0 0.0
    %2285 = vmatpush2.msra.mxu0 0.0
    %2286 = vmatprep.subr.mxu0 0.0
    %2287 = vmatpush2.msra.mxu0 0.0
    %2288 = vmatprep.subr.mxu0 0.0
    %2289 = vmatpush2.msra.mxu0 0.0
    %2290 = vmatprep.subr.mxu0 0.0
    %2291 = vmatpush2.msra.mxu0 0.0
    %2292 = vmatprep.mubr.f32.mxu0 0.0
    %2293 = vmatmul.mubr.f32.gmra.mxu0 %v1995
    %v2294 = vpop.f32.mrf.mxu0
    %v2295 = vadd.f32 0.0, %v2294
    %v2296 = vpop.f32.mrf.mxu0
    %2297 = vdwg.mxu0
    %v2298 = vadd.f32 %v2223, %v2295
    %v2299 = vxor.u32 %v2067, 2147483648
    %v2300 = vmul.f32 %v2299, 1.442695
    %v2301 = vpow.pop %v2300
    %v2302 = vadd.f32 %v2301, 1.0
    %v2303 = vrcp.pop %v2302
    %v2304 = vmul.f32 1.0, %v2303
    %v2305 = vxor.u32 %v2144, 2147483648
    %v2306 = vmul.f32 %v2305, 1.442695
    %v2307 = vpow.pop %v2306
    %v2308 = vadd.f32 %v2307, 1.0
    %v2309 = vrcp.pop %v2308
    %v2310 = vmul.f32 1.0, %v2309
    %v2311 = vtanh.pop %v2221
    %v2312 = vxor.u32 %v2298, 2147483648
    %v2313 = vmul.f32 %v2312, 1.442695
    %v2314 = vpow.pop %v2313
    %v2315 = vadd.f32 %v2314, 1.0
    %v2316 = vrcp.pop %v2315
    %v2317 = vmul.f32 1.0, %v2316
    %v2318 = vmul.f32 %v2310, %v1987
    %v2319 = vmul.f32 %v2304, %v2311
    %v2320 = vadd.f32 %v2318, %v2319
    %v2321 = vtanh.pop %v2320
    %v2322 = vmul.f32 %v2317, %v2321
    %2323 = vst.msk [vmem:[#allocation7] sm:$0xff] %vm235, %v2322
    %2324 = vst.msk [vmem:[#allocation8] sm:$0xff] %vm235, %v2320
    %s2325 = scalar_lea.vmem [#allocation2], 32
    %2326 = vst.msk [vmem:[%s2325] sm:$0xff] %vm235, %v2322
    %v2327 = vld [vmem:[#allocation7] sm:$0xff]
    %v2328 = vld [vmem:[#allocation8] sm:$0xff]
    %s2329 = scalar_lea.vmem [#allocation3], 40
    %v2330 = vld [vmem:[%s2329] sm:$0xff]
    %v2331 = vld [vmem:[#allocation9] sm:$0xff]
    %v2332 = vld [vmem:[#allocation9 + $0x8] sm:$0xff]
    %v2333 = vld [vmem:[#allocation9 + $0x10] sm:$0xff]
    %v2334 = vld [vmem:[#allocation9 + $0x18] sm:$0xff]
    %v2336 = vsel %vm235, %v2327, 0
    %2338 = vmatprep.subr.mxu0 0.0
    %2339 = vmatpush1.msra.mxu0 0.0
    %2340 = vmatprep.subr.mxu0 0.0
    %2341 = vmatpush1.msra.mxu0 0.0
    %2342 = vmatprep.subr.mxu0 0.0
    %2343 = vmatpush1.msra.mxu0 0.0
    %2344 = vmatprep.subr.mxu0 0.0
    %2345 = vmatpush1.msra.mxu0 0.0
    %2346 = vmatprep.subr.mxu0 0.0
    %2347 = vmatpush1.msra.mxu0 0.0
    %2348 = vmatprep.subr.mxu0 0.0
    %2349 = vmatpush1.msra.mxu0 0.0
    %2350 = vmatprep.subr.mxu0 0.0
    %2351 = vmatpush1.msra.mxu0 0.0
    %2352 = vmatprep.subr.mxu0 0.0
    %2353 = vmatpush1.msra.mxu0 0.0
    %2354 = vmatprep.subr.mxu0 0.0
    %2355 = vmatpush1.msra.mxu0 0.0
    %2356 = vmatprep.subr.mxu0 0.0
    %2357 = vmatpush1.msra.mxu0 0.0
    %2358 = vmatprep.subr.mxu0 0.0
    %2359 = vmatpush1.msra.mxu0 0.0
    %2360 = vmatprep.subr.mxu0 0.0
    %2361 = vmatpush1.msra.mxu0 0.0
    %2362 = vmatprep.subr.mxu0 0.0
    %2363 = vmatpush1.msra.mxu0 %v2334
    %2364 = vmatprep.subr.mxu0 0.0
    %2365 = vmatpush1.msra.mxu0 %v2333
    %2366 = vmatprep.subr.mxu0 0.0
    %2367 = vmatpush1.msra.mxu0 %v2332
    %2368 = vmatprep.subr.mxu0 0.0
    %2369 = vmatpush1.msra.mxu0 %v2331
    %2370 = vmatprep.subr.mxu0 0.0
    %2371 = vmatpush2.msra.mxu0 0.0
    %2372 = vmatprep.subr.mxu0 0.0
    %2373 = vmatpush2.msra.mxu0 0.0
    %2374 = vmatprep.subr.mxu0 0.0
    %2375 = vmatpush2.msra.mxu0 0.0
    %2376 = vmatprep.subr.mxu0 0.0
    %2377 = vmatpush2.msra.mxu0 0.0
    %2378 = vmatprep.subr.mxu0 0.0
    %2379 = vmatpush2.msra.mxu0 0.0
    %2380 = vmatprep.subr.mxu0 0.0
    %2381 = vmatpush2.msra.mxu0 0.0
    %2382 = vmatprep.subr.mxu0 0.0
    %2383 = vmatpush2.msra.mxu0 0.0
    %2384 = vmatprep.subr.mxu0 0.0
    %2385 = vmatpush2.msra.mxu0 0.0
    %2386 = vmatprep.subr.mxu0 0.0
    %2387 = vmatpush2.msra.mxu0 0.0
    %2388 = vmatprep.subr.mxu0 0.0
    %2389 = vmatpush2.msra.mxu0 0.0
    %2390 = vmatprep.subr.mxu0 0.0
    %2391 = vmatpush2.msra.mxu0 0.0
    %2392 = vmatprep.subr.mxu0 0.0
    %2393 = vmatpush2.msra.mxu0 0.0
    %2394 = vmatprep.subr.mxu0 0.0
    %2395 = vmatpush2.msra.mxu0 0.0
    %2396 = vmatprep.subr.mxu0 0.0
    %2397 = vmatpush2.msra.mxu0 0.0
    %2398 = vmatprep.subr.mxu0 0.0
    %2399 = vmatpush2.msra.mxu0 0.0
    %2400 = vmatprep.subr.mxu0 0.0
    %2401 = vmatpush2.msra.mxu0 0.0
    %2402 = vmatprep.mubr.f32.mxu0 0.0
    %2403 = vmatmul.mubr.f32.gmra.mxu0 %v2336
    %v2404 = vpop.f32.mrf.mxu0
    %v2405 = vadd.f32 0.0, %v2404
    %v2406 = vpop.f32.mrf.mxu0
    %2407 = vdwg.mxu0
    %v2408 = vadd.f32 %v2330, %v2405
    %s2409 = scalar_lea.vmem [#allocation4], 40
    %v2410 = vld [vmem:[%s2409] sm:$0xff]
    %v2411 = vld [vmem:[%s706] sm:$0xff]
    %v2412 = vld [vmem:[%s706 + $0x8] sm:$0xff]
    %v2413 = vld [vmem:[%s706 + $0x10] sm:$0xff]
    %v2414 = vld [vmem:[%s706 + $0x18] sm:$0xff]
    %2415 = vmatprep.subr.mxu0 0.0
    %2416 = vmatpush1.msra.mxu0 0.0
    %2417 = vmatprep.subr.mxu0 0.0
    %2418 = vmatpush1.msra.mxu0 0.0
    %2419 = vmatprep.subr.mxu0 0.0
    %2420 = vmatpush1.msra.mxu0 0.0
    %2421 = vmatprep.subr.mxu0 0.0
    %2422 = vmatpush1.msra.mxu0 0.0
    %2423 = vmatprep.subr.mxu0 0.0
    %2424 = vmatpush1.msra.mxu0 0.0
    %2425 = vmatprep.subr.mxu0 0.0
    %2426 = vmatpush1.msra.mxu0 0.0
    %2427 = vmatprep.subr.mxu0 0.0
    %2428 = vmatpush1.msra.mxu0 0.0
    %2429 = vmatprep.subr.mxu0 0.0
    %2430 = vmatpush1.msra.mxu0 0.0
    %2431 = vmatprep.subr.mxu0 0.0
    %2432 = vmatpush1.msra.mxu0 0.0
    %2433 = vmatprep.subr.mxu0 0.0
    %2434 = vmatpush1.msra.mxu0 0.0
    %2435 = vmatprep.subr.mxu0 0.0
    %2436 = vmatpush1.msra.mxu0 0.0
    %2437 = vmatprep.subr.mxu0 0.0
    %2438 = vmatpush1.msra.mxu0 0.0
    %2439 = vmatprep.subr.mxu0 0.0
    %2440 = vmatpush1.msra.mxu0 %v2414
    %2441 = vmatprep.subr.mxu0 0.0
    %2442 = vmatpush1.msra.mxu0 %v2413
    %2443 = vmatprep.subr.mxu0 0.0
    %2444 = vmatpush1.msra.mxu0 %v2412
    %2445 = vmatprep.subr.mxu0 0.0
    %2446 = vmatpush1.msra.mxu0 %v2411
    %2447 = vmatprep.subr.mxu0 0.0
    %2448 = vmatpush2.msra.mxu0 0.0
    %2449 = vmatprep.subr.mxu0 0.0
    %2450 = vmatpush2.msra.mxu0 0.0
    %2451 = vmatprep.subr.mxu0 0.0
    %2452 = vmatpush2.msra.mxu0 0.0
    %2453 = vmatprep.subr.mxu0 0.0
    %2454 = vmatpush2.msra.mxu0 0.0
    %2455 = vmatprep.subr.mxu0 0.0
    %2456 = vmatpush2.msra.mxu0 0.0
    %2457 = vmatprep.subr.mxu0 0.0
    %2458 = vmatpush2.msra.mxu0 0.0
    %2459 = vmatprep.subr.mxu0 0.0
    %2460 = vmatpush2.msra.mxu0 0.0
    %2461 = vmatprep.subr.mxu0 0.0
    %2462 = vmatpush2.msra.mxu0 0.0
    %2463 = vmatprep.subr.mxu0 0.0
    %2464 = vmatpush2.msra.mxu0 0.0
    %2465 = vmatprep.subr.mxu0 0.0
    %2466 = vmatpush2.msra.mxu0 0.0
    %2467 = vmatprep.subr.mxu0 0.0
    %2468 = vmatpush2.msra.mxu0 0.0
    %2469 = vmatprep.subr.mxu0 0.0
    %2470 = vmatpush2.msra.mxu0 0.0
    %2471 = vmatprep.subr.mxu0 0.0
    %2472 = vmatpush2.msra.mxu0 0.0
    %2473 = vmatprep.subr.mxu0 0.0
    %2474 = vmatpush2.msra.mxu0 0.0
    %2475 = vmatprep.subr.mxu0 0.0
    %2476 = vmatpush2.msra.mxu0 0.0
    %2477 = vmatprep.subr.mxu0 0.0
    %2478 = vmatpush2.msra.mxu0 0.0
    %2479 = vmatprep.mubr.f32.mxu0 0.0
    %2480 = vmatmul.mubr.f32.gmra.mxu0 %v2336
    %v2481 = vpop.f32.mrf.mxu0
    %v2482 = vadd.f32 0.0, %v2481
    %v2483 = vpop.f32.mrf.mxu0
    %2484 = vdwg.mxu0
    %v2485 = vadd.f32 %v2410, %v2482
    %s2486 = scalar_lea.vmem [#allocation5], 40
    %v2487 = vld [vmem:[%s2486] sm:$0xff]
    %v2488 = vld [vmem:[%s783] sm:$0xff]
    %v2489 = vld [vmem:[%s783 + $0x8] sm:$0xff]
    %v2490 = vld [vmem:[%s783 + $0x10] sm:$0xff]
    %v2491 = vld [vmem:[%s783 + $0x18] sm:$0xff]
    %2492 = vmatprep.subr.mxu0 0.0
    %2493 = vmatpush1.msra.mxu0 0.0
    %2494 = vmatprep.subr.mxu0 0.0
    %2495 = vmatpush1.msra.mxu0 0.0
    %2496 = vmatprep.subr.mxu0 0.0
    %2497 = vmatpush1.msra.mxu0 0.0
    %2498 = vmatprep.subr.mxu0 0.0
    %2499 = vmatpush1.msra.mxu0 0.0
    %2500 = vmatprep.subr.mxu0 0.0
    %2501 = vmatpush1.msra.mxu0 0.0
    %2502 = vmatprep.subr.mxu0 0.0
    %2503 = vmatpush1.msra.mxu0 0.0
    %2504 = vmatprep.subr.mxu0 0.0
    %2505 = vmatpush1.msra.mxu0 0.0
    %2506 = vmatprep.subr.mxu0 0.0
    %2507 = vmatpush1.msra.mxu0 0.0
    %2508 = vmatprep.subr.mxu0 0.0
    %2509 = vmatpush1.msra.mxu0 0.0
    %2510 = vmatprep.subr.mxu0 0.0
    %2511 = vmatpush1.msra.mxu0 0.0
    %2512 = vmatprep.subr.mxu0 0.0
    %2513 = vmatpush1.msra.mxu0 0.0
    %2514 = vmatprep.subr.mxu0 0.0
    %2515 = vmatpush1.msra.mxu0 0.0
    %2516 = vmatprep.subr.mxu0 0.0
    %2517 = vmatpush1.msra.mxu0 %v2491
    %2518 = vmatprep.subr.mxu0 0.0
    %2519 = vmatpush1.msra.mxu0 %v2490
    %2520 = vmatprep.subr.mxu0 0.0
    %2521 = vmatpush1.msra.mxu0 %v2489
    %2522 = vmatprep.subr.mxu0 0.0
    %2523 = vmatpush1.msra.mxu0 %v2488
    %2524 = vmatprep.subr.mxu0 0.0
    %2525 = vmatpush2.msra.mxu0 0.0
    %2526 = vmatprep.subr.mxu0 0.0
    %2527 = vmatpush2.msra.mxu0 0.0
    %2528 = vmatprep.subr.mxu0 0.0
    %2529 = vmatpush2.msra.mxu0 0.0
    %2530 = vmatprep.subr.mxu0 0.0
    %2531 = vmatpush2.msra.mxu0 0.0
    %2532 = vmatprep.subr.mxu0 0.0
    %2533 = vmatpush2.msra.mxu0 0.0
    %2534 = vmatprep.subr.mxu0 0.0
    %2535 = vmatpush2.msra.mxu0 0.0
    %2536 = vmatprep.subr.mxu0 0.0
    %2537 = vmatpush2.msra.mxu0 0.0
    %2538 = vmatprep.subr.mxu0 0.0
    %2539 = vmatpush2.msra.mxu0 0.0
    %2540 = vmatprep.subr.mxu0 0.0
    %2541 = vmatpush2.msra.mxu0 0.0
    %2542 = vmatprep.subr.mxu0 0.0
    %2543 = vmatpush2.msra.mxu0 0.0
    %2544 = vmatprep.subr.mxu0 0.0
    %2545 = vmatpush2.msra.mxu0 0.0
    %2546 = vmatprep.subr.mxu0 0.0
    %2547 = vmatpush2.msra.mxu0 0.0
    %2548 = vmatprep.subr.mxu0 0.0
    %2549 = vmatpush2.msra.mxu0 0.0
    %2550 = vmatprep.subr.mxu0 0.0
    %2551 = vmatpush2.msra.mxu0 0.0
    %2552 = vmatprep.subr.mxu0 0.0
    %2553 = vmatpush2.msra.mxu0 0.0
    %2554 = vmatprep.subr.mxu0 0.0
    %2555 = vmatpush2.msra.mxu0 0.0
    %2556 = vmatprep.mubr.f32.mxu0 0.0
    %2557 = vmatmul.mubr.f32.gmra.mxu0 %v2336
    %v2558 = vpop.f32.mrf.mxu0
    %v2559 = vadd.f32 0.0, %v2558
    %v2560 = vpop.f32.mrf.mxu0
    %2561 = vdwg.mxu0
    %v2562 = vadd.f32 %v2487, %v2559
    %s2563 = scalar_lea.vmem [#allocation6], 40
    %v2564 = vld [vmem:[%s2563] sm:$0xff]
    %v2565 = vld [vmem:[%s860] sm:$0xff]
    %v2566 = vld [vmem:[%s860 + $0x8] sm:$0xff]
    %v2567 = vld [vmem:[%s860 + $0x10] sm:$0xff]
    %v2568 = vld [vmem:[%s860 + $0x18] sm:$0xff]
    %2569 = vmatprep.subr.mxu0 0.0
    %2570 = vmatpush1.msra.mxu0 0.0
    %2571 = vmatprep.subr.mxu0 0.0
    %2572 = vmatpush1.msra.mxu0 0.0
    %2573 = vmatprep.subr.mxu0 0.0
    %2574 = vmatpush1.msra.mxu0 0.0
    %2575 = vmatprep.subr.mxu0 0.0
    %2576 = vmatpush1.msra.mxu0 0.0
    %2577 = vmatprep.subr.mxu0 0.0
    %2578 = vmatpush1.msra.mxu0 0.0
    %2579 = vmatprep.subr.mxu0 0.0
    %2580 = vmatpush1.msra.mxu0 0.0
    %2581 = vmatprep.subr.mxu0 0.0
    %2582 = vmatpush1.msra.mxu0 0.0
    %2583 = vmatprep.subr.mxu0 0.0
    %2584 = vmatpush1.msra.mxu0 0.0
    %2585 = vmatprep.subr.mxu0 0.0
    %2586 = vmatpush1.msra.mxu0 0.0
    %2587 = vmatprep.subr.mxu0 0.0
    %2588 = vmatpush1.msra.mxu0 0.0
    %2589 = vmatprep.subr.mxu0 0.0
    %2590 = vmatpush1.msra.mxu0 0.0
    %2591 = vmatprep.subr.mxu0 0.0
    %2592 = vmatpush1.msra.mxu0 0.0
    %2593 = vmatprep.subr.mxu0 0.0
    %2594 = vmatpush1.msra.mxu0 %v2568
    %2595 = vmatprep.subr.mxu0 0.0
    %2596 = vmatpush1.msra.mxu0 %v2567
    %2597 = vmatprep.subr.mxu0 0.0
    %2598 = vmatpush1.msra.mxu0 %v2566
    %2599 = vmatprep.subr.mxu0 0.0
    %2600 = vmatpush1.msra.mxu0 %v2565
    %2601 = vmatprep.subr.mxu0 0.0
    %2602 = vmatpush2.msra.mxu0 0.0
    %2603 = vmatprep.subr.mxu0 0.0
    %2604 = vmatpush2.msra.mxu0 0.0
    %2605 = vmatprep.subr.mxu0 0.0
    %2606 = vmatpush2.msra.mxu0 0.0
    %2607 = vmatprep.subr.mxu0 0.0
    %2608 = vmatpush2.msra.mxu0 0.0
    %2609 = vmatprep.subr.mxu0 0.0
    %2610 = vmatpush2.msra.mxu0 0.0
    %2611 = vmatprep.subr.mxu0 0.0
    %2612 = vmatpush2.msra.mxu0 0.0
    %2613 = vmatprep.subr.mxu0 0.0
    %2614 = vmatpush2.msra.mxu0 0.0
    %2615 = vmatprep.subr.mxu0 0.0
    %2616 = vmatpush2.msra.mxu0 0.0
    %2617 = vmatprep.subr.mxu0 0.0
    %2618 = vmatpush2.msra.mxu0 0.0
    %2619 = vmatprep.subr.mxu0 0.0
    %2620 = vmatpush2.msra.mxu0 0.0
    %2621 = vmatprep.subr.mxu0 0.0
    %2622 = vmatpush2.msra.mxu0 0.0
    %2623 = vmatprep.subr.mxu0 0.0
    %2624 = vmatpush2.msra.mxu0 0.0
    %2625 = vmatprep.subr.mxu0 0.0
    %2626 = vmatpush2.msra.mxu0 0.0
    %2627 = vmatprep.subr.mxu0 0.0
    %2628 = vmatpush2.msra.mxu0 0.0
    %2629 = vmatprep.subr.mxu0 0.0
    %2630 = vmatpush2.msra.mxu0 0.0
    %2631 = vmatprep.subr.mxu0 0.0
    %2632 = vmatpush2.msra.mxu0 0.0
    %2633 = vmatprep.mubr.f32.mxu0 0.0
    %2634 = vmatmul.mubr.f32.gmra.mxu0 %v2336
    %v2635 = vpop.f32.mrf.mxu0
    %v2636 = vadd.f32 0.0, %v2635
    %v2637 = vpop.f32.mrf.mxu0
    %2638 = vdwg.mxu0
    %v2639 = vadd.f32 %v2564, %v2636
    %v2640 = vxor.u32 %v2408, 2147483648
    %v2641 = vmul.f32 %v2640, 1.442695
    %v2642 = vpow.pop %v2641
    %v2643 = vadd.f32 %v2642, 1.0
    %v2644 = vrcp.pop %v2643
    %v2645 = vmul.f32 1.0, %v2644
    %v2646 = vxor.u32 %v2485, 2147483648
    %v2647 = vmul.f32 %v2646, 1.442695
    %v2648 = vpow.pop %v2647
    %v2649 = vadd.f32 %v2648, 1.0
    %v2650 = vrcp.pop %v2649
    %v2651 = vmul.f32 1.0, %v2650
    %v2652 = vtanh.pop %v2562
    %v2653 = vxor.u32 %v2639, 2147483648
    %v2654 = vmul.f32 %v2653, 1.442695
    %v2655 = vpow.pop %v2654
    %v2656 = vadd.f32 %v2655, 1.0
    %v2657 = vrcp.pop %v2656
    %v2658 = vmul.f32 1.0, %v2657
    %v2659 = vmul.f32 %v2651, %v2328
    %v2660 = vmul.f32 %v2645, %v2652
    %v2661 = vadd.f32 %v2659, %v2660
    %v2662 = vtanh.pop %v2661
    %v2663 = vmul.f32 %v2658, %v2662
    %2664 = vst.msk [vmem:[#allocation7] sm:$0xff] %vm235, %v2663
    %2665 = vst.msk [vmem:[#allocation8] sm:$0xff] %vm235, %v2661
    %s2666 = scalar_lea.vmem [#allocation2], 40
    %2667 = vst.msk [vmem:[%s2666] sm:$0xff] %vm235, %v2663
    %v2668 = vld [vmem:[#allocation7] sm:$0xff]
    %v2669 = vld [vmem:[#allocation8] sm:$0xff]
    %s2670 = scalar_lea.vmem [#allocation3], 48
    %v2671 = vld [vmem:[%s2670] sm:$0xff]
    %v2672 = vld [vmem:[#allocation9] sm:$0xff]
    %v2673 = vld [vmem:[#allocation9 + $0x8] sm:$0xff]
    %v2674 = vld [vmem:[#allocation9 + $0x10] sm:$0xff]
    %v2675 = vld [vmem:[#allocation9 + $0x18] sm:$0xff]
    %v2677 = vsel %vm235, %v2668, 0
    %2679 = vmatprep.subr.mxu0 0.0
    %2680 = vmatpush1.msra.mxu0 0.0
    %2681 = vmatprep.subr.mxu0 0.0
    %2682 = vmatpush1.msra.mxu0 0.0
    %2683 = vmatprep.subr.mxu0 0.0
    %2684 = vmatpush1.msra.mxu0 0.0
    %2685 = vmatprep.subr.mxu0 0.0
    %2686 = vmatpush1.msra.mxu0 0.0
    %2687 = vmatprep.subr.mxu0 0.0
    %2688 = vmatpush1.msra.mxu0 0.0
    %2689 = vmatprep.subr.mxu0 0.0
    %2690 = vmatpush1.msra.mxu0 0.0
    %2691 = vmatprep.subr.mxu0 0.0
    %2692 = vmatpush1.msra.mxu0 0.0
    %2693 = vmatprep.subr.mxu0 0.0
    %2694 = vmatpush1.msra.mxu0 0.0
    %2695 = vmatprep.subr.mxu0 0.0
    %2696 = vmatpush1.msra.mxu0 0.0
    %2697 = vmatprep.subr.mxu0 0.0
    %2698 = vmatpush1.msra.mxu0 0.0
    %2699 = vmatprep.subr.mxu0 0.0
    %2700 = vmatpush1.msra.mxu0 0.0
    %2701 = vmatprep.subr.mxu0 0.0
    %2702 = vmatpush1.msra.mxu0 0.0
    %2703 = vmatprep.subr.mxu0 0.0
    %2704 = vmatpush1.msra.mxu0 %v2675
    %2705 = vmatprep.subr.mxu0 0.0
    %2706 = vmatpush1.msra.mxu0 %v2674
    %2707 = vmatprep.subr.mxu0 0.0
    %2708 = vmatpush1.msra.mxu0 %v2673
    %2709 = vmatprep.subr.mxu0 0.0
    %2710 = vmatpush1.msra.mxu0 %v2672
    %2711 = vmatprep.subr.mxu0 0.0
    %2712 = vmatpush2.msra.mxu0 0.0
    %2713 = vmatprep.subr.mxu0 0.0
    %2714 = vmatpush2.msra.mxu0 0.0
    %2715 = vmatprep.subr.mxu0 0.0
    %2716 = vmatpush2.msra.mxu0 0.0
    %2717 = vmatprep.subr.mxu0 0.0
    %2718 = vmatpush2.msra.mxu0 0.0
    %2719 = vmatprep.subr.mxu0 0.0
    %2720 = vmatpush2.msra.mxu0 0.0
    %2721 = vmatprep.subr.mxu0 0.0
    %2722 = vmatpush2.msra.mxu0 0.0
    %2723 = vmatprep.subr.mxu0 0.0
    %2724 = vmatpush2.msra.mxu0 0.0
    %2725 = vmatprep.subr.mxu0 0.0
    %2726 = vmatpush2.msra.mxu0 0.0
    %2727 = vmatprep.subr.mxu0 0.0
    %2728 = vmatpush2.msra.mxu0 0.0
    %2729 = vmatprep.subr.mxu0 0.0
    %2730 = vmatpush2.msra.mxu0 0.0
    %2731 = vmatprep.subr.mxu0 0.0
    %2732 = vmatpush2.msra.mxu0 0.0
    %2733 = vmatprep.subr.mxu0 0.0
    %2734 = vmatpush2.msra.mxu0 0.0
    %2735 = vmatprep.subr.mxu0 0.0
    %2736 = vmatpush2.msra.mxu0 0.0
    %2737 = vmatprep.subr.mxu0 0.0
    %2738 = vmatpush2.msra.mxu0 0.0
    %2739 = vmatprep.subr.mxu0 0.0
    %2740 = vmatpush2.msra.mxu0 0.0
    %2741 = vmatprep.subr.mxu0 0.0
    %2742 = vmatpush2.msra.mxu0 0.0
    %2743 = vmatprep.mubr.f32.mxu0 0.0
    %2744 = vmatmul.mubr.f32.gmra.mxu0 %v2677
    %v2745 = vpop.f32.mrf.mxu0
    %v2746 = vadd.f32 0.0, %v2745
    %v2747 = vpop.f32.mrf.mxu0
    %2748 = vdwg.mxu0
    %v2749 = vadd.f32 %v2671, %v2746
    %s2750 = scalar_lea.vmem [#allocation4], 48
    %v2751 = vld [vmem:[%s2750] sm:$0xff]
    %v2752 = vld [vmem:[%s706] sm:$0xff]
    %v2753 = vld [vmem:[%s706 + $0x8] sm:$0xff]
    %v2754 = vld [vmem:[%s706 + $0x10] sm:$0xff]
    %v2755 = vld [vmem:[%s706 + $0x18] sm:$0xff]
    %2756 = vmatprep.subr.mxu0 0.0
    %2757 = vmatpush1.msra.mxu0 0.0
    %2758 = vmatprep.subr.mxu0 0.0
    %2759 = vmatpush1.msra.mxu0 0.0
    %2760 = vmatprep.subr.mxu0 0.0
    %2761 = vmatpush1.msra.mxu0 0.0
    %2762 = vmatprep.subr.mxu0 0.0
    %2763 = vmatpush1.msra.mxu0 0.0
    %2764 = vmatprep.subr.mxu0 0.0
    %2765 = vmatpush1.msra.mxu0 0.0
    %2766 = vmatprep.subr.mxu0 0.0
    %2767 = vmatpush1.msra.mxu0 0.0
    %2768 = vmatprep.subr.mxu0 0.0
    %2769 = vmatpush1.msra.mxu0 0.0
    %2770 = vmatprep.subr.mxu0 0.0
    %2771 = vmatpush1.msra.mxu0 0.0
    %2772 = vmatprep.subr.mxu0 0.0
    %2773 = vmatpush1.msra.mxu0 0.0
    %2774 = vmatprep.subr.mxu0 0.0
    %2775 = vmatpush1.msra.mxu0 0.0
    %2776 = vmatprep.subr.mxu0 0.0
    %2777 = vmatpush1.msra.mxu0 0.0
    %2778 = vmatprep.subr.mxu0 0.0
    %2779 = vmatpush1.msra.mxu0 0.0
    %2780 = vmatprep.subr.mxu0 0.0
    %2781 = vmatpush1.msra.mxu0 %v2755
    %2782 = vmatprep.subr.mxu0 0.0
    %2783 = vmatpush1.msra.mxu0 %v2754
    %2784 = vmatprep.subr.mxu0 0.0
    %2785 = vmatpush1.msra.mxu0 %v2753
    %2786 = vmatprep.subr.mxu0 0.0
    %2787 = vmatpush1.msra.mxu0 %v2752
    %2788 = vmatprep.subr.mxu0 0.0
    %2789 = vmatpush2.msra.mxu0 0.0
    %2790 = vmatprep.subr.mxu0 0.0
    %2791 = vmatpush2.msra.mxu0 0.0
    %2792 = vmatprep.subr.mxu0 0.0
    %2793 = vmatpush2.msra.mxu0 0.0
    %2794 = vmatprep.subr.mxu0 0.0
    %2795 = vmatpush2.msra.mxu0 0.0
    %2796 = vmatprep.subr.mxu0 0.0
    %2797 = vmatpush2.msra.mxu0 0.0
    %2798 = vmatprep.subr.mxu0 0.0
    %2799 = vmatpush2.msra.mxu0 0.0
    %2800 = vmatprep.subr.mxu0 0.0
    %2801 = vmatpush2.msra.mxu0 0.0
    %2802 = vmatprep.subr.mxu0 0.0
    %2803 = vmatpush2.msra.mxu0 0.0
    %2804 = vmatprep.subr.mxu0 0.0
    %2805 = vmatpush2.msra.mxu0 0.0
    %2806 = vmatprep.subr.mxu0 0.0
    %2807 = vmatpush2.msra.mxu0 0.0
    %2808 = vmatprep.subr.mxu0 0.0
    %2809 = vmatpush2.msra.mxu0 0.0
    %2810 = vmatprep.subr.mxu0 0.0
    %2811 = vmatpush2.msra.mxu0 0.0
    %2812 = vmatprep.subr.mxu0 0.0
    %2813 = vmatpush2.msra.mxu0 0.0
    %2814 = vmatprep.subr.mxu0 0.0
    %2815 = vmatpush2.msra.mxu0 0.0
    %2816 = vmatprep.subr.mxu0 0.0
    %2817 = vmatpush2.msra.mxu0 0.0
    %2818 = vmatprep.subr.mxu0 0.0
    %2819 = vmatpush2.msra.mxu0 0.0
    %2820 = vmatprep.mubr.f32.mxu0 0.0
    %2821 = vmatmul.mubr.f32.gmra.mxu0 %v2677
    %v2822 = vpop.f32.mrf.mxu0
    %v2823 = vadd.f32 0.0, %v2822
    %v2824 = vpop.f32.mrf.mxu0
    %2825 = vdwg.mxu0
    %v2826 = vadd.f32 %v2751, %v2823
    %s2827 = scalar_lea.vmem [#allocation5], 48
    %v2828 = vld [vmem:[%s2827] sm:$0xff]
    %v2829 = vld [vmem:[%s783] sm:$0xff]
    %v2830 = vld [vmem:[%s783 + $0x8] sm:$0xff]
    %v2831 = vld [vmem:[%s783 + $0x10] sm:$0xff]
    %v2832 = vld [vmem:[%s783 + $0x18] sm:$0xff]
    %2833 = vmatprep.subr.mxu0 0.0
    %2834 = vmatpush1.msra.mxu0 0.0
    %2835 = vmatprep.subr.mxu0 0.0
    %2836 = vmatpush1.msra.mxu0 0.0
    %2837 = vmatprep.subr.mxu0 0.0
    %2838 = vmatpush1.msra.mxu0 0.0
    %2839 = vmatprep.subr.mxu0 0.0
    %2840 = vmatpush1.msra.mxu0 0.0
    %2841 = vmatprep.subr.mxu0 0.0
    %2842 = vmatpush1.msra.mxu0 0.0
    %2843 = vmatprep.subr.mxu0 0.0
    %2844 = vmatpush1.msra.mxu0 0.0
    %2845 = vmatprep.subr.mxu0 0.0
    %2846 = vmatpush1.msra.mxu0 0.0
    %2847 = vmatprep.subr.mxu0 0.0
    %2848 = vmatpush1.msra.mxu0 0.0
    %2849 = vmatprep.subr.mxu0 0.0
    %2850 = vmatpush1.msra.mxu0 0.0
    %2851 = vmatprep.subr.mxu0 0.0
    %2852 = vmatpush1.msra.mxu0 0.0
    %2853 = vmatprep.subr.mxu0 0.0
    %2854 = vmatpush1.msra.mxu0 0.0
    %2855 = vmatprep.subr.mxu0 0.0
    %2856 = vmatpush1.msra.mxu0 0.0
    %2857 = vmatprep.subr.mxu0 0.0
    %2858 = vmatpush1.msra.mxu0 %v2832
    %2859 = vmatprep.subr.mxu0 0.0
    %2860 = vmatpush1.msra.mxu0 %v2831
    %2861 = vmatprep.subr.mxu0 0.0
    %2862 = vmatpush1.msra.mxu0 %v2830
    %2863 = vmatprep.subr.mxu0 0.0
    %2864 = vmatpush1.msra.mxu0 %v2829
    %2865 = vmatprep.subr.mxu0 0.0
    %2866 = vmatpush2.msra.mxu0 0.0
    %2867 = vmatprep.subr.mxu0 0.0
    %2868 = vmatpush2.msra.mxu0 0.0
    %2869 = vmatprep.subr.mxu0 0.0
    %2870 = vmatpush2.msra.mxu0 0.0
    %2871 = vmatprep.subr.mxu0 0.0
    %2872 = vmatpush2.msra.mxu0 0.0
    %2873 = vmatprep.subr.mxu0 0.0
    %2874 = vmatpush2.msra.mxu0 0.0
    %2875 = vmatprep.subr.mxu0 0.0
    %2876 = vmatpush2.msra.mxu0 0.0
    %2877 = vmatprep.subr.mxu0 0.0
    %2878 = vmatpush2.msra.mxu0 0.0
    %2879 = vmatprep.subr.mxu0 0.0
    %2880 = vmatpush2.msra.mxu0 0.0
    %2881 = vmatprep.subr.mxu0 0.0
    %2882 = vmatpush2.msra.mxu0 0.0
    %2883 = vmatprep.subr.mxu0 0.0
    %2884 = vmatpush2.msra.mxu0 0.0
    %2885 = vmatprep.subr.mxu0 0.0
    %2886 = vmatpush2.msra.mxu0 0.0
    %2887 = vmatprep.subr.mxu0 0.0
    %2888 = vmatpush2.msra.mxu0 0.0
    %2889 = vmatprep.subr.mxu0 0.0
    %2890 = vmatpush2.msra.mxu0 0.0
    %2891 = vmatprep.subr.mxu0 0.0
    %2892 = vmatpush2.msra.mxu0 0.0
    %2893 = vmatprep.subr.mxu0 0.0
    %2894 = vmatpush2.msra.mxu0 0.0
    %2895 = vmatprep.subr.mxu0 0.0
    %2896 = vmatpush2.msra.mxu0 0.0
    %2897 = vmatprep.mubr.f32.mxu0 0.0
    %2898 = vmatmul.mubr.f32.gmra.mxu0 %v2677
    %v2899 = vpop.f32.mrf.mxu0
    %v2900 = vadd.f32 0.0, %v2899
    %v2901 = vpop.f32.mrf.mxu0
    %2902 = vdwg.mxu0
    %v2903 = vadd.f32 %v2828, %v2900
    %s2904 = scalar_lea.vmem [#allocation6], 48
    %v2905 = vld [vmem:[%s2904] sm:$0xff]
    %v2906 = vld [vmem:[%s860] sm:$0xff]
    %v2907 = vld [vmem:[%s860 + $0x8] sm:$0xff]
    %v2908 = vld [vmem:[%s860 + $0x10] sm:$0xff]
    %v2909 = vld [vmem:[%s860 + $0x18] sm:$0xff]
    %2910 = vmatprep.subr.mxu0 0.0
    %2911 = vmatpush1.msra.mxu0 0.0
    %2912 = vmatprep.subr.mxu0 0.0
    %2913 = vmatpush1.msra.mxu0 0.0
    %2914 = vmatprep.subr.mxu0 0.0
    %2915 = vmatpush1.msra.mxu0 0.0
    %2916 = vmatprep.subr.mxu0 0.0
    %2917 = vmatpush1.msra.mxu0 0.0
    %2918 = vmatprep.subr.mxu0 0.0
    %2919 = vmatpush1.msra.mxu0 0.0
    %2920 = vmatprep.subr.mxu0 0.0
    %2921 = vmatpush1.msra.mxu0 0.0
    %2922 = vmatprep.subr.mxu0 0.0
    %2923 = vmatpush1.msra.mxu0 0.0
    %2924 = vmatprep.subr.mxu0 0.0
    %2925 = vmatpush1.msra.mxu0 0.0
    %2926 = vmatprep.subr.mxu0 0.0
    %2927 = vmatpush1.msra.mxu0 0.0
    %2928 = vmatprep.subr.mxu0 0.0
    %2929 = vmatpush1.msra.mxu0 0.0
    %2930 = vmatprep.subr.mxu0 0.0
    %2931 = vmatpush1.msra.mxu0 0.0
    %2932 = vmatprep.subr.mxu0 0.0
    %2933 = vmatpush1.msra.mxu0 0.0
    %2934 = vmatprep.subr.mxu0 0.0
    %2935 = vmatpush1.msra.mxu0 %v2909
    %2936 = vmatprep.subr.mxu0 0.0
    %2937 = vmatpush1.msra.mxu0 %v2908
    %2938 = vmatprep.subr.mxu0 0.0
    %2939 = vmatpush1.msra.mxu0 %v2907
    %2940 = vmatprep.subr.mxu0 0.0
    %2941 = vmatpush1.msra.mxu0 %v2906
    %2942 = vmatprep.subr.mxu0 0.0
    %2943 = vmatpush2.msra.mxu0 0.0
    %2944 = vmatprep.subr.mxu0 0.0
    %2945 = vmatpush2.msra.mxu0 0.0
    %2946 = vmatprep.subr.mxu0 0.0
    %2947 = vmatpush2.msra.mxu0 0.0
    %2948 = vmatprep.subr.mxu0 0.0
    %2949 = vmatpush2.msra.mxu0 0.0
    %2950 = vmatprep.subr.mxu0 0.0
    %2951 = vmatpush2.msra.mxu0 0.0
    %2952 = vmatprep.subr.mxu0 0.0
    %2953 = vmatpush2.msra.mxu0 0.0
    %2954 = vmatprep.subr.mxu0 0.0
    %2955 = vmatpush2.msra.mxu0 0.0
    %2956 = vmatprep.subr.mxu0 0.0
    %2957 = vmatpush2.msra.mxu0 0.0
    %2958 = vmatprep.subr.mxu0 0.0
    %2959 = vmatpush2.msra.mxu0 0.0
    %2960 = vmatprep.subr.mxu0 0.0
    %2961 = vmatpush2.msra.mxu0 0.0
    %2962 = vmatprep.subr.mxu0 0.0
    %2963 = vmatpush2.msra.mxu0 0.0
    %2964 = vmatprep.subr.mxu0 0.0
    %2965 = vmatpush2.msra.mxu0 0.0
    %2966 = vmatprep.subr.mxu0 0.0
    %2967 = vmatpush2.msra.mxu0 0.0
    %2968 = vmatprep.subr.mxu0 0.0
    %2969 = vmatpush2.msra.mxu0 0.0
    %2970 = vmatprep.subr.mxu0 0.0
    %2971 = vmatpush2.msra.mxu0 0.0
    %2972 = vmatprep.subr.mxu0 0.0
    %2973 = vmatpush2.msra.mxu0 0.0
    %2974 = vmatprep.mubr.f32.mxu0 0.0
    %2975 = vmatmul.mubr.f32.gmra.mxu0 %v2677
    %v2976 = vpop.f32.mrf.mxu0
    %v2977 = vadd.f32 0.0, %v2976
    %v2978 = vpop.f32.mrf.mxu0
    %2979 = vdwg.mxu0
    %v2980 = vadd.f32 %v2905, %v2977
    %v2981 = vxor.u32 %v2749, 2147483648
    %v2982 = vmul.f32 %v2981, 1.442695
    %v2983 = vpow.pop %v2982
    %v2984 = vadd.f32 %v2983, 1.0
    %v2985 = vrcp.pop %v2984
    %v2986 = vmul.f32 1.0, %v2985
    %v2987 = vxor.u32 %v2826, 2147483648
    %v2988 = vmul.f32 %v2987, 1.442695
    %v2989 = vpow.pop %v2988
    %v2990 = vadd.f32 %v2989, 1.0
    %v2991 = vrcp.pop %v2990
    %v2992 = vmul.f32 1.0, %v2991
    %v2993 = vtanh.pop %v2903
    %v2994 = vxor.u32 %v2980, 2147483648
    %v2995 = vmul.f32 %v2994, 1.442695
    %v2996 = vpow.pop %v2995
    %v2997 = vadd.f32 %v2996, 1.0
    %v2998 = vrcp.pop %v2997
    %v2999 = vmul.f32 1.0, %v2998
    %v3000 = vmul.f32 %v2992, %v2669
    %v3001 = vmul.f32 %v2986, %v2993
    %v3002 = vadd.f32 %v3000, %v3001
    %v3003 = vtanh.pop %v3002
    %v3004 = vmul.f32 %v2999, %v3003
    %3005 = vst.msk [vmem:[#allocation7] sm:$0xff] %vm235, %v3004
    %3006 = vst.msk [vmem:[#allocation8] sm:$0xff] %vm235, %v3002
    %s3007 = scalar_lea.vmem [#allocation2], 48
    %3008 = vst.msk [vmem:[%s3007] sm:$0xff] %vm235, %v3004
    %v3009 = vld [vmem:[#allocation7] sm:$0xff]
    %v3010 = vld [vmem:[#allocation8] sm:$0xff]
    %s3011 = scalar_lea.vmem [#allocation3], 56
    %v3012 = vld [vmem:[%s3011] sm:$0xff]
    %v3013 = vld [vmem:[#allocation9] sm:$0xff]
    %v3014 = vld [vmem:[#allocation9 + $0x8] sm:$0xff]
    %v3015 = vld [vmem:[#allocation9 + $0x10] sm:$0xff]
    %v3016 = vld [vmem:[#allocation9 + $0x18] sm:$0xff]
    %v3018 = vsel %vm235, %v3009, 0
    %3020 = vmatprep.subr.mxu0 0.0
    %3021 = vmatpush1.msra.mxu0 0.0
    %3022 = vmatprep.subr.mxu0 0.0
    %3023 = vmatpush1.msra.mxu0 0.0
    %3024 = vmatprep.subr.mxu0 0.0
    %3025 = vmatpush1.msra.mxu0 0.0
    %3026 = vmatprep.subr.mxu0 0.0
    %3027 = vmatpush1.msra.mxu0 0.0
    %3028 = vmatprep.subr.mxu0 0.0
    %3029 = vmatpush1.msra.mxu0 0.0
    %3030 = vmatprep.subr.mxu0 0.0
    %3031 = vmatpush1.msra.mxu0 0.0
    %3032 = vmatprep.subr.mxu0 0.0
    %3033 = vmatpush1.msra.mxu0 0.0
    %3034 = vmatprep.subr.mxu0 0.0
    %3035 = vmatpush1.msra.mxu0 0.0
    %3036 = vmatprep.subr.mxu0 0.0
    %3037 = vmatpush1.msra.mxu0 0.0
    %3038 = vmatprep.subr.mxu0 0.0
    %3039 = vmatpush1.msra.mxu0 0.0
    %3040 = vmatprep.subr.mxu0 0.0
    %3041 = vmatpush1.msra.mxu0 0.0
    %3042 = vmatprep.subr.mxu0 0.0
    %3043 = vmatpush1.msra.mxu0 0.0
    %3044 = vmatprep.subr.mxu0 0.0
    %3045 = vmatpush1.msra.mxu0 %v3016
    %3046 = vmatprep.subr.mxu0 0.0
    %3047 = vmatpush1.msra.mxu0 %v3015
    %3048 = vmatprep.subr.mxu0 0.0
    %3049 = vmatpush1.msra.mxu0 %v3014
    %3050 = vmatprep.subr.mxu0 0.0
    %3051 = vmatpush1.msra.mxu0 %v3013
    %3052 = vmatprep.subr.mxu0 0.0
    %3053 = vmatpush2.msra.mxu0 0.0
    %3054 = vmatprep.subr.mxu0 0.0
    %3055 = vmatpush2.msra.mxu0 0.0
    %3056 = vmatprep.subr.mxu0 0.0
    %3057 = vmatpush2.msra.mxu0 0.0
    %3058 = vmatprep.subr.mxu0 0.0
    %3059 = vmatpush2.msra.mxu0 0.0
    %3060 = vmatprep.subr.mxu0 0.0
    %3061 = vmatpush2.msra.mxu0 0.0
    %3062 = vmatprep.subr.mxu0 0.0
    %3063 = vmatpush2.msra.mxu0 0.0
    %3064 = vmatprep.subr.mxu0 0.0
    %3065 = vmatpush2.msra.mxu0 0.0
    %3066 = vmatprep.subr.mxu0 0.0
    %3067 = vmatpush2.msra.mxu0 0.0
    %3068 = vmatprep.subr.mxu0 0.0
    %3069 = vmatpush2.msra.mxu0 0.0
    %3070 = vmatprep.subr.mxu0 0.0
    %3071 = vmatpush2.msra.mxu0 0.0
    %3072 = vmatprep.subr.mxu0 0.0
    %3073 = vmatpush2.msra.mxu0 0.0
    %3074 = vmatprep.subr.mxu0 0.0
    %3075 = vmatpush2.msra.mxu0 0.0
    %3076 = vmatprep.subr.mxu0 0.0
    %3077 = vmatpush2.msra.mxu0 0.0
    %3078 = vmatprep.subr.mxu0 0.0
    %3079 = vmatpush2.msra.mxu0 0.0
    %3080 = vmatprep.subr.mxu0 0.0
    %3081 = vmatpush2.msra.mxu0 0.0
    %3082 = vmatprep.subr.mxu0 0.0
    %3083 = vmatpush2.msra.mxu0 0.0
    %3084 = vmatprep.mubr.f32.mxu0 0.0
    %3085 = vmatmul.mubr.f32.gmra.mxu0 %v3018
    %v3086 = vpop.f32.mrf.mxu0
    %v3087 = vadd.f32 0.0, %v3086
    %v3088 = vpop.f32.mrf.mxu0
    %3089 = vdwg.mxu0
    %v3090 = vadd.f32 %v3012, %v3087
    %s3091 = scalar_lea.vmem [#allocation4], 56
    %v3092 = vld [vmem:[%s3091] sm:$0xff]
    %v3093 = vld [vmem:[%s706] sm:$0xff]
    %v3094 = vld [vmem:[%s706 + $0x8] sm:$0xff]
    %v3095 = vld [vmem:[%s706 + $0x10] sm:$0xff]
    %v3096 = vld [vmem:[%s706 + $0x18] sm:$0xff]
    %3097 = vmatprep.subr.mxu0 0.0
    %3098 = vmatpush1.msra.mxu0 0.0
    %3099 = vmatprep.subr.mxu0 0.0
    %3100 = vmatpush1.msra.mxu0 0.0
    %3101 = vmatprep.subr.mxu0 0.0
    %3102 = vmatpush1.msra.mxu0 0.0
    %3103 = vmatprep.subr.mxu0 0.0
    %3104 = vmatpush1.msra.mxu0 0.0
    %3105 = vmatprep.subr.mxu0 0.0
    %3106 = vmatpush1.msra.mxu0 0.0
    %3107 = vmatprep.subr.mxu0 0.0
    %3108 = vmatpush1.msra.mxu0 0.0
    %3109 = vmatprep.subr.mxu0 0.0
    %3110 = vmatpush1.msra.mxu0 0.0
    %3111 = vmatprep.subr.mxu0 0.0
    %3112 = vmatpush1.msra.mxu0 0.0
    %3113 = vmatprep.subr.mxu0 0.0
    %3114 = vmatpush1.msra.mxu0 0.0
    %3115 = vmatprep.subr.mxu0 0.0
    %3116 = vmatpush1.msra.mxu0 0.0
    %3117 = vmatprep.subr.mxu0 0.0
    %3118 = vmatpush1.msra.mxu0 0.0
    %3119 = vmatprep.subr.mxu0 0.0
    %3120 = vmatpush1.msra.mxu0 0.0
    %3121 = vmatprep.subr.mxu0 0.0
    %3122 = vmatpush1.msra.mxu0 %v3096
    %3123 = vmatprep.subr.mxu0 0.0
    %3124 = vmatpush1.msra.mxu0 %v3095
    %3125 = vmatprep.subr.mxu0 0.0
    %3126 = vmatpush1.msra.mxu0 %v3094
    %3127 = vmatprep.subr.mxu0 0.0
    %3128 = vmatpush1.msra.mxu0 %v3093
    %3129 = vmatprep.subr.mxu0 0.0
    %3130 = vmatpush2.msra.mxu0 0.0
    %3131 = vmatprep.subr.mxu0 0.0
    %3132 = vmatpush2.msra.mxu0 0.0
    %3133 = vmatprep.subr.mxu0 0.0
    %3134 = vmatpush2.msra.mxu0 0.0
    %3135 = vmatprep.subr.mxu0 0.0
    %3136 = vmatpush2.msra.mxu0 0.0
    %3137 = vmatprep.subr.mxu0 0.0
    %3138 = vmatpush2.msra.mxu0 0.0
    %3139 = vmatprep.subr.mxu0 0.0
    %3140 = vmatpush2.msra.mxu0 0.0
    %3141 = vmatprep.subr.mxu0 0.0
    %3142 = vmatpush2.msra.mxu0 0.0
    %3143 = vmatprep.subr.mxu0 0.0
    %3144 = vmatpush2.msra.mxu0 0.0
    %3145 = vmatprep.subr.mxu0 0.0
    %3146 = vmatpush2.msra.mxu0 0.0
    %3147 = vmatprep.subr.mxu0 0.0
    %3148 = vmatpush2.msra.mxu0 0.0
    %3149 = vmatprep.subr.mxu0 0.0
    %3150 = vmatpush2.msra.mxu0 0.0
    %3151 = vmatprep.subr.mxu0 0.0
    %3152 = vmatpush2.msra.mxu0 0.0
    %3153 = vmatprep.subr.mxu0 0.0
    %3154 = vmatpush2.msra.mxu0 0.0
    %3155 = vmatprep.subr.mxu0 0.0
    %3156 = vmatpush2.msra.mxu0 0.0
    %3157 = vmatprep.subr.mxu0 0.0
    %3158 = vmatpush2.msra.mxu0 0.0
    %3159 = vmatprep.subr.mxu0 0.0
    %3160 = vmatpush2.msra.mxu0 0.0
    %3161 = vmatprep.mubr.f32.mxu0 0.0
    %3162 = vmatmul.mubr.f32.gmra.mxu0 %v3018
    %v3163 = vpop.f32.mrf.mxu0
    %v3164 = vadd.f32 0.0, %v3163
    %v3165 = vpop.f32.mrf.mxu0
    %3166 = vdwg.mxu0
    %v3167 = vadd.f32 %v3092, %v3164
    %s3168 = scalar_lea.vmem [#allocation5], 56
    %v3169 = vld [vmem:[%s3168] sm:$0xff]
    %v3170 = vld [vmem:[%s783] sm:$0xff]
    %v3171 = vld [vmem:[%s783 + $0x8] sm:$0xff]
    %v3172 = vld [vmem:[%s783 + $0x10] sm:$0xff]
    %v3173 = vld [vmem:[%s783 + $0x18] sm:$0xff]
    %3174 = vmatprep.subr.mxu0 0.0
    %3175 = vmatpush1.msra.mxu0 0.0
    %3176 = vmatprep.subr.mxu0 0.0
    %3177 = vmatpush1.msra.mxu0 0.0
    %3178 = vmatprep.subr.mxu0 0.0
    %3179 = vmatpush1.msra.mxu0 0.0
    %3180 = vmatprep.subr.mxu0 0.0
    %3181 = vmatpush1.msra.mxu0 0.0
    %3182 = vmatprep.subr.mxu0 0.0
    %3183 = vmatpush1.msra.mxu0 0.0
    %3184 = vmatprep.subr.mxu0 0.0
    %3185 = vmatpush1.msra.mxu0 0.0
    %3186 = vmatprep.subr.mxu0 0.0
    %3187 = vmatpush1.msra.mxu0 0.0
    %3188 = vmatprep.subr.mxu0 0.0
    %3189 = vmatpush1.msra.mxu0 0.0
    %3190 = vmatprep.subr.mxu0 0.0
    %3191 = vmatpush1.msra.mxu0 0.0
    %3192 = vmatprep.subr.mxu0 0.0
    %3193 = vmatpush1.msra.mxu0 0.0
    %3194 = vmatprep.subr.mxu0 0.0
    %3195 = vmatpush1.msra.mxu0 0.0
    %3196 = vmatprep.subr.mxu0 0.0
    %3197 = vmatpush1.msra.mxu0 0.0
    %3198 = vmatprep.subr.mxu0 0.0
    %3199 = vmatpush1.msra.mxu0 %v3173
    %3200 = vmatprep.subr.mxu0 0.0
    %3201 = vmatpush1.msra.mxu0 %v3172
    %3202 = vmatprep.subr.mxu0 0.0
    %3203 = vmatpush1.msra.mxu0 %v3171
    %3204 = vmatprep.subr.mxu0 0.0
    %3205 = vmatpush1.msra.mxu0 %v3170
    %3206 = vmatprep.subr.mxu0 0.0
    %3207 = vmatpush2.msra.mxu0 0.0
    %3208 = vmatprep.subr.mxu0 0.0
    %3209 = vmatpush2.msra.mxu0 0.0
    %3210 = vmatprep.subr.mxu0 0.0
    %3211 = vmatpush2.msra.mxu0 0.0
    %3212 = vmatprep.subr.mxu0 0.0
    %3213 = vmatpush2.msra.mxu0 0.0
    %3214 = vmatprep.subr.mxu0 0.0
    %3215 = vmatpush2.msra.mxu0 0.0
    %3216 = vmatprep.subr.mxu0 0.0
    %3217 = vmatpush2.msra.mxu0 0.0
    %3218 = vmatprep.subr.mxu0 0.0
    %3219 = vmatpush2.msra.mxu0 0.0
    %3220 = vmatprep.subr.mxu0 0.0
    %3221 = vmatpush2.msra.mxu0 0.0
    %3222 = vmatprep.subr.mxu0 0.0
    %3223 = vmatpush2.msra.mxu0 0.0
    %3224 = vmatprep.subr.mxu0 0.0
    %3225 = vmatpush2.msra.mxu0 0.0
    %3226 = vmatprep.subr.mxu0 0.0
    %3227 = vmatpush2.msra.mxu0 0.0
    %3228 = vmatprep.subr.mxu0 0.0
    %3229 = vmatpush2.msra.mxu0 0.0
    %3230 = vmatprep.subr.mxu0 0.0
    %3231 = vmatpush2.msra.mxu0 0.0
    %3232 = vmatprep.subr.mxu0 0.0
    %3233 = vmatpush2.msra.mxu0 0.0
    %3234 = vmatprep.subr.mxu0 0.0
    %3235 = vmatpush2.msra.mxu0 0.0
    %3236 = vmatprep.subr.mxu0 0.0
    %3237 = vmatpush2.msra.mxu0 0.0
    %3238 = vmatprep.mubr.f32.mxu0 0.0
    %3239 = vmatmul.mubr.f32.gmra.mxu0 %v3018
    %v3240 = vpop.f32.mrf.mxu0
    %v3241 = vadd.f32 0.0, %v3240
    %v3242 = vpop.f32.mrf.mxu0
    %3243 = vdwg.mxu0
    %v3244 = vadd.f32 %v3169, %v3241
    %s3245 = scalar_lea.vmem [#allocation6], 56
    %v3246 = vld [vmem:[%s3245] sm:$0xff]
    %v3247 = vld [vmem:[%s860] sm:$0xff]
    %v3248 = vld [vmem:[%s860 + $0x8] sm:$0xff]
    %v3249 = vld [vmem:[%s860 + $0x10] sm:$0xff]
    %v3250 = vld [vmem:[%s860 + $0x18] sm:$0xff]
    %3251 = vmatprep.subr.mxu0 0.0
    %3252 = vmatpush1.msra.mxu0 0.0
    %3253 = vmatprep.subr.mxu0 0.0
    %3254 = vmatpush1.msra.mxu0 0.0
    %3255 = vmatprep.subr.mxu0 0.0
    %3256 = vmatpush1.msra.mxu0 0.0
    %3257 = vmatprep.subr.mxu0 0.0
    %3258 = vmatpush1.msra.mxu0 0.0
    %3259 = vmatprep.subr.mxu0 0.0
    %3260 = vmatpush1.msra.mxu0 0.0
    %3261 = vmatprep.subr.mxu0 0.0
    %3262 = vmatpush1.msra.mxu0 0.0
    %3263 = vmatprep.subr.mxu0 0.0
    %3264 = vmatpush1.msra.mxu0 0.0
    %3265 = vmatprep.subr.mxu0 0.0
    %3266 = vmatpush1.msra.mxu0 0.0
    %3267 = vmatprep.subr.mxu0 0.0
    %3268 = vmatpush1.msra.mxu0 0.0
    %3269 = vmatprep.subr.mxu0 0.0
    %3270 = vmatpush1.msra.mxu0 0.0
    %3271 = vmatprep.subr.mxu0 0.0
    %3272 = vmatpush1.msra.mxu0 0.0
    %3273 = vmatprep.subr.mxu0 0.0
    %3274 = vmatpush1.msra.mxu0 0.0
    %3275 = vmatprep.subr.mxu0 0.0
    %3276 = vmatpush1.msra.mxu0 %v3250
    %3277 = vmatprep.subr.mxu0 0.0
    %3278 = vmatpush1.msra.mxu0 %v3249
    %3279 = vmatprep.subr.mxu0 0.0
    %3280 = vmatpush1.msra.mxu0 %v3248
    %3281 = vmatprep.subr.mxu0 0.0
    %3282 = vmatpush1.msra.mxu0 %v3247
    %3283 = vmatprep.subr.mxu0 0.0
    %3284 = vmatpush2.msra.mxu0 0.0
    %3285 = vmatprep.subr.mxu0 0.0
    %3286 = vmatpush2.msra.mxu0 0.0
    %3287 = vmatprep.subr.mxu0 0.0
    %3288 = vmatpush2.msra.mxu0 0.0
    %3289 = vmatprep.subr.mxu0 0.0
    %3290 = vmatpush2.msra.mxu0 0.0
    %3291 = vmatprep.subr.mxu0 0.0
    %3292 = vmatpush2.msra.mxu0 0.0
    %3293 = vmatprep.subr.mxu0 0.0
    %3294 = vmatpush2.msra.mxu0 0.0
    %3295 = vmatprep.subr.mxu0 0.0
    %3296 = vmatpush2.msra.mxu0 0.0
    %3297 = vmatprep.subr.mxu0 0.0
    %3298 = vmatpush2.msra.mxu0 0.0
    %3299 = vmatprep.subr.mxu0 0.0
    %3300 = vmatpush2.msra.mxu0 0.0
    %3301 = vmatprep.subr.mxu0 0.0
    %3302 = vmatpush2.msra.mxu0 0.0
    %3303 = vmatprep.subr.mxu0 0.0
    %3304 = vmatpush2.msra.mxu0 0.0
    %3305 = vmatprep.subr.mxu0 0.0
    %3306 = vmatpush2.msra.mxu0 0.0
    %3307 = vmatprep.subr.mxu0 0.0
    %3308 = vmatpush2.msra.mxu0 0.0
    %3309 = vmatprep.subr.mxu0 0.0
    %3310 = vmatpush2.msra.mxu0 0.0
    %3311 = vmatprep.subr.mxu0 0.0
    %3312 = vmatpush2.msra.mxu0 0.0
    %3313 = vmatprep.subr.mxu0 0.0
    %3314 = vmatpush2.msra.mxu0 0.0
    %3315 = vmatprep.mubr.f32.mxu0 0.0
    %3316 = vmatmul.mubr.f32.gmra.mxu0 %v3018
    %v3317 = vpop.f32.mrf.mxu0
    %v3318 = vadd.f32 0.0, %v3317
    %v3319 = vpop.f32.mrf.mxu0
    %3320 = vdwg.mxu0
    %v3321 = vadd.f32 %v3246, %v3318
    %v3322 = vxor.u32 %v3090, 2147483648
    %v3323 = vmul.f32 %v3322, 1.442695
    %v3324 = vpow.pop %v3323
    %v3325 = vadd.f32 %v3324, 1.0
    %v3326 = vrcp.pop %v3325
    %v3327 = vmul.f32 1.0, %v3326
    %v3328 = vxor.u32 %v3167, 2147483648
    %v3329 = vmul.f32 %v3328, 1.442695
    %v3330 = vpow.pop %v3329
    %v3331 = vadd.f32 %v3330, 1.0
    %v3332 = vrcp.pop %v3331
    %v3333 = vmul.f32 1.0, %v3332
    %v3334 = vtanh.pop %v3244
    %v3335 = vxor.u32 %v3321, 2147483648
    %v3336 = vmul.f32 %v3335, 1.442695
    %v3337 = vpow.pop %v3336
    %v3338 = vadd.f32 %v3337, 1.0
    %v3339 = vrcp.pop %v3338
    %v3340 = vmul.f32 1.0, %v3339
    %v3341 = vmul.f32 %v3333, %v3010
    %v3342 = vmul.f32 %v3327, %v3334
    %v3343 = vadd.f32 %v3341, %v3342
    %v3344 = vtanh.pop %v3343
    %v3345 = vmul.f32 %v3340, %v3344
    %3346 = vst.msk [vmem:[#allocation7] sm:$0xff] %vm235, %v3345
    %3347 = vst.msk [vmem:[#allocation8] sm:$0xff] %vm235, %v3343
    %s3348 = scalar_lea.vmem [#allocation2], 56
    %3349 = vst.msk [vmem:[%s3348] sm:$0xff] %vm235, %v3345
    %v3350 = vld [vmem:[#allocation2] sm:$0xff]
    %v3351 = vld [vmem:[#allocation2 + $0x8] sm:$0xff]
    %v3352 = vld [vmem:[#allocation2 + $0x10] sm:$0xff]
    %v3353 = vld [vmem:[#allocation2 + $0x18] sm:$0xff]
    %v3354 = vld [vmem:[#allocation2 + $0x20] sm:$0xff]
    %v3355 = vld [vmem:[#allocation2 + $0x28] sm:$0xff]
    %v3356 = vld [vmem:[#allocation2 + $0x30] sm:$0xff]
    %v3357 = vld [vmem:[#allocation2 + $0x38] sm:$0xff]
    %v3358 = vld [vmem:[#allocation11] sm:$0xff]
    %v3359 = vld [vmem:[#allocation11 + $0x8] sm:$0xff]
    %v3360 = vld [vmem:[#allocation11 + $0x10] sm:$0xff]
    %v3361 = vld [vmem:[#allocation11 + $0x18] sm:$0xff]
    %v3362 = vld [vmem:[%s6] sm:$0x1]
    %v3364 = vlaneseq
    %v3365 = vshrl.u32 %v3364, 7
    %v3366 = vsub.s32 0, %v3365
    %v3367 = vrot.slane %v3362, %v3366
    %v3370 = vsel %vm235, %v3350, 0
    %v3373 = vsel %vm235, %v3351, 0
    %v3376 = vsel %vm235, %v3352, 0
    %v3379 = vsel %vm235, %v3353, 0
    %v3382 = vsel %vm235, %v3354, 0
    %v3385 = vsel %vm235, %v3355, 0
    %v3388 = vsel %vm235, %v3356, 0
    %v3391 = vsel %vm235, %v3357, 0
    %3393 = vmatprep.subr.mxu0 0.0
    %3394 = vmatpush1.msra.mxu0 0.0
    %3395 = vmatprep.subr.mxu0 0.0
    %3396 = vmatpush1.msra.mxu0 0.0
    %3397 = vmatprep.subr.mxu0 0.0
    %3398 = vmatpush1.msra.mxu0 0.0
    %3399 = vmatprep.subr.mxu0 0.0
    %3400 = vmatpush1.msra.mxu0 0.0
    %3401 = vmatprep.subr.mxu0 0.0
    %3402 = vmatpush1.msra.mxu0 0.0
    %3403 = vmatprep.subr.mxu0 0.0
    %3404 = vmatpush1.msra.mxu0 0.0
    %3405 = vmatprep.subr.mxu0 0.0
    %3406 = vmatpush1.msra.mxu0 0.0
    %3407 = vmatprep.subr.mxu0 0.0
    %3408 = vmatpush1.msra.mxu0 0.0
    %3409 = vmatprep.subr.mxu0 0.0
    %3410 = vmatpush1.msra.mxu0 0.0
    %3411 = vmatprep.subr.mxu0 0.0
    %3412 = vmatpush1.msra.mxu0 0.0
    %3413 = vmatprep.subr.mxu0 0.0
    %3414 = vmatpush1.msra.mxu0 0.0
    %3415 = vmatprep.subr.mxu0 0.0
    %3416 = vmatpush1.msra.mxu0 0.0
    %3417 = vmatprep.subr.mxu0 0.0
    %3418 = vmatpush1.msra.mxu0 %v3361
    %3419 = vmatprep.subr.mxu0 0.0
    %3420 = vmatpush1.msra.mxu0 %v3360
    %3421 = vmatprep.subr.mxu0 0.0
    %3422 = vmatpush1.msra.mxu0 %v3359
    %3423 = vmatprep.subr.mxu0 0.0
    %3424 = vmatpush1.msra.mxu0 %v3358
    %3425 = vmatprep.subr.mxu0 0.0
    %3426 = vmatpush2.msra.mxu0 0.0
    %3427 = vmatprep.subr.mxu0 0.0
    %3428 = vmatpush2.msra.mxu0 0.0
    %3429 = vmatprep.subr.mxu0 0.0
    %3430 = vmatpush2.msra.mxu0 0.0
    %3431 = vmatprep.subr.mxu0 0.0
    %3432 = vmatpush2.msra.mxu0 0.0
    %3433 = vmatprep.subr.mxu0 0.0
    %3434 = vmatpush2.msra.mxu0 0.0
    %3435 = vmatprep.subr.mxu0 0.0
    %3436 = vmatpush2.msra.mxu0 0.0
    %3437 = vmatprep.subr.mxu0 0.0
    %3438 = vmatpush2.msra.mxu0 0.0
    %3439 = vmatprep.subr.mxu0 0.0
    %3440 = vmatpush2.msra.mxu0 0.0
    %3441 = vmatprep.subr.mxu0 0.0
    %3442 = vmatpush2.msra.mxu0 0.0
    %3443 = vmatprep.subr.mxu0 0.0
    %3444 = vmatpush2.msra.mxu0 0.0
    %3445 = vmatprep.subr.mxu0 0.0
    %3446 = vmatpush2.msra.mxu0 0.0
    %3447 = vmatprep.subr.mxu0 0.0
    %3448 = vmatpush2.msra.mxu0 0.0
    %3449 = vmatprep.subr.mxu0 0.0
    %3450 = vmatpush2.msra.mxu0 0.0
    %3451 = vmatprep.subr.mxu0 0.0
    %3452 = vmatpush2.msra.mxu0 0.0
    %3453 = vmatprep.subr.mxu0 0.0
    %3454 = vmatpush2.msra.mxu0 0.0
    %3455 = vmatprep.subr.mxu0 0.0
    %3456 = vmatpush2.msra.mxu0 0.0
    %3457 = vmatprep.mubr.f32.mxu0 0.0
    %3458 = vmatmul.mubr.f32.gmra.mxu0 %v3370
    %v3459 = vpop.f32.mrf.mxu0
    %v3460 = vadd.f32 %v3367, %v3459
    %v3461 = vpop.f32.mrf.mxu0
    %3462 = vmatprep.mubr.f32.mxu0 0.0
    %3463 = vmatmul.mubr.f32.gmra.mxu0 %v3373
    %v3464 = vpop.f32.mrf.mxu0
    %v3465 = vadd.f32 %v3367, %v3464
    %v3466 = vpop.f32.mrf.mxu0
    %3467 = vmatprep.mubr.f32.mxu0 0.0
    %3468 = vmatmul.mubr.f32.gmra.mxu0 %v3376
    %v3469 = vpop.f32.mrf.mxu0
    %v3470 = vadd.f32 %v3367, %v3469
    %v3471 = vpop.f32.mrf.mxu0
    %3472 = vmatprep.mubr.f32.mxu0 0.0
    %3473 = vmatmul.mubr.f32.gmra.mxu0 %v3379
    %v3474 = vpop.f32.mrf.mxu0
    %v3475 = vadd.f32 %v3367, %v3474
    %v3476 = vpop.f32.mrf.mxu0
    %3477 = vmatprep.mubr.f32.mxu0 0.0
    %3478 = vmatmul.mubr.f32.gmra.mxu0 %v3382
    %v3479 = vpop.f32.mrf.mxu0
    %v3480 = vadd.f32 %v3367, %v3479
    %v3481 = vpop.f32.mrf.mxu0
    %3482 = vmatprep.mubr.f32.mxu0 0.0
    %3483 = vmatmul.mubr.f32.gmra.mxu0 %v3385
    %v3484 = vpop.f32.mrf.mxu0
    %v3485 = vadd.f32 %v3367, %v3484
    %v3486 = vpop.f32.mrf.mxu0
    %3487 = vmatprep.mubr.f32.mxu0 0.0
    %3488 = vmatmul.mubr.f32.gmra.mxu0 %v3388
    %v3489 = vpop.f32.mrf.mxu0
    %v3490 = vadd.f32 %v3367, %v3489
    %v3491 = vpop.f32.mrf.mxu0
    %3492 = vmatprep.mubr.f32.mxu0 0.0
    %3493 = vmatmul.mubr.f32.gmra.mxu0 %v3391
    %v3494 = vpop.f32.mrf.mxu0
    %v3495 = vadd.f32 %v3367, %v3494
    %v3496 = vpop.f32.mrf.mxu0
    %3497 = vdwg.mxu0
    %3498 = vst.msk [vmem:[#allocation3] sm:$0xff] %vm235, %v3460
    %3499 = vst.msk [vmem:[#allocation3 + $0x8] sm:$0xff] %vm235, %v3465
    %3500 = vst.msk [vmem:[#allocation3 + $0x10] sm:$0xff] %vm235, %v3470
    %3501 = vst.msk [vmem:[#allocation3 + $0x18] sm:$0xff] %vm235, %v3475
    %3502 = vst.msk [vmem:[#allocation3 + $0x20] sm:$0xff] %vm235, %v3480
    %3503 = vst.msk [vmem:[#allocation3 + $0x28] sm:$0xff] %vm235, %v3485
    %3504 = vst.msk [vmem:[#allocation3 + $0x30] sm:$0xff] %vm235, %v3490
    %3505 = vst.msk [vmem:[#allocation3 + $0x38] sm:$0xff] %vm235, %v3495
    %s3506 = scalar_lea.vmem [#allocation11], 32
    %v3507 = vld [vmem:[%s3506] sm:$0xff]
    %v3508 = vld [vmem:[%s3506 + $0x8] sm:$0xff]
    %v3509 = vld [vmem:[%s3506 + $0x10] sm:$0xff]
    %v3510 = vld [vmem:[%s3506 + $0x18] sm:$0xff]
    %s3511 = scalar_lea.vmem %s6, 1
    %v3512 = vld [vmem:[%s3511] sm:$0x1]
    %v3514 = vlaneseq
    %v3515 = vshrl.u32 %v3514, 7
    %v3516 = vsub.s32 0, %v3515
    %v3517 = vrot.slane %v3512, %v3516
    %3519 = vmatprep.subr.mxu0 0.0
    %3520 = vmatpush1.msra.mxu0 0.0
    %3521 = vmatprep.subr.mxu0 0.0
    %3522 = vmatpush1.msra.mxu0 0.0
    %3523 = vmatprep.subr.mxu0 0.0
    %3524 = vmatpush1.msra.mxu0 0.0
    %3525 = vmatprep.subr.mxu0 0.0
    %3526 = vmatpush1.msra.mxu0 0.0
    %3527 = vmatprep.subr.mxu0 0.0
    %3528 = vmatpush1.msra.mxu0 0.0
    %3529 = vmatprep.subr.mxu0 0.0
    %3530 = vmatpush1.msra.mxu0 0.0
    %3531 = vmatprep.subr.mxu0 0.0
    %3532 = vmatpush1.msra.mxu0 0.0
    %3533 = vmatprep.subr.mxu0 0.0
    %3534 = vmatpush1.msra.mxu0 0.0
    %3535 = vmatprep.subr.mxu0 0.0
    %3536 = vmatpush1.msra.mxu0 0.0
    %3537 = vmatprep.subr.mxu0 0.0
    %3538 = vmatpush1.msra.mxu0 0.0
    %3539 = vmatprep.subr.mxu0 0.0
    %3540 = vmatpush1.msra.mxu0 0.0
    %3541 = vmatprep.subr.mxu0 0.0
    %3542 = vmatpush1.msra.mxu0 0.0
    %3543 = vmatprep.subr.mxu0 0.0
    %3544 = vmatpush1.msra.mxu0 %v3510
    %3545 = vmatprep.subr.mxu0 0.0
    %3546 = vmatpush1.msra.mxu0 %v3509
    %3547 = vmatprep.subr.mxu0 0.0
    %3548 = vmatpush1.msra.mxu0 %v3508
    %3549 = vmatprep.subr.mxu0 0.0
    %3550 = vmatpush1.msra.mxu0 %v3507
    %3551 = vmatprep.subr.mxu0 0.0
    %3552 = vmatpush2.msra.mxu0 0.0
    %3553 = vmatprep.subr.mxu0 0.0
    %3554 = vmatpush2.msra.mxu0 0.0
    %3555 = vmatprep.subr.mxu0 0.0
    %3556 = vmatpush2.msra.mxu0 0.0
    %3557 = vmatprep.subr.mxu0 0.0
    %3558 = vmatpush2.msra.mxu0 0.0
    %3559 = vmatprep.subr.mxu0 0.0
    %3560 = vmatpush2.msra.mxu0 0.0
    %3561 = vmatprep.subr.mxu0 0.0
    %3562 = vmatpush2.msra.mxu0 0.0
    %3563 = vmatprep.subr.mxu0 0.0
    %3564 = vmatpush2.msra.mxu0 0.0
    %3565 = vmatprep.subr.mxu0 0.0
    %3566 = vmatpush2.msra.mxu0 0.0
    %3567 = vmatprep.subr.mxu0 0.0
    %3568 = vmatpush2.msra.mxu0 0.0
    %3569 = vmatprep.subr.mxu0 0.0
    %3570 = vmatpush2.msra.mxu0 0.0
    %3571 = vmatprep.subr.mxu0 0.0
    %3572 = vmatpush2.msra.mxu0 0.0
    %3573 = vmatprep.subr.mxu0 0.0
    %3574 = vmatpush2.msra.mxu0 0.0
    %3575 = vmatprep.subr.mxu0 0.0
    %3576 = vmatpush2.msra.mxu0 0.0
    %3577 = vmatprep.subr.mxu0 0.0
    %3578 = vmatpush2.msra.mxu0 0.0
    %3579 = vmatprep.subr.mxu0 0.0
    %3580 = vmatpush2.msra.mxu0 0.0
    %3581 = vmatprep.subr.mxu0 0.0
    %3582 = vmatpush2.msra.mxu0 0.0
    %3583 = vmatprep.mubr.f32.mxu0 0.0
    %3584 = vmatmul.mubr.f32.gmra.mxu0 %v3370
    %v3585 = vpop.f32.mrf.mxu0
    %v3586 = vadd.f32 %v3517, %v3585
    %v3587 = vpop.f32.mrf.mxu0
    %3588 = vmatprep.mubr.f32.mxu0 0.0
    %3589 = vmatmul.mubr.f32.gmra.mxu0 %v3373
    %v3590 = vpop.f32.mrf.mxu0
    %v3591 = vadd.f32 %v3517, %v3590
    %v3592 = vpop.f32.mrf.mxu0
    %3593 = vmatprep.mubr.f32.mxu0 0.0
    %3594 = vmatmul.mubr.f32.gmra.mxu0 %v3376
    %v3595 = vpop.f32.mrf.mxu0
    %v3596 = vadd.f32 %v3517, %v3595
    %v3597 = vpop.f32.mrf.mxu0
    %3598 = vmatprep.mubr.f32.mxu0 0.0
    %3599 = vmatmul.mubr.f32.gmra.mxu0 %v3379
    %v3600 = vpop.f32.mrf.mxu0
    %v3601 = vadd.f32 %v3517, %v3600
    %v3602 = vpop.f32.mrf.mxu0
    %3603 = vmatprep.mubr.f32.mxu0 0.0
    %3604 = vmatmul.mubr.f32.gmra.mxu0 %v3382
    %v3605 = vpop.f32.mrf.mxu0
    %v3606 = vadd.f32 %v3517, %v3605
    %v3607 = vpop.f32.mrf.mxu0
    %3608 = vmatprep.mubr.f32.mxu0 0.0
    %3609 = vmatmul.mubr.f32.gmra.mxu0 %v3385
    %v3610 = vpop.f32.mrf.mxu0
    %v3611 = vadd.f32 %v3517, %v3610
    %v3612 = vpop.f32.mrf.mxu0
    %3613 = vmatprep.mubr.f32.mxu0 0.0
    %3614 = vmatmul.mubr.f32.gmra.mxu0 %v3388
    %v3615 = vpop.f32.mrf.mxu0
    %v3616 = vadd.f32 %v3517, %v3615
    %v3617 = vpop.f32.mrf.mxu0
    %3618 = vmatprep.mubr.f32.mxu0 0.0
    %3619 = vmatmul.mubr.f32.gmra.mxu0 %v3391
    %v3620 = vpop.f32.mrf.mxu0
    %v3621 = vadd.f32 %v3517, %v3620
    %v3622 = vpop.f32.mrf.mxu0
    %3623 = vdwg.mxu0
    %3624 = vst.msk [vmem:[#allocation4] sm:$0xff] %vm235, %v3586
    %3625 = vst.msk [vmem:[#allocation4 + $0x8] sm:$0xff] %vm235, %v3591
    %3626 = vst.msk [vmem:[#allocation4 + $0x10] sm:$0xff] %vm235, %v3596
    %3627 = vst.msk [vmem:[#allocation4 + $0x18] sm:$0xff] %vm235, %v3601
    %3628 = vst.msk [vmem:[#allocation4 + $0x20] sm:$0xff] %vm235, %v3606
    %3629 = vst.msk [vmem:[#allocation4 + $0x28] sm:$0xff] %vm235, %v3611
    %3630 = vst.msk [vmem:[#allocation4 + $0x30] sm:$0xff] %vm235, %v3616
    %3631 = vst.msk [vmem:[#allocation4 + $0x38] sm:$0xff] %vm235, %v3621
    %s3632 = scalar_lea.vmem [#allocation11], 64
    %v3633 = vld [vmem:[%s3632] sm:$0xff]
    %v3634 = vld [vmem:[%s3632 + $0x8] sm:$0xff]
    %v3635 = vld [vmem:[%s3632 + $0x10] sm:$0xff]
    %v3636 = vld [vmem:[%s3632 + $0x18] sm:$0xff]
    %s3637 = scalar_lea.vmem %s6, 2
    %v3638 = vld [vmem:[%s3637] sm:$0x1]
    %v3640 = vlaneseq
    %v3641 = vshrl.u32 %v3640, 7
    %v3642 = vsub.s32 0, %v3641
    %v3643 = vrot.slane %v3638, %v3642
    %3645 = vmatprep.subr.mxu0 0.0
    %3646 = vmatpush1.msra.mxu0 0.0
    %3647 = vmatprep.subr.mxu0 0.0
    %3648 = vmatpush1.msra.mxu0 0.0
    %3649 = vmatprep.subr.mxu0 0.0
    %3650 = vmatpush1.msra.mxu0 0.0
    %3651 = vmatprep.subr.mxu0 0.0
    %3652 = vmatpush1.msra.mxu0 0.0
    %3653 = vmatprep.subr.mxu0 0.0
    %3654 = vmatpush1.msra.mxu0 0.0
    %3655 = vmatprep.subr.mxu0 0.0
    %3656 = vmatpush1.msra.mxu0 0.0
    %3657 = vmatprep.subr.mxu0 0.0
    %3658 = vmatpush1.msra.mxu0 0.0
    %3659 = vmatprep.subr.mxu0 0.0
    %3660 = vmatpush1.msra.mxu0 0.0
    %3661 = vmatprep.subr.mxu0 0.0
    %3662 = vmatpush1.msra.mxu0 0.0
    %3663 = vmatprep.subr.mxu0 0.0
    %3664 = vmatpush1.msra.mxu0 0.0
    %3665 = vmatprep.subr.mxu0 0.0
    %3666 = vmatpush1.msra.mxu0 0.0
    %3667 = vmatprep.subr.mxu0 0.0
    %3668 = vmatpush1.msra.mxu0 0.0
    %3669 = vmatprep.subr.mxu0 0.0
    %3670 = vmatpush1.msra.mxu0 %v3636
    %3671 = vmatprep.subr.mxu0 0.0
    %3672 = vmatpush1.msra.mxu0 %v3635
    %3673 = vmatprep.subr.mxu0 0.0
    %3674 = vmatpush1.msra.mxu0 %v3634
    %3675 = vmatprep.subr.mxu0 0.0
    %3676 = vmatpush1.msra.mxu0 %v3633
    %3677 = vmatprep.subr.mxu0 0.0
    %3678 = vmatpush2.msra.mxu0 0.0
    %3679 = vmatprep.subr.mxu0 0.0
    %3680 = vmatpush2.msra.mxu0 0.0
    %3681 = vmatprep.subr.mxu0 0.0
    %3682 = vmatpush2.msra.mxu0 0.0
    %3683 = vmatprep.subr.mxu0 0.0
    %3684 = vmatpush2.msra.mxu0 0.0
    %3685 = vmatprep.subr.mxu0 0.0
    %3686 = vmatpush2.msra.mxu0 0.0
    %3687 = vmatprep.subr.mxu0 0.0
    %3688 = vmatpush2.msra.mxu0 0.0
    %3689 = vmatprep.subr.mxu0 0.0
    %3690 = vmatpush2.msra.mxu0 0.0
    %3691 = vmatprep.subr.mxu0 0.0
    %3692 = vmatpush2.msra.mxu0 0.0
    %3693 = vmatprep.subr.mxu0 0.0
    %3694 = vmatpush2.msra.mxu0 0.0
    %3695 = vmatprep.subr.mxu0 0.0
    %3696 = vmatpush2.msra.mxu0 0.0
    %3697 = vmatprep.subr.mxu0 0.0
    %3698 = vmatpush2.msra.mxu0 0.0
    %3699 = vmatprep.subr.mxu0 0.0
    %3700 = vmatpush2.msra.mxu0 0.0
    %3701 = vmatprep.subr.mxu0 0.0
    %3702 = vmatpush2.msra.mxu0 0.0
    %3703 = vmatprep.subr.mxu0 0.0
    %3704 = vmatpush2.msra.mxu0 0.0
    %3705 = vmatprep.subr.mxu0 0.0
    %3706 = vmatpush2.msra.mxu0 0.0
    %3707 = vmatprep.subr.mxu0 0.0
    %3708 = vmatpush2.msra.mxu0 0.0
    %3709 = vmatprep.mubr.f32.mxu0 0.0
    %3710 = vmatmul.mubr.f32.gmra.mxu0 %v3370
    %v3711 = vpop.f32.mrf.mxu0
    %v3712 = vadd.f32 %v3643, %v3711
    %v3713 = vpop.f32.mrf.mxu0
    %3714 = vmatprep.mubr.f32.mxu0 0.0
    %3715 = vmatmul.mubr.f32.gmra.mxu0 %v3373
    %v3716 = vpop.f32.mrf.mxu0
    %v3717 = vadd.f32 %v3643, %v3716
    %v3718 = vpop.f32.mrf.mxu0
    %3719 = vmatprep.mubr.f32.mxu0 0.0
    %3720 = vmatmul.mubr.f32.gmra.mxu0 %v3376
    %v3721 = vpop.f32.mrf.mxu0
    %v3722 = vadd.f32 %v3643, %v3721
    %v3723 = vpop.f32.mrf.mxu0
    %3724 = vmatprep.mubr.f32.mxu0 0.0
    %3725 = vmatmul.mubr.f32.gmra.mxu0 %v3379
    %v3726 = vpop.f32.mrf.mxu0
    %v3727 = vadd.f32 %v3643, %v3726
    %v3728 = vpop.f32.mrf.mxu0
    %3729 = vmatprep.mubr.f32.mxu0 0.0
    %3730 = vmatmul.mubr.f32.gmra.mxu0 %v3382
    %v3731 = vpop.f32.mrf.mxu0
    %v3732 = vadd.f32 %v3643, %v3731
    %v3733 = vpop.f32.mrf.mxu0
    %3734 = vmatprep.mubr.f32.mxu0 0.0
    %3735 = vmatmul.mubr.f32.gmra.mxu0 %v3385
    %v3736 = vpop.f32.mrf.mxu0
    %v3737 = vadd.f32 %v3643, %v3736
    %v3738 = vpop.f32.mrf.mxu0
    %3739 = vmatprep.mubr.f32.mxu0 0.0
    %3740 = vmatmul.mubr.f32.gmra.mxu0 %v3388
    %v3741 = vpop.f32.mrf.mxu0
    %v3742 = vadd.f32 %v3643, %v3741
    %v3743 = vpop.f32.mrf.mxu0
    %3744 = vmatprep.mubr.f32.mxu0 0.0
    %3745 = vmatmul.mubr.f32.gmra.mxu0 %v3391
    %v3746 = vpop.f32.mrf.mxu0
    %v3747 = vadd.f32 %v3643, %v3746
    %v3748 = vpop.f32.mrf.mxu0
    %3749 = vdwg.mxu0
    %3750 = vst.msk [vmem:[#allocation5] sm:$0xff] %vm235, %v3712
    %3751 = vst.msk [vmem:[#allocation5 + $0x8] sm:$0xff] %vm235, %v3717
    %3752 = vst.msk [vmem:[#allocation5 + $0x10] sm:$0xff] %vm235, %v3722
    %3753 = vst.msk [vmem:[#allocation5 + $0x18] sm:$0xff] %vm235, %v3727
    %3754 = vst.msk [vmem:[#allocation5 + $0x20] sm:$0xff] %vm235, %v3732
    %3755 = vst.msk [vmem:[#allocation5 + $0x28] sm:$0xff] %vm235, %v3737
    %3756 = vst.msk [vmem:[#allocation5 + $0x30] sm:$0xff] %vm235, %v3742
    %3757 = vst.msk [vmem:[#allocation5 + $0x38] sm:$0xff] %vm235, %v3747
    %s3758 = scalar_lea.vmem [#allocation11], 96
    %v3759 = vld [vmem:[%s3758] sm:$0xff]
    %v3760 = vld [vmem:[%s3758 + $0x8] sm:$0xff]
    %v3761 = vld [vmem:[%s3758 + $0x10] sm:$0xff]
    %v3762 = vld [vmem:[%s3758 + $0x18] sm:$0xff]
    %s3763 = scalar_lea.vmem %s6, 3
    %v3764 = vld [vmem:[%s3763] sm:$0x1]
    %v3766 = vlaneseq
    %v3767 = vshrl.u32 %v3766, 7
    %v3768 = vsub.s32 0, %v3767
    %v3769 = vrot.slane %v3764, %v3768
    %3771 = vmatprep.subr.mxu0 0.0
    %3772 = vmatpush1.msra.mxu0 0.0
    %3773 = vmatprep.subr.mxu0 0.0
    %3774 = vmatpush1.msra.mxu0 0.0
    %3775 = vmatprep.subr.mxu0 0.0
    %3776 = vmatpush1.msra.mxu0 0.0
    %3777 = vmatprep.subr.mxu0 0.0
    %3778 = vmatpush1.msra.mxu0 0.0
    %3779 = vmatprep.subr.mxu0 0.0
    %3780 = vmatpush1.msra.mxu0 0.0
    %3781 = vmatprep.subr.mxu0 0.0
    %3782 = vmatpush1.msra.mxu0 0.0
    %3783 = vmatprep.subr.mxu0 0.0
    %3784 = vmatpush1.msra.mxu0 0.0
    %3785 = vmatprep.subr.mxu0 0.0
    %3786 = vmatpush1.msra.mxu0 0.0
    %3787 = vmatprep.subr.mxu0 0.0
    %3788 = vmatpush1.msra.mxu0 0.0
    %3789 = vmatprep.subr.mxu0 0.0
    %3790 = vmatpush1.msra.mxu0 0.0
    %3791 = vmatprep.subr.mxu0 0.0
    %3792 = vmatpush1.msra.mxu0 0.0
    %3793 = vmatprep.subr.mxu0 0.0
    %3794 = vmatpush1.msra.mxu0 0.0
    %3795 = vmatprep.subr.mxu0 0.0
    %3796 = vmatpush1.msra.mxu0 %v3762
    %3797 = vmatprep.subr.mxu0 0.0
    %3798 = vmatpush1.msra.mxu0 %v3761
    %3799 = vmatprep.subr.mxu0 0.0
    %3800 = vmatpush1.msra.mxu0 %v3760
    %3801 = vmatprep.subr.mxu0 0.0
    %3802 = vmatpush1.msra.mxu0 %v3759
    %3803 = vmatprep.subr.mxu0 0.0
    %3804 = vmatpush2.msra.mxu0 0.0
    %3805 = vmatprep.subr.mxu0 0.0
    %3806 = vmatpush2.msra.mxu0 0.0
    %3807 = vmatprep.subr.mxu0 0.0
    %3808 = vmatpush2.msra.mxu0 0.0
    %3809 = vmatprep.subr.mxu0 0.0
    %3810 = vmatpush2.msra.mxu0 0.0
    %3811 = vmatprep.subr.mxu0 0.0
    %3812 = vmatpush2.msra.mxu0 0.0
    %3813 = vmatprep.subr.mxu0 0.0
    %3814 = vmatpush2.msra.mxu0 0.0
    %3815 = vmatprep.subr.mxu0 0.0
    %3816 = vmatpush2.msra.mxu0 0.0
    %3817 = vmatprep.subr.mxu0 0.0
    %3818 = vmatpush2.msra.mxu0 0.0
    %3819 = vmatprep.subr.mxu0 0.0
    %3820 = vmatpush2.msra.mxu0 0.0
    %3821 = vmatprep.subr.mxu0 0.0
    %3822 = vmatpush2.msra.mxu0 0.0
    %3823 = vmatprep.subr.mxu0 0.0
    %3824 = vmatpush2.msra.mxu0 0.0
    %3825 = vmatprep.subr.mxu0 0.0
    %3826 = vmatpush2.msra.mxu0 0.0
    %3827 = vmatprep.subr.mxu0 0.0
    %3828 = vmatpush2.msra.mxu0 0.0
    %3829 = vmatprep.subr.mxu0 0.0
    %3830 = vmatpush2.msra.mxu0 0.0
    %3831 = vmatprep.subr.mxu0 0.0
    %3832 = vmatpush2.msra.mxu0 0.0
    %3833 = vmatprep.subr.mxu0 0.0
    %3834 = vmatpush2.msra.mxu0 0.0
    %3835 = vmatprep.mubr.f32.mxu0 0.0
    %3836 = vmatmul.mubr.f32.gmra.mxu0 %v3370
    %v3837 = vpop.f32.mrf.mxu0
    %v3838 = vadd.f32 %v3769, %v3837
    %v3839 = vpop.f32.mrf.mxu0
    %3840 = vmatprep.mubr.f32.mxu0 0.0
    %3841 = vmatmul.mubr.f32.gmra.mxu0 %v3373
    %v3842 = vpop.f32.mrf.mxu0
    %v3843 = vadd.f32 %v3769, %v3842
    %v3844 = vpop.f32.mrf.mxu0
    %3845 = vmatprep.mubr.f32.mxu0 0.0
    %3846 = vmatmul.mubr.f32.gmra.mxu0 %v3376
    %v3847 = vpop.f32.mrf.mxu0
    %v3848 = vadd.f32 %v3769, %v3847
    %v3849 = vpop.f32.mrf.mxu0
    %3850 = vmatprep.mubr.f32.mxu0 0.0
    %3851 = vmatmul.mubr.f32.gmra.mxu0 %v3379
    %v3852 = vpop.f32.mrf.mxu0
    %v3853 = vadd.f32 %v3769, %v3852
    %v3854 = vpop.f32.mrf.mxu0
    %3855 = vmatprep.mubr.f32.mxu0 0.0
    %3856 = vmatmul.mubr.f32.gmra.mxu0 %v3382
    %v3857 = vpop.f32.mrf.mxu0
    %v3858 = vadd.f32 %v3769, %v3857
    %v3859 = vpop.f32.mrf.mxu0
    %3860 = vmatprep.mubr.f32.mxu0 0.0
    %3861 = vmatmul.mubr.f32.gmra.mxu0 %v3385
    %v3862 = vpop.f32.mrf.mxu0
    %v3863 = vadd.f32 %v3769, %v3862
    %v3864 = vpop.f32.mrf.mxu0
    %3865 = vmatprep.mubr.f32.mxu0 0.0
    %3866 = vmatmul.mubr.f32.gmra.mxu0 %v3388
    %v3867 = vpop.f32.mrf.mxu0
    %v3868 = vadd.f32 %v3769, %v3867
    %v3869 = vpop.f32.mrf.mxu0
    %3870 = vmatprep.mubr.f32.mxu0 0.0
    %3871 = vmatmul.mubr.f32.gmra.mxu0 %v3391
    %v3872 = vpop.f32.mrf.mxu0
    %v3873 = vadd.f32 %v3769, %v3872
    %v3874 = vpop.f32.mrf.mxu0
    %3875 = vdwg.mxu0
    %3876 = vst.msk [vmem:[#allocation6] sm:$0xff] %vm235, %v3838
    %3877 = vst.msk [vmem:[#allocation6 + $0x8] sm:$0xff] %vm235, %v3843
    %3878 = vst.msk [vmem:[#allocation6 + $0x10] sm:$0xff] %vm235, %v3848
    %3879 = vst.msk [vmem:[#allocation6 + $0x18] sm:$0xff] %vm235, %v3853
    %3880 = vst.msk [vmem:[#allocation6 + $0x20] sm:$0xff] %vm235, %v3858
    %3881 = vst.msk [vmem:[#allocation6 + $0x28] sm:$0xff] %vm235, %v3863
    %3882 = vst.msk [vmem:[#allocation6 + $0x30] sm:$0xff] %vm235, %v3868
    %3883 = vst.msk [vmem:[#allocation6 + $0x38] sm:$0xff] %vm235, %v3873
    %3884 = vst.msk [vmem:[#allocation7] sm:$0xff] %vm235, 0.0
    %3885 = vst.msk [vmem:[#allocation8] sm:$0xff] %vm235, 0.0
    %v3886 = vld [vmem:[#allocation7] sm:$0xff]
    %v3887 = vld [vmem:[#allocation8] sm:$0xff]
    %v3888 = vld [vmem:[#allocation3] sm:$0xff]
    %v3889 = vld [vmem:[#allocation13] sm:$0xff]
    %v3890 = vld [vmem:[#allocation13 + $0x8] sm:$0xff]
    %v3891 = vld [vmem:[#allocation13 + $0x10] sm:$0xff]
    %v3892 = vld [vmem:[#allocation13 + $0x18] sm:$0xff]
    %v3894 = vsel %vm235, %v3886, 0
    %3896 = vmatprep.subr.mxu0 0.0
    %3897 = vmatpush1.msra.mxu0 0.0
    %3898 = vmatprep.subr.mxu0 0.0
    %3899 = vmatpush1.msra.mxu0 0.0
    %3900 = vmatprep.subr.mxu0 0.0
    %3901 = vmatpush1.msra.mxu0 0.0
    %3902 = vmatprep.subr.mxu0 0.0
    %3903 = vmatpush1.msra.mxu0 0.0
    %3904 = vmatprep.subr.mxu0 0.0
    %3905 = vmatpush1.msra.mxu0 0.0
    %3906 = vmatprep.subr.mxu0 0.0
    %3907 = vmatpush1.msra.mxu0 0.0
    %3908 = vmatprep.subr.mxu0 0.0
    %3909 = vmatpush1.msra.mxu0 0.0
    %3910 = vmatprep.subr.mxu0 0.0
    %3911 = vmatpush1.msra.mxu0 0.0
    %3912 = vmatprep.subr.mxu0 0.0
    %3913 = vmatpush1.msra.mxu0 0.0
    %3914 = vmatprep.subr.mxu0 0.0
    %3915 = vmatpush1.msra.mxu0 0.0
    %3916 = vmatprep.subr.mxu0 0.0
    %3917 = vmatpush1.msra.mxu0 0.0
    %3918 = vmatprep.subr.mxu0 0.0
    %3919 = vmatpush1.msra.mxu0 0.0
    %3920 = vmatprep.subr.mxu0 0.0
    %3921 = vmatpush1.msra.mxu0 %v3892
    %3922 = vmatprep.subr.mxu0 0.0
    %3923 = vmatpush1.msra.mxu0 %v3891
    %3924 = vmatprep.subr.mxu0 0.0
    %3925 = vmatpush1.msra.mxu0 %v3890
    %3926 = vmatprep.subr.mxu0 0.0
    %3927 = vmatpush1.msra.mxu0 %v3889
    %3928 = vmatprep.subr.mxu0 0.0
    %3929 = vmatpush2.msra.mxu0 0.0
    %3930 = vmatprep.subr.mxu0 0.0
    %3931 = vmatpush2.msra.mxu0 0.0
    %3932 = vmatprep.subr.mxu0 0.0
    %3933 = vmatpush2.msra.mxu0 0.0
    %3934 = vmatprep.subr.mxu0 0.0
    %3935 = vmatpush2.msra.mxu0 0.0
    %3936 = vmatprep.subr.mxu0 0.0
    %3937 = vmatpush2.msra.mxu0 0.0
    %3938 = vmatprep.subr.mxu0 0.0
    %3939 = vmatpush2.msra.mxu0 0.0
    %3940 = vmatprep.subr.mxu0 0.0
    %3941 = vmatpush2.msra.mxu0 0.0
    %3942 = vmatprep.subr.mxu0 0.0
    %3943 = vmatpush2.msra.mxu0 0.0
    %3944 = vmatprep.subr.mxu0 0.0
    %3945 = vmatpush2.msra.mxu0 0.0
    %3946 = vmatprep.subr.mxu0 0.0
    %3947 = vmatpush2.msra.mxu0 0.0
    %3948 = vmatprep.subr.mxu0 0.0
    %3949 = vmatpush2.msra.mxu0 0.0
    %3950 = vmatprep.subr.mxu0 0.0
    %3951 = vmatpush2.msra.mxu0 0.0
    %3952 = vmatprep.subr.mxu0 0.0
    %3953 = vmatpush2.msra.mxu0 0.0
    %3954 = vmatprep.subr.mxu0 0.0
    %3955 = vmatpush2.msra.mxu0 0.0
    %3956 = vmatprep.subr.mxu0 0.0
    %3957 = vmatpush2.msra.mxu0 0.0
    %3958 = vmatprep.subr.mxu0 0.0
    %3959 = vmatpush2.msra.mxu0 0.0
    %3960 = vmatprep.mubr.f32.mxu0 0.0
    %3961 = vmatmul.mubr.f32.gmra.mxu0 %v3894
    %v3962 = vpop.f32.mrf.mxu0
    %v3963 = vadd.f32 0.0, %v3962
    %v3964 = vpop.f32.mrf.mxu0
    %3965 = vdwg.mxu0
    %v3966 = vadd.f32 %v3888, %v3963
    %v3967 = vld [vmem:[#allocation4] sm:$0xff]
    %s3968 = scalar_lea.vmem [#allocation13], 32
    %v3969 = vld [vmem:[%s3968] sm:$0xff]
    %v3970 = vld [vmem:[%s3968 + $0x8] sm:$0xff]
    %v3971 = vld [vmem:[%s3968 + $0x10] sm:$0xff]
    %v3972 = vld [vmem:[%s3968 + $0x18] sm:$0xff]
    %3973 = vmatprep.subr.mxu0 0.0
    %3974 = vmatpush1.msra.mxu0 0.0
    %3975 = vmatprep.subr.mxu0 0.0
    %3976 = vmatpush1.msra.mxu0 0.0
    %3977 = vmatprep.subr.mxu0 0.0
    %3978 = vmatpush1.msra.mxu0 0.0
    %3979 = vmatprep.subr.mxu0 0.0
    %3980 = vmatpush1.msra.mxu0 0.0
    %3981 = vmatprep.subr.mxu0 0.0
    %3982 = vmatpush1.msra.mxu0 0.0
    %3983 = vmatprep.subr.mxu0 0.0
    %3984 = vmatpush1.msra.mxu0 0.0
    %3985 = vmatprep.subr.mxu0 0.0
    %3986 = vmatpush1.msra.mxu0 0.0
    %3987 = vmatprep.subr.mxu0 0.0
    %3988 = vmatpush1.msra.mxu0 0.0
    %3989 = vmatprep.subr.mxu0 0.0
    %3990 = vmatpush1.msra.mxu0 0.0
    %3991 = vmatprep.subr.mxu0 0.0
    %3992 = vmatpush1.msra.mxu0 0.0
    %3993 = vmatprep.subr.mxu0 0.0
    %3994 = vmatpush1.msra.mxu0 0.0
    %3995 = vmatprep.subr.mxu0 0.0
    %3996 = vmatpush1.msra.mxu0 0.0
    %3997 = vmatprep.subr.mxu0 0.0
    %3998 = vmatpush1.msra.mxu0 %v3972
    %3999 = vmatprep.subr.mxu0 0.0
    %4000 = vmatpush1.msra.mxu0 %v3971
    %4001 = vmatprep.subr.mxu0 0.0
    %4002 = vmatpush1.msra.mxu0 %v3970
    %4003 = vmatprep.subr.mxu0 0.0
    %4004 = vmatpush1.msra.mxu0 %v3969
    %4005 = vmatprep.subr.mxu0 0.0
    %4006 = vmatpush2.msra.mxu0 0.0
    %4007 = vmatprep.subr.mxu0 0.0
    %4008 = vmatpush2.msra.mxu0 0.0
    %4009 = vmatprep.subr.mxu0 0.0
    %4010 = vmatpush2.msra.mxu0 0.0
    %4011 = vmatprep.subr.mxu0 0.0
    %4012 = vmatpush2.msra.mxu0 0.0
    %4013 = vmatprep.subr.mxu0 0.0
    %4014 = vmatpush2.msra.mxu0 0.0
    %4015 = vmatprep.subr.mxu0 0.0
    %4016 = vmatpush2.msra.mxu0 0.0
    %4017 = vmatprep.subr.mxu0 0.0
    %4018 = vmatpush2.msra.mxu0 0.0
    %4019 = vmatprep.subr.mxu0 0.0
    %4020 = vmatpush2.msra.mxu0 0.0
    %4021 = vmatprep.subr.mxu0 0.0
    %4022 = vmatpush2.msra.mxu0 0.0
    %4023 = vmatprep.subr.mxu0 0.0
    %4024 = vmatpush2.msra.mxu0 0.0
    %4025 = vmatprep.subr.mxu0 0.0
    %4026 = vmatpush2.msra.mxu0 0.0
    %4027 = vmatprep.subr.mxu0 0.0
    %4028 = vmatpush2.msra.mxu0 0.0
    %4029 = vmatprep.subr.mxu0 0.0
    %4030 = vmatpush2.msra.mxu0 0.0
    %4031 = vmatprep.subr.mxu0 0.0
    %4032 = vmatpush2.msra.mxu0 0.0
    %4033 = vmatprep.subr.mxu0 0.0
    %4034 = vmatpush2.msra.mxu0 0.0
    %4035 = vmatprep.subr.mxu0 0.0
    %4036 = vmatpush2.msra.mxu0 0.0
    %4037 = vmatprep.mubr.f32.mxu0 0.0
    %4038 = vmatmul.mubr.f32.gmra.mxu0 %v3894
    %v4039 = vpop.f32.mrf.mxu0
    %v4040 = vadd.f32 0.0, %v4039
    %v4041 = vpop.f32.mrf.mxu0
    %4042 = vdwg.mxu0
    %v4043 = vadd.f32 %v3967, %v4040
    %v4044 = vld [vmem:[#allocation5] sm:$0xff]
    %s4045 = scalar_lea.vmem [#allocation13], 64
    %v4046 = vld [vmem:[%s4045] sm:$0xff]
    %v4047 = vld [vmem:[%s4045 + $0x8] sm:$0xff]
    %v4048 = vld [vmem:[%s4045 + $0x10] sm:$0xff]
    %v4049 = vld [vmem:[%s4045 + $0x18] sm:$0xff]
    %4050 = vmatprep.subr.mxu0 0.0
    %4051 = vmatpush1.msra.mxu0 0.0
    %4052 = vmatprep.subr.mxu0 0.0
    %4053 = vmatpush1.msra.mxu0 0.0
    %4054 = vmatprep.subr.mxu0 0.0
    %4055 = vmatpush1.msra.mxu0 0.0
    %4056 = vmatprep.subr.mxu0 0.0
    %4057 = vmatpush1.msra.mxu0 0.0
    %4058 = vmatprep.subr.mxu0 0.0
    %4059 = vmatpush1.msra.mxu0 0.0
    %4060 = vmatprep.subr.mxu0 0.0
    %4061 = vmatpush1.msra.mxu0 0.0
    %4062 = vmatprep.subr.mxu0 0.0
    %4063 = vmatpush1.msra.mxu0 0.0
    %4064 = vmatprep.subr.mxu0 0.0
    %4065 = vmatpush1.msra.mxu0 0.0
    %4066 = vmatprep.subr.mxu0 0.0
    %4067 = vmatpush1.msra.mxu0 0.0
    %4068 = vmatprep.subr.mxu0 0.0
    %4069 = vmatpush1.msra.mxu0 0.0
    %4070 = vmatprep.subr.mxu0 0.0
    %4071 = vmatpush1.msra.mxu0 0.0
    %4072 = vmatprep.subr.mxu0 0.0
    %4073 = vmatpush1.msra.mxu0 0.0
    %4074 = vmatprep.subr.mxu0 0.0
    %4075 = vmatpush1.msra.mxu0 %v4049
    %4076 = vmatprep.subr.mxu0 0.0
    %4077 = vmatpush1.msra.mxu0 %v4048
    %4078 = vmatprep.subr.mxu0 0.0
    %4079 = vmatpush1.msra.mxu0 %v4047
    %4080 = vmatprep.subr.mxu0 0.0
    %4081 = vmatpush1.msra.mxu0 %v4046
    %4082 = vmatprep.subr.mxu0 0.0
    %4083 = vmatpush2.msra.mxu0 0.0
    %4084 = vmatprep.subr.mxu0 0.0
    %4085 = vmatpush2.msra.mxu0 0.0
    %4086 = vmatprep.subr.mxu0 0.0
    %4087 = vmatpush2.msra.mxu0 0.0
    %4088 = vmatprep.subr.mxu0 0.0
    %4089 = vmatpush2.msra.mxu0 0.0
    %4090 = vmatprep.subr.mxu0 0.0
    %4091 = vmatpush2.msra.mxu0 0.0
    %4092 = vmatprep.subr.mxu0 0.0
    %4093 = vmatpush2.msra.mxu0 0.0
    %4094 = vmatprep.subr.mxu0 0.0
    %4095 = vmatpush2.msra.mxu0 0.0
    %4096 = vmatprep.subr.mxu0 0.0
    %4097 = vmatpush2.msra.mxu0 0.0
    %4098 = vmatprep.subr.mxu0 0.0
    %4099 = vmatpush2.msra.mxu0 0.0
    %4100 = vmatprep.subr.mxu0 0.0
    %4101 = vmatpush2.msra.mxu0 0.0
    %4102 = vmatprep.subr.mxu0 0.0
    %4103 = vmatpush2.msra.mxu0 0.0
    %4104 = vmatprep.subr.mxu0 0.0
    %4105 = vmatpush2.msra.mxu0 0.0
    %4106 = vmatprep.subr.mxu0 0.0
    %4107 = vmatpush2.msra.mxu0 0.0
    %4108 = vmatprep.subr.mxu0 0.0
    %4109 = vmatpush2.msra.mxu0 0.0
    %4110 = vmatprep.subr.mxu0 0.0
    %4111 = vmatpush2.msra.mxu0 0.0
    %4112 = vmatprep.subr.mxu0 0.0
    %4113 = vmatpush2.msra.mxu0 0.0
    %4114 = vmatprep.mubr.f32.mxu0 0.0
    %4115 = vmatmul.mubr.f32.gmra.mxu0 %v3894
    %v4116 = vpop.f32.mrf.mxu0
    %v4117 = vadd.f32 0.0, %v4116
    %v4118 = vpop.f32.mrf.mxu0
    %4119 = vdwg.mxu0
    %v4120 = vadd.f32 %v4044, %v4117
    %v4121 = vld [vmem:[#allocation6] sm:$0xff]
    %s4122 = scalar_lea.vmem [#allocation13], 96
    %v4123 = vld [vmem:[%s4122] sm:$0xff]
    %v4124 = vld [vmem:[%s4122 + $0x8] sm:$0xff]
    %v4125 = vld [vmem:[%s4122 + $0x10] sm:$0xff]
    %v4126 = vld [vmem:[%s4122 + $0x18] sm:$0xff]
    %4127 = vmatprep.subr.mxu0 0.0
    %4128 = vmatpush1.msra.mxu0 0.0
    %4129 = vmatprep.subr.mxu0 0.0
    %4130 = vmatpush1.msra.mxu0 0.0
    %4131 = vmatprep.subr.mxu0 0.0
    %4132 = vmatpush1.msra.mxu0 0.0
    %4133 = vmatprep.subr.mxu0 0.0
    %4134 = vmatpush1.msra.mxu0 0.0
    %4135 = vmatprep.subr.mxu0 0.0
    %4136 = vmatpush1.msra.mxu0 0.0
    %4137 = vmatprep.subr.mxu0 0.0
    %4138 = vmatpush1.msra.mxu0 0.0
    %4139 = vmatprep.subr.mxu0 0.0
    %4140 = vmatpush1.msra.mxu0 0.0
    %4141 = vmatprep.subr.mxu0 0.0
    %4142 = vmatpush1.msra.mxu0 0.0
    %4143 = vmatprep.subr.mxu0 0.0
    %4144 = vmatpush1.msra.mxu0 0.0
    %4145 = vmatprep.subr.mxu0 0.0
    %4146 = vmatpush1.msra.mxu0 0.0
    %4147 = vmatprep.subr.mxu0 0.0
    %4148 = vmatpush1.msra.mxu0 0.0
    %4149 = vmatprep.subr.mxu0 0.0
    %4150 = vmatpush1.msra.mxu0 0.0
    %4151 = vmatprep.subr.mxu0 0.0
    %4152 = vmatpush1.msra.mxu0 %v4126
    %4153 = vmatprep.subr.mxu0 0.0
    %4154 = vmatpush1.msra.mxu0 %v4125
    %4155 = vmatprep.subr.mxu0 0.0
    %4156 = vmatpush1.msra.mxu0 %v4124
    %4157 = vmatprep.subr.mxu0 0.0
    %4158 = vmatpush1.msra.mxu0 %v4123
    %4159 = vmatprep.subr.mxu0 0.0
    %4160 = vmatpush2.msra.mxu0 0.0
    %4161 = vmatprep.subr.mxu0 0.0
    %4162 = vmatpush2.msra.mxu0 0.0
    %4163 = vmatprep.subr.mxu0 0.0
    %4164 = vmatpush2.msra.mxu0 0.0
    %4165 = vmatprep.subr.mxu0 0.0
    %4166 = vmatpush2.msra.mxu0 0.0
    %4167 = vmatprep.subr.mxu0 0.0
    %4168 = vmatpush2.msra.mxu0 0.0
    %4169 = vmatprep.subr.mxu0 0.0
    %4170 = vmatpush2.msra.mxu0 0.0
    %4171 = vmatprep.subr.mxu0 0.0
    %4172 = vmatpush2.msra.mxu0 0.0
    %4173 = vmatprep.subr.mxu0 0.0
    %4174 = vmatpush2.msra.mxu0 0.0
    %4175 = vmatprep.subr.mxu0 0.0
    %4176 = vmatpush2.msra.mxu0 0.0
    %4177 = vmatprep.subr.mxu0 0.0
    %4178 = vmatpush2.msra.mxu0 0.0
    %4179 = vmatprep.subr.mxu0 0.0
    %4180 = vmatpush2.msra.mxu0 0.0
    %4181 = vmatprep.subr.mxu0 0.0
    %4182 = vmatpush2.msra.mxu0 0.0
    %4183 = vmatprep.subr.mxu0 0.0
    %4184 = vmatpush2.msra.mxu0 0.0
    %4185 = vmatprep.subr.mxu0 0.0
    %4186 = vmatpush2.msra.mxu0 0.0
    %4187 = vmatprep.subr.mxu0 0.0
    %4188 = vmatpush2.msra.mxu0 0.0
    %4189 = vmatprep.subr.mxu0 0.0
    %4190 = vmatpush2.msra.mxu0 0.0
    %4191 = vmatprep.mubr.f32.mxu0 0.0
    %4192 = vmatmul.mubr.f32.gmra.mxu0 %v3894
    %v4193 = vpop.f32.mrf.mxu0
    %v4194 = vadd.f32 0.0, %v4193
    %v4195 = vpop.f32.mrf.mxu0
    %4196 = vdwg.mxu0
    %v4197 = vadd.f32 %v4121, %v4194
    %v4198 = vxor.u32 %v3966, 2147483648
    %v4199 = vmul.f32 %v4198, 1.442695
    %v4200 = vpow.pop %v4199
    %v4201 = vadd.f32 %v4200, 1.0
    %v4202 = vrcp.pop %v4201
    %v4203 = vmul.f32 1.0, %v4202
    %v4204 = vxor.u32 %v4043, 2147483648
    %v4205 = vmul.f32 %v4204, 1.442695
    %v4206 = vpow.pop %v4205
    %v4207 = vadd.f32 %v4206, 1.0
    %v4208 = vrcp.pop %v4207
    %v4209 = vmul.f32 1.0, %v4208
    %v4210 = vtanh.pop %v4120
    %v4211 = vxor.u32 %v4197, 2147483648
    %v4212 = vmul.f32 %v4211, 1.442695
    %v4213 = vpow.pop %v4212
    %v4214 = vadd.f32 %v4213, 1.0
    %v4215 = vrcp.pop %v4214
    %v4216 = vmul.f32 1.0, %v4215
    %v4217 = vmul.f32 %v4209, %v3887
    %v4218 = vmul.f32 %v4203, %v4210
    %v4219 = vadd.f32 %v4217, %v4218
    %v4220 = vtanh.pop %v4219
    %v4221 = vmul.f32 %v4216, %v4220
    %4222 = vst.msk [vmem:[#allocation7] sm:$0xff] %vm235, %v4221
    %4223 = vst.msk [vmem:[#allocation8] sm:$0xff] %vm235, %v4219
    %4224 = vst.msk [vmem:[#allocation2] sm:$0xff] %vm235, %v4221
    %v4225 = vld [vmem:[#allocation7] sm:$0xff]
    %v4226 = vld [vmem:[#allocation8] sm:$0xff]
    %v4227 = vld [vmem:[%s965] sm:$0xff]
    %v4228 = vld [vmem:[#allocation13] sm:$0xff]
    %v4229 = vld [vmem:[#allocation13 + $0x8] sm:$0xff]
    %v4230 = vld [vmem:[#allocation13 + $0x10] sm:$0xff]
    %v4231 = vld [vmem:[#allocation13 + $0x18] sm:$0xff]
    %v4233 = vsel %vm235, %v4225, 0
    %4235 = vmatprep.subr.mxu0 0.0
    %4236 = vmatpush1.msra.mxu0 0.0
    %4237 = vmatprep.subr.mxu0 0.0
    %4238 = vmatpush1.msra.mxu0 0.0
    %4239 = vmatprep.subr.mxu0 0.0
    %4240 = vmatpush1.msra.mxu0 0.0
    %4241 = vmatprep.subr.mxu0 0.0
    %4242 = vmatpush1.msra.mxu0 0.0
    %4243 = vmatprep.subr.mxu0 0.0
    %4244 = vmatpush1.msra.mxu0 0.0
    %4245 = vmatprep.subr.mxu0 0.0
    %4246 = vmatpush1.msra.mxu0 0.0
    %4247 = vmatprep.subr.mxu0 0.0
    %4248 = vmatpush1.msra.mxu0 0.0
    %4249 = vmatprep.subr.mxu0 0.0
    %4250 = vmatpush1.msra.mxu0 0.0
    %4251 = vmatprep.subr.mxu0 0.0
    %4252 = vmatpush1.msra.mxu0 0.0
    %4253 = vmatprep.subr.mxu0 0.0
    %4254 = vmatpush1.msra.mxu0 0.0
    %4255 = vmatprep.subr.mxu0 0.0
    %4256 = vmatpush1.msra.mxu0 0.0
    %4257 = vmatprep.subr.mxu0 0.0
    %4258 = vmatpush1.msra.mxu0 0.0
    %4259 = vmatprep.subr.mxu0 0.0
    %4260 = vmatpush1.msra.mxu0 %v4231
    %4261 = vmatprep.subr.mxu0 0.0
    %4262 = vmatpush1.msra.mxu0 %v4230
    %4263 = vmatprep.subr.mxu0 0.0
    %4264 = vmatpush1.msra.mxu0 %v4229
    %4265 = vmatprep.subr.mxu0 0.0
    %4266 = vmatpush1.msra.mxu0 %v4228
    %4267 = vmatprep.subr.mxu0 0.0
    %4268 = vmatpush2.msra.mxu0 0.0
    %4269 = vmatprep.subr.mxu0 0.0
    %4270 = vmatpush2.msra.mxu0 0.0
    %4271 = vmatprep.subr.mxu0 0.0
    %4272 = vmatpush2.msra.mxu0 0.0
    %4273 = vmatprep.subr.mxu0 0.0
    %4274 = vmatpush2.msra.mxu0 0.0
    %4275 = vmatprep.subr.mxu0 0.0
    %4276 = vmatpush2.msra.mxu0 0.0
    %4277 = vmatprep.subr.mxu0 0.0
    %4278 = vmatpush2.msra.mxu0 0.0
    %4279 = vmatprep.subr.mxu0 0.0
    %4280 = vmatpush2.msra.mxu0 0.0
    %4281 = vmatprep.subr.mxu0 0.0
    %4282 = vmatpush2.msra.mxu0 0.0
    %4283 = vmatprep.subr.mxu0 0.0
    %4284 = vmatpush2.msra.mxu0 0.0
    %4285 = vmatprep.subr.mxu0 0.0
    %4286 = vmatpush2.msra.mxu0 0.0
    %4287 = vmatprep.subr.mxu0 0.0
    %4288 = vmatpush2.msra.mxu0 0.0
    %4289 = vmatprep.subr.mxu0 0.0
    %4290 = vmatpush2.msra.mxu0 0.0
    %4291 = vmatprep.subr.mxu0 0.0
    %4292 = vmatpush2.msra.mxu0 0.0
    %4293 = vmatprep.subr.mxu0 0.0
    %4294 = vmatpush2.msra.mxu0 0.0
    %4295 = vmatprep.subr.mxu0 0.0
    %4296 = vmatpush2.msra.mxu0 0.0
    %4297 = vmatprep.subr.mxu0 0.0
    %4298 = vmatpush2.msra.mxu0 0.0
    %4299 = vmatprep.mubr.f32.mxu0 0.0
    %4300 = vmatmul.mubr.f32.gmra.mxu0 %v4233
    %v4301 = vpop.f32.mrf.mxu0
    %v4302 = vadd.f32 0.0, %v4301
    %v4303 = vpop.f32.mrf.mxu0
    %4304 = vdwg.mxu0
    %v4305 = vadd.f32 %v4227, %v4302
    %v4306 = vld [vmem:[%s1045] sm:$0xff]
    %v4307 = vld [vmem:[%s3968] sm:$0xff]
    %v4308 = vld [vmem:[%s3968 + $0x8] sm:$0xff]
    %v4309 = vld [vmem:[%s3968 + $0x10] sm:$0xff]
    %v4310 = vld [vmem:[%s3968 + $0x18] sm:$0xff]
    %4311 = vmatprep.subr.mxu0 0.0
    %4312 = vmatpush1.msra.mxu0 0.0
    %4313 = vmatprep.subr.mxu0 0.0
    %4314 = vmatpush1.msra.mxu0 0.0
    %4315 = vmatprep.subr.mxu0 0.0
    %4316 = vmatpush1.msra.mxu0 0.0
    %4317 = vmatprep.subr.mxu0 0.0
    %4318 = vmatpush1.msra.mxu0 0.0
    %4319 = vmatprep.subr.mxu0 0.0
    %4320 = vmatpush1.msra.mxu0 0.0
    %4321 = vmatprep.subr.mxu0 0.0
    %4322 = vmatpush1.msra.mxu0 0.0
    %4323 = vmatprep.subr.mxu0 0.0
    %4324 = vmatpush1.msra.mxu0 0.0
    %4325 = vmatprep.subr.mxu0 0.0
    %4326 = vmatpush1.msra.mxu0 0.0
    %4327 = vmatprep.subr.mxu0 0.0
    %4328 = vmatpush1.msra.mxu0 0.0
    %4329 = vmatprep.subr.mxu0 0.0
    %4330 = vmatpush1.msra.mxu0 0.0
    %4331 = vmatprep.subr.mxu0 0.0
    %4332 = vmatpush1.msra.mxu0 0.0
    %4333 = vmatprep.subr.mxu0 0.0
    %4334 = vmatpush1.msra.mxu0 0.0
    %4335 = vmatprep.subr.mxu0 0.0
    %4336 = vmatpush1.msra.mxu0 %v4310
    %4337 = vmatprep.subr.mxu0 0.0
    %4338 = vmatpush1.msra.mxu0 %v4309
    %4339 = vmatprep.subr.mxu0 0.0
    %4340 = vmatpush1.msra.mxu0 %v4308
    %4341 = vmatprep.subr.mxu0 0.0
    %4342 = vmatpush1.msra.mxu0 %v4307
    %4343 = vmatprep.subr.mxu0 0.0
    %4344 = vmatpush2.msra.mxu0 0.0
    %4345 = vmatprep.subr.mxu0 0.0
    %4346 = vmatpush2.msra.mxu0 0.0
    %4347 = vmatprep.subr.mxu0 0.0
    %4348 = vmatpush2.msra.mxu0 0.0
    %4349 = vmatprep.subr.mxu0 0.0
    %4350 = vmatpush2.msra.mxu0 0.0
    %4351 = vmatprep.subr.mxu0 0.0
    %4352 = vmatpush2.msra.mxu0 0.0
    %4353 = vmatprep.subr.mxu0 0.0
    %4354 = vmatpush2.msra.mxu0 0.0
    %4355 = vmatprep.subr.mxu0 0.0
    %4356 = vmatpush2.msra.mxu0 0.0
    %4357 = vmatprep.subr.mxu0 0.0
    %4358 = vmatpush2.msra.mxu0 0.0
    %4359 = vmatprep.subr.mxu0 0.0
    %4360 = vmatpush2.msra.mxu0 0.0
    %4361 = vmatprep.subr.mxu0 0.0
    %4362 = vmatpush2.msra.mxu0 0.0
    %4363 = vmatprep.subr.mxu0 0.0
    %4364 = vmatpush2.msra.mxu0 0.0
    %4365 = vmatprep.subr.mxu0 0.0
    %4366 = vmatpush2.msra.mxu0 0.0
    %4367 = vmatprep.subr.mxu0 0.0
    %4368 = vmatpush2.msra.mxu0 0.0
    %4369 = vmatprep.subr.mxu0 0.0
    %4370 = vmatpush2.msra.mxu0 0.0
    %4371 = vmatprep.subr.mxu0 0.0
    %4372 = vmatpush2.msra.mxu0 0.0
    %4373 = vmatprep.subr.mxu0 0.0
    %4374 = vmatpush2.msra.mxu0 0.0
    %4375 = vmatprep.mubr.f32.mxu0 0.0
    %4376 = vmatmul.mubr.f32.gmra.mxu0 %v4233
    %v4377 = vpop.f32.mrf.mxu0
    %v4378 = vadd.f32 0.0, %v4377
    %v4379 = vpop.f32.mrf.mxu0
    %4380 = vdwg.mxu0
    %v4381 = vadd.f32 %v4306, %v4378
    %v4382 = vld [vmem:[%s1122] sm:$0xff]
    %v4383 = vld [vmem:[%s4045] sm:$0xff]
    %v4384 = vld [vmem:[%s4045 + $0x8] sm:$0xff]
    %v4385 = vld [vmem:[%s4045 + $0x10] sm:$0xff]
    %v4386 = vld [vmem:[%s4045 + $0x18] sm:$0xff]
    %4387 = vmatprep.subr.mxu0 0.0
    %4388 = vmatpush1.msra.mxu0 0.0
    %4389 = vmatprep.subr.mxu0 0.0
    %4390 = vmatpush1.msra.mxu0 0.0
    %4391 = vmatprep.subr.mxu0 0.0
    %4392 = vmatpush1.msra.mxu0 0.0
    %4393 = vmatprep.subr.mxu0 0.0
    %4394 = vmatpush1.msra.mxu0 0.0
    %4395 = vmatprep.subr.mxu0 0.0
    %4396 = vmatpush1.msra.mxu0 0.0
    %4397 = vmatprep.subr.mxu0 0.0
    %4398 = vmatpush1.msra.mxu0 0.0
    %4399 = vmatprep.subr.mxu0 0.0
    %4400 = vmatpush1.msra.mxu0 0.0
    %4401 = vmatprep.subr.mxu0 0.0
    %4402 = vmatpush1.msra.mxu0 0.0
    %4403 = vmatprep.subr.mxu0 0.0
    %4404 = vmatpush1.msra.mxu0 0.0
    %4405 = vmatprep.subr.mxu0 0.0
    %4406 = vmatpush1.msra.mxu0 0.0
    %4407 = vmatprep.subr.mxu0 0.0
    %4408 = vmatpush1.msra.mxu0 0.0
    %4409 = vmatprep.subr.mxu0 0.0
    %4410 = vmatpush1.msra.mxu0 0.0
    %4411 = vmatprep.subr.mxu0 0.0
    %4412 = vmatpush1.msra.mxu0 %v4386
    %4413 = vmatprep.subr.mxu0 0.0
    %4414 = vmatpush1.msra.mxu0 %v4385
    %4415 = vmatprep.subr.mxu0 0.0
    %4416 = vmatpush1.msra.mxu0 %v4384
    %4417 = vmatprep.subr.mxu0 0.0
    %4418 = vmatpush1.msra.mxu0 %v4383
    %4419 = vmatprep.subr.mxu0 0.0
    %4420 = vmatpush2.msra.mxu0 0.0
    %4421 = vmatprep.subr.mxu0 0.0
    %4422 = vmatpush2.msra.mxu0 0.0
    %4423 = vmatprep.subr.mxu0 0.0
    %4424 = vmatpush2.msra.mxu0 0.0
    %4425 = vmatprep.subr.mxu0 0.0
    %4426 = vmatpush2.msra.mxu0 0.0
    %4427 = vmatprep.subr.mxu0 0.0
    %4428 = vmatpush2.msra.mxu0 0.0
    %4429 = vmatprep.subr.mxu0 0.0
    %4430 = vmatpush2.msra.mxu0 0.0
    %4431 = vmatprep.subr.mxu0 0.0
    %4432 = vmatpush2.msra.mxu0 0.0
    %4433 = vmatprep.subr.mxu0 0.0
    %4434 = vmatpush2.msra.mxu0 0.0
    %4435 = vmatprep.subr.mxu0 0.0
    %4436 = vmatpush2.msra.mxu0 0.0
    %4437 = vmatprep.subr.mxu0 0.0
    %4438 = vmatpush2.msra.mxu0 0.0
    %4439 = vmatprep.subr.mxu0 0.0
    %4440 = vmatpush2.msra.mxu0 0.0
    %4441 = vmatprep.subr.mxu0 0.0
    %4442 = vmatpush2.msra.mxu0 0.0
    %4443 = vmatprep.subr.mxu0 0.0
    %4444 = vmatpush2.msra.mxu0 0.0
    %4445 = vmatprep.subr.mxu0 0.0
    %4446 = vmatpush2.msra.mxu0 0.0
    %4447 = vmatprep.subr.mxu0 0.0
    %4448 = vmatpush2.msra.mxu0 0.0
    %4449 = vmatprep.subr.mxu0 0.0
    %4450 = vmatpush2.msra.mxu0 0.0
    %4451 = vmatprep.mubr.f32.mxu0 0.0
    %4452 = vmatmul.mubr.f32.gmra.mxu0 %v4233
    %v4453 = vpop.f32.mrf.mxu0
    %v4454 = vadd.f32 0.0, %v4453
    %v4455 = vpop.f32.mrf.mxu0
    %4456 = vdwg.mxu0
    %v4457 = vadd.f32 %v4382, %v4454
    %v4458 = vld [vmem:[%s1199] sm:$0xff]
    %v4459 = vld [vmem:[%s4122] sm:$0xff]
    %v4460 = vld [vmem:[%s4122 + $0x8] sm:$0xff]
    %v4461 = vld [vmem:[%s4122 + $0x10] sm:$0xff]
    %v4462 = vld [vmem:[%s4122 + $0x18] sm:$0xff]
    %4463 = vmatprep.subr.mxu0 0.0
    %4464 = vmatpush1.msra.mxu0 0.0
    %4465 = vmatprep.subr.mxu0 0.0
    %4466 = vmatpush1.msra.mxu0 0.0
    %4467 = vmatprep.subr.mxu0 0.0
    %4468 = vmatpush1.msra.mxu0 0.0
    %4469 = vmatprep.subr.mxu0 0.0
    %4470 = vmatpush1.msra.mxu0 0.0
    %4471 = vmatprep.subr.mxu0 0.0
    %4472 = vmatpush1.msra.mxu0 0.0
    %4473 = vmatprep.subr.mxu0 0.0
    %4474 = vmatpush1.msra.mxu0 0.0
    %4475 = vmatprep.subr.mxu0 0.0
    %4476 = vmatpush1.msra.mxu0 0.0
    %4477 = vmatprep.subr.mxu0 0.0
    %4478 = vmatpush1.msra.mxu0 0.0
    %4479 = vmatprep.subr.mxu0 0.0
    %4480 = vmatpush1.msra.mxu0 0.0
    %4481 = vmatprep.subr.mxu0 0.0
    %4482 = vmatpush1.msra.mxu0 0.0
    %4483 = vmatprep.subr.mxu0 0.0
    %4484 = vmatpush1.msra.mxu0 0.0
    %4485 = vmatprep.subr.mxu0 0.0
    %4486 = vmatpush1.msra.mxu0 0.0
    %4487 = vmatprep.subr.mxu0 0.0
    %4488 = vmatpush1.msra.mxu0 %v4462
    %4489 = vmatprep.subr.mxu0 0.0
    %4490 = vmatpush1.msra.mxu0 %v4461
    %4491 = vmatprep.subr.mxu0 0.0
    %4492 = vmatpush1.msra.mxu0 %v4460
    %4493 = vmatprep.subr.mxu0 0.0
    %4494 = vmatpush1.msra.mxu0 %v4459
    %4495 = vmatprep.subr.mxu0 0.0
    %4496 = vmatpush2.msra.mxu0 0.0
    %4497 = vmatprep.subr.mxu0 0.0
    %4498 = vmatpush2.msra.mxu0 0.0
    %4499 = vmatprep.subr.mxu0 0.0
    %4500 = vmatpush2.msra.mxu0 0.0
    %4501 = vmatprep.subr.mxu0 0.0
    %4502 = vmatpush2.msra.mxu0 0.0
    %4503 = vmatprep.subr.mxu0 0.0
    %4504 = vmatpush2.msra.mxu0 0.0
    %4505 = vmatprep.subr.mxu0 0.0
    %4506 = vmatpush2.msra.mxu0 0.0
    %4507 = vmatprep.subr.mxu0 0.0
    %4508 = vmatpush2.msra.mxu0 0.0
    %4509 = vmatprep.subr.mxu0 0.0
    %4510 = vmatpush2.msra.mxu0 0.0
    %4511 = vmatprep.subr.mxu0 0.0
    %4512 = vmatpush2.msra.mxu0 0.0
    %4513 = vmatprep.subr.mxu0 0.0
    %4514 = vmatpush2.msra.mxu0 0.0
    %4515 = vmatprep.subr.mxu0 0.0
    %4516 = vmatpush2.msra.mxu0 0.0
    %4517 = vmatprep.subr.mxu0 0.0
    %4518 = vmatpush2.msra.mxu0 0.0
    %4519 = vmatprep.subr.mxu0 0.0
    %4520 = vmatpush2.msra.mxu0 0.0
    %4521 = vmatprep.subr.mxu0 0.0
    %4522 = vmatpush2.msra.mxu0 0.0
    %4523 = vmatprep.subr.mxu0 0.0
    %4524 = vmatpush2.msra.mxu0 0.0
    %4525 = vmatprep.subr.mxu0 0.0
    %4526 = vmatpush2.msra.mxu0 0.0
    %4527 = vmatprep.mubr.f32.mxu0 0.0
    %4528 = vmatmul.mubr.f32.gmra.mxu0 %v4233
    %v4529 = vpop.f32.mrf.mxu0
    %v4530 = vadd.f32 0.0, %v4529
    %v4531 = vpop.f32.mrf.mxu0
    %4532 = vdwg.mxu0
    %v4533 = vadd.f32 %v4458, %v4530
    %v4534 = vxor.u32 %v4305, 2147483648
    %v4535 = vmul.f32 %v4534, 1.442695
    %v4536 = vpow.pop %v4535
    %v4537 = vadd.f32 %v4536, 1.0
    %v4538 = vrcp.pop %v4537
    %v4539 = vmul.f32 1.0, %v4538
    %v4540 = vxor.u32 %v4381, 2147483648
    %v4541 = vmul.f32 %v4540, 1.442695
    %v4542 = vpow.pop %v4541
    %v4543 = vadd.f32 %v4542, 1.0
    %v4544 = vrcp.pop %v4543
    %v4545 = vmul.f32 1.0, %v4544
    %v4546 = vtanh.pop %v4457
    %v4547 = vxor.u32 %v4533, 2147483648
    %v4548 = vmul.f32 %v4547, 1.442695
    %v4549 = vpow.pop %v4548
    %v4550 = vadd.f32 %v4549, 1.0
    %v4551 = vrcp.pop %v4550
    %v4552 = vmul.f32 1.0, %v4551
    %v4553 = vmul.f32 %v4545, %v4226
    %v4554 = vmul.f32 %v4539, %v4546
    %v4555 = vadd.f32 %v4553, %v4554
    %v4556 = vtanh.pop %v4555
    %v4557 = vmul.f32 %v4552, %v4556
    %4558 = vst.msk [vmem:[#allocation7] sm:$0xff] %vm235, %v4557
    %4559 = vst.msk [vmem:[#allocation8] sm:$0xff] %vm235, %v4555
    %4560 = vst.msk [vmem:[%s1302] sm:$0xff] %vm235, %v4557
    %v4561 = vld [vmem:[#allocation7] sm:$0xff]
    %v4562 = vld [vmem:[#allocation8] sm:$0xff]
    %v4563 = vld [vmem:[%s1306] sm:$0xff]
    %v4564 = vld [vmem:[#allocation13] sm:$0xff]
    %v4565 = vld [vmem:[#allocation13 + $0x8] sm:$0xff]
    %v4566 = vld [vmem:[#allocation13 + $0x10] sm:$0xff]
    %v4567 = vld [vmem:[#allocation13 + $0x18] sm:$0xff]
    %v4569 = vsel %vm235, %v4561, 0
    %4571 = vmatprep.subr.mxu0 0.0
    %4572 = vmatpush1.msra.mxu0 0.0
    %4573 = vmatprep.subr.mxu0 0.0
    %4574 = vmatpush1.msra.mxu0 0.0
    %4575 = vmatprep.subr.mxu0 0.0
    %4576 = vmatpush1.msra.mxu0 0.0
    %4577 = vmatprep.subr.mxu0 0.0
    %4578 = vmatpush1.msra.mxu0 0.0
    %4579 = vmatprep.subr.mxu0 0.0
    %4580 = vmatpush1.msra.mxu0 0.0
    %4581 = vmatprep.subr.mxu0 0.0
    %4582 = vmatpush1.msra.mxu0 0.0
    %4583 = vmatprep.subr.mxu0 0.0
    %4584 = vmatpush1.msra.mxu0 0.0
    %4585 = vmatprep.subr.mxu0 0.0
    %4586 = vmatpush1.msra.mxu0 0.0
    %4587 = vmatprep.subr.mxu0 0.0
    %4588 = vmatpush1.msra.mxu0 0.0
    %4589 = vmatprep.subr.mxu0 0.0
    %4590 = vmatpush1.msra.mxu0 0.0
    %4591 = vmatprep.subr.mxu0 0.0
    %4592 = vmatpush1.msra.mxu0 0.0
    %4593 = vmatprep.subr.mxu0 0.0
    %4594 = vmatpush1.msra.mxu0 0.0
    %4595 = vmatprep.subr.mxu0 0.0
    %4596 = vmatpush1.msra.mxu0 %v4567
    %4597 = vmatprep.subr.mxu0 0.0
    %4598 = vmatpush1.msra.mxu0 %v4566
    %4599 = vmatprep.subr.mxu0 0.0
    %4600 = vmatpush1.msra.mxu0 %v4565
    %4601 = vmatprep.subr.mxu0 0.0
    %4602 = vmatpush1.msra.mxu0 %v4564
    %4603 = vmatprep.subr.mxu0 0.0
    %4604 = vmatpush2.msra.mxu0 0.0
    %4605 = vmatprep.subr.mxu0 0.0
    %4606 = vmatpush2.msra.mxu0 0.0
    %4607 = vmatprep.subr.mxu0 0.0
    %4608 = vmatpush2.msra.mxu0 0.0
    %4609 = vmatprep.subr.mxu0 0.0
    %4610 = vmatpush2.msra.mxu0 0.0
    %4611 = vmatprep.subr.mxu0 0.0
    %4612 = vmatpush2.msra.mxu0 0.0
    %4613 = vmatprep.subr.mxu0 0.0
    %4614 = vmatpush2.msra.mxu0 0.0
    %4615 = vmatprep.subr.mxu0 0.0
    %4616 = vmatpush2.msra.mxu0 0.0
    %4617 = vmatprep.subr.mxu0 0.0
    %4618 = vmatpush2.msra.mxu0 0.0
    %4619 = vmatprep.subr.mxu0 0.0
    %4620 = vmatpush2.msra.mxu0 0.0
    %4621 = vmatprep.subr.mxu0 0.0
    %4622 = vmatpush2.msra.mxu0 0.0
    %4623 = vmatprep.subr.mxu0 0.0
    %4624 = vmatpush2.msra.mxu0 0.0
    %4625 = vmatprep.subr.mxu0 0.0
    %4626 = vmatpush2.msra.mxu0 0.0
    %4627 = vmatprep.subr.mxu0 0.0
    %4628 = vmatpush2.msra.mxu0 0.0
    %4629 = vmatprep.subr.mxu0 0.0
    %4630 = vmatpush2.msra.mxu0 0.0
    %4631 = vmatprep.subr.mxu0 0.0
    %4632 = vmatpush2.msra.mxu0 0.0
    %4633 = vmatprep.subr.mxu0 0.0
    %4634 = vmatpush2.msra.mxu0 0.0
    %4635 = vmatprep.mubr.f32.mxu0 0.0
    %4636 = vmatmul.mubr.f32.gmra.mxu0 %v4569
    %v4637 = vpop.f32.mrf.mxu0
    %v4638 = vadd.f32 0.0, %v4637
    %v4639 = vpop.f32.mrf.mxu0
    %4640 = vdwg.mxu0
    %v4641 = vadd.f32 %v4563, %v4638
    %v4642 = vld [vmem:[%s1386] sm:$0xff]
    %v4643 = vld [vmem:[%s3968] sm:$0xff]
    %v4644 = vld [vmem:[%s3968 + $0x8] sm:$0xff]
    %v4645 = vld [vmem:[%s3968 + $0x10] sm:$0xff]
    %v4646 = vld [vmem:[%s3968 + $0x18] sm:$0xff]
    %4647 = vmatprep.subr.mxu0 0.0
    %4648 = vmatpush1.msra.mxu0 0.0
    %4649 = vmatprep.subr.mxu0 0.0
    %4650 = vmatpush1.msra.mxu0 0.0
    %4651 = vmatprep.subr.mxu0 0.0
    %4652 = vmatpush1.msra.mxu0 0.0
    %4653 = vmatprep.subr.mxu0 0.0
    %4654 = vmatpush1.msra.mxu0 0.0
    %4655 = vmatprep.subr.mxu0 0.0
    %4656 = vmatpush1.msra.mxu0 0.0
    %4657 = vmatprep.subr.mxu0 0.0
    %4658 = vmatpush1.msra.mxu0 0.0
    %4659 = vmatprep.subr.mxu0 0.0
    %4660 = vmatpush1.msra.mxu0 0.0
    %4661 = vmatprep.subr.mxu0 0.0
    %4662 = vmatpush1.msra.mxu0 0.0
    %4663 = vmatprep.subr.mxu0 0.0
    %4664 = vmatpush1.msra.mxu0 0.0
    %4665 = vmatprep.subr.mxu0 0.0
    %4666 = vmatpush1.msra.mxu0 0.0
    %4667 = vmatprep.subr.mxu0 0.0
    %4668 = vmatpush1.msra.mxu0 0.0
    %4669 = vmatprep.subr.mxu0 0.0
    %4670 = vmatpush1.msra.mxu0 0.0
    %4671 = vmatprep.subr.mxu0 0.0
    %4672 = vmatpush1.msra.mxu0 %v4646
    %4673 = vmatprep.subr.mxu0 0.0
    %4674 = vmatpush1.msra.mxu0 %v4645
    %4675 = vmatprep.subr.mxu0 0.0
    %4676 = vmatpush1.msra.mxu0 %v4644
    %4677 = vmatprep.subr.mxu0 0.0
    %4678 = vmatpush1.msra.mxu0 %v4643
    %4679 = vmatprep.subr.mxu0 0.0
    %4680 = vmatpush2.msra.mxu0 0.0
    %4681 = vmatprep.subr.mxu0 0.0
    %4682 = vmatpush2.msra.mxu0 0.0
    %4683 = vmatprep.subr.mxu0 0.0
    %4684 = vmatpush2.msra.mxu0 0.0
    %4685 = vmatprep.subr.mxu0 0.0
    %4686 = vmatpush2.msra.mxu0 0.0
    %4687 = vmatprep.subr.mxu0 0.0
    %4688 = vmatpush2.msra.mxu0 0.0
    %4689 = vmatprep.subr.mxu0 0.0
    %4690 = vmatpush2.msra.mxu0 0.0
    %4691 = vmatprep.subr.mxu0 0.0
    %4692 = vmatpush2.msra.mxu0 0.0
    %4693 = vmatprep.subr.mxu0 0.0
    %4694 = vmatpush2.msra.mxu0 0.0
    %4695 = vmatprep.subr.mxu0 0.0
    %4696 = vmatpush2.msra.mxu0 0.0
    %4697 = vmatprep.subr.mxu0 0.0
    %4698 = vmatpush2.msra.mxu0 0.0
    %4699 = vmatprep.subr.mxu0 0.0
    %4700 = vmatpush2.msra.mxu0 0.0
    %4701 = vmatprep.subr.mxu0 0.0
    %4702 = vmatpush2.msra.mxu0 0.0
    %4703 = vmatprep.subr.mxu0 0.0
    %4704 = vmatpush2.msra.mxu0 0.0
    %4705 = vmatprep.subr.mxu0 0.0
    %4706 = vmatpush2.msra.mxu0 0.0
    %4707 = vmatprep.subr.mxu0 0.0
    %4708 = vmatpush2.msra.mxu0 0.0
    %4709 = vmatprep.subr.mxu0 0.0
    %4710 = vmatpush2.msra.mxu0 0.0
    %4711 = vmatprep.mubr.f32.mxu0 0.0
    %4712 = vmatmul.mubr.f32.gmra.mxu0 %v4569
    %v4713 = vpop.f32.mrf.mxu0
    %v4714 = vadd.f32 0.0, %v4713
    %v4715 = vpop.f32.mrf.mxu0
    %4716 = vdwg.mxu0
    %v4717 = vadd.f32 %v4642, %v4714
    %v4718 = vld [vmem:[%s1463] sm:$0xff]
    %v4719 = vld [vmem:[%s4045] sm:$0xff]
    %v4720 = vld [vmem:[%s4045 + $0x8] sm:$0xff]
    %v4721 = vld [vmem:[%s4045 + $0x10] sm:$0xff]
    %v4722 = vld [vmem:[%s4045 + $0x18] sm:$0xff]
    %4723 = vmatprep.subr.mxu0 0.0
    %4724 = vmatpush1.msra.mxu0 0.0
    %4725 = vmatprep.subr.mxu0 0.0
    %4726 = vmatpush1.msra.mxu0 0.0
    %4727 = vmatprep.subr.mxu0 0.0
    %4728 = vmatpush1.msra.mxu0 0.0
    %4729 = vmatprep.subr.mxu0 0.0
    %4730 = vmatpush1.msra.mxu0 0.0
    %4731 = vmatprep.subr.mxu0 0.0
    %4732 = vmatpush1.msra.mxu0 0.0
    %4733 = vmatprep.subr.mxu0 0.0
    %4734 = vmatpush1.msra.mxu0 0.0
    %4735 = vmatprep.subr.mxu0 0.0
    %4736 = vmatpush1.msra.mxu0 0.0
    %4737 = vmatprep.subr.mxu0 0.0
    %4738 = vmatpush1.msra.mxu0 0.0
    %4739 = vmatprep.subr.mxu0 0.0
    %4740 = vmatpush1.msra.mxu0 0.0
    %4741 = vmatprep.subr.mxu0 0.0
    %4742 = vmatpush1.msra.mxu0 0.0
    %4743 = vmatprep.subr.mxu0 0.0
    %4744 = vmatpush1.msra.mxu0 0.0
    %4745 = vmatprep.subr.mxu0 0.0
    %4746 = vmatpush1.msra.mxu0 0.0
    %4747 = vmatprep.subr.mxu0 0.0
    %4748 = vmatpush1.msra.mxu0 %v4722
    %4749 = vmatprep.subr.mxu0 0.0
    %4750 = vmatpush1.msra.mxu0 %v4721
    %4751 = vmatprep.subr.mxu0 0.0
    %4752 = vmatpush1.msra.mxu0 %v4720
    %4753 = vmatprep.subr.mxu0 0.0
    %4754 = vmatpush1.msra.mxu0 %v4719
    %4755 = vmatprep.subr.mxu0 0.0
    %4756 = vmatpush2.msra.mxu0 0.0
    %4757 = vmatprep.subr.mxu0 0.0
    %4758 = vmatpush2.msra.mxu0 0.0
    %4759 = vmatprep.subr.mxu0 0.0
    %4760 = vmatpush2.msra.mxu0 0.0
    %4761 = vmatprep.subr.mxu0 0.0
    %4762 = vmatpush2.msra.mxu0 0.0
    %4763 = vmatprep.subr.mxu0 0.0
    %4764 = vmatpush2.msra.mxu0 0.0
    %4765 = vmatprep.subr.mxu0 0.0
    %4766 = vmatpush2.msra.mxu0 0.0
    %4767 = vmatprep.subr.mxu0 0.0
    %4768 = vmatpush2.msra.mxu0 0.0
    %4769 = vmatprep.subr.mxu0 0.0
    %4770 = vmatpush2.msra.mxu0 0.0
    %4771 = vmatprep.subr.mxu0 0.0
    %4772 = vmatpush2.msra.mxu0 0.0
    %4773 = vmatprep.subr.mxu0 0.0
    %4774 = vmatpush2.msra.mxu0 0.0
    %4775 = vmatprep.subr.mxu0 0.0
    %4776 = vmatpush2.msra.mxu0 0.0
    %4777 = vmatprep.subr.mxu0 0.0
    %4778 = vmatpush2.msra.mxu0 0.0
    %4779 = vmatprep.subr.mxu0 0.0
    %4780 = vmatpush2.msra.mxu0 0.0
    %4781 = vmatprep.subr.mxu0 0.0
    %4782 = vmatpush2.msra.mxu0 0.0
    %4783 = vmatprep.subr.mxu0 0.0
    %4784 = vmatpush2.msra.mxu0 0.0
    %4785 = vmatprep.subr.mxu0 0.0
    %4786 = vmatpush2.msra.mxu0 0.0
    %4787 = vmatprep.mubr.f32.mxu0 0.0
    %4788 = vmatmul.mubr.f32.gmra.mxu0 %v4569
    %v4789 = vpop.f32.mrf.mxu0
    %v4790 = vadd.f32 0.0, %v4789
    %v4791 = vpop.f32.mrf.mxu0
    %4792 = vdwg.mxu0
    %v4793 = vadd.f32 %v4718, %v4790
    %v4794 = vld [vmem:[%s1540] sm:$0xff]
    %v4795 = vld [vmem:[%s4122] sm:$0xff]
    %v4796 = vld [vmem:[%s4122 + $0x8] sm:$0xff]
    %v4797 = vld [vmem:[%s4122 + $0x10] sm:$0xff]
    %v4798 = vld [vmem:[%s4122 + $0x18] sm:$0xff]
    %4799 = vmatprep.subr.mxu0 0.0
    %4800 = vmatpush1.msra.mxu0 0.0
    %4801 = vmatprep.subr.mxu0 0.0
    %4802 = vmatpush1.msra.mxu0 0.0
    %4803 = vmatprep.subr.mxu0 0.0
    %4804 = vmatpush1.msra.mxu0 0.0
    %4805 = vmatprep.subr.mxu0 0.0
    %4806 = vmatpush1.msra.mxu0 0.0
    %4807 = vmatprep.subr.mxu0 0.0
    %4808 = vmatpush1.msra.mxu0 0.0
    %4809 = vmatprep.subr.mxu0 0.0
    %4810 = vmatpush1.msra.mxu0 0.0
    %4811 = vmatprep.subr.mxu0 0.0
    %4812 = vmatpush1.msra.mxu0 0.0
    %4813 = vmatprep.subr.mxu0 0.0
    %4814 = vmatpush1.msra.mxu0 0.0
    %4815 = vmatprep.subr.mxu0 0.0
    %4816 = vmatpush1.msra.mxu0 0.0
    %4817 = vmatprep.subr.mxu0 0.0
    %4818 = vmatpush1.msra.mxu0 0.0
    %4819 = vmatprep.subr.mxu0 0.0
    %4820 = vmatpush1.msra.mxu0 0.0
    %4821 = vmatprep.subr.mxu0 0.0
    %4822 = vmatpush1.msra.mxu0 0.0
    %4823 = vmatprep.subr.mxu0 0.0
    %4824 = vmatpush1.msra.mxu0 %v4798
    %4825 = vmatprep.subr.mxu0 0.0
    %4826 = vmatpush1.msra.mxu0 %v4797
    %4827 = vmatprep.subr.mxu0 0.0
    %4828 = vmatpush1.msra.mxu0 %v4796
    %4829 = vmatprep.subr.mxu0 0.0
    %4830 = vmatpush1.msra.mxu0 %v4795
    %4831 = vmatprep.subr.mxu0 0.0
    %4832 = vmatpush2.msra.mxu0 0.0
    %4833 = vmatprep.subr.mxu0 0.0
    %4834 = vmatpush2.msra.mxu0 0.0
    %4835 = vmatprep.subr.mxu0 0.0
    %4836 = vmatpush2.msra.mxu0 0.0
    %4837 = vmatprep.subr.mxu0 0.0
    %4838 = vmatpush2.msra.mxu0 0.0
    %4839 = vmatprep.subr.mxu0 0.0
    %4840 = vmatpush2.msra.mxu0 0.0
    %4841 = vmatprep.subr.mxu0 0.0
    %4842 = vmatpush2.msra.mxu0 0.0
    %4843 = vmatprep.subr.mxu0 0.0
    %4844 = vmatpush2.msra.mxu0 0.0
    %4845 = vmatprep.subr.mxu0 0.0
    %4846 = vmatpush2.msra.mxu0 0.0
    %4847 = vmatprep.subr.mxu0 0.0
    %4848 = vmatpush2.msra.mxu0 0.0
    %4849 = vmatprep.subr.mxu0 0.0
    %4850 = vmatpush2.msra.mxu0 0.0
    %4851 = vmatprep.subr.mxu0 0.0
    %4852 = vmatpush2.msra.mxu0 0.0
    %4853 = vmatprep.subr.mxu0 0.0
    %4854 = vmatpush2.msra.mxu0 0.0
    %4855 = vmatprep.subr.mxu0 0.0
    %4856 = vmatpush2.msra.mxu0 0.0
    %4857 = vmatprep.subr.mxu0 0.0
    %4858 = vmatpush2.msra.mxu0 0.0
    %4859 = vmatprep.subr.mxu0 0.0
    %4860 = vmatpush2.msra.mxu0 0.0
    %4861 = vmatprep.subr.mxu0 0.0
    %4862 = vmatpush2.msra.mxu0 0.0
    %4863 = vmatprep.mubr.f32.mxu0 0.0
    %4864 = vmatmul.mubr.f32.gmra.mxu0 %v4569
    %v4865 = vpop.f32.mrf.mxu0
    %v4866 = vadd.f32 0.0, %v4865
    %v4867 = vpop.f32.mrf.mxu0
    %4868 = vdwg.mxu0
    %v4869 = vadd.f32 %v4794, %v4866
    %v4870 = vxor.u32 %v4641, 2147483648
    %v4871 = vmul.f32 %v4870, 1.442695
    %v4872 = vpow.pop %v4871
    %v4873 = vadd.f32 %v4872, 1.0
    %v4874 = vrcp.pop %v4873
    %v4875 = vmul.f32 1.0, %v4874
    %v4876 = vxor.u32 %v4717, 2147483648
    %v4877 = vmul.f32 %v4876, 1.442695
    %v4878 = vpow.pop %v4877
    %v4879 = vadd.f32 %v4878, 1.0
    %v4880 = vrcp.pop %v4879
    %v4881 = vmul.f32 1.0, %v4880
    %v4882 = vtanh.pop %v4793
    %v4883 = vxor.u32 %v4869, 2147483648
    %v4884 = vmul.f32 %v4883, 1.442695
    %v4885 = vpow.pop %v4884
    %v4886 = vadd.f32 %v4885, 1.0
    %v4887 = vrcp.pop %v4886
    %v4888 = vmul.f32 1.0, %v4887
    %v4889 = vmul.f32 %v4881, %v4562
    %v4890 = vmul.f32 %v4875, %v4882
    %v4891 = vadd.f32 %v4889, %v4890
    %v4892 = vtanh.pop %v4891
    %v4893 = vmul.f32 %v4888, %v4892
    %4894 = vst.msk [vmem:[#allocation7] sm:$0xff] %vm235, %v4893
    %4895 = vst.msk [vmem:[#allocation8] sm:$0xff] %vm235, %v4891
    %4896 = vst.msk [vmem:[%s1643] sm:$0xff] %vm235, %v4893
    %v4897 = vld [vmem:[#allocation7] sm:$0xff]
    %v4898 = vld [vmem:[#allocation8] sm:$0xff]
    %v4899 = vld [vmem:[%s1647] sm:$0xff]
    %v4900 = vld [vmem:[#allocation13] sm:$0xff]
    %v4901 = vld [vmem:[#allocation13 + $0x8] sm:$0xff]
    %v4902 = vld [vmem:[#allocation13 + $0x10] sm:$0xff]
    %v4903 = vld [vmem:[#allocation13 + $0x18] sm:$0xff]
    %v4905 = vsel %vm235, %v4897, 0
    %4907 = vmatprep.subr.mxu0 0.0
    %4908 = vmatpush1.msra.mxu0 0.0
    %4909 = vmatprep.subr.mxu0 0.0
    %4910 = vmatpush1.msra.mxu0 0.0
    %4911 = vmatprep.subr.mxu0 0.0
    %4912 = vmatpush1.msra.mxu0 0.0
    %4913 = vmatprep.subr.mxu0 0.0
    %4914 = vmatpush1.msra.mxu0 0.0
    %4915 = vmatprep.subr.mxu0 0.0
    %4916 = vmatpush1.msra.mxu0 0.0
    %4917 = vmatprep.subr.mxu0 0.0
    %4918 = vmatpush1.msra.mxu0 0.0
    %4919 = vmatprep.subr.mxu0 0.0
    %4920 = vmatpush1.msra.mxu0 0.0
    %4921 = vmatprep.subr.mxu0 0.0
    %4922 = vmatpush1.msra.mxu0 0.0
    %4923 = vmatprep.subr.mxu0 0.0
    %4924 = vmatpush1.msra.mxu0 0.0
    %4925 = vmatprep.subr.mxu0 0.0
    %4926 = vmatpush1.msra.mxu0 0.0
    %4927 = vmatprep.subr.mxu0 0.0
    %4928 = vmatpush1.msra.mxu0 0.0
    %4929 = vmatprep.subr.mxu0 0.0
    %4930 = vmatpush1.msra.mxu0 0.0
    %4931 = vmatprep.subr.mxu0 0.0
    %4932 = vmatpush1.msra.mxu0 %v4903
    %4933 = vmatprep.subr.mxu0 0.0
    %4934 = vmatpush1.msra.mxu0 %v4902
    %4935 = vmatprep.subr.mxu0 0.0
    %4936 = vmatpush1.msra.mxu0 %v4901
    %4937 = vmatprep.subr.mxu0 0.0
    %4938 = vmatpush1.msra.mxu0 %v4900
    %4939 = vmatprep.subr.mxu0 0.0
    %4940 = vmatpush2.msra.mxu0 0.0
    %4941 = vmatprep.subr.mxu0 0.0
    %4942 = vmatpush2.msra.mxu0 0.0
    %4943 = vmatprep.subr.mxu0 0.0
    %4944 = vmatpush2.msra.mxu0 0.0
    %4945 = vmatprep.subr.mxu0 0.0
    %4946 = vmatpush2.msra.mxu0 0.0
    %4947 = vmatprep.subr.mxu0 0.0
    %4948 = vmatpush2.msra.mxu0 0.0
    %4949 = vmatprep.subr.mxu0 0.0
    %4950 = vmatpush2.msra.mxu0 0.0
    %4951 = vmatprep.subr.mxu0 0.0
    %4952 = vmatpush2.msra.mxu0 0.0
    %4953 = vmatprep.subr.mxu0 0.0
    %4954 = vmatpush2.msra.mxu0 0.0
    %4955 = vmatprep.subr.mxu0 0.0
    %4956 = vmatpush2.msra.mxu0 0.0
    %4957 = vmatprep.subr.mxu0 0.0
    %4958 = vmatpush2.msra.mxu0 0.0
    %4959 = vmatprep.subr.mxu0 0.0
    %4960 = vmatpush2.msra.mxu0 0.0
    %4961 = vmatprep.subr.mxu0 0.0
    %4962 = vmatpush2.msra.mxu0 0.0
    %4963 = vmatprep.subr.mxu0 0.0
    %4964 = vmatpush2.msra.mxu0 0.0
    %4965 = vmatprep.subr.mxu0 0.0
    %4966 = vmatpush2.msra.mxu0 0.0
    %4967 = vmatprep.subr.mxu0 0.0
    %4968 = vmatpush2.msra.mxu0 0.0
    %4969 = vmatprep.subr.mxu0 0.0
    %4970 = vmatpush2.msra.mxu0 0.0
    %4971 = vmatprep.mubr.f32.mxu0 0.0
    %4972 = vmatmul.mubr.f32.gmra.mxu0 %v4905
    %v4973 = vpop.f32.mrf.mxu0
    %v4974 = vadd.f32 0.0, %v4973
    %v4975 = vpop.f32.mrf.mxu0
    %4976 = vdwg.mxu0
    %v4977 = vadd.f32 %v4899, %v4974
    %v4978 = vld [vmem:[%s1727] sm:$0xff]
    %v4979 = vld [vmem:[%s3968] sm:$0xff]
    %v4980 = vld [vmem:[%s3968 + $0x8] sm:$0xff]
    %v4981 = vld [vmem:[%s3968 + $0x10] sm:$0xff]
    %v4982 = vld [vmem:[%s3968 + $0x18] sm:$0xff]
    %4983 = vmatprep.subr.mxu0 0.0
    %4984 = vmatpush1.msra.mxu0 0.0
    %4985 = vmatprep.subr.mxu0 0.0
    %4986 = vmatpush1.msra.mxu0 0.0
    %4987 = vmatprep.subr.mxu0 0.0
    %4988 = vmatpush1.msra.mxu0 0.0
    %4989 = vmatprep.subr.mxu0 0.0
    %4990 = vmatpush1.msra.mxu0 0.0
    %4991 = vmatprep.subr.mxu0 0.0
    %4992 = vmatpush1.msra.mxu0 0.0
    %4993 = vmatprep.subr.mxu0 0.0
    %4994 = vmatpush1.msra.mxu0 0.0
    %4995 = vmatprep.subr.mxu0 0.0
    %4996 = vmatpush1.msra.mxu0 0.0
    %4997 = vmatprep.subr.mxu0 0.0
    %4998 = vmatpush1.msra.mxu0 0.0
    %4999 = vmatprep.subr.mxu0 0.0
    %5000 = vmatpush1.msra.mxu0 0.0
    %5001 = vmatprep.subr.mxu0 0.0
    %5002 = vmatpush1.msra.mxu0 0.0
    %5003 = vmatprep.subr.mxu0 0.0
    %5004 = vmatpush1.msra.mxu0 0.0
    %5005 = vmatprep.subr.mxu0 0.0
    %5006 = vmatpush1.msra.mxu0 0.0
    %5007 = vmatprep.subr.mxu0 0.0
    %5008 = vmatpush1.msra.mxu0 %v4982
    %5009 = vmatprep.subr.mxu0 0.0
    %5010 = vmatpush1.msra.mxu0 %v4981
    %5011 = vmatprep.subr.mxu0 0.0
    %5012 = vmatpush1.msra.mxu0 %v4980
    %5013 = vmatprep.subr.mxu0 0.0
    %5014 = vmatpush1.msra.mxu0 %v4979
    %5015 = vmatprep.subr.mxu0 0.0
    %5016 = vmatpush2.msra.mxu0 0.0
    %5017 = vmatprep.subr.mxu0 0.0
    %5018 = vmatpush2.msra.mxu0 0.0
    %5019 = vmatprep.subr.mxu0 0.0
    %5020 = vmatpush2.msra.mxu0 0.0
    %5021 = vmatprep.subr.mxu0 0.0
    %5022 = vmatpush2.msra.mxu0 0.0
    %5023 = vmatprep.subr.mxu0 0.0
    %5024 = vmatpush2.msra.mxu0 0.0
    %5025 = vmatprep.subr.mxu0 0.0
    %5026 = vmatpush2.msra.mxu0 0.0
    %5027 = vmatprep.subr.mxu0 0.0
    %5028 = vmatpush2.msra.mxu0 0.0
    %5029 = vmatprep.subr.mxu0 0.0
    %5030 = vmatpush2.msra.mxu0 0.0
    %5031 = vmatprep.subr.mxu0 0.0
    %5032 = vmatpush2.msra.mxu0 0.0
    %5033 = vmatprep.subr.mxu0 0.0
    %5034 = vmatpush2.msra.mxu0 0.0
    %5035 = vmatprep.subr.mxu0 0.0
    %5036 = vmatpush2.msra.mxu0 0.0
    %5037 = vmatprep.subr.mxu0 0.0
    %5038 = vmatpush2.msra.mxu0 0.0
    %5039 = vmatprep.subr.mxu0 0.0
    %5040 = vmatpush2.msra.mxu0 0.0
    %5041 = vmatprep.subr.mxu0 0.0
    %5042 = vmatpush2.msra.mxu0 0.0
    %5043 = vmatprep.subr.mxu0 0.0
    %5044 = vmatpush2.msra.mxu0 0.0
    %5045 = vmatprep.subr.mxu0 0.0
    %5046 = vmatpush2.msra.mxu0 0.0
    %5047 = vmatprep.mubr.f32.mxu0 0.0
    %5048 = vmatmul.mubr.f32.gmra.mxu0 %v4905
    %v5049 = vpop.f32.mrf.mxu0
    %v5050 = vadd.f32 0.0, %v5049
    %v5051 = vpop.f32.mrf.mxu0
    %5052 = vdwg.mxu0
    %v5053 = vadd.f32 %v4978, %v5050
    %v5054 = vld [vmem:[%s1804] sm:$0xff]
    %v5055 = vld [vmem:[%s4045] sm:$0xff]
    %v5056 = vld [vmem:[%s4045 + $0x8] sm:$0xff]
    %v5057 = vld [vmem:[%s4045 + $0x10] sm:$0xff]
    %v5058 = vld [vmem:[%s4045 + $0x18] sm:$0xff]
    %5059 = vmatprep.subr.mxu0 0.0
    %5060 = vmatpush1.msra.mxu0 0.0
    %5061 = vmatprep.subr.mxu0 0.0
    %5062 = vmatpush1.msra.mxu0 0.0
    %5063 = vmatprep.subr.mxu0 0.0
    %5064 = vmatpush1.msra.mxu0 0.0
    %5065 = vmatprep.subr.mxu0 0.0
    %5066 = vmatpush1.msra.mxu0 0.0
    %5067 = vmatprep.subr.mxu0 0.0
    %5068 = vmatpush1.msra.mxu0 0.0
    %5069 = vmatprep.subr.mxu0 0.0
    %5070 = vmatpush1.msra.mxu0 0.0
    %5071 = vmatprep.subr.mxu0 0.0
    %5072 = vmatpush1.msra.mxu0 0.0
    %5073 = vmatprep.subr.mxu0 0.0
    %5074 = vmatpush1.msra.mxu0 0.0
    %5075 = vmatprep.subr.mxu0 0.0
    %5076 = vmatpush1.msra.mxu0 0.0
    %5077 = vmatprep.subr.mxu0 0.0
    %5078 = vmatpush1.msra.mxu0 0.0
    %5079 = vmatprep.subr.mxu0 0.0
    %5080 = vmatpush1.msra.mxu0 0.0
    %5081 = vmatprep.subr.mxu0 0.0
    %5082 = vmatpush1.msra.mxu0 0.0
    %5083 = vmatprep.subr.mxu0 0.0
    %5084 = vmatpush1.msra.mxu0 %v5058
    %5085 = vmatprep.subr.mxu0 0.0
    %5086 = vmatpush1.msra.mxu0 %v5057
    %5087 = vmatprep.subr.mxu0 0.0
    %5088 = vmatpush1.msra.mxu0 %v5056
    %5089 = vmatprep.subr.mxu0 0.0
    %5090 = vmatpush1.msra.mxu0 %v5055
    %5091 = vmatprep.subr.mxu0 0.0
    %5092 = vmatpush2.msra.mxu0 0.0
    %5093 = vmatprep.subr.mxu0 0.0
    %5094 = vmatpush2.msra.mxu0 0.0
    %5095 = vmatprep.subr.mxu0 0.0
    %5096 = vmatpush2.msra.mxu0 0.0
    %5097 = vmatprep.subr.mxu0 0.0
    %5098 = vmatpush2.msra.mxu0 0.0
    %5099 = vmatprep.subr.mxu0 0.0
    %5100 = vmatpush2.msra.mxu0 0.0
    %5101 = vmatprep.subr.mxu0 0.0
    %5102 = vmatpush2.msra.mxu0 0.0
    %5103 = vmatprep.subr.mxu0 0.0
    %5104 = vmatpush2.msra.mxu0 0.0
    %5105 = vmatprep.subr.mxu0 0.0
    %5106 = vmatpush2.msra.mxu0 0.0
    %5107 = vmatprep.subr.mxu0 0.0
    %5108 = vmatpush2.msra.mxu0 0.0
    %5109 = vmatprep.subr.mxu0 0.0
    %5110 = vmatpush2.msra.mxu0 0.0
    %5111 = vmatprep.subr.mxu0 0.0
    %5112 = vmatpush2.msra.mxu0 0.0
    %5113 = vmatprep.subr.mxu0 0.0
    %5114 = vmatpush2.msra.mxu0 0.0
    %5115 = vmatprep.subr.mxu0 0.0
    %5116 = vmatpush2.msra.mxu0 0.0
    %5117 = vmatprep.subr.mxu0 0.0
    %5118 = vmatpush2.msra.mxu0 0.0
    %5119 = vmatprep.subr.mxu0 0.0
    %5120 = vmatpush2.msra.mxu0 0.0
    %5121 = vmatprep.subr.mxu0 0.0
    %5122 = vmatpush2.msra.mxu0 0.0
    %5123 = vmatprep.mubr.f32.mxu0 0.0
    %5124 = vmatmul.mubr.f32.gmra.mxu0 %v4905
    %v5125 = vpop.f32.mrf.mxu0
    %v5126 = vadd.f32 0.0, %v5125
    %v5127 = vpop.f32.mrf.mxu0
    %5128 = vdwg.mxu0
    %v5129 = vadd.f32 %v5054, %v5126
    %v5130 = vld [vmem:[%s1881] sm:$0xff]
    %v5131 = vld [vmem:[%s4122] sm:$0xff]
    %v5132 = vld [vmem:[%s4122 + $0x8] sm:$0xff]
    %v5133 = vld [vmem:[%s4122 + $0x10] sm:$0xff]
    %v5134 = vld [vmem:[%s4122 + $0x18] sm:$0xff]
    %5135 = vmatprep.subr.mxu0 0.0
    %5136 = vmatpush1.msra.mxu0 0.0
    %5137 = vmatprep.subr.mxu0 0.0
    %5138 = vmatpush1.msra.mxu0 0.0
    %5139 = vmatprep.subr.mxu0 0.0
    %5140 = vmatpush1.msra.mxu0 0.0
    %5141 = vmatprep.subr.mxu0 0.0
    %5142 = vmatpush1.msra.mxu0 0.0
    %5143 = vmatprep.subr.mxu0 0.0
    %5144 = vmatpush1.msra.mxu0 0.0
    %5145 = vmatprep.subr.mxu0 0.0
    %5146 = vmatpush1.msra.mxu0 0.0
    %5147 = vmatprep.subr.mxu0 0.0
    %5148 = vmatpush1.msra.mxu0 0.0
    %5149 = vmatprep.subr.mxu0 0.0
    %5150 = vmatpush1.msra.mxu0 0.0
    %5151 = vmatprep.subr.mxu0 0.0
    %5152 = vmatpush1.msra.mxu0 0.0
    %5153 = vmatprep.subr.mxu0 0.0
    %5154 = vmatpush1.msra.mxu0 0.0
    %5155 = vmatprep.subr.mxu0 0.0
    %5156 = vmatpush1.msra.mxu0 0.0
    %5157 = vmatprep.subr.mxu0 0.0
    %5158 = vmatpush1.msra.mxu0 0.0
    %5159 = vmatprep.subr.mxu0 0.0
    %5160 = vmatpush1.msra.mxu0 %v5134
    %5161 = vmatprep.subr.mxu0 0.0
    %5162 = vmatpush1.msra.mxu0 %v5133
    %5163 = vmatprep.subr.mxu0 0.0
    %5164 = vmatpush1.msra.mxu0 %v5132
    %5165 = vmatprep.subr.mxu0 0.0
    %5166 = vmatpush1.msra.mxu0 %v5131
    %5167 = vmatprep.subr.mxu0 0.0
    %5168 = vmatpush2.msra.mxu0 0.0
    %5169 = vmatprep.subr.mxu0 0.0
    %5170 = vmatpush2.msra.mxu0 0.0
    %5171 = vmatprep.subr.mxu0 0.0
    %5172 = vmatpush2.msra.mxu0 0.0
    %5173 = vmatprep.subr.mxu0 0.0
    %5174 = vmatpush2.msra.mxu0 0.0
    %5175 = vmatprep.subr.mxu0 0.0
    %5176 = vmatpush2.msra.mxu0 0.0
    %5177 = vmatprep.subr.mxu0 0.0
    %5178 = vmatpush2.msra.mxu0 0.0
    %5179 = vmatprep.subr.mxu0 0.0
    %5180 = vmatpush2.msra.mxu0 0.0
    %5181 = vmatprep.subr.mxu0 0.0
    %5182 = vmatpush2.msra.mxu0 0.0
    %5183 = vmatprep.subr.mxu0 0.0
    %5184 = vmatpush2.msra.mxu0 0.0
    %5185 = vmatprep.subr.mxu0 0.0
    %5186 = vmatpush2.msra.mxu0 0.0
    %5187 = vmatprep.subr.mxu0 0.0
    %5188 = vmatpush2.msra.mxu0 0.0
    %5189 = vmatprep.subr.mxu0 0.0
    %5190 = vmatpush2.msra.mxu0 0.0
    %5191 = vmatprep.subr.mxu0 0.0
    %5192 = vmatpush2.msra.mxu0 0.0
    %5193 = vmatprep.subr.mxu0 0.0
    %5194 = vmatpush2.msra.mxu0 0.0
    %5195 = vmatprep.subr.mxu0 0.0
    %5196 = vmatpush2.msra.mxu0 0.0
    %5197 = vmatprep.subr.mxu0 0.0
    %5198 = vmatpush2.msra.mxu0 0.0
    %5199 = vmatprep.mubr.f32.mxu0 0.0
    %5200 = vmatmul.mubr.f32.gmra.mxu0 %v4905
    %v5201 = vpop.f32.mrf.mxu0
    %v5202 = vadd.f32 0.0, %v5201
    %v5203 = vpop.f32.mrf.mxu0
    %5204 = vdwg.mxu0
    %v5205 = vadd.f32 %v5130, %v5202
    %v5206 = vxor.u32 %v4977, 2147483648
    %v5207 = vmul.f32 %v5206, 1.442695
    %v5208 = vpow.pop %v5207
    %v5209 = vadd.f32 %v5208, 1.0
    %v5210 = vrcp.pop %v5209
    %v5211 = vmul.f32 1.0, %v5210
    %v5212 = vxor.u32 %v5053, 2147483648
    %v5213 = vmul.f32 %v5212, 1.442695
    %v5214 = vpow.pop %v5213
    %v5215 = vadd.f32 %v5214, 1.0
    %v5216 = vrcp.pop %v5215
    %v5217 = vmul.f32 1.0, %v5216
    %v5218 = vtanh.pop %v5129
    %v5219 = vxor.u32 %v5205, 2147483648
    %v5220 = vmul.f32 %v5219, 1.442695
    %v5221 = vpow.pop %v5220
    %v5222 = vadd.f32 %v5221, 1.0
    %v5223 = vrcp.pop %v5222
    %v5224 = vmul.f32 1.0, %v5223
    %v5225 = vmul.f32 %v5217, %v4898
    %v5226 = vmul.f32 %v5211, %v5218
    %v5227 = vadd.f32 %v5225, %v5226
    %v5228 = vtanh.pop %v5227
    %v5229 = vmul.f32 %v5224, %v5228
    %5230 = vst.msk [vmem:[#allocation7] sm:$0xff] %vm235, %v5229
    %5231 = vst.msk [vmem:[#allocation8] sm:$0xff] %vm235, %v5227
    %5232 = vst.msk [vmem:[%s1984] sm:$0xff] %vm235, %v5229
    %v5233 = vld [vmem:[#allocation7] sm:$0xff]
    %v5234 = vld [vmem:[#allocation8] sm:$0xff]
    %v5235 = vld [vmem:[%s1988] sm:$0xff]
    %v5236 = vld [vmem:[#allocation13] sm:$0xff]
    %v5237 = vld [vmem:[#allocation13 + $0x8] sm:$0xff]
    %v5238 = vld [vmem:[#allocation13 + $0x10] sm:$0xff]
    %v5239 = vld [vmem:[#allocation13 + $0x18] sm:$0xff]
    %v5241 = vsel %vm235, %v5233, 0
    %5243 = vmatprep.subr.mxu0 0.0
    %5244 = vmatpush1.msra.mxu0 0.0
    %5245 = vmatprep.subr.mxu0 0.0
    %5246 = vmatpush1.msra.mxu0 0.0
    %5247 = vmatprep.subr.mxu0 0.0
    %5248 = vmatpush1.msra.mxu0 0.0
    %5249 = vmatprep.subr.mxu0 0.0
    %5250 = vmatpush1.msra.mxu0 0.0
    %5251 = vmatprep.subr.mxu0 0.0
    %5252 = vmatpush1.msra.mxu0 0.0
    %5253 = vmatprep.subr.mxu0 0.0
    %5254 = vmatpush1.msra.mxu0 0.0
    %5255 = vmatprep.subr.mxu0 0.0
    %5256 = vmatpush1.msra.mxu0 0.0
    %5257 = vmatprep.subr.mxu0 0.0
    %5258 = vmatpush1.msra.mxu0 0.0
    %5259 = vmatprep.subr.mxu0 0.0
    %5260 = vmatpush1.msra.mxu0 0.0
    %5261 = vmatprep.subr.mxu0 0.0
    %5262 = vmatpush1.msra.mxu0 0.0
    %5263 = vmatprep.subr.mxu0 0.0
    %5264 = vmatpush1.msra.mxu0 0.0
    %5265 = vmatprep.subr.mxu0 0.0
    %5266 = vmatpush1.msra.mxu0 0.0
    %5267 = vmatprep.subr.mxu0 0.0
    %5268 = vmatpush1.msra.mxu0 %v5239
    %5269 = vmatprep.subr.mxu0 0.0
    %5270 = vmatpush1.msra.mxu0 %v5238
    %5271 = vmatprep.subr.mxu0 0.0
    %5272 = vmatpush1.msra.mxu0 %v5237
    %5273 = vmatprep.subr.mxu0 0.0
    %5274 = vmatpush1.msra.mxu0 %v5236
    %5275 = vmatprep.subr.mxu0 0.0
    %5276 = vmatpush2.msra.mxu0 0.0
    %5277 = vmatprep.subr.mxu0 0.0
    %5278 = vmatpush2.msra.mxu0 0.0
    %5279 = vmatprep.subr.mxu0 0.0
    %5280 = vmatpush2.msra.mxu0 0.0
    %5281 = vmatprep.subr.mxu0 0.0
    %5282 = vmatpush2.msra.mxu0 0.0
    %5283 = vmatprep.subr.mxu0 0.0
    %5284 = vmatpush2.msra.mxu0 0.0
    %5285 = vmatprep.subr.mxu0 0.0
    %5286 = vmatpush2.msra.mxu0 0.0
    %5287 = vmatprep.subr.mxu0 0.0
    %5288 = vmatpush2.msra.mxu0 0.0
    %5289 = vmatprep.subr.mxu0 0.0
    %5290 = vmatpush2.msra.mxu0 0.0
    %5291 = vmatprep.subr.mxu0 0.0
    %5292 = vmatpush2.msra.mxu0 0.0
    %5293 = vmatprep.subr.mxu0 0.0
    %5294 = vmatpush2.msra.mxu0 0.0
    %5295 = vmatprep.subr.mxu0 0.0
    %5296 = vmatpush2.msra.mxu0 0.0
    %5297 = vmatprep.subr.mxu0 0.0
    %5298 = vmatpush2.msra.mxu0 0.0
    %5299 = vmatprep.subr.mxu0 0.0
    %5300 = vmatpush2.msra.mxu0 0.0
    %5301 = vmatprep.subr.mxu0 0.0
    %5302 = vmatpush2.msra.mxu0 0.0
    %5303 = vmatprep.subr.mxu0 0.0
    %5304 = vmatpush2.msra.mxu0 0.0
    %5305 = vmatprep.subr.mxu0 0.0
    %5306 = vmatpush2.msra.mxu0 0.0
    %5307 = vmatprep.mubr.f32.mxu0 0.0
    %5308 = vmatmul.mubr.f32.gmra.mxu0 %v5241
    %v5309 = vpop.f32.mrf.mxu0
    %v5310 = vadd.f32 0.0, %v5309
    %v5311 = vpop.f32.mrf.mxu0
    %5312 = vdwg.mxu0
    %v5313 = vadd.f32 %v5235, %v5310
    %v5314 = vld [vmem:[%s2068] sm:$0xff]
    %v5315 = vld [vmem:[%s3968] sm:$0xff]
    %v5316 = vld [vmem:[%s3968 + $0x8] sm:$0xff]
    %v5317 = vld [vmem:[%s3968 + $0x10] sm:$0xff]
    %v5318 = vld [vmem:[%s3968 + $0x18] sm:$0xff]
    %5319 = vmatprep.subr.mxu0 0.0
    %5320 = vmatpush1.msra.mxu0 0.0
    %5321 = vmatprep.subr.mxu0 0.0
    %5322 = vmatpush1.msra.mxu0 0.0
    %5323 = vmatprep.subr.mxu0 0.0
    %5324 = vmatpush1.msra.mxu0 0.0
    %5325 = vmatprep.subr.mxu0 0.0
    %5326 = vmatpush1.msra.mxu0 0.0
    %5327 = vmatprep.subr.mxu0 0.0
    %5328 = vmatpush1.msra.mxu0 0.0
    %5329 = vmatprep.subr.mxu0 0.0
    %5330 = vmatpush1.msra.mxu0 0.0
    %5331 = vmatprep.subr.mxu0 0.0
    %5332 = vmatpush1.msra.mxu0 0.0
    %5333 = vmatprep.subr.mxu0 0.0
    %5334 = vmatpush1.msra.mxu0 0.0
    %5335 = vmatprep.subr.mxu0 0.0
    %5336 = vmatpush1.msra.mxu0 0.0
    %5337 = vmatprep.subr.mxu0 0.0
    %5338 = vmatpush1.msra.mxu0 0.0
    %5339 = vmatprep.subr.mxu0 0.0
    %5340 = vmatpush1.msra.mxu0 0.0
    %5341 = vmatprep.subr.mxu0 0.0
    %5342 = vmatpush1.msra.mxu0 0.0
    %5343 = vmatprep.subr.mxu0 0.0
    %5344 = vmatpush1.msra.mxu0 %v5318
    %5345 = vmatprep.subr.mxu0 0.0
    %5346 = vmatpush1.msra.mxu0 %v5317
    %5347 = vmatprep.subr.mxu0 0.0
    %5348 = vmatpush1.msra.mxu0 %v5316
    %5349 = vmatprep.subr.mxu0 0.0
    %5350 = vmatpush1.msra.mxu0 %v5315
    %5351 = vmatprep.subr.mxu0 0.0
    %5352 = vmatpush2.msra.mxu0 0.0
    %5353 = vmatprep.subr.mxu0 0.0
    %5354 = vmatpush2.msra.mxu0 0.0
    %5355 = vmatprep.subr.mxu0 0.0
    %5356 = vmatpush2.msra.mxu0 0.0
    %5357 = vmatprep.subr.mxu0 0.0
    %5358 = vmatpush2.msra.mxu0 0.0
    %5359 = vmatprep.subr.mxu0 0.0
    %5360 = vmatpush2.msra.mxu0 0.0
    %5361 = vmatprep.subr.mxu0 0.0
    %5362 = vmatpush2.msra.mxu0 0.0
    %5363 = vmatprep.subr.mxu0 0.0
    %5364 = vmatpush2.msra.mxu0 0.0
    %5365 = vmatprep.subr.mxu0 0.0
    %5366 = vmatpush2.msra.mxu0 0.0
    %5367 = vmatprep.subr.mxu0 0.0
    %5368 = vmatpush2.msra.mxu0 0.0
    %5369 = vmatprep.subr.mxu0 0.0
    %5370 = vmatpush2.msra.mxu0 0.0
    %5371 = vmatprep.subr.mxu0 0.0
    %5372 = vmatpush2.msra.mxu0 0.0
    %5373 = vmatprep.subr.mxu0 0.0
    %5374 = vmatpush2.msra.mxu0 0.0
    %5375 = vmatprep.subr.mxu0 0.0
    %5376 = vmatpush2.msra.mxu0 0.0
    %5377 = vmatprep.subr.mxu0 0.0
    %5378 = vmatpush2.msra.mxu0 0.0
    %5379 = vmatprep.subr.mxu0 0.0
    %5380 = vmatpush2.msra.mxu0 0.0
    %5381 = vmatprep.subr.mxu0 0.0
    %5382 = vmatpush2.msra.mxu0 0.0
    %5383 = vmatprep.mubr.f32.mxu0 0.0
    %5384 = vmatmul.mubr.f32.gmra.mxu0 %v5241
    %v5385 = vpop.f32.mrf.mxu0
    %v5386 = vadd.f32 0.0, %v5385
    %v5387 = vpop.f32.mrf.mxu0
    %5388 = vdwg.mxu0
    %v5389 = vadd.f32 %v5314, %v5386
    %v5390 = vld [vmem:[%s2145] sm:$0xff]
    %v5391 = vld [vmem:[%s4045] sm:$0xff]
    %v5392 = vld [vmem:[%s4045 + $0x8] sm:$0xff]
    %v5393 = vld [vmem:[%s4045 + $0x10] sm:$0xff]
    %v5394 = vld [vmem:[%s4045 + $0x18] sm:$0xff]
    %5395 = vmatprep.subr.mxu0 0.0
    %5396 = vmatpush1.msra.mxu0 0.0
    %5397 = vmatprep.subr.mxu0 0.0
    %5398 = vmatpush1.msra.mxu0 0.0
    %5399 = vmatprep.subr.mxu0 0.0
    %5400 = vmatpush1.msra.mxu0 0.0
    %5401 = vmatprep.subr.mxu0 0.0
    %5402 = vmatpush1.msra.mxu0 0.0
    %5403 = vmatprep.subr.mxu0 0.0
    %5404 = vmatpush1.msra.mxu0 0.0
    %5405 = vmatprep.subr.mxu0 0.0
    %5406 = vmatpush1.msra.mxu0 0.0
    %5407 = vmatprep.subr.mxu0 0.0
    %5408 = vmatpush1.msra.mxu0 0.0
    %5409 = vmatprep.subr.mxu0 0.0
    %5410 = vmatpush1.msra.mxu0 0.0
    %5411 = vmatprep.subr.mxu0 0.0
    %5412 = vmatpush1.msra.mxu0 0.0
    %5413 = vmatprep.subr.mxu0 0.0
    %5414 = vmatpush1.msra.mxu0 0.0
    %5415 = vmatprep.subr.mxu0 0.0
    %5416 = vmatpush1.msra.mxu0 0.0
    %5417 = vmatprep.subr.mxu0 0.0
    %5418 = vmatpush1.msra.mxu0 0.0
    %5419 = vmatprep.subr.mxu0 0.0
    %5420 = vmatpush1.msra.mxu0 %v5394
    %5421 = vmatprep.subr.mxu0 0.0
    %5422 = vmatpush1.msra.mxu0 %v5393
    %5423 = vmatprep.subr.mxu0 0.0
    %5424 = vmatpush1.msra.mxu0 %v5392
    %5425 = vmatprep.subr.mxu0 0.0
    %5426 = vmatpush1.msra.mxu0 %v5391
    %5427 = vmatprep.subr.mxu0 0.0
    %5428 = vmatpush2.msra.mxu0 0.0
    %5429 = vmatprep.subr.mxu0 0.0
    %5430 = vmatpush2.msra.mxu0 0.0
    %5431 = vmatprep.subr.mxu0 0.0
    %5432 = vmatpush2.msra.mxu0 0.0
    %5433 = vmatprep.subr.mxu0 0.0
    %5434 = vmatpush2.msra.mxu0 0.0
    %5435 = vmatprep.subr.mxu0 0.0
    %5436 = vmatpush2.msra.mxu0 0.0
    %5437 = vmatprep.subr.mxu0 0.0
    %5438 = vmatpush2.msra.mxu0 0.0
    %5439 = vmatprep.subr.mxu0 0.0
    %5440 = vmatpush2.msra.mxu0 0.0
    %5441 = vmatprep.subr.mxu0 0.0
    %5442 = vmatpush2.msra.mxu0 0.0
    %5443 = vmatprep.subr.mxu0 0.0
    %5444 = vmatpush2.msra.mxu0 0.0
    %5445 = vmatprep.subr.mxu0 0.0
    %5446 = vmatpush2.msra.mxu0 0.0
    %5447 = vmatprep.subr.mxu0 0.0
    %5448 = vmatpush2.msra.mxu0 0.0
    %5449 = vmatprep.subr.mxu0 0.0
    %5450 = vmatpush2.msra.mxu0 0.0
    %5451 = vmatprep.subr.mxu0 0.0
    %5452 = vmatpush2.msra.mxu0 0.0
    %5453 = vmatprep.subr.mxu0 0.0
    %5454 = vmatpush2.msra.mxu0 0.0
    %5455 = vmatprep.subr.mxu0 0.0
    %5456 = vmatpush2.msra.mxu0 0.0
    %5457 = vmatprep.subr.mxu0 0.0
    %5458 = vmatpush2.msra.mxu0 0.0
    %5459 = vmatprep.mubr.f32.mxu0 0.0
    %5460 = vmatmul.mubr.f32.gmra.mxu0 %v5241
    %v5461 = vpop.f32.mrf.mxu0
    %v5462 = vadd.f32 0.0, %v5461
    %v5463 = vpop.f32.mrf.mxu0
    %5464 = vdwg.mxu0
    %v5465 = vadd.f32 %v5390, %v5462
    %v5466 = vld [vmem:[%s2222] sm:$0xff]
    %v5467 = vld [vmem:[%s4122] sm:$0xff]
    %v5468 = vld [vmem:[%s4122 + $0x8] sm:$0xff]
    %v5469 = vld [vmem:[%s4122 + $0x10] sm:$0xff]
    %v5470 = vld [vmem:[%s4122 + $0x18] sm:$0xff]
    %5471 = vmatprep.subr.mxu0 0.0
    %5472 = vmatpush1.msra.mxu0 0.0
    %5473 = vmatprep.subr.mxu0 0.0
    %5474 = vmatpush1.msra.mxu0 0.0
    %5475 = vmatprep.subr.mxu0 0.0
    %5476 = vmatpush1.msra.mxu0 0.0
    %5477 = vmatprep.subr.mxu0 0.0
    %5478 = vmatpush1.msra.mxu0 0.0
    %5479 = vmatprep.subr.mxu0 0.0
    %5480 = vmatpush1.msra.mxu0 0.0
    %5481 = vmatprep.subr.mxu0 0.0
    %5482 = vmatpush1.msra.mxu0 0.0
    %5483 = vmatprep.subr.mxu0 0.0
    %5484 = vmatpush1.msra.mxu0 0.0
    %5485 = vmatprep.subr.mxu0 0.0
    %5486 = vmatpush1.msra.mxu0 0.0
    %5487 = vmatprep.subr.mxu0 0.0
    %5488 = vmatpush1.msra.mxu0 0.0
    %5489 = vmatprep.subr.mxu0 0.0
    %5490 = vmatpush1.msra.mxu0 0.0
    %5491 = vmatprep.subr.mxu0 0.0
    %5492 = vmatpush1.msra.mxu0 0.0
    %5493 = vmatprep.subr.mxu0 0.0
    %5494 = vmatpush1.msra.mxu0 0.0
    %5495 = vmatprep.subr.mxu0 0.0
    %5496 = vmatpush1.msra.mxu0 %v5470
    %5497 = vmatprep.subr.mxu0 0.0
    %5498 = vmatpush1.msra.mxu0 %v5469
    %5499 = vmatprep.subr.mxu0 0.0
    %5500 = vmatpush1.msra.mxu0 %v5468
    %5501 = vmatprep.subr.mxu0 0.0
    %5502 = vmatpush1.msra.mxu0 %v5467
    %5503 = vmatprep.subr.mxu0 0.0
    %5504 = vmatpush2.msra.mxu0 0.0
    %5505 = vmatprep.subr.mxu0 0.0
    %5506 = vmatpush2.msra.mxu0 0.0
    %5507 = vmatprep.subr.mxu0 0.0
    %5508 = vmatpush2.msra.mxu0 0.0
    %5509 = vmatprep.subr.mxu0 0.0
    %5510 = vmatpush2.msra.mxu0 0.0
    %5511 = vmatprep.subr.mxu0 0.0
    %5512 = vmatpush2.msra.mxu0 0.0
    %5513 = vmatprep.subr.mxu0 0.0
    %5514 = vmatpush2.msra.mxu0 0.0
    %5515 = vmatprep.subr.mxu0 0.0
    %5516 = vmatpush2.msra.mxu0 0.0
    %5517 = vmatprep.subr.mxu0 0.0
    %5518 = vmatpush2.msra.mxu0 0.0
    %5519 = vmatprep.subr.mxu0 0.0
    %5520 = vmatpush2.msra.mxu0 0.0
    %5521 = vmatprep.subr.mxu0 0.0
    %5522 = vmatpush2.msra.mxu0 0.0
    %5523 = vmatprep.subr.mxu0 0.0
    %5524 = vmatpush2.msra.mxu0 0.0
    %5525 = vmatprep.subr.mxu0 0.0
    %5526 = vmatpush2.msra.mxu0 0.0
    %5527 = vmatprep.subr.mxu0 0.0
    %5528 = vmatpush2.msra.mxu0 0.0
    %5529 = vmatprep.subr.mxu0 0.0
    %5530 = vmatpush2.msra.mxu0 0.0
    %5531 = vmatprep.subr.mxu0 0.0
    %5532 = vmatpush2.msra.mxu0 0.0
    %5533 = vmatprep.subr.mxu0 0.0
    %5534 = vmatpush2.msra.mxu0 0.0
    %5535 = vmatprep.mubr.f32.mxu0 0.0
    %5536 = vmatmul.mubr.f32.gmra.mxu0 %v5241
    %v5537 = vpop.f32.mrf.mxu0
    %v5538 = vadd.f32 0.0, %v5537
    %v5539 = vpop.f32.mrf.mxu0
    %5540 = vdwg.mxu0
    %v5541 = vadd.f32 %v5466, %v5538
    %v5542 = vxor.u32 %v5313, 2147483648
    %v5543 = vmul.f32 %v5542, 1.442695
    %v5544 = vpow.pop %v5543
    %v5545 = vadd.f32 %v5544, 1.0
    %v5546 = vrcp.pop %v5545
    %v5547 = vmul.f32 1.0, %v5546
    %v5548 = vxor.u32 %v5389, 2147483648
    %v5549 = vmul.f32 %v5548, 1.442695
    %v5550 = vpow.pop %v5549
    %v5551 = vadd.f32 %v5550, 1.0
    %v5552 = vrcp.pop %v5551
    %v5553 = vmul.f32 1.0, %v5552
    %v5554 = vtanh.pop %v5465
    %v5555 = vxor.u32 %v5541, 2147483648
    %v5556 = vmul.f32 %v5555, 1.442695
    %v5557 = vpow.pop %v5556
    %v5558 = vadd.f32 %v5557, 1.0
    %v5559 = vrcp.pop %v5558
    %v5560 = vmul.f32 1.0, %v5559
    %v5561 = vmul.f32 %v5553, %v5234
    %v5562 = vmul.f32 %v5547, %v5554
    %v5563 = vadd.f32 %v5561, %v5562
    %v5564 = vtanh.pop %v5563
    %v5565 = vmul.f32 %v5560, %v5564
    %5566 = vst.msk [vmem:[#allocation7] sm:$0xff] %vm235, %v5565
    %5567 = vst.msk [vmem:[#allocation8] sm:$0xff] %vm235, %v5563
    %5568 = vst.msk [vmem:[%s2325] sm:$0xff] %vm235, %v5565
    %v5569 = vld [vmem:[#allocation7] sm:$0xff]
    %v5570 = vld [vmem:[#allocation8] sm:$0xff]
    %v5571 = vld [vmem:[%s2329] sm:$0xff]
    %v5572 = vld [vmem:[#allocation13] sm:$0xff]
    %v5573 = vld [vmem:[#allocation13 + $0x8] sm:$0xff]
    %v5574 = vld [vmem:[#allocation13 + $0x10] sm:$0xff]
    %v5575 = vld [vmem:[#allocation13 + $0x18] sm:$0xff]
    %v5577 = vsel %vm235, %v5569, 0
    %5579 = vmatprep.subr.mxu0 0.0
    %5580 = vmatpush1.msra.mxu0 0.0
    %5581 = vmatprep.subr.mxu0 0.0
    %5582 = vmatpush1.msra.mxu0 0.0
    %5583 = vmatprep.subr.mxu0 0.0
    %5584 = vmatpush1.msra.mxu0 0.0
    %5585 = vmatprep.subr.mxu0 0.0
    %5586 = vmatpush1.msra.mxu0 0.0
    %5587 = vmatprep.subr.mxu0 0.0
    %5588 = vmatpush1.msra.mxu0 0.0
    %5589 = vmatprep.subr.mxu0 0.0
    %5590 = vmatpush1.msra.mxu0 0.0
    %5591 = vmatprep.subr.mxu0 0.0
    %5592 = vmatpush1.msra.mxu0 0.0
    %5593 = vmatprep.subr.mxu0 0.0
    %5594 = vmatpush1.msra.mxu0 0.0
    %5595 = vmatprep.subr.mxu0 0.0
    %5596 = vmatpush1.msra.mxu0 0.0
    %5597 = vmatprep.subr.mxu0 0.0
    %5598 = vmatpush1.msra.mxu0 0.0
    %5599 = vmatprep.subr.mxu0 0.0
    %5600 = vmatpush1.msra.mxu0 0.0
    %5601 = vmatprep.subr.mxu0 0.0
    %5602 = vmatpush1.msra.mxu0 0.0
    %5603 = vmatprep.subr.mxu0 0.0
    %5604 = vmatpush1.msra.mxu0 %v5575
    %5605 = vmatprep.subr.mxu0 0.0
    %5606 = vmatpush1.msra.mxu0 %v5574
    %5607 = vmatprep.subr.mxu0 0.0
    %5608 = vmatpush1.msra.mxu0 %v5573
    %5609 = vmatprep.subr.mxu0 0.0
    %5610 = vmatpush1.msra.mxu0 %v5572
    %5611 = vmatprep.subr.mxu0 0.0
    %5612 = vmatpush2.msra.mxu0 0.0
    %5613 = vmatprep.subr.mxu0 0.0
    %5614 = vmatpush2.msra.mxu0 0.0
    %5615 = vmatprep.subr.mxu0 0.0
    %5616 = vmatpush2.msra.mxu0 0.0
    %5617 = vmatprep.subr.mxu0 0.0
    %5618 = vmatpush2.msra.mxu0 0.0
    %5619 = vmatprep.subr.mxu0 0.0
    %5620 = vmatpush2.msra.mxu0 0.0
    %5621 = vmatprep.subr.mxu0 0.0
    %5622 = vmatpush2.msra.mxu0 0.0
    %5623 = vmatprep.subr.mxu0 0.0
    %5624 = vmatpush2.msra.mxu0 0.0
    %5625 = vmatprep.subr.mxu0 0.0
    %5626 = vmatpush2.msra.mxu0 0.0
    %5627 = vmatprep.subr.mxu0 0.0
    %5628 = vmatpush2.msra.mxu0 0.0
    %5629 = vmatprep.subr.mxu0 0.0
    %5630 = vmatpush2.msra.mxu0 0.0
    %5631 = vmatprep.subr.mxu0 0.0
    %5632 = vmatpush2.msra.mxu0 0.0
    %5633 = vmatprep.subr.mxu0 0.0
    %5634 = vmatpush2.msra.mxu0 0.0
    %5635 = vmatprep.subr.mxu0 0.0
    %5636 = vmatpush2.msra.mxu0 0.0
    %5637 = vmatprep.subr.mxu0 0.0
    %5638 = vmatpush2.msra.mxu0 0.0
    %5639 = vmatprep.subr.mxu0 0.0
    %5640 = vmatpush2.msra.mxu0 0.0
    %5641 = vmatprep.subr.mxu0 0.0
    %5642 = vmatpush2.msra.mxu0 0.0
    %5643 = vmatprep.mubr.f32.mxu0 0.0
    %5644 = vmatmul.mubr.f32.gmra.mxu0 %v5577
    %v5645 = vpop.f32.mrf.mxu0
    %v5646 = vadd.f32 0.0, %v5645
    %v5647 = vpop.f32.mrf.mxu0
    %5648 = vdwg.mxu0
    %v5649 = vadd.f32 %v5571, %v5646
    %v5650 = vld [vmem:[%s2409] sm:$0xff]
    %v5651 = vld [vmem:[%s3968] sm:$0xff]
    %v5652 = vld [vmem:[%s3968 + $0x8] sm:$0xff]
    %v5653 = vld [vmem:[%s3968 + $0x10] sm:$0xff]
    %v5654 = vld [vmem:[%s3968 + $0x18] sm:$0xff]
    %5655 = vmatprep.subr.mxu0 0.0
    %5656 = vmatpush1.msra.mxu0 0.0
    %5657 = vmatprep.subr.mxu0 0.0
    %5658 = vmatpush1.msra.mxu0 0.0
    %5659 = vmatprep.subr.mxu0 0.0
    %5660 = vmatpush1.msra.mxu0 0.0
    %5661 = vmatprep.subr.mxu0 0.0
    %5662 = vmatpush1.msra.mxu0 0.0
    %5663 = vmatprep.subr.mxu0 0.0
    %5664 = vmatpush1.msra.mxu0 0.0
    %5665 = vmatprep.subr.mxu0 0.0
    %5666 = vmatpush1.msra.mxu0 0.0
    %5667 = vmatprep.subr.mxu0 0.0
    %5668 = vmatpush1.msra.mxu0 0.0
    %5669 = vmatprep.subr.mxu0 0.0
    %5670 = vmatpush1.msra.mxu0 0.0
    %5671 = vmatprep.subr.mxu0 0.0
    %5672 = vmatpush1.msra.mxu0 0.0
    %5673 = vmatprep.subr.mxu0 0.0
    %5674 = vmatpush1.msra.mxu0 0.0
    %5675 = vmatprep.subr.mxu0 0.0
    %5676 = vmatpush1.msra.mxu0 0.0
    %5677 = vmatprep.subr.mxu0 0.0
    %5678 = vmatpush1.msra.mxu0 0.0
    %5679 = vmatprep.subr.mxu0 0.0
    %5680 = vmatpush1.msra.mxu0 %v5654
    %5681 = vmatprep.subr.mxu0 0.0
    %5682 = vmatpush1.msra.mxu0 %v5653
    %5683 = vmatprep.subr.mxu0 0.0
    %5684 = vmatpush1.msra.mxu0 %v5652
    %5685 = vmatprep.subr.mxu0 0.0
    %5686 = vmatpush1.msra.mxu0 %v5651
    %5687 = vmatprep.subr.mxu0 0.0
    %5688 = vmatpush2.msra.mxu0 0.0
    %5689 = vmatprep.subr.mxu0 0.0
    %5690 = vmatpush2.msra.mxu0 0.0
    %5691 = vmatprep.subr.mxu0 0.0
    %5692 = vmatpush2.msra.mxu0 0.0
    %5693 = vmatprep.subr.mxu0 0.0
    %5694 = vmatpush2.msra.mxu0 0.0
    %5695 = vmatprep.subr.mxu0 0.0
    %5696 = vmatpush2.msra.mxu0 0.0
    %5697 = vmatprep.subr.mxu0 0.0
    %5698 = vmatpush2.msra.mxu0 0.0
    %5699 = vmatprep.subr.mxu0 0.0
    %5700 = vmatpush2.msra.mxu0 0.0
    %5701 = vmatprep.subr.mxu0 0.0
    %5702 = vmatpush2.msra.mxu0 0.0
    %5703 = vmatprep.subr.mxu0 0.0
    %5704 = vmatpush2.msra.mxu0 0.0
    %5705 = vmatprep.subr.mxu0 0.0
    %5706 = vmatpush2.msra.mxu0 0.0
    %5707 = vmatprep.subr.mxu0 0.0
    %5708 = vmatpush2.msra.mxu0 0.0
    %5709 = vmatprep.subr.mxu0 0.0
    %5710 = vmatpush2.msra.mxu0 0.0
    %5711 = vmatprep.subr.mxu0 0.0
    %5712 = vmatpush2.msra.mxu0 0.0
    %5713 = vmatprep.subr.mxu0 0.0
    %5714 = vmatpush2.msra.mxu0 0.0
    %5715 = vmatprep.subr.mxu0 0.0
    %5716 = vmatpush2.msra.mxu0 0.0
    %5717 = vmatprep.subr.mxu0 0.0
    %5718 = vmatpush2.msra.mxu0 0.0
    %5719 = vmatprep.mubr.f32.mxu0 0.0
    %5720 = vmatmul.mubr.f32.gmra.mxu0 %v5577
    %v5721 = vpop.f32.mrf.mxu0
    %v5722 = vadd.f32 0.0, %v5721
    %v5723 = vpop.f32.mrf.mxu0
    %5724 = vdwg.mxu0
    %v5725 = vadd.f32 %v5650, %v5722
    %v5726 = vld [vmem:[%s2486] sm:$0xff]
    %v5727 = vld [vmem:[%s4045] sm:$0xff]
    %v5728 = vld [vmem:[%s4045 + $0x8] sm:$0xff]
    %v5729 = vld [vmem:[%s4045 + $0x10] sm:$0xff]
    %v5730 = vld [vmem:[%s4045 + $0x18] sm:$0xff]
    %5731 = vmatprep.subr.mxu0 0.0
    %5732 = vmatpush1.msra.mxu0 0.0
    %5733 = vmatprep.subr.mxu0 0.0
    %5734 = vmatpush1.msra.mxu0 0.0
    %5735 = vmatprep.subr.mxu0 0.0
    %5736 = vmatpush1.msra.mxu0 0.0
    %5737 = vmatprep.subr.mxu0 0.0
    %5738 = vmatpush1.msra.mxu0 0.0
    %5739 = vmatprep.subr.mxu0 0.0
    %5740 = vmatpush1.msra.mxu0 0.0
    %5741 = vmatprep.subr.mxu0 0.0
    %5742 = vmatpush1.msra.mxu0 0.0
    %5743 = vmatprep.subr.mxu0 0.0
    %5744 = vmatpush1.msra.mxu0 0.0
    %5745 = vmatprep.subr.mxu0 0.0
    %5746 = vmatpush1.msra.mxu0 0.0
    %5747 = vmatprep.subr.mxu0 0.0
    %5748 = vmatpush1.msra.mxu0 0.0
    %5749 = vmatprep.subr.mxu0 0.0
    %5750 = vmatpush1.msra.mxu0 0.0
    %5751 = vmatprep.subr.mxu0 0.0
    %5752 = vmatpush1.msra.mxu0 0.0
    %5753 = vmatprep.subr.mxu0 0.0
    %5754 = vmatpush1.msra.mxu0 0.0
    %5755 = vmatprep.subr.mxu0 0.0
    %5756 = vmatpush1.msra.mxu0 %v5730
    %5757 = vmatprep.subr.mxu0 0.0
    %5758 = vmatpush1.msra.mxu0 %v5729
    %5759 = vmatprep.subr.mxu0 0.0
    %5760 = vmatpush1.msra.mxu0 %v5728
    %5761 = vmatprep.subr.mxu0 0.0
    %5762 = vmatpush1.msra.mxu0 %v5727
    %5763 = vmatprep.subr.mxu0 0.0
    %5764 = vmatpush2.msra.mxu0 0.0
    %5765 = vmatprep.subr.mxu0 0.0
    %5766 = vmatpush2.msra.mxu0 0.0
    %5767 = vmatprep.subr.mxu0 0.0
    %5768 = vmatpush2.msra.mxu0 0.0
    %5769 = vmatprep.subr.mxu0 0.0
    %5770 = vmatpush2.msra.mxu0 0.0
    %5771 = vmatprep.subr.mxu0 0.0
    %5772 = vmatpush2.msra.mxu0 0.0
    %5773 = vmatprep.subr.mxu0 0.0
    %5774 = vmatpush2.msra.mxu0 0.0
    %5775 = vmatprep.subr.mxu0 0.0
    %5776 = vmatpush2.msra.mxu0 0.0
    %5777 = vmatprep.subr.mxu0 0.0
    %5778 = vmatpush2.msra.mxu0 0.0
    %5779 = vmatprep.subr.mxu0 0.0
    %5780 = vmatpush2.msra.mxu0 0.0
    %5781 = vmatprep.subr.mxu0 0.0
    %5782 = vmatpush2.msra.mxu0 0.0
    %5783 = vmatprep.subr.mxu0 0.0
    %5784 = vmatpush2.msra.mxu0 0.0
    %5785 = vmatprep.subr.mxu0 0.0
    %5786 = vmatpush2.msra.mxu0 0.0
    %5787 = vmatprep.subr.mxu0 0.0
    %5788 = vmatpush2.msra.mxu0 0.0
    %5789 = vmatprep.subr.mxu0 0.0
    %5790 = vmatpush2.msra.mxu0 0.0
    %5791 = vmatprep.subr.mxu0 0.0
    %5792 = vmatpush2.msra.mxu0 0.0
    %5793 = vmatprep.subr.mxu0 0.0
    %5794 = vmatpush2.msra.mxu0 0.0
    %5795 = vmatprep.mubr.f32.mxu0 0.0
    %5796 = vmatmul.mubr.f32.gmra.mxu0 %v5577
    %v5797 = vpop.f32.mrf.mxu0
    %v5798 = vadd.f32 0.0, %v5797
    %v5799 = vpop.f32.mrf.mxu0
    %5800 = vdwg.mxu0
    %v5801 = vadd.f32 %v5726, %v5798
    %v5802 = vld [vmem:[%s2563] sm:$0xff]
    %v5803 = vld [vmem:[%s4122] sm:$0xff]
    %v5804 = vld [vmem:[%s4122 + $0x8] sm:$0xff]
    %v5805 = vld [vmem:[%s4122 + $0x10] sm:$0xff]
    %v5806 = vld [vmem:[%s4122 + $0x18] sm:$0xff]
    %5807 = vmatprep.subr.mxu0 0.0
    %5808 = vmatpush1.msra.mxu0 0.0
    %5809 = vmatprep.subr.mxu0 0.0
    %5810 = vmatpush1.msra.mxu0 0.0
    %5811 = vmatprep.subr.mxu0 0.0
    %5812 = vmatpush1.msra.mxu0 0.0
    %5813 = vmatprep.subr.mxu0 0.0
    %5814 = vmatpush1.msra.mxu0 0.0
    %5815 = vmatprep.subr.mxu0 0.0
    %5816 = vmatpush1.msra.mxu0 0.0
    %5817 = vmatprep.subr.mxu0 0.0
    %5818 = vmatpush1.msra.mxu0 0.0
    %5819 = vmatprep.subr.mxu0 0.0
    %5820 = vmatpush1.msra.mxu0 0.0
    %5821 = vmatprep.subr.mxu0 0.0
    %5822 = vmatpush1.msra.mxu0 0.0
    %5823 = vmatprep.subr.mxu0 0.0
    %5824 = vmatpush1.msra.mxu0 0.0
    %5825 = vmatprep.subr.mxu0 0.0
    %5826 = vmatpush1.msra.mxu0 0.0
    %5827 = vmatprep.subr.mxu0 0.0
    %5828 = vmatpush1.msra.mxu0 0.0
    %5829 = vmatprep.subr.mxu0 0.0
    %5830 = vmatpush1.msra.mxu0 0.0
    %5831 = vmatprep.subr.mxu0 0.0
    %5832 = vmatpush1.msra.mxu0 %v5806
    %5833 = vmatprep.subr.mxu0 0.0
    %5834 = vmatpush1.msra.mxu0 %v5805
    %5835 = vmatprep.subr.mxu0 0.0
    %5836 = vmatpush1.msra.mxu0 %v5804
    %5837 = vmatprep.subr.mxu0 0.0
    %5838 = vmatpush1.msra.mxu0 %v5803
    %5839 = vmatprep.subr.mxu0 0.0
    %5840 = vmatpush2.msra.mxu0 0.0
    %5841 = vmatprep.subr.mxu0 0.0
    %5842 = vmatpush2.msra.mxu0 0.0
    %5843 = vmatprep.subr.mxu0 0.0
    %5844 = vmatpush2.msra.mxu0 0.0
    %5845 = vmatprep.subr.mxu0 0.0
    %5846 = vmatpush2.msra.mxu0 0.0
    %5847 = vmatprep.subr.mxu0 0.0
    %5848 = vmatpush2.msra.mxu0 0.0
    %5849 = vmatprep.subr.mxu0 0.0
    %5850 = vmatpush2.msra.mxu0 0.0
    %5851 = vmatprep.subr.mxu0 0.0
    %5852 = vmatpush2.msra.mxu0 0.0
    %5853 = vmatprep.subr.mxu0 0.0
    %5854 = vmatpush2.msra.mxu0 0.0
    %5855 = vmatprep.subr.mxu0 0.0
    %5856 = vmatpush2.msra.mxu0 0.0
    %5857 = vmatprep.subr.mxu0 0.0
    %5858 = vmatpush2.msra.mxu0 0.0
    %5859 = vmatprep.subr.mxu0 0.0
    %5860 = vmatpush2.msra.mxu0 0.0
    %5861 = vmatprep.subr.mxu0 0.0
    %5862 = vmatpush2.msra.mxu0 0.0
    %5863 = vmatprep.subr.mxu0 0.0
    %5864 = vmatpush2.msra.mxu0 0.0
    %5865 = vmatprep.subr.mxu0 0.0
    %5866 = vmatpush2.msra.mxu0 0.0
    %5867 = vmatprep.subr.mxu0 0.0
    %5868 = vmatpush2.msra.mxu0 0.0
    %5869 = vmatprep.subr.mxu0 0.0
    %5870 = vmatpush2.msra.mxu0 0.0
    %5871 = vmatprep.mubr.f32.mxu0 0.0
    %5872 = vmatmul.mubr.f32.gmra.mxu0 %v5577
    %v5873 = vpop.f32.mrf.mxu0
    %v5874 = vadd.f32 0.0, %v5873
    %v5875 = vpop.f32.mrf.mxu0
    %5876 = vdwg.mxu0
    %v5877 = vadd.f32 %v5802, %v5874
    %v5878 = vxor.u32 %v5649, 2147483648
    %v5879 = vmul.f32 %v5878, 1.442695
    %v5880 = vpow.pop %v5879
    %v5881 = vadd.f32 %v5880, 1.0
    %v5882 = vrcp.pop %v5881
    %v5883 = vmul.f32 1.0, %v5882
    %v5884 = vxor.u32 %v5725, 2147483648
    %v5885 = vmul.f32 %v5884, 1.442695
    %v5886 = vpow.pop %v5885
    %v5887 = vadd.f32 %v5886, 1.0
    %v5888 = vrcp.pop %v5887
    %v5889 = vmul.f32 1.0, %v5888
    %v5890 = vtanh.pop %v5801
    %v5891 = vxor.u32 %v5877, 2147483648
    %v5892 = vmul.f32 %v5891, 1.442695
    %v5893 = vpow.pop %v5892
    %v5894 = vadd.f32 %v5893, 1.0
    %v5895 = vrcp.pop %v5894
    %v5896 = vmul.f32 1.0, %v5895
    %v5897 = vmul.f32 %v5889, %v5570
    %v5898 = vmul.f32 %v5883, %v5890
    %v5899 = vadd.f32 %v5897, %v5898
    %v5900 = vtanh.pop %v5899
    %v5901 = vmul.f32 %v5896, %v5900
    %5902 = vst.msk [vmem:[#allocation7] sm:$0xff] %vm235, %v5901
    %5903 = vst.msk [vmem:[#allocation8] sm:$0xff] %vm235, %v5899
    %5904 = vst.msk [vmem:[%s2666] sm:$0xff] %vm235, %v5901
    %v5905 = vld [vmem:[#allocation7] sm:$0xff]
    %v5906 = vld [vmem:[#allocation8] sm:$0xff]
    %v5907 = vld [vmem:[%s2670] sm:$0xff]
    %v5908 = vld [vmem:[#allocation13] sm:$0xff]
    %v5909 = vld [vmem:[#allocation13 + $0x8] sm:$0xff]
    %v5910 = vld [vmem:[#allocation13 + $0x10] sm:$0xff]
    %v5911 = vld [vmem:[#allocation13 + $0x18] sm:$0xff]
    %v5913 = vsel %vm235, %v5905, 0
    %5915 = vmatprep.subr.mxu0 0.0
    %5916 = vmatpush1.msra.mxu0 0.0
    %5917 = vmatprep.subr.mxu0 0.0
    %5918 = vmatpush1.msra.mxu0 0.0
    %5919 = vmatprep.subr.mxu0 0.0
    %5920 = vmatpush1.msra.mxu0 0.0
    %5921 = vmatprep.subr.mxu0 0.0
    %5922 = vmatpush1.msra.mxu0 0.0
    %5923 = vmatprep.subr.mxu0 0.0
    %5924 = vmatpush1.msra.mxu0 0.0
    %5925 = vmatprep.subr.mxu0 0.0
    %5926 = vmatpush1.msra.mxu0 0.0
    %5927 = vmatprep.subr.mxu0 0.0
    %5928 = vmatpush1.msra.mxu0 0.0
    %5929 = vmatprep.subr.mxu0 0.0
    %5930 = vmatpush1.msra.mxu0 0.0
    %5931 = vmatprep.subr.mxu0 0.0
    %5932 = vmatpush1.msra.mxu0 0.0
    %5933 = vmatprep.subr.mxu0 0.0
    %5934 = vmatpush1.msra.mxu0 0.0
    %5935 = vmatprep.subr.mxu0 0.0
    %5936 = vmatpush1.msra.mxu0 0.0
    %5937 = vmatprep.subr.mxu0 0.0
    %5938 = vmatpush1.msra.mxu0 0.0
    %5939 = vmatprep.subr.mxu0 0.0
    %5940 = vmatpush1.msra.mxu0 %v5911
    %5941 = vmatprep.subr.mxu0 0.0
    %5942 = vmatpush1.msra.mxu0 %v5910
    %5943 = vmatprep.subr.mxu0 0.0
    %5944 = vmatpush1.msra.mxu0 %v5909
    %5945 = vmatprep.subr.mxu0 0.0
    %5946 = vmatpush1.msra.mxu0 %v5908
    %5947 = vmatprep.subr.mxu0 0.0
    %5948 = vmatpush2.msra.mxu0 0.0
    %5949 = vmatprep.subr.mxu0 0.0
    %5950 = vmatpush2.msra.mxu0 0.0
    %5951 = vmatprep.subr.mxu0 0.0
    %5952 = vmatpush2.msra.mxu0 0.0
    %5953 = vmatprep.subr.mxu0 0.0
    %5954 = vmatpush2.msra.mxu0 0.0
    %5955 = vmatprep.subr.mxu0 0.0
    %5956 = vmatpush2.msra.mxu0 0.0
    %5957 = vmatprep.subr.mxu0 0.0
    %5958 = vmatpush2.msra.mxu0 0.0
    %5959 = vmatprep.subr.mxu0 0.0
    %5960 = vmatpush2.msra.mxu0 0.0
    %5961 = vmatprep.subr.mxu0 0.0
    %5962 = vmatpush2.msra.mxu0 0.0
    %5963 = vmatprep.subr.mxu0 0.0
    %5964 = vmatpush2.msra.mxu0 0.0
    %5965 = vmatprep.subr.mxu0 0.0
    %5966 = vmatpush2.msra.mxu0 0.0
    %5967 = vmatprep.subr.mxu0 0.0
    %5968 = vmatpush2.msra.mxu0 0.0
    %5969 = vmatprep.subr.mxu0 0.0
    %5970 = vmatpush2.msra.mxu0 0.0
    %5971 = vmatprep.subr.mxu0 0.0
    %5972 = vmatpush2.msra.mxu0 0.0
    %5973 = vmatprep.subr.mxu0 0.0
    %5974 = vmatpush2.msra.mxu0 0.0
    %5975 = vmatprep.subr.mxu0 0.0
    %5976 = vmatpush2.msra.mxu0 0.0
    %5977 = vmatprep.subr.mxu0 0.0
    %5978 = vmatpush2.msra.mxu0 0.0
    %5979 = vmatprep.mubr.f32.mxu0 0.0
    %5980 = vmatmul.mubr.f32.gmra.mxu0 %v5913
    %v5981 = vpop.f32.mrf.mxu0
    %v5982 = vadd.f32 0.0, %v5981
    %v5983 = vpop.f32.mrf.mxu0
    %5984 = vdwg.mxu0
    %v5985 = vadd.f32 %v5907, %v5982
    %v5986 = vld [vmem:[%s2750] sm:$0xff]
    %v5987 = vld [vmem:[%s3968] sm:$0xff]
    %v5988 = vld [vmem:[%s3968 + $0x8] sm:$0xff]
    %v5989 = vld [vmem:[%s3968 + $0x10] sm:$0xff]
    %v5990 = vld [vmem:[%s3968 + $0x18] sm:$0xff]
    %5991 = vmatprep.subr.mxu0 0.0
    %5992 = vmatpush1.msra.mxu0 0.0
    %5993 = vmatprep.subr.mxu0 0.0
    %5994 = vmatpush1.msra.mxu0 0.0
    %5995 = vmatprep.subr.mxu0 0.0
    %5996 = vmatpush1.msra.mxu0 0.0
    %5997 = vmatprep.subr.mxu0 0.0
    %5998 = vmatpush1.msra.mxu0 0.0
    %5999 = vmatprep.subr.mxu0 0.0
    %6000 = vmatpush1.msra.mxu0 0.0
    %6001 = vmatprep.subr.mxu0 0.0
    %6002 = vmatpush1.msra.mxu0 0.0
    %6003 = vmatprep.subr.mxu0 0.0
    %6004 = vmatpush1.msra.mxu0 0.0
    %6005 = vmatprep.subr.mxu0 0.0
    %6006 = vmatpush1.msra.mxu0 0.0
    %6007 = vmatprep.subr.mxu0 0.0
    %6008 = vmatpush1.msra.mxu0 0.0
    %6009 = vmatprep.subr.mxu0 0.0
    %6010 = vmatpush1.msra.mxu0 0.0
    %6011 = vmatprep.subr.mxu0 0.0
    %6012 = vmatpush1.msra.mxu0 0.0
    %6013 = vmatprep.subr.mxu0 0.0
    %6014 = vmatpush1.msra.mxu0 0.0
    %6015 = vmatprep.subr.mxu0 0.0
    %6016 = vmatpush1.msra.mxu0 %v5990
    %6017 = vmatprep.subr.mxu0 0.0
    %6018 = vmatpush1.msra.mxu0 %v5989
    %6019 = vmatprep.subr.mxu0 0.0
    %6020 = vmatpush1.msra.mxu0 %v5988
    %6021 = vmatprep.subr.mxu0 0.0
    %6022 = vmatpush1.msra.mxu0 %v5987
    %6023 = vmatprep.subr.mxu0 0.0
    %6024 = vmatpush2.msra.mxu0 0.0
    %6025 = vmatprep.subr.mxu0 0.0
    %6026 = vmatpush2.msra.mxu0 0.0
    %6027 = vmatprep.subr.mxu0 0.0
    %6028 = vmatpush2.msra.mxu0 0.0
    %6029 = vmatprep.subr.mxu0 0.0
    %6030 = vmatpush2.msra.mxu0 0.0
    %6031 = vmatprep.subr.mxu0 0.0
    %6032 = vmatpush2.msra.mxu0 0.0
    %6033 = vmatprep.subr.mxu0 0.0
    %6034 = vmatpush2.msra.mxu0 0.0
    %6035 = vmatprep.subr.mxu0 0.0
    %6036 = vmatpush2.msra.mxu0 0.0
    %6037 = vmatprep.subr.mxu0 0.0
    %6038 = vmatpush2.msra.mxu0 0.0
    %6039 = vmatprep.subr.mxu0 0.0
    %6040 = vmatpush2.msra.mxu0 0.0
    %6041 = vmatprep.subr.mxu0 0.0
    %6042 = vmatpush2.msra.mxu0 0.0
    %6043 = vmatprep.subr.mxu0 0.0
    %6044 = vmatpush2.msra.mxu0 0.0
    %6045 = vmatprep.subr.mxu0 0.0
    %6046 = vmatpush2.msra.mxu0 0.0
    %6047 = vmatprep.subr.mxu0 0.0
    %6048 = vmatpush2.msra.mxu0 0.0
    %6049 = vmatprep.subr.mxu0 0.0
    %6050 = vmatpush2.msra.mxu0 0.0
    %6051 = vmatprep.subr.mxu0 0.0
    %6052 = vmatpush2.msra.mxu0 0.0
    %6053 = vmatprep.subr.mxu0 0.0
    %6054 = vmatpush2.msra.mxu0 0.0
    %6055 = vmatprep.mubr.f32.mxu0 0.0
    %6056 = vmatmul.mubr.f32.gmra.mxu0 %v5913
    %v6057 = vpop.f32.mrf.mxu0
    %v6058 = vadd.f32 0.0, %v6057
    %v6059 = vpop.f32.mrf.mxu0
    %6060 = vdwg.mxu0
    %v6061 = vadd.f32 %v5986, %v6058
    %v6062 = vld [vmem:[%s2827] sm:$0xff]
    %v6063 = vld [vmem:[%s4045] sm:$0xff]
    %v6064 = vld [vmem:[%s4045 + $0x8] sm:$0xff]
    %v6065 = vld [vmem:[%s4045 + $0x10] sm:$0xff]
    %v6066 = vld [vmem:[%s4045 + $0x18] sm:$0xff]
    %6067 = vmatprep.subr.mxu0 0.0
    %6068 = vmatpush1.msra.mxu0 0.0
    %6069 = vmatprep.subr.mxu0 0.0
    %6070 = vmatpush1.msra.mxu0 0.0
    %6071 = vmatprep.subr.mxu0 0.0
    %6072 = vmatpush1.msra.mxu0 0.0
    %6073 = vmatprep.subr.mxu0 0.0
    %6074 = vmatpush1.msra.mxu0 0.0
    %6075 = vmatprep.subr.mxu0 0.0
    %6076 = vmatpush1.msra.mxu0 0.0
    %6077 = vmatprep.subr.mxu0 0.0
    %6078 = vmatpush1.msra.mxu0 0.0
    %6079 = vmatprep.subr.mxu0 0.0
    %6080 = vmatpush1.msra.mxu0 0.0
    %6081 = vmatprep.subr.mxu0 0.0
    %6082 = vmatpush1.msra.mxu0 0.0
    %6083 = vmatprep.subr.mxu0 0.0
    %6084 = vmatpush1.msra.mxu0 0.0
    %6085 = vmatprep.subr.mxu0 0.0
    %6086 = vmatpush1.msra.mxu0 0.0
    %6087 = vmatprep.subr.mxu0 0.0
    %6088 = vmatpush1.msra.mxu0 0.0
    %6089 = vmatprep.subr.mxu0 0.0
    %6090 = vmatpush1.msra.mxu0 0.0
    %6091 = vmatprep.subr.mxu0 0.0
    %6092 = vmatpush1.msra.mxu0 %v6066
    %6093 = vmatprep.subr.mxu0 0.0
    %6094 = vmatpush1.msra.mxu0 %v6065
    %6095 = vmatprep.subr.mxu0 0.0
    %6096 = vmatpush1.msra.mxu0 %v6064
    %6097 = vmatprep.subr.mxu0 0.0
    %6098 = vmatpush1.msra.mxu0 %v6063
    %6099 = vmatprep.subr.mxu0 0.0
    %6100 = vmatpush2.msra.mxu0 0.0
    %6101 = vmatprep.subr.mxu0 0.0
    %6102 = vmatpush2.msra.mxu0 0.0
    %6103 = vmatprep.subr.mxu0 0.0
    %6104 = vmatpush2.msra.mxu0 0.0
    %6105 = vmatprep.subr.mxu0 0.0
    %6106 = vmatpush2.msra.mxu0 0.0
    %6107 = vmatprep.subr.mxu0 0.0
    %6108 = vmatpush2.msra.mxu0 0.0
    %6109 = vmatprep.subr.mxu0 0.0
    %6110 = vmatpush2.msra.mxu0 0.0
    %6111 = vmatprep.subr.mxu0 0.0
    %6112 = vmatpush2.msra.mxu0 0.0
    %6113 = vmatprep.subr.mxu0 0.0
    %6114 = vmatpush2.msra.mxu0 0.0
    %6115 = vmatprep.subr.mxu0 0.0
    %6116 = vmatpush2.msra.mxu0 0.0
    %6117 = vmatprep.subr.mxu0 0.0
    %6118 = vmatpush2.msra.mxu0 0.0
    %6119 = vmatprep.subr.mxu0 0.0
    %6120 = vmatpush2.msra.mxu0 0.0
    %6121 = vmatprep.subr.mxu0 0.0
    %6122 = vmatpush2.msra.mxu0 0.0
    %6123 = vmatprep.subr.mxu0 0.0
    %6124 = vmatpush2.msra.mxu0 0.0
    %6125 = vmatprep.subr.mxu0 0.0
    %6126 = vmatpush2.msra.mxu0 0.0
    %6127 = vmatprep.subr.mxu0 0.0
    %6128 = vmatpush2.msra.mxu0 0.0
    %6129 = vmatprep.subr.mxu0 0.0
    %6130 = vmatpush2.msra.mxu0 0.0
    %6131 = vmatprep.mubr.f32.mxu0 0.0
    %6132 = vmatmul.mubr.f32.gmra.mxu0 %v5913
    %v6133 = vpop.f32.mrf.mxu0
    %v6134 = vadd.f32 0.0, %v6133
    %v6135 = vpop.f32.mrf.mxu0
    %6136 = vdwg.mxu0
    %v6137 = vadd.f32 %v6062, %v6134
    %v6138 = vld [vmem:[%s2904] sm:$0xff]
    %v6139 = vld [vmem:[%s4122] sm:$0xff]
    %v6140 = vld [vmem:[%s4122 + $0x8] sm:$0xff]
    %v6141 = vld [vmem:[%s4122 + $0x10] sm:$0xff]
    %v6142 = vld [vmem:[%s4122 + $0x18] sm:$0xff]
    %6143 = vmatprep.subr.mxu0 0.0
    %6144 = vmatpush1.msra.mxu0 0.0
    %6145 = vmatprep.subr.mxu0 0.0
    %6146 = vmatpush1.msra.mxu0 0.0
    %6147 = vmatprep.subr.mxu0 0.0
    %6148 = vmatpush1.msra.mxu0 0.0
    %6149 = vmatprep.subr.mxu0 0.0
    %6150 = vmatpush1.msra.mxu0 0.0
    %6151 = vmatprep.subr.mxu0 0.0
    %6152 = vmatpush1.msra.mxu0 0.0
    %6153 = vmatprep.subr.mxu0 0.0
    %6154 = vmatpush1.msra.mxu0 0.0
    %6155 = vmatprep.subr.mxu0 0.0
    %6156 = vmatpush1.msra.mxu0 0.0
    %6157 = vmatprep.subr.mxu0 0.0
    %6158 = vmatpush1.msra.mxu0 0.0
    %6159 = vmatprep.subr.mxu0 0.0
    %6160 = vmatpush1.msra.mxu0 0.0
    %6161 = vmatprep.subr.mxu0 0.0
    %6162 = vmatpush1.msra.mxu0 0.0
    %6163 = vmatprep.subr.mxu0 0.0
    %6164 = vmatpush1.msra.mxu0 0.0
    %6165 = vmatprep.subr.mxu0 0.0
    %6166 = vmatpush1.msra.mxu0 0.0
    %6167 = vmatprep.subr.mxu0 0.0
    %6168 = vmatpush1.msra.mxu0 %v6142
    %6169 = vmatprep.subr.mxu0 0.0
    %6170 = vmatpush1.msra.mxu0 %v6141
    %6171 = vmatprep.subr.mxu0 0.0
    %6172 = vmatpush1.msra.mxu0 %v6140
    %6173 = vmatprep.subr.mxu0 0.0
    %6174 = vmatpush1.msra.mxu0 %v6139
    %6175 = vmatprep.subr.mxu0 0.0
    %6176 = vmatpush2.msra.mxu0 0.0
    %6177 = vmatprep.subr.mxu0 0.0
    %6178 = vmatpush2.msra.mxu0 0.0
    %6179 = vmatprep.subr.mxu0 0.0
    %6180 = vmatpush2.msra.mxu0 0.0
    %6181 = vmatprep.subr.mxu0 0.0
    %6182 = vmatpush2.msra.mxu0 0.0
    %6183 = vmatprep.subr.mxu0 0.0
    %6184 = vmatpush2.msra.mxu0 0.0
    %6185 = vmatprep.subr.mxu0 0.0
    %6186 = vmatpush2.msra.mxu0 0.0
    %6187 = vmatprep.subr.mxu0 0.0
    %6188 = vmatpush2.msra.mxu0 0.0
    %6189 = vmatprep.subr.mxu0 0.0
    %6190 = vmatpush2.msra.mxu0 0.0
    %6191 = vmatprep.subr.mxu0 0.0
    %6192 = vmatpush2.msra.mxu0 0.0
    %6193 = vmatprep.subr.mxu0 0.0
    %6194 = vmatpush2.msra.mxu0 0.0
    %6195 = vmatprep.subr.mxu0 0.0
    %6196 = vmatpush2.msra.mxu0 0.0
    %6197 = vmatprep.subr.mxu0 0.0
    %6198 = vmatpush2.msra.mxu0 0.0
    %6199 = vmatprep.subr.mxu0 0.0
    %6200 = vmatpush2.msra.mxu0 0.0
    %6201 = vmatprep.subr.mxu0 0.0
    %6202 = vmatpush2.msra.mxu0 0.0
    %6203 = vmatprep.subr.mxu0 0.0
    %6204 = vmatpush2.msra.mxu0 0.0
    %6205 = vmatprep.subr.mxu0 0.0
    %6206 = vmatpush2.msra.mxu0 0.0
    %6207 = vmatprep.mubr.f32.mxu0 0.0
    %6208 = vmatmul.mubr.f32.gmra.mxu0 %v5913
    %v6209 = vpop.f32.mrf.mxu0
    %v6210 = vadd.f32 0.0, %v6209
    %v6211 = vpop.f32.mrf.mxu0
    %6212 = vdwg.mxu0
    %v6213 = vadd.f32 %v6138, %v6210
    %v6214 = vxor.u32 %v5985, 2147483648
    %v6215 = vmul.f32 %v6214, 1.442695
    %v6216 = vpow.pop %v6215
    %v6217 = vadd.f32 %v6216, 1.0
    %v6218 = vrcp.pop %v6217
    %v6219 = vmul.f32 1.0, %v6218
    %v6220 = vxor.u32 %v6061, 2147483648
    %v6221 = vmul.f32 %v6220, 1.442695
    %v6222 = vpow.pop %v6221
    %v6223 = vadd.f32 %v6222, 1.0
    %v6224 = vrcp.pop %v6223
    %v6225 = vmul.f32 1.0, %v6224
    %v6226 = vtanh.pop %v6137
    %v6227 = vxor.u32 %v6213, 2147483648
    %v6228 = vmul.f32 %v6227, 1.442695
    %v6229 = vpow.pop %v6228
    %v6230 = vadd.f32 %v6229, 1.0
    %v6231 = vrcp.pop %v6230
    %v6232 = vmul.f32 1.0, %v6231
    %v6233 = vmul.f32 %v6225, %v5906
    %v6234 = vmul.f32 %v6219, %v6226
    %v6235 = vadd.f32 %v6233, %v6234
    %v6236 = vtanh.pop %v6235
    %v6237 = vmul.f32 %v6232, %v6236
    %6238 = vst.msk [vmem:[#allocation7] sm:$0xff] %vm235, %v6237
    %6239 = vst.msk [vmem:[#allocation8] sm:$0xff] %vm235, %v6235
    %6240 = vst.msk [vmem:[%s3007] sm:$0xff] %vm235, %v6237
    %v6241 = vld [vmem:[#allocation7] sm:$0xff]
    %v6242 = vld [vmem:[#allocation8] sm:$0xff]
    %v6243 = vld [vmem:[%s3011] sm:$0xff]
    %v6244 = vld [vmem:[#allocation13] sm:$0xff]
    %v6245 = vld [vmem:[#allocation13 + $0x8] sm:$0xff]
    %v6246 = vld [vmem:[#allocation13 + $0x10] sm:$0xff]
    %v6247 = vld [vmem:[#allocation13 + $0x18] sm:$0xff]
    %v6249 = vsel %vm235, %v6241, 0
    %6251 = vmatprep.subr.mxu0 0.0
    %6252 = vmatpush1.msra.mxu0 0.0
    %6253 = vmatprep.subr.mxu0 0.0
    %6254 = vmatpush1.msra.mxu0 0.0
    %6255 = vmatprep.subr.mxu0 0.0
    %6256 = vmatpush1.msra.mxu0 0.0
    %6257 = vmatprep.subr.mxu0 0.0
    %6258 = vmatpush1.msra.mxu0 0.0
    %6259 = vmatprep.subr.mxu0 0.0
    %6260 = vmatpush1.msra.mxu0 0.0
    %6261 = vmatprep.subr.mxu0 0.0
    %6262 = vmatpush1.msra.mxu0 0.0
    %6263 = vmatprep.subr.mxu0 0.0
    %6264 = vmatpush1.msra.mxu0 0.0
    %6265 = vmatprep.subr.mxu0 0.0
    %6266 = vmatpush1.msra.mxu0 0.0
    %6267 = vmatprep.subr.mxu0 0.0
    %6268 = vmatpush1.msra.mxu0 0.0
    %6269 = vmatprep.subr.mxu0 0.0
    %6270 = vmatpush1.msra.mxu0 0.0
    %6271 = vmatprep.subr.mxu0 0.0
    %6272 = vmatpush1.msra.mxu0 0.0
    %6273 = vmatprep.subr.mxu0 0.0
    %6274 = vmatpush1.msra.mxu0 0.0
    %6275 = vmatprep.subr.mxu0 0.0
    %6276 = vmatpush1.msra.mxu0 %v6247
    %6277 = vmatprep.subr.mxu0 0.0
    %6278 = vmatpush1.msra.mxu0 %v6246
    %6279 = vmatprep.subr.mxu0 0.0
    %6280 = vmatpush1.msra.mxu0 %v6245
    %6281 = vmatprep.subr.mxu0 0.0
    %6282 = vmatpush1.msra.mxu0 %v6244
    %6283 = vmatprep.subr.mxu0 0.0
    %6284 = vmatpush2.msra.mxu0 0.0
    %6285 = vmatprep.subr.mxu0 0.0
    %6286 = vmatpush2.msra.mxu0 0.0
    %6287 = vmatprep.subr.mxu0 0.0
    %6288 = vmatpush2.msra.mxu0 0.0
    %6289 = vmatprep.subr.mxu0 0.0
    %6290 = vmatpush2.msra.mxu0 0.0
    %6291 = vmatprep.subr.mxu0 0.0
    %6292 = vmatpush2.msra.mxu0 0.0
    %6293 = vmatprep.subr.mxu0 0.0
    %6294 = vmatpush2.msra.mxu0 0.0
    %6295 = vmatprep.subr.mxu0 0.0
    %6296 = vmatpush2.msra.mxu0 0.0
    %6297 = vmatprep.subr.mxu0 0.0
    %6298 = vmatpush2.msra.mxu0 0.0
    %6299 = vmatprep.subr.mxu0 0.0
    %6300 = vmatpush2.msra.mxu0 0.0
    %6301 = vmatprep.subr.mxu0 0.0
    %6302 = vmatpush2.msra.mxu0 0.0
    %6303 = vmatprep.subr.mxu0 0.0
    %6304 = vmatpush2.msra.mxu0 0.0
    %6305 = vmatprep.subr.mxu0 0.0
    %6306 = vmatpush2.msra.mxu0 0.0
    %6307 = vmatprep.subr.mxu0 0.0
    %6308 = vmatpush2.msra.mxu0 0.0
    %6309 = vmatprep.subr.mxu0 0.0
    %6310 = vmatpush2.msra.mxu0 0.0
    %6311 = vmatprep.subr.mxu0 0.0
    %6312 = vmatpush2.msra.mxu0 0.0
    %6313 = vmatprep.subr.mxu0 0.0
    %6314 = vmatpush2.msra.mxu0 0.0
    %6315 = vmatprep.mubr.f32.mxu0 0.0
    %6316 = vmatmul.mubr.f32.gmra.mxu0 %v6249
    %v6317 = vpop.f32.mrf.mxu0
    %v6318 = vadd.f32 0.0, %v6317
    %v6319 = vpop.f32.mrf.mxu0
    %6320 = vdwg.mxu0
    %v6321 = vadd.f32 %v6243, %v6318
    %v6322 = vld [vmem:[%s3091] sm:$0xff]
    %v6323 = vld [vmem:[%s3968] sm:$0xff]
    %v6324 = vld [vmem:[%s3968 + $0x8] sm:$0xff]
    %v6325 = vld [vmem:[%s3968 + $0x10] sm:$0xff]
    %v6326 = vld [vmem:[%s3968 + $0x18] sm:$0xff]
    %6327 = vmatprep.subr.mxu0 0.0
    %6328 = vmatpush1.msra.mxu0 0.0
    %6329 = vmatprep.subr.mxu0 0.0
    %6330 = vmatpush1.msra.mxu0 0.0
    %6331 = vmatprep.subr.mxu0 0.0
    %6332 = vmatpush1.msra.mxu0 0.0
    %6333 = vmatprep.subr.mxu0 0.0
    %6334 = vmatpush1.msra.mxu0 0.0
    %6335 = vmatprep.subr.mxu0 0.0
    %6336 = vmatpush1.msra.mxu0 0.0
    %6337 = vmatprep.subr.mxu0 0.0
    %6338 = vmatpush1.msra.mxu0 0.0
    %6339 = vmatprep.subr.mxu0 0.0
    %6340 = vmatpush1.msra.mxu0 0.0
    %6341 = vmatprep.subr.mxu0 0.0
    %6342 = vmatpush1.msra.mxu0 0.0
    %6343 = vmatprep.subr.mxu0 0.0
    %6344 = vmatpush1.msra.mxu0 0.0
    %6345 = vmatprep.subr.mxu0 0.0
    %6346 = vmatpush1.msra.mxu0 0.0
    %6347 = vmatprep.subr.mxu0 0.0
    %6348 = vmatpush1.msra.mxu0 0.0
    %6349 = vmatprep.subr.mxu0 0.0
    %6350 = vmatpush1.msra.mxu0 0.0
    %6351 = vmatprep.subr.mxu0 0.0
    %6352 = vmatpush1.msra.mxu0 %v6326
    %6353 = vmatprep.subr.mxu0 0.0
    %6354 = vmatpush1.msra.mxu0 %v6325
    %6355 = vmatprep.subr.mxu0 0.0
    %6356 = vmatpush1.msra.mxu0 %v6324
    %6357 = vmatprep.subr.mxu0 0.0
    %6358 = vmatpush1.msra.mxu0 %v6323
    %6359 = vmatprep.subr.mxu0 0.0
    %6360 = vmatpush2.msra.mxu0 0.0
    %6361 = vmatprep.subr.mxu0 0.0
    %6362 = vmatpush2.msra.mxu0 0.0
    %6363 = vmatprep.subr.mxu0 0.0
    %6364 = vmatpush2.msra.mxu0 0.0
    %6365 = vmatprep.subr.mxu0 0.0
    %6366 = vmatpush2.msra.mxu0 0.0
    %6367 = vmatprep.subr.mxu0 0.0
    %6368 = vmatpush2.msra.mxu0 0.0
    %6369 = vmatprep.subr.mxu0 0.0
    %6370 = vmatpush2.msra.mxu0 0.0
    %6371 = vmatprep.subr.mxu0 0.0
    %6372 = vmatpush2.msra.mxu0 0.0
    %6373 = vmatprep.subr.mxu0 0.0
    %6374 = vmatpush2.msra.mxu0 0.0
    %6375 = vmatprep.subr.mxu0 0.0
    %6376 = vmatpush2.msra.mxu0 0.0
    %6377 = vmatprep.subr.mxu0 0.0
    %6378 = vmatpush2.msra.mxu0 0.0
    %6379 = vmatprep.subr.mxu0 0.0
    %6380 = vmatpush2.msra.mxu0 0.0
    %6381 = vmatprep.subr.mxu0 0.0
    %6382 = vmatpush2.msra.mxu0 0.0
    %6383 = vmatprep.subr.mxu0 0.0
    %6384 = vmatpush2.msra.mxu0 0.0
    %6385 = vmatprep.subr.mxu0 0.0
    %6386 = vmatpush2.msra.mxu0 0.0
    %6387 = vmatprep.subr.mxu0 0.0
    %6388 = vmatpush2.msra.mxu0 0.0
    %6389 = vmatprep.subr.mxu0 0.0
    %6390 = vmatpush2.msra.mxu0 0.0
    %6391 = vmatprep.mubr.f32.mxu0 0.0
    %6392 = vmatmul.mubr.f32.gmra.mxu0 %v6249
    %v6393 = vpop.f32.mrf.mxu0
    %v6394 = vadd.f32 0.0, %v6393
    %v6395 = vpop.f32.mrf.mxu0
    %6396 = vdwg.mxu0
    %v6397 = vadd.f32 %v6322, %v6394
    %v6398 = vld [vmem:[%s3168] sm:$0xff]
    %v6399 = vld [vmem:[%s4045] sm:$0xff]
    %v6400 = vld [vmem:[%s4045 + $0x8] sm:$0xff]
    %v6401 = vld [vmem:[%s4045 + $0x10] sm:$0xff]
    %v6402 = vld [vmem:[%s4045 + $0x18] sm:$0xff]
    %6403 = vmatprep.subr.mxu0 0.0
    %6404 = vmatpush1.msra.mxu0 0.0
    %6405 = vmatprep.subr.mxu0 0.0
    %6406 = vmatpush1.msra.mxu0 0.0
    %6407 = vmatprep.subr.mxu0 0.0
    %6408 = vmatpush1.msra.mxu0 0.0
    %6409 = vmatprep.subr.mxu0 0.0
    %6410 = vmatpush1.msra.mxu0 0.0
    %6411 = vmatprep.subr.mxu0 0.0
    %6412 = vmatpush1.msra.mxu0 0.0
    %6413 = vmatprep.subr.mxu0 0.0
    %6414 = vmatpush1.msra.mxu0 0.0
    %6415 = vmatprep.subr.mxu0 0.0
    %6416 = vmatpush1.msra.mxu0 0.0
    %6417 = vmatprep.subr.mxu0 0.0
    %6418 = vmatpush1.msra.mxu0 0.0
    %6419 = vmatprep.subr.mxu0 0.0
    %6420 = vmatpush1.msra.mxu0 0.0
    %6421 = vmatprep.subr.mxu0 0.0
    %6422 = vmatpush1.msra.mxu0 0.0
    %6423 = vmatprep.subr.mxu0 0.0
    %6424 = vmatpush1.msra.mxu0 0.0
    %6425 = vmatprep.subr.mxu0 0.0
    %6426 = vmatpush1.msra.mxu0 0.0
    %6427 = vmatprep.subr.mxu0 0.0
    %6428 = vmatpush1.msra.mxu0 %v6402
    %6429 = vmatprep.subr.mxu0 0.0
    %6430 = vmatpush1.msra.mxu0 %v6401
    %6431 = vmatprep.subr.mxu0 0.0
    %6432 = vmatpush1.msra.mxu0 %v6400
    %6433 = vmatprep.subr.mxu0 0.0
    %6434 = vmatpush1.msra.mxu0 %v6399
    %6435 = vmatprep.subr.mxu0 0.0
    %6436 = vmatpush2.msra.mxu0 0.0
    %6437 = vmatprep.subr.mxu0 0.0
    %6438 = vmatpush2.msra.mxu0 0.0
    %6439 = vmatprep.subr.mxu0 0.0
    %6440 = vmatpush2.msra.mxu0 0.0
    %6441 = vmatprep.subr.mxu0 0.0
    %6442 = vmatpush2.msra.mxu0 0.0
    %6443 = vmatprep.subr.mxu0 0.0
    %6444 = vmatpush2.msra.mxu0 0.0
    %6445 = vmatprep.subr.mxu0 0.0
    %6446 = vmatpush2.msra.mxu0 0.0
    %6447 = vmatprep.subr.mxu0 0.0
    %6448 = vmatpush2.msra.mxu0 0.0
    %6449 = vmatprep.subr.mxu0 0.0
    %6450 = vmatpush2.msra.mxu0 0.0
    %6451 = vmatprep.subr.mxu0 0.0
    %6452 = vmatpush2.msra.mxu0 0.0
    %6453 = vmatprep.subr.mxu0 0.0
    %6454 = vmatpush2.msra.mxu0 0.0
    %6455 = vmatprep.subr.mxu0 0.0
    %6456 = vmatpush2.msra.mxu0 0.0
    %6457 = vmatprep.subr.mxu0 0.0
    %6458 = vmatpush2.msra.mxu0 0.0
    %6459 = vmatprep.subr.mxu0 0.0
    %6460 = vmatpush2.msra.mxu0 0.0
    %6461 = vmatprep.subr.mxu0 0.0
    %6462 = vmatpush2.msra.mxu0 0.0
    %6463 = vmatprep.subr.mxu0 0.0
    %6464 = vmatpush2.msra.mxu0 0.0
    %6465 = vmatprep.subr.mxu0 0.0
    %6466 = vmatpush2.msra.mxu0 0.0
    %6467 = vmatprep.mubr.f32.mxu0 0.0
    %6468 = vmatmul.mubr.f32.gmra.mxu0 %v6249
    %v6469 = vpop.f32.mrf.mxu0
    %v6470 = vadd.f32 0.0, %v6469
    %v6471 = vpop.f32.mrf.mxu0
    %6472 = vdwg.mxu0
    %v6473 = vadd.f32 %v6398, %v6470
    %v6474 = vld [vmem:[%s3245] sm:$0xff]
    %v6475 = vld [vmem:[%s4122] sm:$0xff]
    %v6476 = vld [vmem:[%s4122 + $0x8] sm:$0xff]
    %v6477 = vld [vmem:[%s4122 + $0x10] sm:$0xff]
    %v6478 = vld [vmem:[%s4122 + $0x18] sm:$0xff]
    %6479 = vmatprep.subr.mxu0 0.0
    %6480 = vmatpush1.msra.mxu0 0.0
    %6481 = vmatprep.subr.mxu0 0.0
    %6482 = vmatpush1.msra.mxu0 0.0
    %6483 = vmatprep.subr.mxu0 0.0
    %6484 = vmatpush1.msra.mxu0 0.0
    %6485 = vmatprep.subr.mxu0 0.0
    %6486 = vmatpush1.msra.mxu0 0.0
    %6487 = vmatprep.subr.mxu0 0.0
    %6488 = vmatpush1.msra.mxu0 0.0
    %6489 = vmatprep.subr.mxu0 0.0
    %6490 = vmatpush1.msra.mxu0 0.0
    %6491 = vmatprep.subr.mxu0 0.0
    %6492 = vmatpush1.msra.mxu0 0.0
    %6493 = vmatprep.subr.mxu0 0.0
    %6494 = vmatpush1.msra.mxu0 0.0
    %6495 = vmatprep.subr.mxu0 0.0
    %6496 = vmatpush1.msra.mxu0 0.0
    %6497 = vmatprep.subr.mxu0 0.0
    %6498 = vmatpush1.msra.mxu0 0.0
    %6499 = vmatprep.subr.mxu0 0.0
    %6500 = vmatpush1.msra.mxu0 0.0
    %6501 = vmatprep.subr.mxu0 0.0
    %6502 = vmatpush1.msra.mxu0 0.0
    %6503 = vmatprep.subr.mxu0 0.0
    %6504 = vmatpush1.msra.mxu0 %v6478
    %6505 = vmatprep.subr.mxu0 0.0
    %6506 = vmatpush1.msra.mxu0 %v6477
    %6507 = vmatprep.subr.mxu0 0.0
    %6508 = vmatpush1.msra.mxu0 %v6476
    %6509 = vmatprep.subr.mxu0 0.0
    %6510 = vmatpush1.msra.mxu0 %v6475
    %6511 = vmatprep.subr.mxu0 0.0
    %6512 = vmatpush2.msra.mxu0 0.0
    %6513 = vmatprep.subr.mxu0 0.0
    %6514 = vmatpush2.msra.mxu0 0.0
    %6515 = vmatprep.subr.mxu0 0.0
    %6516 = vmatpush2.msra.mxu0 0.0
    %6517 = vmatprep.subr.mxu0 0.0
    %6518 = vmatpush2.msra.mxu0 0.0
    %6519 = vmatprep.subr.mxu0 0.0
    %6520 = vmatpush2.msra.mxu0 0.0
    %6521 = vmatprep.subr.mxu0 0.0
    %6522 = vmatpush2.msra.mxu0 0.0
    %6523 = vmatprep.subr.mxu0 0.0
    %6524 = vmatpush2.msra.mxu0 0.0
    %6525 = vmatprep.subr.mxu0 0.0
    %6526 = vmatpush2.msra.mxu0 0.0
    %6527 = vmatprep.subr.mxu0 0.0
    %6528 = vmatpush2.msra.mxu0 0.0
    %6529 = vmatprep.subr.mxu0 0.0
    %6530 = vmatpush2.msra.mxu0 0.0
    %6531 = vmatprep.subr.mxu0 0.0
    %6532 = vmatpush2.msra.mxu0 0.0
    %6533 = vmatprep.subr.mxu0 0.0
    %6534 = vmatpush2.msra.mxu0 0.0
    %6535 = vmatprep.subr.mxu0 0.0
    %6536 = vmatpush2.msra.mxu0 0.0
    %6537 = vmatprep.subr.mxu0 0.0
    %6538 = vmatpush2.msra.mxu0 0.0
    %6539 = vmatprep.subr.mxu0 0.0
    %6540 = vmatpush2.msra.mxu0 0.0
    %6541 = vmatprep.subr.mxu0 0.0
    %6542 = vmatpush2.msra.mxu0 0.0
    %6543 = vmatprep.mubr.f32.mxu0 0.0
    %6544 = vmatmul.mubr.f32.gmra.mxu0 %v6249
    %v6545 = vpop.f32.mrf.mxu0
    %v6546 = vadd.f32 0.0, %v6545
    %v6547 = vpop.f32.mrf.mxu0
    %6548 = vdwg.mxu0
    %v6549 = vadd.f32 %v6474, %v6546
    %v6550 = vxor.u32 %v6321, 2147483648
    %v6551 = vmul.f32 %v6550, 1.442695
    %v6552 = vpow.pop %v6551
    %v6553 = vadd.f32 %v6552, 1.0
    %v6554 = vrcp.pop %v6553
    %v6555 = vmul.f32 1.0, %v6554
    %v6556 = vxor.u32 %v6397, 2147483648
    %v6557 = vmul.f32 %v6556, 1.442695
    %v6558 = vpow.pop %v6557
    %v6559 = vadd.f32 %v6558, 1.0
    %v6560 = vrcp.pop %v6559
    %v6561 = vmul.f32 1.0, %v6560
    %v6562 = vtanh.pop %v6473
    %v6563 = vxor.u32 %v6549, 2147483648
    %v6564 = vmul.f32 %v6563, 1.442695
    %v6565 = vpow.pop %v6564
    %v6566 = vadd.f32 %v6565, 1.0
    %v6567 = vrcp.pop %v6566
    %v6568 = vmul.f32 1.0, %v6567
    %v6569 = vmul.f32 %v6561, %v6242
    %v6570 = vmul.f32 %v6555, %v6562
    %v6571 = vadd.f32 %v6569, %v6570
    %v6572 = vtanh.pop %v6571
    %v6573 = vmul.f32 %v6568, %v6572
    %6574 = vst.msk [vmem:[#allocation7] sm:$0xff] %vm235, %v6573
    %6575 = vst.msk [vmem:[#allocation8] sm:$0xff] %vm235, %v6571
    %6576 = vst.msk [vmem:[%s3348] sm:$0xff] %vm235, %v6573
    %v6577 = vld [vmem:[#allocation2] sm:$0xff]
    %v6578 = vld [vmem:[#allocation2 + $0x8] sm:$0xff]
    %v6579 = vld [vmem:[#allocation2 + $0x10] sm:$0xff]
    %v6580 = vld [vmem:[#allocation2 + $0x18] sm:$0xff]
    %v6581 = vld [vmem:[#allocation2 + $0x20] sm:$0xff]
    %v6582 = vld [vmem:[#allocation2 + $0x28] sm:$0xff]
    %v6583 = vld [vmem:[#allocation2 + $0x30] sm:$0xff]
    %v6584 = vld [vmem:[#allocation2 + $0x38] sm:$0xff]
    %v6585 = vsel %vm235, %v6577, 0.0
    %6586 = vadd.xlane.f32.xlu0 %v6585
    %v6587 = vpop.xlane.xlu0 %6586
    %v6588 = vsel %vm235, %v6578, 0.0
    %6589 = vadd.xlane.f32.xlu0 %v6588
    %v6590 = vpop.xlane.xlu0 %6589
    %v6591 = vsel %vm235, %v6579, 0.0
    %6592 = vadd.xlane.f32.xlu0 %v6591
    %v6593 = vpop.xlane.xlu0 %6592
    %v6594 = vsel %vm235, %v6580, 0.0
    %6595 = vadd.xlane.f32.xlu0 %v6594
    %v6596 = vpop.xlane.xlu0 %6595
    %v6597 = vsel %vm235, %v6581, 0.0
    %6598 = vadd.xlane.f32.xlu0 %v6597
    %v6599 = vpop.xlane.xlu0 %6598
    %v6600 = vsel %vm235, %v6582, 0.0
    %6601 = vadd.xlane.f32.xlu0 %v6600
    %v6602 = vpop.xlane.xlu0 %6601
    %v6603 = vsel %vm235, %v6583, 0.0
    %6604 = vadd.xlane.f32.xlu0 %v6603
    %v6605 = vpop.xlane.xlu0 %6604
    %v6606 = vsel %vm235, %v6584, 0.0
    %6607 = vadd.xlane.f32.xlu0 %v6606
    %v6608 = vpop.xlane.xlu0 %6607
    %v6609 = vrcp.pop 32.0
    %v6610 = vmul.f32 %v6587, %v6609
    %v6611 = vmul.f32 %v6590, %v6609
    %v6612 = vmul.f32 %v6593, %v6609
    %v6613 = vmul.f32 %v6596, %v6609
    %v6614 = vmul.f32 %v6599, %v6609
    %v6615 = vmul.f32 %v6602, %v6609
    %v6616 = vmul.f32 %v6605, %v6609
    %v6617 = vmul.f32 %v6608, %v6609
    %v6618 = vmax.f32 %v6610, %v6614
    %v6619 = vmax.f32 %v6611, %v6615
    %v6620 = vmax.f32 %v6612, %v6616
    %v6621 = vmax.f32 %v6613, %v6617
    %v6622 = vmax.f32 %v6618, %v6619
    %v6623 = vmax.f32 %v6620, %v6621
    %v6624 = vmax.f32 %v6622, %v6623
    %v6625 = vsub.f32 %v6610, %v6624
    %v6626 = vsub.f32 %v6611, %v6624
    %v6627 = vsub.f32 %v6612, %v6624
    %v6628 = vsub.f32 %v6613, %v6624
    %v6629 = vsub.f32 %v6614, %v6624
    %v6630 = vsub.f32 %v6615, %v6624
    %v6631 = vsub.f32 %v6616, %v6624
    %v6632 = vsub.f32 %v6617, %v6624
    %v6633 = vmul.f32 %v6625, 1.442695
    %v6634 = vpow.pop %v6633
    %v6635 = vmul.f32 %v6626, 1.442695
    %v6636 = vpow.pop %v6635
    %v6637 = vmul.f32 %v6627, 1.442695
    %v6638 = vpow.pop %v6637
    %v6639 = vmul.f32 %v6628, 1.442695
    %v6640 = vpow.pop %v6639
    %v6641 = vmul.f32 %v6629, 1.442695
    %v6642 = vpow.pop %v6641
    %v6643 = vmul.f32 %v6630, 1.442695
    %v6644 = vpow.pop %v6643
    %v6645 = vmul.f32 %v6631, 1.442695
    %v6646 = vpow.pop %v6645
    %v6647 = vmul.f32 %v6632, 1.442695
    %v6648 = vpow.pop %v6647
    %v6649 = vadd.f32 %v6634, %v6636
    %v6650 = vadd.f32 %v6649, %v6638
    %v6651 = vadd.f32 %v6650, %v6640
    %v6652 = vadd.f32 %v6651, %v6642
    %v6653 = vadd.f32 %v6652, %v6644
    %v6654 = vadd.f32 %v6653, %v6646
    %v6655 = vadd.f32 %v6654, %v6648
    %v6656 = vrcp.pop %v6655
    %v6657 = vmul.f32 %v6634, %v6656
    %v6658 = vmul.f32 %v6636, %v6656
    %v6659 = vmul.f32 %v6638, %v6656
    %v6660 = vmul.f32 %v6640, %v6656
    %v6661 = vmul.f32 %v6642, %v6656
    %v6662 = vmul.f32 %v6644, %v6656
    %v6663 = vmul.f32 %v6646, %v6656
    %v6664 = vmul.f32 %v6648, %v6656
    %v6665 = vmul.f32 %v6657, %v6577
    %v6666 = vmul.f32 %v6658, %v6578
    %v6667 = vmul.f32 %v6659, %v6579
    %v6668 = vmul.f32 %v6660, %v6580
    %v6669 = vmul.f32 %v6661, %v6581
    %v6670 = vmul.f32 %v6662, %v6582
    %v6671 = vmul.f32 %v6663, %v6583
    %v6672 = vmul.f32 %v6664, %v6584
    %v6673 = vsel %vm235, %v6665, 0.0
    %v6674 = vsel %vm235, %v6666, 0.0
    %v6675 = vadd.f32 %v6673, %v6674
    %v6676 = vsel %vm235, %v6667, 0.0
    %v6677 = vadd.f32 %v6675, %v6676
    %v6678 = vsel %vm235, %v6668, 0.0
    %v6679 = vadd.f32 %v6677, %v6678
    %v6680 = vsel %vm235, %v6669, 0.0
    %v6681 = vadd.f32 %v6679, %v6680
    %v6682 = vsel %vm235, %v6670, 0.0
    %v6683 = vadd.f32 %v6681, %v6682
    %v6684 = vsel %vm235, %v6671, 0.0
    %v6685 = vadd.f32 %v6683, %v6684
    %v6686 = vsel %vm235, %v6672, 0.0
    %v6687 = vadd.f32 %v6685, %v6686
    %v6688 = vld [vmem:[%s9] sm:$0x1]
    %v6690 = vlaneseq
    %v6691 = vshrl.u32 %v6690, 7
    %v6692 = vsub.s32 0, %v6691
    %v6693 = vrot.slane %v6688, %v6692
    %v6695 = vsub.f32 %v6687, %v6693
    %v6696 = vld [vmem:[%s10] sm:$0x1]
    %v6697 = vadd.f32 %v6696, 1e-05
    %v6698 = vrsqrt.pop %v6697
    %v6700 = vlaneseq
    %v6701 = vshrl.u32 %v6700, 7
    %v6702 = vsub.s32 0, %v6701
    %v6703 = vrot.slane %v6698, %v6702
    %v6705 = vmul.f32 %v6695, %v6703
    %v6706 = vld [vmem:[%s7] sm:$0x1]
    %v6708 = vlaneseq
    %v6709 = vshrl.u32 %v6708, 7
    %v6710 = vsub.s32 0, %v6709
    %v6711 = vrot.slane %v6706, %v6710
    %v6713 = vmul.f32 %v6705, %v6711
    %v6714 = vld [vmem:[%s8] sm:$0x1]
    %v6716 = vlaneseq
    %v6717 = vshrl.u32 %v6716, 7
    %v6718 = vsub.s32 0, %v6717
    %v6719 = vrot.slane %v6714, %v6718
    %v6721 = vadd.f32 %v6713, %v6719
    %v6722 = vld [vmem:[%s11] sm:$0xff]
    %v6723 = vld [vmem:[%s11 + $0x8] sm:$0xff]
    %v6724 = vld [vmem:[%s11 + $0x10] sm:$0xff]
    %v6725 = vld [vmem:[%s11 + $0x18] sm:$0xff]
    %v6726 = vld [vmem:[%s12] sm:$0x1]
    %v6728 = vlaneseq
    %v6729 = vshrl.u32 %v6728, 7
    %v6730 = vsub.s32 0, %v6729
    %v6731 = vrot.slane %v6726, %v6730
    %v6734 = vsel %vm235, %v6721, 0
    %6736 = vmatprep.subr.mxu0 0.0
    %6737 = vmatpush1.msra.mxu0 0.0
    %6738 = vmatprep.subr.mxu0 0.0
    %6739 = vmatpush1.msra.mxu0 0.0
    %6740 = vmatprep.subr.mxu0 0.0
    %6741 = vmatpush1.msra.mxu0 0.0
    %6742 = vmatprep.subr.mxu0 0.0
    %6743 = vmatpush1.msra.mxu0 0.0
    %6744 = vmatprep.subr.mxu0 0.0
    %6745 = vmatpush1.msra.mxu0 0.0
    %6746 = vmatprep.subr.mxu0 0.0
    %6747 = vmatpush1.msra.mxu0 0.0
    %6748 = vmatprep.subr.mxu0 0.0
    %6749 = vmatpush1.msra.mxu0 0.0
    %6750 = vmatprep.subr.mxu0 0.0
    %6751 = vmatpush1.msra.mxu0 0.0
    %6752 = vmatprep.subr.mxu0 0.0
    %6753 = vmatpush1.msra.mxu0 0.0
    %6754 = vmatprep.subr.mxu0 0.0
    %6755 = vmatpush1.msra.mxu0 0.0
    %6756 = vmatprep.subr.mxu0 0.0
    %6757 = vmatpush1.msra.mxu0 0.0
    %6758 = vmatprep.subr.mxu0 0.0
    %6759 = vmatpush1.msra.mxu0 0.0
    %6760 = vmatprep.subr.mxu0 0.0
    %6761 = vmatpush1.msra.mxu0 %v6725
    %6762 = vmatprep.subr.mxu0 0.0
    %6763 = vmatpush1.msra.mxu0 %v6724
    %6764 = vmatprep.subr.mxu0 0.0
    %6765 = vmatpush1.msra.mxu0 %v6723
    %6766 = vmatprep.subr.mxu0 0.0
    %6767 = vmatpush1.msra.mxu0 %v6722
    %6768 = vmatprep.subr.mxu0 0.0
    %6769 = vmatpush2.msra.mxu0 0.0
    %6770 = vmatprep.subr.mxu0 0.0
    %6771 = vmatpush2.msra.mxu0 0.0
    %6772 = vmatprep.subr.mxu0 0.0
    %6773 = vmatpush2.msra.mxu0 0.0
    %6774 = vmatprep.subr.mxu0 0.0
    %6775 = vmatpush2.msra.mxu0 0.0
    %6776 = vmatprep.subr.mxu0 0.0
    %6777 = vmatpush2.msra.mxu0 0.0
    %6778 = vmatprep.subr.mxu0 0.0
    %6779 = vmatpush2.msra.mxu0 0.0
    %6780 = vmatprep.subr.mxu0 0.0
    %6781 = vmatpush2.msra.mxu0 0.0
    %6782 = vmatprep.subr.mxu0 0.0
    %6783 = vmatpush2.msra.mxu0 0.0
    %6784 = vmatprep.subr.mxu0 0.0
    %6785 = vmatpush2.msra.mxu0 0.0
    %6786 = vmatprep.subr.mxu0 0.0
    %6787 = vmatpush2.msra.mxu0 0.0
    %6788 = vmatprep.subr.mxu0 0.0
    %6789 = vmatpush2.msra.mxu0 0.0
    %6790 = vmatprep.subr.mxu0 0.0
    %6791 = vmatpush2.msra.mxu0 0.0
    %6792 = vmatprep.subr.mxu0 0.0
    %6793 = vmatpush2.msra.mxu0 0.0
    %6794 = vmatprep.subr.mxu0 0.0
    %6795 = vmatpush2.msra.mxu0 0.0
    %6796 = vmatprep.subr.mxu0 0.0
    %6797 = vmatpush2.msra.mxu0 0.0
    %6798 = vmatprep.subr.mxu0 0.0
    %6799 = vmatpush2.msra.mxu0 0.0
    %6800 = vmatprep.mubr.f32.mxu0 0.0
    %6801 = vmatmul.mubr.f32.gmra.mxu0 %v6734
    %v6802 = vpop.f32.mrf.mxu0
    %v6803 = vadd.f32 %v6731, %v6802
    %v6804 = vpop.f32.mrf.mxu0
    %6805 = vdwg.mxu0
    %vm6806 = vcmask 23552
    %6807 = vst.msk [vmem:[%s13] sm:$0xff] %vm6806, %v6803
    // Predicated region
    $region66: #{lstm_attention_reg_forward.1} parent=1 // pred_check
      _
    $region67: #{lstm_attention_reg_forward.1} parent=1 // pred_check_branch
      %6809 = sbr.rel (0) target = $region69
    $region68: #{lstm_attention_reg_forward.1} parent=1 // pred_region
      _
    $region69: #{lstm_attention_reg_forward.1} parent=1 // pred_fallthru
      _
    // Predicated region
    $region70: #{lstm_attention_reg_forward.1} parent=1 // pred_check
      _
    $region71: #{lstm_attention_reg_forward.1} parent=1 // pred_check_branch
      %6811 = sbr.rel (0) target = $region73
    $region72: #{lstm_attention_reg_forward.1} parent=1 // pred_region
      _
    $region73: #{lstm_attention_reg_forward.1} parent=1 // pred_fallthru
      _
    %6812 = vsyncpa [#allocation10], 1
    %6813 = vsyncpa [#allocation12], 1

</llo_original>
